<compile_context>
chip_gen: v6e
topology: v6e:2x2x1
jax: 0.10.0
libtpu: 0.0.40
codegen_flags: <defaults>
</compile_context>

<pallas_src>
import functools
import math

import jax
import jax.numpy as jnp
from jax.experimental import pallas as pl
from jax.experimental.pallas import tpu as pltpu


# -----------------------------------------------------------------------------
# Kernel
# -----------------------------------------------------------------------------
def _conv3x3_mxu(pad_ref, w_ref, *, c_in, c_out, h_out, w_out, stride):
    """3x3 conv over a halo-padded (H+2, W+2, C_in) VMEM scratch.

    w_ref: (9, C_in, C_out) VMEM tile, tap-major (kh*3+kw), BN scale folded in.
    Returns an f32 (H_out*W_out, C_out) accumulator (9 MXU matmuls).
    """
    hw = h_out * w_out
    acc = jnp.zeros((hw, c_out), jnp.float32)
    for kh in range(3):
        for kw in range(3):
            if stride == 1:
                win = pad_ref[pl.ds(kh, h_out), pl.ds(kw, w_out), :]
            else:
                win = pad_ref[pl.ds(kh, h_out, stride),
                              pl.ds(kw, w_out, stride), :]
            acc = acc + jnp.dot(win.reshape(hw, c_in),
                                w_ref[kh * 3 + kw],
                                preferred_element_type=jnp.float32)
    return acc


def _basic_block_kernel(x_ref, w1_ref, b1_ref, w2_ref, b2_ref, out_ref,
                        xpad_ref, midpad_ref, *, stride, c_in, c_out,
                        h, w, h_out, w_out, apply_relu, identity_shortcut):
    cdt = xpad_ref.dtype
    hw = h_out * w_out

    # In-kernel halo padding of the input (no jnp.pad / HBM copy in wrapper).
    xpad_ref[...] = jnp.zeros_like(xpad_ref)
    xpad_ref[pl.ds(1, h), pl.ds(1, w), :] = x_ref[0].astype(cdt)

    # conv1 (stride s) + folded bn1 + relu  -> stays in VMEM scratch.
    acc1 = _conv3x3_mxu(xpad_ref, w1_ref, c_in=c_in, c_out=c_out,
                        h_out=h_out, w_out=w_out, stride=stride)
    mid = jnp.maximum(acc1 + b1_ref[...].astype(jnp.float32), 0.0)

    midpad_ref[...] = jnp.zeros_like(midpad_ref)
    midpad_ref[pl.ds(1, h_out), pl.ds(1, w_out), :] = (
        mid.reshape(h_out, w_out, c_out).astype(cdt))

    # conv2 (stride 1) + folded bn2.
    acc2 = _conv3x3_mxu(midpad_ref, w2_ref, c_in=c_out, c_out=c_out,
                        h_out=h_out, w_out=w_out, stride=1)
    acc2 = acc2 + b2_ref[...].astype(jnp.float32)

    # Residual: identity, or DownsampleA (subsample + zero channel pad),
    # computed in-kernel from the already-resident input.
    if identity_shortcut:
        res = x_ref[0].reshape(hw, c_out).astype(jnp.float32)
    else:
        sub = xpad_ref[pl.ds(1, h_out, stride), pl.ds(1, w_out, stride), :]
        res = sub.reshape(hw, c_in).astype(jnp.float32)
        res = jnp.concatenate(
            [res, jnp.zeros((hw, c_out - c_in), jnp.float32)], axis=-1)
    acc2 = acc2 + res

    if apply_relu:
        acc2 = jnp.maximum(acc2, 0.0)
    out_ref[0] = acc2.reshape(h_out, w_out, c_out).astype(out_ref.dtype)


# -----------------------------------------------------------------------------
# Wrapper
# -----------------------------------------------------------------------------
def fold_bn(gamma, beta, mean, var, eps=1e-5):
    scale = gamma / jnp.sqrt(var + eps)
    bias = beta - mean * scale
    return scale, bias


def basic_block_forward(x, params, *, stride=1, relu=True,
                        compute_dtype=jnp.float32):
    """Fused Pallas BasicBlock.forward.  x: (N, C_in, H, W) f32 (NCHW)."""
    n, c_in, h, w = x.shape
    c_out = params["w1"].shape[0]
    h_out = (h - 1) // stride + 1
    w_out = (w - 1) // stride + 1

    identity = (stride == 1 and c_in == c_out)
    if not identity:
        assert stride == 2, "DownsampleA requires stride == 2"
        assert c_out == 2 * c_in, "DownsampleA zero-concat => planes == 2*in_planes"

    s1, b1 = fold_bn(*params["bn1"])
    s2, b2 = fold_bn(*params["bn2"])

    # OIHW -> (tap, C_in, C_out) with BN scale folded into the output columns.
    def prep_w(wt, scale):
        co, ci = wt.shape[0], wt.shape[1]
        m = jnp.transpose(wt, (2, 3, 1, 0)).reshape(9, ci, co)
        return (m * scale[None, None, :]).astype(compute_dtype)

    w1m = prep_w(params["w1"], s1)
    w2m = prep_w(params["w2"], s2)
    b1v = b1.reshape(1, c_out).astype(jnp.float32)
    b2v = b2.reshape(1, c_out).astype(jnp.float32)

    # NCHW -> NHWC so channels sit on the lane dim for the MXU matmuls.
    x_nhwc = jnp.transpose(x, (0, 2, 3, 1)).astype(compute_dtype)

    kernel = functools.partial(
        _basic_block_kernel, stride=stride, c_in=c_in, c_out=c_out,
        h=h, w=w, h_out=h_out, w_out=w_out, apply_relu=relu,
        identity_shortcut=identity)

    out_nhwc = pl.pallas_call(
        kernel,
        out_shape=jax.ShapeDtypeStruct((n, h_out, w_out, c_out), jnp.float32),
        grid=(n,),
        in_specs=[
            pl.BlockSpec((1, h, w, c_in), lambda i: (i, 0, 0, 0)),
            pl.BlockSpec((9, c_in, c_out), lambda i: (0, 0, 0)),
            pl.BlockSpec((1, c_out), lambda i: (0, 0)),
            pl.BlockSpec((9, c_out, c_out), lambda i: (0, 0, 0)),
            pl.BlockSpec((1, c_out), lambda i: (0, 0)),
        ],
        out_specs=pl.BlockSpec((1, h_out, w_out, c_out),
                               lambda i: (i, 0, 0, 0)),
        scratch_shapes=[
            pltpu.VMEM((h + 2, w + 2, c_in), compute_dtype),
            pltpu.VMEM((h_out + 2, w_out + 2, c_out), compute_dtype),
        ],
        compiler_params=pltpu.CompilerParams(
            dimension_semantics=("parallel",),
            vmem_limit_bytes=64 * 1024 * 1024),
    )(x_nhwc, w1m, b1v, w2m, b2v)

    # Back to PyTorch NCHW.
    return jnp.transpose(out_nhwc, (0, 3, 1, 2))


# -----------------------------------------------------------------------------
# Pure-JAX reference (for correctness check)
# -----------------------------------------------------------------------------
def _ref_forward(x, params, *, stride=1, relu=True):
    def conv(a, w, s):
        return jax.lax.conv_general_dilated(
            a, w, (s, s), ((1, 1), (1, 1)),
            dimension_numbers=("NCHW", "OIHW", "NCHW"))

    def bn(a, g, b, m, v, eps=1e-5):
        rs = lambda t: t[None, :, None, None]
        return (a - rs(m)) / jnp.sqrt(rs(v) + eps) * rs(g) + rs(b)

    out = jax.nn.relu(bn(conv(x, params["w1"], stride), *params["bn1"]))
    out = bn(conv(out, params["w2"], 1), *params["bn2"])
    if stride != 1 or x.shape[1] != params["w1"].shape[0]:
        sc = x[:, :, ::stride, ::stride]
        sc = jnp.concatenate([sc, jnp.zeros_like(sc)], axis=1)
    else:
        sc = x
    out = out + sc
    if relu:
        out = jax.nn.relu(out)
    return out


# -----------------------------------------------------------------------------
# Main
# -----------------------------------------------------------------------------
def _make_params(key, in_planes, planes):
    ks = jax.random.split(key, 10)
    fan1, fan2 = in_planes * 9, planes * 9
    return {
        "w1": jax.random.normal(ks[0], (planes, in_planes, 3, 3), jnp.float32)
              * (1.0 / math.sqrt(fan1)),
        "w2": jax.random.normal(ks[1], (planes, planes, 3, 3), jnp.float32)
              * (1.0 / math.sqrt(fan2)),
        "bn1": (1.0 + 0.1 * jax.random.normal(ks[2], (planes,), jnp.float32),
                0.1 * jax.random.normal(ks[3], (planes,), jnp.float32),
                0.1 * jax.random.normal(ks[4], (planes,), jnp.float32),
                jax.random.uniform(ks[5], (planes,), jnp.float32, 0.5, 1.5)),
        "bn2": (1.0 + 0.1 * jax.random.normal(ks[6], (planes,), jnp.float32),
                0.1 * jax.random.normal(ks[7], (planes,), jnp.float32),
                0.1 * jax.random.normal(ks[8], (planes,), jnp.float32),
                jax.random.uniform(ks[9], (planes,), jnp.float32, 0.5, 1.5)),
    }


def _run_case(key, *, n, in_planes, planes, h, w, stride, relu):
    kp, kx = jax.random.split(key)
    params = _make_params(kp, in_planes, planes)
    x = jax.random.normal(kx, (n, in_planes, h, w), jnp.float32)

    out = jax.block_until_ready(
        basic_block_forward(x, params, stride=stride, relu=relu))
    ref = jax.block_until_ready(
        _ref_forward(x, params, stride=stride, relu=relu))

    assert out.shape == ref.shape, (out.shape, ref.shape)
    err = float(jnp.max(jnp.abs(out - ref)))
    assert err < 1e-4, err


if __name__ == "__main__":
    key = jax.random.PRNGKey(0)
    k1, k2 = jax.random.split(key)

    # Identity-shortcut case.
    _run_case(k1, n=2, in_planes=4, planes=4, h=16, w=16, stride=1, relu=True)
    # DownsampleA-shortcut case (stride 2, planes == 2*in_planes).
    _run_case(k2, n=2, in_planes=4, planes=8, h=16, w=16, stride=2, relu=True)

    print("KERNEL_OK")
</pallas_src>

<mosaic_0001>
module attributes {stable_mosaic.version = 11 : i64} {
  func.func @_basic_block_kernel(%arg0: i32, %arg1: memref<1x16x16x4xf32, #tpu.memory_space<vmem>>, %arg2: memref<9x4x4xf32, #tpu.memory_space<vmem>>, %arg3: memref<1x4xf32, #tpu.memory_space<vmem>>, %arg4: memref<9x4x4xf32, #tpu.memory_space<vmem>>, %arg5: memref<1x4xf32, #tpu.memory_space<vmem>>, %arg6: memref<1x16x16x4xf32, #tpu.memory_space<vmem>>, %arg7: memref<18x18x4xf32, #tpu.memory_space<vmem>>, %arg8: memref<18x18x4xf32, #tpu.memory_space<vmem>>) attributes {dimension_semantics = [#tpu.dimension_semantics<parallel>], iteration_bounds = array<i64: 2>, scalar_prefetch = 0 : i64, scratch_operands = 2 : i64, tpu.core_type = #tpu.core_type<tc>, window_params = [{transform_indices = @transform_0, window_bounds = array<i64: 1, 16, 16, 4>}, {pipeline_mode = #tpu.pipeline_mode<synchronous>, transform_indices = @transform_1, window_bounds = array<i64: 9, 4, 4>}, {pipeline_mode = #tpu.pipeline_mode<synchronous>, transform_indices = @transform_2, window_bounds = array<i64: 1, 4>}, {pipeline_mode = #tpu.pipeline_mode<synchronous>, transform_indices = @transform_3, window_bounds = array<i64: 9, 4, 4>}, {pipeline_mode = #tpu.pipeline_mode<synchronous>, transform_indices = @transform_4, window_bounds = array<i64: 1, 4>}, {transform_indices = @transform_5, window_bounds = array<i64: 1, 16, 16, 4>}]} {
    %cst = arith.constant 0.000000e+00 : f32
    %0 = vector.broadcast %cst : f32 to vector<18x18x4xf32>
    %c0 = arith.constant 0 : index
    %c0_0 = arith.constant 0 : index
    %c0_1 = arith.constant 0 : index
    %1 = vector.load %arg7[%c0, %c0_0, %c0_1] : memref<18x18x4xf32, #tpu.memory_space<vmem>>, vector<18x18x4xf32>
    tpu.vector_store %arg7[%c0, %c0_0, %c0_1], %0 {strides = array<i32>} : memref<18x18x4xf32, #tpu.memory_space<vmem>>, vector<18x18x4xf32>,
    %c0_2 = arith.constant 0 : index
    %c0_3 = arith.constant 0 : index
    %c0_4 = arith.constant 0 : index
    %c0_5 = arith.constant 0 : index
    %2 = vector.load %arg1[%c0_2, %c0_3, %c0_4, %c0_5] : memref<1x16x16x4xf32, #tpu.memory_space<vmem>>, vector<1x16x16x4xf32>
    %3 = vector.shape_cast %2 : vector<1x16x16x4xf32> to vector<16x16x4xf32>
    %c1 = arith.constant 1 : index
    %c1_6 = arith.constant 1 : index
    %c0_7 = arith.constant 0 : index
    %4 = vector.load %arg7[%c1, %c1_6, %c0_7] : memref<18x18x4xf32, #tpu.memory_space<vmem>>, vector<16x16x4xf32>
    tpu.vector_store %arg7[%c1, %c1_6, %c0_7], %3 {strides = array<i32>} : memref<18x18x4xf32, #tpu.memory_space<vmem>>, vector<16x16x4xf32>,
    %cst_8 = arith.constant 0.000000e+00 : f32
    %5 = vector.broadcast %cst_8 : f32 to vector<256x4xf32>
    %c0_9 = arith.constant 0 : index
    %c0_10 = arith.constant 0 : index
    %c0_11 = arith.constant 0 : index
    %6 = vector.load %arg7[%c0_9, %c0_10, %c0_11] : memref<18x18x4xf32, #tpu.memory_space<vmem>>, vector<16x16x4xf32>
    %7 = vector.shape_cast %6 : vector<16x16x4xf32> to vector<256x4xf32>
    %c0_12 = arith.constant 0 : index
    %c0_13 = arith.constant 0 : index
    %c0_14 = arith.constant 0 : index
    %8 = vector.load %arg2[%c0_12, %c0_13, %c0_14] : memref<9x4x4xf32, #tpu.memory_space<vmem>>, vector<1x4x4xf32>
    %9 = vector.shape_cast %8 : vector<1x4x4xf32> to vector<4x4xf32>
    %cst_15 = arith.constant dense<0.000000e+00> : vector<256x4xf32>
    %10 = tpu.matmul %7, %9, %cst_15 {dimension_numbers = #tpu.dot_dimension_numbers<[1], [0], [0], [1], [0, 0, 1, 1], [], []>} : vector<256x4xf32>, vector<4x4xf32>, vector<256x4xf32> -> vector<256x4xf32>
    %11 = arith.addf %5, %10 : vector<256x4xf32>
    %c0_16 = arith.constant 0 : index
    %c1_17 = arith.constant 1 : index
    %c0_18 = arith.constant 0 : index
    %12 = vector.load %arg7[%c0_16, %c1_17, %c0_18] : memref<18x18x4xf32, #tpu.memory_space<vmem>>, vector<16x16x4xf32>
    %13 = vector.shape_cast %12 : vector<16x16x4xf32> to vector<256x4xf32>
    %c1_19 = arith.constant 1 : index
    %c0_20 = arith.constant 0 : index
    %c0_21 = arith.constant 0 : index
    %14 = vector.load %arg2[%c1_19, %c0_20, %c0_21] : memref<9x4x4xf32, #tpu.memory_space<vmem>>, vector<1x4x4xf32>
    %15 = vector.shape_cast %14 : vector<1x4x4xf32> to vector<4x4xf32>
    %cst_22 = arith.constant dense<0.000000e+00> : vector<256x4xf32>
    %16 = tpu.matmul %13, %15, %cst_22 {dimension_numbers = #tpu.dot_dimension_numbers<[1], [0], [0], [1], [0, 0, 1, 1], [], []>} : vector<256x4xf32>, vector<4x4xf32>, vector<256x4xf32> -> vector<256x4xf32>
    %17 = arith.addf %11, %16 : vector<256x4xf32>
    %c0_23 = arith.constant 0 : index
    %c2 = arith.constant 2 : index
    %c0_24 = arith.constant 0 : index
    %18 = vector.load %arg7[%c0_23, %c2, %c0_24] : memref<18x18x4xf32, #tpu.memory_space<vmem>>, vector<16x16x4xf32>
    %19 = vector.shape_cast %18 : vector<16x16x4xf32> to vector<256x4xf32>
    %c2_25 = arith.constant 2 : index
    %c0_26 = arith.constant 0 : index
    %c0_27 = arith.constant 0 : index
    %20 = vector.load %arg2[%c2_25, %c0_26, %c0_27] : memref<9x4x4xf32, #tpu.memory_space<vmem>>, vector<1x4x4xf32>
    %21 = vector.shape_cast %20 : vector<1x4x4xf32> to vector<4x4xf32>
    %cst_28 = arith.constant dense<0.000000e+00> : vector<256x4xf32>
    %22 = tpu.matmul %19, %21, %cst_28 {dimension_numbers = #tpu.dot_dimension_numbers<[1], [0], [0], [1], [0, 0, 1, 1], [], []>} : vector<256x4xf32>, vector<4x4xf32>, vector<256x4xf32> -> vector<256x4xf32>
    %23 = arith.addf %17, %22 : vector<256x4xf32>
    %c1_29 = arith.constant 1 : index
    %c0_30 = arith.constant 0 : index
    %c0_31 = arith.constant 0 : index
    %24 = vector.load %arg7[%c1_29, %c0_30, %c0_31] : memref<18x18x4xf32, #tpu.memory_space<vmem>>, vector<16x16x4xf32>
    %25 = vector.shape_cast %24 : vector<16x16x4xf32> to vector<256x4xf32>
    %c3 = arith.constant 3 : index
    %c0_32 = arith.constant 0 : index
    %c0_33 = arith.constant 0 : index
    %26 = vector.load %arg2[%c3, %c0_32, %c0_33] : memref<9x4x4xf32, #tpu.memory_space<vmem>>, vector<1x4x4xf32>
    %27 = vector.shape_cast %26 : vector<1x4x4xf32> to vector<4x4xf32>
    %cst_34 = arith.constant dense<0.000000e+00> : vector<256x4xf32>
    %28 = tpu.matmul %25, %27, %cst_34 {dimension_numbers = #tpu.dot_dimension_numbers<[1], [0], [0], [1], [0, 0, 1, 1], [], []>} : vector<256x4xf32>, vector<4x4xf32>, vector<256x4xf32> -> vector<256x4xf32>
    %29 = arith.addf %23, %28 : vector<256x4xf32>
    %c1_35 = arith.constant 1 : index
    %c1_36 = arith.constant 1 : index
    %c0_37 = arith.constant 0 : index
    %30 = vector.load %arg7[%c1_35, %c1_36, %c0_37] : memref<18x18x4xf32, #tpu.memory_space<vmem>>, vector<16x16x4xf32>
    %31 = vector.shape_cast %30 : vector<16x16x4xf32> to vector<256x4xf32>
    %c4 = arith.constant 4 : index
    %c0_38 = arith.constant 0 : index
    %c0_39 = arith.constant 0 : index
    %32 = vector.load %arg2[%c4, %c0_38, %c0_39] : memref<9x4x4xf32, #tpu.memory_space<vmem>>, vector<1x4x4xf32>
    %33 = vector.shape_cast %32 : vector<1x4x4xf32> to vector<4x4xf32>
    %cst_40 = arith.constant dense<0.000000e+00> : vector<256x4xf32>
    %34 = tpu.matmul %31, %33, %cst_40 {dimension_numbers = #tpu.dot_dimension_numbers<[1], [0], [0], [1], [0, 0, 1, 1], [], []>} : vector<256x4xf32>, vector<4x4xf32>, vector<256x4xf32> -> vector<256x4xf32>
    %35 = arith.addf %29, %34 : vector<256x4xf32>
    %c1_41 = arith.constant 1 : index
    %c2_42 = arith.constant 2 : index
    %c0_43 = arith.constant 0 : index
    %36 = vector.load %arg7[%c1_41, %c2_42, %c0_43] : memref<18x18x4xf32, #tpu.memory_space<vmem>>, vector<16x16x4xf32>
    %37 = vector.shape_cast %36 : vector<16x16x4xf32> to vector<256x4xf32>
    %c5 = arith.constant 5 : index
    %c0_44 = arith.constant 0 : index
    %c0_45 = arith.constant 0 : index
    %38 = vector.load %arg2[%c5, %c0_44, %c0_45] : memref<9x4x4xf32, #tpu.memory_space<vmem>>, vector<1x4x4xf32>
    %39 = vector.shape_cast %38 : vector<1x4x4xf32> to vector<4x4xf32>
    %cst_46 = arith.constant dense<0.000000e+00> : vector<256x4xf32>
    %40 = tpu.matmul %37, %39, %cst_46 {dimension_numbers = #tpu.dot_dimension_numbers<[1], [0], [0], [1], [0, 0, 1, 1], [], []>} : vector<256x4xf32>, vector<4x4xf32>, vector<256x4xf32> -> vector<256x4xf32>
    %41 = arith.addf %35, %40 : vector<256x4xf32>
    %c2_47 = arith.constant 2 : index
    %c0_48 = arith.constant 0 : index
    %c0_49 = arith.constant 0 : index
    %42 = vector.load %arg7[%c2_47, %c0_48, %c0_49] : memref<18x18x4xf32, #tpu.memory_space<vmem>>, vector<16x16x4xf32>
    %43 = vector.shape_cast %42 : vector<16x16x4xf32> to vector<256x4xf32>
    %c6 = arith.constant 6 : index
    %c0_50 = arith.constant 0 : index
    %c0_51 = arith.constant 0 : index
    %44 = vector.load %arg2[%c6, %c0_50, %c0_51] : memref<9x4x4xf32, #tpu.memory_space<vmem>>, vector<1x4x4xf32>
    %45 = vector.shape_cast %44 : vector<1x4x4xf32> to vector<4x4xf32>
    %cst_52 = arith.constant dense<0.000000e+00> : vector<256x4xf32>
    %46 = tpu.matmul %43, %45, %cst_52 {dimension_numbers = #tpu.dot_dimension_numbers<[1], [0], [0], [1], [0, 0, 1, 1], [], []>} : vector<256x4xf32>, vector<4x4xf32>, vector<256x4xf32> -> vector<256x4xf32>
    %47 = arith.addf %41, %46 : vector<256x4xf32>
    %c2_53 = arith.constant 2 : index
    %c1_54 = arith.constant 1 : index
    %c0_55 = arith.constant 0 : index
    %48 = vector.load %arg7[%c2_53, %c1_54, %c0_55] : memref<18x18x4xf32, #tpu.memory_space<vmem>>, vector<16x16x4xf32>
    %49 = vector.shape_cast %48 : vector<16x16x4xf32> to vector<256x4xf32>
    %c7 = arith.constant 7 : index
    %c0_56 = arith.constant 0 : index
    %c0_57 = arith.constant 0 : index
    %50 = vector.load %arg2[%c7, %c0_56, %c0_57] : memref<9x4x4xf32, #tpu.memory_space<vmem>>, vector<1x4x4xf32>
    %51 = vector.shape_cast %50 : vector<1x4x4xf32> to vector<4x4xf32>
    %cst_58 = arith.constant dense<0.000000e+00> : vector<256x4xf32>
    %52 = tpu.matmul %49, %51, %cst_58 {dimension_numbers = #tpu.dot_dimension_numbers<[1], [0], [0], [1], [0, 0, 1, 1], [], []>} : vector<256x4xf32>, vector<4x4xf32>, vector<256x4xf32> -> vector<256x4xf32>
    %53 = arith.addf %47, %52 : vector<256x4xf32>
    %c2_59 = arith.constant 2 : index
    %c2_60 = arith.constant 2 : index
    %c0_61 = arith.constant 0 : index
    %54 = vector.load %arg7[%c2_59, %c2_60, %c0_61] : memref<18x18x4xf32, #tpu.memory_space<vmem>>, vector<16x16x4xf32>
    %55 = vector.shape_cast %54 : vector<16x16x4xf32> to vector<256x4xf32>
    %c8 = arith.constant 8 : index
    %c0_62 = arith.constant 0 : index
    %c0_63 = arith.constant 0 : index
    %56 = vector.load %arg2[%c8, %c0_62, %c0_63] : memref<9x4x4xf32, #tpu.memory_space<vmem>>, vector<1x4x4xf32>
    %57 = vector.shape_cast %56 : vector<1x4x4xf32> to vector<4x4xf32>
    %cst_64 = arith.constant dense<0.000000e+00> : vector<256x4xf32>
    %58 = tpu.matmul %55, %57, %cst_64 {dimension_numbers = #tpu.dot_dimension_numbers<[1], [0], [0], [1], [0, 0, 1, 1], [], []>} : vector<256x4xf32>, vector<4x4xf32>, vector<256x4xf32> -> vector<256x4xf32>
    %59 = arith.addf %53, %58 : vector<256x4xf32>
    %c0_65 = arith.constant 0 : index
    %c0_66 = arith.constant 0 : index
    %60 = vector.load %arg3[%c0_65, %c0_66] : memref<1x4xf32, #tpu.memory_space<vmem>>, vector<1x4xf32>
    %61 = vector.broadcast %60 : vector<1x4xf32> to vector<256x4xf32>
    %62 = arith.addf %59, %61 : vector<256x4xf32>
    %cst_67 = arith.constant 0.000000e+00 : f32
    %63 = vector.broadcast %cst_67 : f32 to vector<256x4xf32>
    %64 = arith.maximumf %62, %63 : vector<256x4xf32>
    %cst_68 = arith.constant 0.000000e+00 : f32
    %65 = vector.broadcast %cst_68 : f32 to vector<18x18x4xf32>
    %c0_69 = arith.constant 0 : index
    %c0_70 = arith.constant 0 : index
    %c0_71 = arith.constant 0 : index
    %66 = vector.load %arg8[%c0_69, %c0_70, %c0_71] : memref<18x18x4xf32, #tpu.memory_space<vmem>>, vector<18x18x4xf32>
    tpu.vector_store %arg8[%c0_69, %c0_70, %c0_71], %65 {strides = array<i32>} : memref<18x18x4xf32, #tpu.memory_space<vmem>>, vector<18x18x4xf32>,
    %67 = vector.shape_cast %64 : vector<256x4xf32> to vector<16x16x4xf32>
    %c1_72 = arith.constant 1 : index
    %c1_73 = arith.constant 1 : index
    %c0_74 = arith.constant 0 : index
    %68 = vector.load %arg8[%c1_72, %c1_73, %c0_74] : memref<18x18x4xf32, #tpu.memory_space<vmem>>, vector<16x16x4xf32>
    tpu.vector_store %arg8[%c1_72, %c1_73, %c0_74], %67 {strides = array<i32>} : memref<18x18x4xf32, #tpu.memory_space<vmem>>, vector<16x16x4xf32>,
    %cst_75 = arith.constant 0.000000e+00 : f32
    %69 = vector.broadcast %cst_75 : f32 to vector<256x4xf32>
    %c0_76 = arith.constant 0 : index
    %c0_77 = arith.constant 0 : index
    %c0_78 = arith.constant 0 : index
    %70 = vector.load %arg8[%c0_76, %c0_77, %c0_78] : memref<18x18x4xf32, #tpu.memory_space<vmem>>, vector<16x16x4xf32>
    %71 = vector.shape_cast %70 : vector<16x16x4xf32> to vector<256x4xf32>
    %c0_79 = arith.constant 0 : index
    %c0_80 = arith.constant 0 : index
    %c0_81 = arith.constant 0 : index
    %72 = vector.load %arg4[%c0_79, %c0_80, %c0_81] : memref<9x4x4xf32, #tpu.memory_space<vmem>>, vector<1x4x4xf32>
    %73 = vector.shape_cast %72 : vector<1x4x4xf32> to vector<4x4xf32>
    %cst_82 = arith.constant dense<0.000000e+00> : vector<256x4xf32>
    %74 = tpu.matmul %71, %73, %cst_82 {dimension_numbers = #tpu.dot_dimension_numbers<[1], [0], [0], [1], [0, 0, 1, 1], [], []>} : vector<256x4xf32>, vector<4x4xf32>, vector<256x4xf32> -> vector<256x4xf32>
    %75 = arith.addf %69, %74 : vector<256x4xf32>
    %c0_83 = arith.constant 0 : index
    %c1_84 = arith.constant 1 : index
    %c0_85 = arith.constant 0 : index
    %76 = vector.load %arg8[%c0_83, %c1_84, %c0_85] : memref<18x18x4xf32, #tpu.memory_space<vmem>>, vector<16x16x4xf32>
    %77 = vector.shape_cast %76 : vector<16x16x4xf32> to vector<256x4xf32>
    %c1_86 = arith.constant 1 : index
    %c0_87 = arith.constant 0 : index
    %c0_88 = arith.constant 0 : index
    %78 = vector.load %arg4[%c1_86, %c0_87, %c0_88] : memref<9x4x4xf32, #tpu.memory_space<vmem>>, vector<1x4x4xf32>
    %79 = vector.shape_cast %78 : vector<1x4x4xf32> to vector<4x4xf32>
    %cst_89 = arith.constant dense<0.000000e+00> : vector<256x4xf32>
    %80 = tpu.matmul %77, %79, %cst_89 {dimension_numbers = #tpu.dot_dimension_numbers<[1], [0], [0], [1], [0, 0, 1, 1], [], []>} : vector<256x4xf32>, vector<4x4xf32>, vector<256x4xf32> -> vector<256x4xf32>
    %81 = arith.addf %75, %80 : vector<256x4xf32>
    %c0_90 = arith.constant 0 : index
    %c2_91 = arith.constant 2 : index
    %c0_92 = arith.constant 0 : index
    %82 = vector.load %arg8[%c0_90, %c2_91, %c0_92] : memref<18x18x4xf32, #tpu.memory_space<vmem>>, vector<16x16x4xf32>
    %83 = vector.shape_cast %82 : vector<16x16x4xf32> to vector<256x4xf32>
    %c2_93 = arith.constant 2 : index
    %c0_94 = arith.constant 0 : index
    %c0_95 = arith.constant 0 : index
    %84 = vector.load %arg4[%c2_93, %c0_94, %c0_95] : memref<9x4x4xf32, #tpu.memory_space<vmem>>, vector<1x4x4xf32>
    %85 = vector.shape_cast %84 : vector<1x4x4xf32> to vector<4x4xf32>
    %cst_96 = arith.constant dense<0.000000e+00> : vector<256x4xf32>
    %86 = tpu.matmul %83, %85, %cst_96 {dimension_numbers = #tpu.dot_dimension_numbers<[1], [0], [0], [1], [0, 0, 1, 1], [], []>} : vector<256x4xf32>, vector<4x4xf32>, vector<256x4xf32> -> vector<256x4xf32>
    %87 = arith.addf %81, %86 : vector<256x4xf32>
    %c1_97 = arith.constant 1 : index
    %c0_98 = arith.constant 0 : index
    %c0_99 = arith.constant 0 : index
    %88 = vector.load %arg8[%c1_97, %c0_98, %c0_99] : memref<18x18x4xf32, #tpu.memory_space<vmem>>, vector<16x16x4xf32>
    %89 = vector.shape_cast %88 : vector<16x16x4xf32> to vector<256x4xf32>
    %c3_100 = arith.constant 3 : index
    %c0_101 = arith.constant 0 : index
    %c0_102 = arith.constant 0 : index
    %90 = vector.load %arg4[%c3_100, %c0_101, %c0_102] : memref<9x4x4xf32, #tpu.memory_space<vmem>>, vector<1x4x4xf32>
    %91 = vector.shape_cast %90 : vector<1x4x4xf32> to vector<4x4xf32>
    %cst_103 = arith.constant dense<0.000000e+00> : vector<256x4xf32>
    %92 = tpu.matmul %89, %91, %cst_103 {dimension_numbers = #tpu.dot_dimension_numbers<[1], [0], [0], [1], [0, 0, 1, 1], [], []>} : vector<256x4xf32>, vector<4x4xf32>, vector<256x4xf32> -> vector<256x4xf32>
    %93 = arith.addf %87, %92 : vector<256x4xf32>
    %c1_104 = arith.constant 1 : index
    %c1_105 = arith.constant 1 : index
    %c0_106 = arith.constant 0 : index
    %94 = vector.load %arg8[%c1_104, %c1_105, %c0_106] : memref<18x18x4xf32, #tpu.memory_space<vmem>>, vector<16x16x4xf32>
    %95 = vector.shape_cast %94 : vector<16x16x4xf32> to vector<256x4xf32>
    %c4_107 = arith.constant 4 : index
    %c0_108 = arith.constant 0 : index
    %c0_109 = arith.constant 0 : index
    %96 = vector.load %arg4[%c4_107, %c0_108, %c0_109] : memref<9x4x4xf32, #tpu.memory_space<vmem>>, vector<1x4x4xf32>
    %97 = vector.shape_cast %96 : vector<1x4x4xf32> to vector<4x4xf32>
    %cst_110 = arith.constant dense<0.000000e+00> : vector<256x4xf32>
    %98 = tpu.matmul %95, %97, %cst_110 {dimension_numbers = #tpu.dot_dimension_numbers<[1], [0], [0], [1], [0, 0, 1, 1], [], []>} : vector<256x4xf32>, vector<4x4xf32>, vector<256x4xf32> -> vector<256x4xf32>
    %99 = arith.addf %93, %98 : vector<256x4xf32>
    %c1_111 = arith.constant 1 : index
    %c2_112 = arith.constant 2 : index
    %c0_113 = arith.constant 0 : index
    %100 = vector.load %arg8[%c1_111, %c2_112, %c0_113] : memref<18x18x4xf32, #tpu.memory_space<vmem>>, vector<16x16x4xf32>
    %101 = vector.shape_cast %100 : vector<16x16x4xf32> to vector<256x4xf32>
    %c5_114 = arith.constant 5 : index
    %c0_115 = arith.constant 0 : index
    %c0_116 = arith.constant 0 : index
    %102 = vector.load %arg4[%c5_114, %c0_115, %c0_116] : memref<9x4x4xf32, #tpu.memory_space<vmem>>, vector<1x4x4xf32>
    %103 = vector.shape_cast %102 : vector<1x4x4xf32> to vector<4x4xf32>
    %cst_117 = arith.constant dense<0.000000e+00> : vector<256x4xf32>
    %104 = tpu.matmul %101, %103, %cst_117 {dimension_numbers = #tpu.dot_dimension_numbers<[1], [0], [0], [1], [0, 0, 1, 1], [], []>} : vector<256x4xf32>, vector<4x4xf32>, vector<256x4xf32> -> vector<256x4xf32>
    %105 = arith.addf %99, %104 : vector<256x4xf32>
    %c2_118 = arith.constant 2 : index
    %c0_119 = arith.constant 0 : index
    %c0_120 = arith.constant 0 : index
    %106 = vector.load %arg8[%c2_118, %c0_119, %c0_120] : memref<18x18x4xf32, #tpu.memory_space<vmem>>, vector<16x16x4xf32>
    %107 = vector.shape_cast %106 : vector<16x16x4xf32> to vector<256x4xf32>
    %c6_121 = arith.constant 6 : index
    %c0_122 = arith.constant 0 : index
    %c0_123 = arith.constant 0 : index
    %108 = vector.load %arg4[%c6_121, %c0_122, %c0_123] : memref<9x4x4xf32, #tpu.memory_space<vmem>>, vector<1x4x4xf32>
    %109 = vector.shape_cast %108 : vector<1x4x4xf32> to vector<4x4xf32>
    %cst_124 = arith.constant dense<0.000000e+00> : vector<256x4xf32>
    %110 = tpu.matmul %107, %109, %cst_124 {dimension_numbers = #tpu.dot_dimension_numbers<[1], [0], [0], [1], [0, 0, 1, 1], [], []>} : vector<256x4xf32>, vector<4x4xf32>, vector<256x4xf32> -> vector<256x4xf32>
    %111 = arith.addf %105, %110 : vector<256x4xf32>
    %c2_125 = arith.constant 2 : index
    %c1_126 = arith.constant 1 : index
    %c0_127 = arith.constant 0 : index
    %112 = vector.load %arg8[%c2_125, %c1_126, %c0_127] : memref<18x18x4xf32, #tpu.memory_space<vmem>>, vector<16x16x4xf32>
    %113 = vector.shape_cast %112 : vector<16x16x4xf32> to vector<256x4xf32>
    %c7_128 = arith.constant 7 : index
    %c0_129 = arith.constant 0 : index
    %c0_130 = arith.constant 0 : index
    %114 = vector.load %arg4[%c7_128, %c0_129, %c0_130] : memref<9x4x4xf32, #tpu.memory_space<vmem>>, vector<1x4x4xf32>
    %115 = vector.shape_cast %114 : vector<1x4x4xf32> to vector<4x4xf32>
    %cst_131 = arith.constant dense<0.000000e+00> : vector<256x4xf32>
    %116 = tpu.matmul %113, %115, %cst_131 {dimension_numbers = #tpu.dot_dimension_numbers<[1], [0], [0], [1], [0, 0, 1, 1], [], []>} : vector<256x4xf32>, vector<4x4xf32>, vector<256x4xf32> -> vector<256x4xf32>
    %117 = arith.addf %111, %116 : vector<256x4xf32>
    %c2_132 = arith.constant 2 : index
    %c2_133 = arith.constant 2 : index
    %c0_134 = arith.constant 0 : index
    %118 = vector.load %arg8[%c2_132, %c2_133, %c0_134] : memref<18x18x4xf32, #tpu.memory_space<vmem>>, vector<16x16x4xf32>
    %119 = vector.shape_cast %118 : vector<16x16x4xf32> to vector<256x4xf32>
    %c8_135 = arith.constant 8 : index
    %c0_136 = arith.constant 0 : index
    %c0_137 = arith.constant 0 : index
    %120 = vector.load %arg4[%c8_135, %c0_136, %c0_137] : memref<9x4x4xf32, #tpu.memory_space<vmem>>, vector<1x4x4xf32>
    %121 = vector.shape_cast %120 : vector<1x4x4xf32> to vector<4x4xf32>
    %cst_138 = arith.constant dense<0.000000e+00> : vector<256x4xf32>
    %122 = tpu.matmul %119, %121, %cst_138 {dimension_numbers = #tpu.dot_dimension_numbers<[1], [0], [0], [1], [0, 0, 1, 1], [], []>} : vector<256x4xf32>, vector<4x4xf32>, vector<256x4xf32> -> vector<256x4xf32>
    %123 = arith.addf %117, %122 : vector<256x4xf32>
    %c0_139 = arith.constant 0 : index
    %c0_140 = arith.constant 0 : index
    %124 = vector.load %arg5[%c0_139, %c0_140] : memref<1x4xf32, #tpu.memory_space<vmem>>, vector<1x4xf32>
    %125 = vector.broadcast %124 : vector<1x4xf32> to vector<256x4xf32>
    %126 = arith.addf %123, %125 : vector<256x4xf32>
    %c0_141 = arith.constant 0 : index
    %c0_142 = arith.constant 0 : index
    %c0_143 = arith.constant 0 : index
    %c0_144 = arith.constant 0 : index
    %127 = vector.load %arg1[%c0_141, %c0_142, %c0_143, %c0_144] : memref<1x16x16x4xf32, #tpu.memory_space<vmem>>, vector<1x16x16x4xf32>
    %128 = vector.shape_cast %127 : vector<1x16x16x4xf32> to vector<16x16x4xf32>
    %129 = vector.shape_cast %128 : vector<16x16x4xf32> to vector<256x4xf32>
    %130 = arith.addf %126, %129 : vector<256x4xf32>
    %cst_145 = arith.constant 0.000000e+00 : f32
    %131 = vector.broadcast %cst_145 : f32 to vector<256x4xf32>
    %132 = arith.maximumf %130, %131 : vector<256x4xf32>
    %133 = vector.shape_cast %132 : vector<256x4xf32> to vector<16x16x4xf32>
    %c0_146 = arith.constant 0 : index
    %c0_147 = arith.constant 0 : index
    %c0_148 = arith.constant 0 : index
    %c0_149 = arith.constant 0 : index
    %134 = vector.load %arg6[%c0_146, %c0_147, %c0_148, %c0_149] : memref<1x16x16x4xf32, #tpu.memory_space<vmem>>, vector<1x16x16x4xf32>
    %135 = vector.shape_cast %134 : vector<1x16x16x4xf32> to vector<16x16x4xf32>
    %136 = vector.shape_cast %133 : vector<16x16x4xf32> to vector<1x16x16x4xf32>
    tpu.vector_store %arg6[%c0_146, %c0_147, %c0_148, %c0_149], %136 {strides = array<i32>} : memref<1x16x16x4xf32, #tpu.memory_space<vmem>>, vector<1x16x16x4xf32>,
    return
  }
  func.func @transform_0(%arg0: i32) -> (i32, i32, i32, i32) {
    %c0_i32 = arith.constant 0 : i32
    %c0_i32_0 = arith.constant 0 : i32
    %c0_i32_1 = arith.constant 0 : i32
    %c0_i32_2 = arith.constant 0 : i32
    return %arg0, %c0_i32, %c0_i32_0, %c0_i32_1 : i32, i32, i32, i32
  }
  func.func @transform_1(%arg0: i32) -> (i32, i32, i32) {
    %c0_i32 = arith.constant 0 : i32
    %c0_i32_0 = arith.constant 0 : i32
    %c0_i32_1 = arith.constant 0 : i32
    %c0_i32_2 = arith.constant 0 : i32
    return %c0_i32, %c0_i32_0, %c0_i32_1 : i32, i32, i32
  }
  func.func @transform_2(%arg0: i32) -> (i32, i32) {
    %c0_i32 = arith.constant 0 : i32
    %c0_i32_0 = arith.constant 0 : i32
    %c0_i32_1 = arith.constant 0 : i32
    return %c0_i32, %c0_i32_0 : i32, i32
  }
  func.func @transform_3(%arg0: i32) -> (i32, i32, i32) {
    %c0_i32 = arith.constant 0 : i32
    %c0_i32_0 = arith.constant 0 : i32
    %c0_i32_1 = arith.constant 0 : i32
    %c0_i32_2 = arith.constant 0 : i32
    return %c0_i32, %c0_i32_0, %c0_i32_1 : i32, i32, i32
  }
  func.func @transform_4(%arg0: i32) -> (i32, i32) {
    %c0_i32 = arith.constant 0 : i32
    %c0_i32_0 = arith.constant 0 : i32
    %c0_i32_1 = arith.constant 0 : i32
    return %c0_i32, %c0_i32_0 : i32, i32
  }
  func.func @transform_5(%arg0: i32) -> (i32, i32, i32, i32) {
    %c0_i32 = arith.constant 0 : i32
    %c0_i32_0 = arith.constant 0 : i32
    %c0_i32_1 = arith.constant 0 : i32
    %c0_i32_2 = arith.constant 0 : i32
    return %arg0, %c0_i32, %c0_i32_0, %c0_i32_1 : i32, i32, i32, i32
  }
}

</mosaic_0001>

<llo_original>
// kernel: tpu_custom_call.1
$region0: #{tpu_custom_call.1}
  #allocation0 [shape = 'u32[]', space=smem, size = 0x4, offset = 0x4, fixed_abs, tag = 'smem constant byte address 0x4 - core index']
  #allocation1 [shape = 'u32[144,128]{1,0:T(1,128)}', space=vmem, size = 0x12000, scoped, tag = 'internal scratch']
  #allocation2 [shape = 'f32[18,18,4]{2,1,0:T(8,128)}', space=vmem, size = 0x36000, scoped, tag = 'scratch operand']
  #allocation3 [shape = 'f32[18,18,4]{2,1,0:T(8,128)}', space=vmem, size = 0x36000, scoped, tag = 'scratch operand']
  %s0 = inlined_call_operand.vmem [shape: f32[2,16,16,4], index: 0, kind: input, shape index: {}]
  %s1 = inlined_call_operand.vmem [shape: f32[9,4,4], index: 1, kind: input, shape index: {}]
  %s2 = inlined_call_operand.vmem [shape: f32[1,4], index: 2, kind: input, shape index: {}]
  %s3 = inlined_call_operand.vmem [shape: f32[9,4,4], index: 3, kind: input, shape index: {}]
  %s4 = inlined_call_operand.vmem [shape: f32[1,4], index: 4, kind: input, shape index: {}]
  %s5 = inlined_call_operand.vmem [shape: f32[2,16,16,4], index: 5, kind: output, shape index: {}]
  %s6 = sld [smem:[#allocation0]]
  $region53: #{tpu_custom_call.1} parent=0
    _
  %s8 = ssub.s32 1, %s6
  %s9 = scalar_select 0, %s8, %s6
  loop: start=0, step=1, limit=4
  $region2: #{tpu_custom_call.1} parent=0 // loop_pre_header
    _
  $region3: #{tpu_custom_call.1} parent=0 // loop_header
    %s11 = sphi 0, %s15
    %p12 = scmp.ge.s32.totalorder %s11, 4
    %s21 = sphi 0, %s23
    %s24 = sphi 0, %s21
    %s25 = sphi 0, %s24
    %s41 = sphi 0, %s25
    %s45 = sphi 0, %s45
    %s47 = sphi 0, %s45
    %s48 = sphi 0, %s47
    %s62 = sphi 0, %s48
    %s66 = sphi 0, %s66
    %s68 = sphi 0, %s66
    %s69 = sphi 0, %s68
    %s83 = sphi 0, %s69
    %s87 = sphi 0, %s87
    %s89 = sphi 0, %s87
    %s90 = sphi 0, %s89
    %s104 = sphi 0, %s90
    %s108 = sphi 0, %s108
    %s110 = sphi 0, %s108
    %s111 = sphi 0, %s110
    %s125 = sphi 0, %s111
    %s131 = sphi 0, %s133
    %s134 = sphi 0, %s131
    %s135 = sphi 0, %s134
    %s151 = sphi 0, %s135
  $region4: #{tpu_custom_call.1} parent=0 // loop_header_branch
    %14 = sbr.rel (%p12) target = $region8
  $region5: #{tpu_custom_call.1} parent=0 // loop_body
    %s16 = ssub.s32 %s11, 1
    %s17 = ssub.s32 %s11, 2
    %s18 = sadd.s32 %s11, 1
    %s19 = ssub.s32 %s11, %s18
    %p20 = scmp.eq.s32.totalorder %s19, 0
    %s22 = sadd.s32 %s21, 1
    %s23 = scalar_select %p20, %s21, %s22
    %p26 = pneg %p20
    %p27 = scmp.eq.s32.totalorder %s11, 1
    %p28 = por %p26, %p27
    %p29 = scmp.ne.s32.totalorder %s21, %s24
    %p30 = scmp.eq.s32.totalorder %s11, 0
    %p31 = por %p29, %p30
    %p32 = scmp.ne.s32.totalorder %s21, %s24
    %p33 = scmp.eq.s32.totalorder %s16, 1
    %p34 = por %p32, %p33
    %p35 = scmp.ne.s32.totalorder %s24, %s25
    %p36 = scmp.eq.s32.totalorder %s16, 0
    %p37 = por %p35, %p36
    %p38 = scmp.ne.s32.totalorder %s24, %s25
    %p39 = scmp.eq.s32.totalorder %s17, 1
    %p40 = por %p38, %p39
    %p42 = scmp.ne.s32.totalorder %s25, %s41
    %p43 = scmp.eq.s32.totalorder %s17, 0
    %p44 = por %p42, %p43
    %s46 = sadd.s32 %s45, 1
    %p49 = scmp.eq.s32.totalorder %s11, 1
    %p50 = scmp.ne.s32.totalorder %s45, %s47
    %p51 = scmp.eq.s32.totalorder %s11, 0
    %p52 = por %p50, %p51
    %p53 = scmp.ne.s32.totalorder %s45, %s47
    %p54 = scmp.eq.s32.totalorder %s16, 1
    %p55 = por %p53, %p54
    %p56 = scmp.ne.s32.totalorder %s47, %s48
    %p57 = scmp.eq.s32.totalorder %s16, 0
    %p58 = por %p56, %p57
    %p59 = scmp.ne.s32.totalorder %s47, %s48
    %p60 = scmp.eq.s32.totalorder %s17, 1
    %p61 = por %p59, %p60
    %p63 = scmp.ne.s32.totalorder %s48, %s62
    %p64 = scmp.eq.s32.totalorder %s17, 0
    %p65 = por %p63, %p64
    %s67 = sadd.s32 %s66, 1
    %p70 = scmp.eq.s32.totalorder %s11, 1
    %p71 = scmp.ne.s32.totalorder %s66, %s68
    %p72 = scmp.eq.s32.totalorder %s11, 0
    %p73 = por %p71, %p72
    %p74 = scmp.ne.s32.totalorder %s66, %s68
    %p75 = scmp.eq.s32.totalorder %s16, 1
    %p76 = por %p74, %p75
    %p77 = scmp.ne.s32.totalorder %s68, %s69
    %p78 = scmp.eq.s32.totalorder %s16, 0
    %p79 = por %p77, %p78
    %p80 = scmp.ne.s32.totalorder %s68, %s69
    %p81 = scmp.eq.s32.totalorder %s17, 1
    %p82 = por %p80, %p81
    %p84 = scmp.ne.s32.totalorder %s69, %s83
    %p85 = scmp.eq.s32.totalorder %s17, 0
    %p86 = por %p84, %p85
    %s88 = sadd.s32 %s87, 1
    %p91 = scmp.eq.s32.totalorder %s11, 1
    %p92 = scmp.ne.s32.totalorder %s87, %s89
    %p93 = scmp.eq.s32.totalorder %s11, 0
    %p94 = por %p92, %p93
    %p95 = scmp.ne.s32.totalorder %s87, %s89
    %p96 = scmp.eq.s32.totalorder %s16, 1
    %p97 = por %p95, %p96
    %p98 = scmp.ne.s32.totalorder %s89, %s90
    %p99 = scmp.eq.s32.totalorder %s16, 0
    %p100 = por %p98, %p99
    %p101 = scmp.ne.s32.totalorder %s89, %s90
    %p102 = scmp.eq.s32.totalorder %s17, 1
    %p103 = por %p101, %p102
    %p105 = scmp.ne.s32.totalorder %s90, %s104
    %p106 = scmp.eq.s32.totalorder %s17, 0
    %p107 = por %p105, %p106
    %s109 = sadd.s32 %s108, 1
    %p112 = scmp.eq.s32.totalorder %s11, 1
    %p113 = scmp.ne.s32.totalorder %s108, %s110
    %p114 = scmp.eq.s32.totalorder %s11, 0
    %p115 = por %p113, %p114
    %p116 = scmp.ne.s32.totalorder %s108, %s110
    %p117 = scmp.eq.s32.totalorder %s16, 1
    %p118 = por %p116, %p117
    %p119 = scmp.ne.s32.totalorder %s110, %s111
    %p120 = scmp.eq.s32.totalorder %s16, 0
    %p121 = por %p119, %p120
    %p122 = scmp.ne.s32.totalorder %s110, %s111
    %p123 = scmp.eq.s32.totalorder %s17, 1
    %p124 = por %p122, %p123
    %p126 = scmp.ne.s32.totalorder %s111, %s125
    %p127 = scmp.eq.s32.totalorder %s17, 0
    %p128 = por %p126, %p127
    %s129 = ssub.s32 %s11, %s18
    %p130 = scmp.eq.s32.totalorder %s129, 0
    %s132 = sadd.s32 %s131, 1
    %s133 = scalar_select %p130, %s131, %s132
    %p136 = pneg %p130
    %p137 = scmp.eq.s32.totalorder %s11, 1
    %p138 = por %p136, %p137
    %p139 = scmp.ne.s32.totalorder %s131, %s134
    %p140 = scmp.eq.s32.totalorder %s11, 0
    %p141 = por %p139, %p140
    %p142 = scmp.ne.s32.totalorder %s131, %s134
    %p143 = scmp.eq.s32.totalorder %s16, 1
    %p144 = por %p142, %p143
    %p145 = scmp.ne.s32.totalorder %s134, %s135
    %p146 = scmp.eq.s32.totalorder %s16, 0
    %p147 = por %p145, %p146
    %p148 = scmp.ne.s32.totalorder %s134, %s135
    %p149 = scmp.eq.s32.totalorder %s17, 1
    %p150 = por %p148, %p149
    %p152 = scmp.ne.s32.totalorder %s135, %s151
    %p153 = scmp.eq.s32.totalorder %s17, 0
    %p154 = por %p152, %p153
    %p155 = scmp.le.s32.totalorder 1, %s11
    %p156 = scmp.lt.s32.totalorder %s11, 3
    %p157 = pnand %p155, %p156
    %p158 = pneg %p157
    // Predicated region
    $region9: #{tpu_custom_call.1} parent=5 // pred_check
      _
    $region10: #{tpu_custom_call.1} parent=5 // pred_check_branch
      %160 = sbr.rel (%p157) target = $region12
    $region11: #{tpu_custom_call.1} parent=5 // pred_region
      %s161 = ssub.s32 %s11, 1
      // Predicated region
      $region13: #{tpu_custom_call.1} parent=11 // pred_check
        %p162 = pneg %p58
      $region14: #{tpu_custom_call.1} parent=11 // pred_check_branch
        %164 = sbr.rel (%p162) target = $region16
      $region15: #{tpu_custom_call.1} parent=11 // pred_region
        _
      $region16: #{tpu_custom_call.1} parent=11 // pred_fallthru
        _
      // Predicated region
      $region17: #{tpu_custom_call.1} parent=11 // pred_check
        %p165 = pneg %p79
      $region18: #{tpu_custom_call.1} parent=11 // pred_check_branch
        %167 = sbr.rel (%p165) target = $region20
      $region19: #{tpu_custom_call.1} parent=11 // pred_region
        _
      $region20: #{tpu_custom_call.1} parent=11 // pred_fallthru
        _
      // Predicated region
      $region21: #{tpu_custom_call.1} parent=11 // pred_check
        %p168 = pneg %p100
      $region22: #{tpu_custom_call.1} parent=11 // pred_check_branch
        %170 = sbr.rel (%p168) target = $region24
      $region23: #{tpu_custom_call.1} parent=11 // pred_region
        _
      $region24: #{tpu_custom_call.1} parent=11 // pred_fallthru
        _
      // Predicated region
      $region25: #{tpu_custom_call.1} parent=11 // pred_check
        %p171 = pneg %p121
      $region26: #{tpu_custom_call.1} parent=11 // pred_check_branch
        %173 = sbr.rel (%p171) target = $region28
      $region27: #{tpu_custom_call.1} parent=11 // pred_region
        _
      $region28: #{tpu_custom_call.1} parent=11 // pred_fallthru
        _
    $region12: #{tpu_custom_call.1} parent=5 // pred_fallthru
      _
    %p174 = scmp.lt.s32.totalorder %s11, 2
    // Predicated region
    $region29: #{tpu_custom_call.1} parent=5 // pred_check
      %p175 = pneg %p174
    $region30: #{tpu_custom_call.1} parent=5 // pred_check_branch
      %177 = sbr.rel (%p175) target = $region32
    $region31: #{tpu_custom_call.1} parent=5 // pred_region
      // Predicated region
      $region33: #{tpu_custom_call.1} parent=31 // pred_check
        %p178 = pneg %p31
      $region34: #{tpu_custom_call.1} parent=31 // pred_check_branch
        %180 = sbr.rel (%p178) target = $region36
      $region35: #{tpu_custom_call.1} parent=31 // pred_region
        %p181 = scmp.lt.s32.totalorder %s11, 1
        %s182 = scalar_select %p181, %s11, 1
        %s183 = smul.addr %s182, 32
        %s184 = smul.addr %s183, 8
        %s185 = scalar_lea.vmem %s0, %s184
      $region36: #{tpu_custom_call.1} parent=31 // pred_fallthru
        _
    $region32: #{tpu_custom_call.1} parent=5 // pred_fallthru
      _
    %p186 = scmp.le.s32.totalorder 1, %s11
    %p187 = scmp.lt.s32.totalorder %s11, 3
    %p188 = pnand %p186, %p187
    %p189 = pneg %p188
    // Predicated region
    $region37: #{tpu_custom_call.1} parent=5 // pred_check
      _
    $region38: #{tpu_custom_call.1} parent=5 // pred_check_branch
      %191 = sbr.rel (%p188) target = $region40
    $region39: #{tpu_custom_call.1} parent=5 // pred_region
      %s192 = ssub.s32 %s11, 1
      %p193 = scmp.lt.s32.totalorder %s16, 1
      %s194 = scalar_select %p193, %s16, 1
      %s195 = smul.addr %s194, 32
      %s196 = smul.addr %s195, 8
      %s197 = scalar_lea.vmem %s0, %s196
      %p198 = pneg %p37
      %p199 = pneg %p34
      %p200 = pneg %p58
      %p201 = pneg %p55
      %p202 = pneg %p79
      %p203 = pneg %p76
      %p204 = pneg %p100
      %p205 = pneg %p97
      %p206 = pneg %p121
      %p207 = pneg %p118
      %p208 = pneg %p147
      %p209 = pneg %p144
      %p210 = scmp.lt.s32.totalorder %s16, 1
      %s211 = scalar_select %p210, %s16, 1
      %s212 = smul.addr %s211, 32
      %s213 = smul.addr %s212, 8
      %s214 = scalar_lea.vmem %s5, %s213
      %p215 = scmp.lt.s32.totalorder %s16, 1
      %s216 = scalar_select %p215, %s16, 1
      %s217 = smul.addr %s216, 32
      %s218 = smul.addr %s217, 8
      %s219 = scalar_lea.vmem %s0, %s218
      %p220 = scmp.lt.s32.totalorder %s16, 1
      %s221 = scalar_select %p220, %s16, 1
      %s222 = smul.addr %s221, 32
      %s223 = smul.addr %s222, 8
      %s224 = scalar_lea.vmem %s5, %s223
      %vm225 = vcmask 31744
      %226 = vst.msk [vmem:[#allocation2] sm:$0xff] %vm225, 0.0
      %227 = vst.msk [vmem:[#allocation2 + $0x8] sm:$0xff] %vm225, 0.0
      %vm228 = vcmask 25600
      %229 = vst.msk [vmem:[#allocation2 + $0x10] sm:$0x3] %vm228, 0.0
      %230 = vst.msk [vmem:[#allocation2 + $0x18] sm:$0xff] %vm225, 0.0
      %231 = vst.msk [vmem:[#allocation2 + $0x20] sm:$0xff] %vm225, 0.0
      %232 = vst.msk [vmem:[#allocation2 + $0x28] sm:$0x3] %vm228, 0.0
      %233 = vst.msk [vmem:[#allocation2 + $0x30] sm:$0xff] %vm225, 0.0
      %234 = vst.msk [vmem:[#allocation2 + $0x38] sm:$0xff] %vm225, 0.0
      %235 = vst.msk [vmem:[#allocation2 + $0x40] sm:$0x3] %vm228, 0.0
      %236 = vst.msk [vmem:[#allocation2 + $0x48] sm:$0xff] %vm225, 0.0
      %237 = vst.msk [vmem:[#allocation2 + $0x50] sm:$0xff] %vm225, 0.0
      %238 = vst.msk [vmem:[#allocation2 + $0x58] sm:$0x3] %vm228, 0.0
      %239 = vst.msk [vmem:[#allocation2 + $0x60] sm:$0xff] %vm225, 0.0
      %240 = vst.msk [vmem:[#allocation2 + $0x68] sm:$0xff] %vm225, 0.0
      %241 = vst.msk [vmem:[#allocation2 + $0x70] sm:$0x3] %vm228, 0.0
      %242 = vst.msk [vmem:[#allocation2 + $0x78] sm:$0xff] %vm225, 0.0
      %243 = vst.msk [vmem:[#allocation2 + $0x80] sm:$0xff] %vm225, 0.0
      %244 = vst.msk [vmem:[#allocation2 + $0x88] sm:$0x3] %vm228, 0.0
      %245 = vst.msk [vmem:[#allocation2 + $0x90] sm:$0xff] %vm225, 0.0
      %246 = vst.msk [vmem:[#allocation2 + $0x98] sm:$0xff] %vm225, 0.0
      %247 = vst.msk [vmem:[#allocation2 + $0xa0] sm:$0x3] %vm228, 0.0
      %248 = vst.msk [vmem:[#allocation2 + $0xa8] sm:$0xff] %vm225, 0.0
      %249 = vst.msk [vmem:[#allocation2 + $0xb0] sm:$0xff] %vm225, 0.0
      %250 = vst.msk [vmem:[#allocation2 + $0xb8] sm:$0x3] %vm228, 0.0
      %251 = vst.msk [vmem:[#allocation2 + $0xc0] sm:$0xff] %vm225, 0.0
      %252 = vst.msk [vmem:[#allocation2 + $0xc8] sm:$0xff] %vm225, 0.0
      %253 = vst.msk [vmem:[#allocation2 + $0xd0] sm:$0x3] %vm228, 0.0
      %254 = vst.msk [vmem:[#allocation2 + $0xd8] sm:$0xff] %vm225, 0.0
      %255 = vst.msk [vmem:[#allocation2 + $0xe0] sm:$0xff] %vm225, 0.0
      %256 = vst.msk [vmem:[#allocation2 + $0xe8] sm:$0x3] %vm228, 0.0
      %257 = vst.msk [vmem:[#allocation2 + $0xf0] sm:$0xff] %vm225, 0.0
      %258 = vst.msk [vmem:[#allocation2 + $0xf8] sm:$0xff] %vm225, 0.0
      %259 = vst.msk [vmem:[#allocation2 + $0x100] sm:$0x3] %vm228, 0.0
      %260 = vst.msk [vmem:[#allocation2 + $0x108] sm:$0xff] %vm225, 0.0
      %261 = vst.msk [vmem:[#allocation2 + $0x110] sm:$0xff] %vm225, 0.0
      %262 = vst.msk [vmem:[#allocation2 + $0x118] sm:$0x3] %vm228, 0.0
      %263 = vst.msk [vmem:[#allocation2 + $0x120] sm:$0xff] %vm225, 0.0
      %264 = vst.msk [vmem:[#allocation2 + $0x128] sm:$0xff] %vm225, 0.0
      %265 = vst.msk [vmem:[#allocation2 + $0x130] sm:$0x3] %vm228, 0.0
      %266 = vst.msk [vmem:[#allocation2 + $0x138] sm:$0xff] %vm225, 0.0
      %267 = vst.msk [vmem:[#allocation2 + $0x140] sm:$0xff] %vm225, 0.0
      %268 = vst.msk [vmem:[#allocation2 + $0x148] sm:$0x3] %vm228, 0.0
      %269 = vst.msk [vmem:[#allocation2 + $0x150] sm:$0xff] %vm225, 0.0
      %270 = vst.msk [vmem:[#allocation2 + $0x158] sm:$0xff] %vm225, 0.0
      %271 = vst.msk [vmem:[#allocation2 + $0x160] sm:$0x3] %vm228, 0.0
      %272 = vst.msk [vmem:[#allocation2 + $0x168] sm:$0xff] %vm225, 0.0
      %273 = vst.msk [vmem:[#allocation2 + $0x170] sm:$0xff] %vm225, 0.0
      %274 = vst.msk [vmem:[#allocation2 + $0x178] sm:$0x3] %vm228, 0.0
      %275 = vst.msk [vmem:[#allocation2 + $0x180] sm:$0xff] %vm225, 0.0
      %276 = vst.msk [vmem:[#allocation2 + $0x188] sm:$0xff] %vm225, 0.0
      %277 = vst.msk [vmem:[#allocation2 + $0x190] sm:$0x3] %vm228, 0.0
      %278 = vst.msk [vmem:[#allocation2 + $0x198] sm:$0xff] %vm225, 0.0
      %279 = vst.msk [vmem:[#allocation2 + $0x1a0] sm:$0xff] %vm225, 0.0
      %280 = vst.msk [vmem:[#allocation2 + $0x1a8] sm:$0x3] %vm228, 0.0
      %v281 = vld [vmem:[%s219] sm:$0xff]
      %v282 = vld [vmem:[%s219 + $0x8] sm:$0xff]
      %v283 = vld [vmem:[%s219 + $0x10] sm:$0xff]
      %v284 = vld [vmem:[%s219 + $0x18] sm:$0xff]
      %v285 = vld [vmem:[%s219 + $0x20] sm:$0xff]
      %v286 = vld [vmem:[%s219 + $0x28] sm:$0xff]
      %v287 = vld [vmem:[%s219 + $0x30] sm:$0xff]
      %v288 = vld [vmem:[%s219 + $0x38] sm:$0xff]
      %v289 = vld [vmem:[%s219 + $0x40] sm:$0xff]
      %v290 = vld [vmem:[%s219 + $0x48] sm:$0xff]
      %v291 = vld [vmem:[%s219 + $0x50] sm:$0xff]
      %v292 = vld [vmem:[%s219 + $0x58] sm:$0xff]
      %v293 = vld [vmem:[%s219 + $0x60] sm:$0xff]
      %v294 = vld [vmem:[%s219 + $0x68] sm:$0xff]
      %v295 = vld [vmem:[%s219 + $0x70] sm:$0xff]
      %v296 = vld [vmem:[%s219 + $0x78] sm:$0xff]
      %v297 = vld [vmem:[%s219 + $0x80] sm:$0xff]
      %v298 = vld [vmem:[%s219 + $0x88] sm:$0xff]
      %v299 = vld [vmem:[%s219 + $0x90] sm:$0xff]
      %v300 = vld [vmem:[%s219 + $0x98] sm:$0xff]
      %v301 = vld [vmem:[%s219 + $0xa0] sm:$0xff]
      %v302 = vld [vmem:[%s219 + $0xa8] sm:$0xff]
      %v303 = vld [vmem:[%s219 + $0xb0] sm:$0xff]
      %v304 = vld [vmem:[%s219 + $0xb8] sm:$0xff]
      %v305 = vld [vmem:[%s219 + $0xc0] sm:$0xff]
      %v306 = vld [vmem:[%s219 + $0xc8] sm:$0xff]
      %v307 = vld [vmem:[%s219 + $0xd0] sm:$0xff]
      %v308 = vld [vmem:[%s219 + $0xd8] sm:$0xff]
      %v309 = vld [vmem:[%s219 + $0xe0] sm:$0xff]
      %v310 = vld [vmem:[%s219 + $0xe8] sm:$0xff]
      %v311 = vld [vmem:[%s219 + $0xf0] sm:$0xff]
      %v312 = vld [vmem:[%s219 + $0xf8] sm:$0xff]
      %s313 = scalar_lea.vmem [#allocation2], 24
      %314 = vst.msk [vmem:[%s313 + $0x1] sm:$0xff] %vm225, %v281
      %315 = vst.msk [vmem:[%s313 + $0x9] sm:$0xff] %vm225, %v282
      %316 = vst.msk [vmem:[%s313 + $0x19] sm:$0xff] %vm225, %v283
      %317 = vst.msk [vmem:[%s313 + $0x21] sm:$0xff] %vm225, %v284
      %318 = vst.msk [vmem:[%s313 + $0x31] sm:$0xff] %vm225, %v285
      %319 = vst.msk [vmem:[%s313 + $0x39] sm:$0xff] %vm225, %v286
      %320 = vst.msk [vmem:[%s313 + $0x49] sm:$0xff] %vm225, %v287
      %321 = vst.msk [vmem:[%s313 + $0x51] sm:$0xff] %vm225, %v288
      %322 = vst.msk [vmem:[%s313 + $0x61] sm:$0xff] %vm225, %v289
      %323 = vst.msk [vmem:[%s313 + $0x69] sm:$0xff] %vm225, %v290
      %324 = vst.msk [vmem:[%s313 + $0x79] sm:$0xff] %vm225, %v291
      %325 = vst.msk [vmem:[%s313 + $0x81] sm:$0xff] %vm225, %v292
      %326 = vst.msk [vmem:[%s313 + $0x91] sm:$0xff] %vm225, %v293
      %327 = vst.msk [vmem:[%s313 + $0x99] sm:$0xff] %vm225, %v294
      %328 = vst.msk [vmem:[%s313 + $0xa9] sm:$0xff] %vm225, %v295
      %329 = vst.msk [vmem:[%s313 + $0xb1] sm:$0xff] %vm225, %v296
      %330 = vst.msk [vmem:[%s313 + $0xc1] sm:$0xff] %vm225, %v297
      %331 = vst.msk [vmem:[%s313 + $0xc9] sm:$0xff] %vm225, %v298
      %332 = vst.msk [vmem:[%s313 + $0xd9] sm:$0xff] %vm225, %v299
      %333 = vst.msk [vmem:[%s313 + $0xe1] sm:$0xff] %vm225, %v300
      %334 = vst.msk [vmem:[%s313 + $0xf1] sm:$0xff] %vm225, %v301
      %335 = vst.msk [vmem:[%s313 + $0xf9] sm:$0xff] %vm225, %v302
      %336 = vst.msk [vmem:[%s313 + $0x109] sm:$0xff] %vm225, %v303
      %337 = vst.msk [vmem:[%s313 + $0x111] sm:$0xff] %vm225, %v304
      %338 = vst.msk [vmem:[%s313 + $0x121] sm:$0xff] %vm225, %v305
      %339 = vst.msk [vmem:[%s313 + $0x129] sm:$0xff] %vm225, %v306
      %340 = vst.msk [vmem:[%s313 + $0x139] sm:$0xff] %vm225, %v307
      %341 = vst.msk [vmem:[%s313 + $0x141] sm:$0xff] %vm225, %v308
      %342 = vst.msk [vmem:[%s313 + $0x151] sm:$0xff] %vm225, %v309
      %343 = vst.msk [vmem:[%s313 + $0x159] sm:$0xff] %vm225, %v310
      %344 = vst.msk [vmem:[%s313 + $0x169] sm:$0xff] %vm225, %v311
      %345 = vst.msk [vmem:[%s313 + $0x171] sm:$0xff] %vm225, %v312
      %v346 = vld [vmem:[#allocation2] sm:$0xff]
      %v347 = vld [vmem:[#allocation2 + $0x8] sm:$0xff]
      %v348 = vld [vmem:[#allocation2 + $0x18] sm:$0xff]
      %v349 = vld [vmem:[#allocation2 + $0x20] sm:$0xff]
      %v350 = vld [vmem:[#allocation2 + $0x30] sm:$0xff]
      %v351 = vld [vmem:[#allocation2 + $0x38] sm:$0xff]
      %v352 = vld [vmem:[#allocation2 + $0x48] sm:$0xff]
      %v353 = vld [vmem:[#allocation2 + $0x50] sm:$0xff]
      %v354 = vld [vmem:[#allocation2 + $0x60] sm:$0xff]
      %v355 = vld [vmem:[#allocation2 + $0x68] sm:$0xff]
      %v356 = vld [vmem:[#allocation2 + $0x78] sm:$0xff]
      %v357 = vld [vmem:[#allocation2 + $0x80] sm:$0xff]
      %v358 = vld [vmem:[#allocation2 + $0x90] sm:$0xff]
      %v359 = vld [vmem:[#allocation2 + $0x98] sm:$0xff]
      %v360 = vld [vmem:[#allocation2 + $0xa8] sm:$0xff]
      %v361 = vld [vmem:[#allocation2 + $0xb0] sm:$0xff]
      %v362 = vld [vmem:[#allocation2 + $0xc0] sm:$0xff]
      %v363 = vld [vmem:[#allocation2 + $0xc8] sm:$0xff]
      %v364 = vld [vmem:[#allocation2 + $0xd8] sm:$0xff]
      %v365 = vld [vmem:[#allocation2 + $0xe0] sm:$0xff]
      %v366 = vld [vmem:[#allocation2 + $0xf0] sm:$0xff]
      %v367 = vld [vmem:[#allocation2 + $0xf8] sm:$0xff]
      %v368 = vld [vmem:[#allocation2 + $0x108] sm:$0xff]
      %v369 = vld [vmem:[#allocation2 + $0x110] sm:$0xff]
      %v370 = vld [vmem:[#allocation2 + $0x120] sm:$0xff]
      %v371 = vld [vmem:[#allocation2 + $0x128] sm:$0xff]
      %v372 = vld [vmem:[#allocation2 + $0x138] sm:$0xff]
      %v373 = vld [vmem:[#allocation2 + $0x140] sm:$0xff]
      %v374 = vld [vmem:[#allocation2 + $0x150] sm:$0xff]
      %v375 = vld [vmem:[#allocation2 + $0x158] sm:$0xff]
      %v376 = vld [vmem:[#allocation2 + $0x168] sm:$0xff]
      %v377 = vld [vmem:[#allocation2 + $0x170] sm:$0xff]
      %v378 = vld [vmem:[%s1] sm:$0xf]
      %v379 = vld [vmem:[#allocation2 + $0x1] sm:$0xff]
      %v380 = vld [vmem:[#allocation2 + $0x9] sm:$0xff]
      %v381 = vld [vmem:[#allocation2 + $0x19] sm:$0xff]
      %v382 = vld [vmem:[#allocation2 + $0x21] sm:$0xff]
      %v383 = vld [vmem:[#allocation2 + $0x31] sm:$0xff]
      %v384 = vld [vmem:[#allocation2 + $0x39] sm:$0xff]
      %v385 = vld [vmem:[#allocation2 + $0x49] sm:$0xff]
      %v386 = vld [vmem:[#allocation2 + $0x51] sm:$0xff]
      %v387 = vld [vmem:[#allocation2 + $0x61] sm:$0xff]
      %v388 = vld [vmem:[#allocation2 + $0x69] sm:$0xff]
      %v389 = vld [vmem:[#allocation2 + $0x79] sm:$0xff]
      %v390 = vld [vmem:[#allocation2 + $0x81] sm:$0xff]
      %v391 = vld [vmem:[#allocation2 + $0x91] sm:$0xff]
      %v392 = vld [vmem:[#allocation2 + $0x99] sm:$0xff]
      %v393 = vld [vmem:[#allocation2 + $0xa9] sm:$0xff]
      %v394 = vld [vmem:[#allocation2 + $0xb1] sm:$0xff]
      %v395 = vld [vmem:[#allocation2 + $0xc1] sm:$0xff]
      %v396 = vld [vmem:[#allocation2 + $0xc9] sm:$0xff]
      %v397 = vld [vmem:[#allocation2 + $0xd9] sm:$0xff]
      %v398 = vld [vmem:[#allocation2 + $0xe1] sm:$0xff]
      %v399 = vld [vmem:[#allocation2 + $0xf1] sm:$0xff]
      %v400 = vld [vmem:[#allocation2 + $0xf9] sm:$0xff]
      %v401 = vld [vmem:[#allocation2 + $0x109] sm:$0xff]
      %v402 = vld [vmem:[#allocation2 + $0x111] sm:$0xff]
      %v403 = vld [vmem:[#allocation2 + $0x121] sm:$0xff]
      %v404 = vld [vmem:[#allocation2 + $0x129] sm:$0xff]
      %v405 = vld [vmem:[#allocation2 + $0x139] sm:$0xff]
      %v406 = vld [vmem:[#allocation2 + $0x141] sm:$0xff]
      %v407 = vld [vmem:[#allocation2 + $0x151] sm:$0xff]
      %v408 = vld [vmem:[#allocation2 + $0x159] sm:$0xff]
      %v409 = vld [vmem:[#allocation2 + $0x169] sm:$0xff]
      %v410 = vld [vmem:[#allocation2 + $0x171] sm:$0xff]
      %s411 = scalar_lea.vmem %s1, 4
      %v412 = vld [vmem:[%s411] sm:$0xf]
      %v414 = vsel %vm225, %v379, 0
      %v417 = vsel %vm225, %v380, 0
      %v420 = vsel %vm225, %v381, 0
      %v423 = vsel %vm225, %v382, 0
      %v426 = vsel %vm225, %v383, 0
      %v429 = vsel %vm225, %v384, 0
      %v432 = vsel %vm225, %v385, 0
      %v435 = vsel %vm225, %v386, 0
      %v438 = vsel %vm225, %v387, 0
      %v441 = vsel %vm225, %v388, 0
      %v444 = vsel %vm225, %v389, 0
      %v447 = vsel %vm225, %v390, 0
      %v450 = vsel %vm225, %v391, 0
      %v453 = vsel %vm225, %v392, 0
      %v456 = vsel %vm225, %v393, 0
      %v459 = vsel %vm225, %v394, 0
      %v462 = vsel %vm225, %v395, 0
      %v465 = vsel %vm225, %v396, 0
      %v468 = vsel %vm225, %v397, 0
      %v471 = vsel %vm225, %v398, 0
      %v474 = vsel %vm225, %v399, 0
      %v477 = vsel %vm225, %v400, 0
      %v480 = vsel %vm225, %v401, 0
      %v483 = vsel %vm225, %v402, 0
      %v486 = vsel %vm225, %v403, 0
      %v489 = vsel %vm225, %v404, 0
      %v492 = vsel %vm225, %v405, 0
      %v495 = vsel %vm225, %v406, 0
      %v498 = vsel %vm225, %v407, 0
      %v501 = vsel %vm225, %v408, 0
      %v504 = vsel %vm225, %v409, 0
      %v507 = vsel %vm225, %v410, 0
      %vm509 = vcmask 1043456
      %v511 = vsel %vm509, %v412, 0
      %513 = vmatprep.subr.mxu0 0.0
      %514 = vmatpush1.msra.mxu0 0.0
      %515 = vmatprep.subr.mxu0 0.0
      %516 = vmatpush1.msra.mxu0 0.0
      %517 = vmatprep.subr.mxu0 0.0
      %518 = vmatpush1.msra.mxu0 0.0
      %519 = vmatprep.subr.mxu0 0.0
      %520 = vmatpush1.msra.mxu0 0.0
      %521 = vmatprep.subr.mxu0 0.0
      %522 = vmatpush1.msra.mxu0 0.0
      %523 = vmatprep.subr.mxu0 0.0
      %524 = vmatpush1.msra.mxu0 0.0
      %525 = vmatprep.subr.mxu0 0.0
      %526 = vmatpush1.msra.mxu0 0.0
      %527 = vmatprep.subr.mxu0 0.0
      %528 = vmatpush1.msra.mxu0 0.0
      %529 = vmatprep.subr.mxu0 0.0
      %530 = vmatpush1.msra.mxu0 0.0
      %531 = vmatprep.subr.mxu0 0.0
      %532 = vmatpush1.msra.mxu0 0.0
      %533 = vmatprep.subr.mxu0 0.0
      %534 = vmatpush1.msra.mxu0 0.0
      %535 = vmatprep.subr.mxu0 0.0
      %536 = vmatpush1.msra.mxu0 0.0
      %537 = vmatprep.subr.mxu0 0.0
      %538 = vmatpush1.msra.mxu0 0.0
      %539 = vmatprep.subr.mxu0 0.0
      %540 = vmatpush1.msra.mxu0 0.0
      %541 = vmatprep.subr.mxu0 0.0
      %542 = vmatpush1.msra.mxu0 0.0
      %543 = vmatprep.subr.mxu0 0.0
      %544 = vmatpush1.msra.mxu0 %v511
      %545 = vmatprep.subr.mxu0 0.0
      %546 = vmatpush2.msra.mxu0 0.0
      %547 = vmatprep.subr.mxu0 0.0
      %548 = vmatpush2.msra.mxu0 0.0
      %549 = vmatprep.subr.mxu0 0.0
      %550 = vmatpush2.msra.mxu0 0.0
      %551 = vmatprep.subr.mxu0 0.0
      %552 = vmatpush2.msra.mxu0 0.0
      %553 = vmatprep.subr.mxu0 0.0
      %554 = vmatpush2.msra.mxu0 0.0
      %555 = vmatprep.subr.mxu0 0.0
      %556 = vmatpush2.msra.mxu0 0.0
      %557 = vmatprep.subr.mxu0 0.0
      %558 = vmatpush2.msra.mxu0 0.0
      %559 = vmatprep.subr.mxu0 0.0
      %560 = vmatpush2.msra.mxu0 0.0
      %561 = vmatprep.subr.mxu0 0.0
      %562 = vmatpush2.msra.mxu0 0.0
      %563 = vmatprep.subr.mxu0 0.0
      %564 = vmatpush2.msra.mxu0 0.0
      %565 = vmatprep.subr.mxu0 0.0
      %566 = vmatpush2.msra.mxu0 0.0
      %567 = vmatprep.subr.mxu0 0.0
      %568 = vmatpush2.msra.mxu0 0.0
      %569 = vmatprep.subr.mxu0 0.0
      %570 = vmatpush2.msra.mxu0 0.0
      %571 = vmatprep.subr.mxu0 0.0
      %572 = vmatpush2.msra.mxu0 0.0
      %573 = vmatprep.subr.mxu0 0.0
      %574 = vmatpush2.msra.mxu0 0.0
      %575 = vmatprep.subr.mxu0 0.0
      %576 = vmatpush2.msra.mxu0 0.0
      %577 = vmatprep.mubr.f32.mxu0 0.0
      %578 = vmatmul.mubr.f32.gmra.mxu0 %v414
      %v579 = vpop.f32.mrf.mxu0
      %v580 = vadd.f32 0.0, %v579
      %v581 = vpop.f32.mrf.mxu0
      %582 = vmatprep.mubr.f32.mxu0 0.0
      %583 = vmatmul.mubr.f32.gmra.mxu0 %v417
      %v584 = vpop.f32.mrf.mxu0
      %v585 = vadd.f32 0.0, %v584
      %v586 = vpop.f32.mrf.mxu0
      %587 = vmatprep.mubr.f32.mxu0 0.0
      %588 = vmatmul.mubr.f32.gmra.mxu0 %v420
      %v589 = vpop.f32.mrf.mxu0
      %v590 = vadd.f32 0.0, %v589
      %v591 = vpop.f32.mrf.mxu0
      %592 = vmatprep.mubr.f32.mxu0 0.0
      %593 = vmatmul.mubr.f32.gmra.mxu0 %v423
      %v594 = vpop.f32.mrf.mxu0
      %v595 = vadd.f32 0.0, %v594
      %v596 = vpop.f32.mrf.mxu0
      %597 = vmatprep.mubr.f32.mxu0 0.0
      %598 = vmatmul.mubr.f32.gmra.mxu0 %v426
      %v599 = vpop.f32.mrf.mxu0
      %v600 = vadd.f32 0.0, %v599
      %v601 = vpop.f32.mrf.mxu0
      %602 = vmatprep.mubr.f32.mxu0 0.0
      %603 = vmatmul.mubr.f32.gmra.mxu0 %v429
      %v604 = vpop.f32.mrf.mxu0
      %v605 = vadd.f32 0.0, %v604
      %v606 = vpop.f32.mrf.mxu0
      %607 = vmatprep.mubr.f32.mxu0 0.0
      %608 = vmatmul.mubr.f32.gmra.mxu0 %v432
      %v609 = vpop.f32.mrf.mxu0
      %v610 = vadd.f32 0.0, %v609
      %v611 = vpop.f32.mrf.mxu0
      %612 = vmatprep.mubr.f32.mxu0 0.0
      %613 = vmatmul.mubr.f32.gmra.mxu0 %v435
      %v614 = vpop.f32.mrf.mxu0
      %v615 = vadd.f32 0.0, %v614
      %v616 = vpop.f32.mrf.mxu0
      %617 = vmatprep.mubr.f32.mxu0 0.0
      %618 = vmatmul.mubr.f32.gmra.mxu0 %v438
      %v619 = vpop.f32.mrf.mxu0
      %v620 = vadd.f32 0.0, %v619
      %v621 = vpop.f32.mrf.mxu0
      %622 = vmatprep.mubr.f32.mxu0 0.0
      %623 = vmatmul.mubr.f32.gmra.mxu0 %v441
      %v624 = vpop.f32.mrf.mxu0
      %v625 = vadd.f32 0.0, %v624
      %v626 = vpop.f32.mrf.mxu0
      %627 = vmatprep.mubr.f32.mxu0 0.0
      %628 = vmatmul.mubr.f32.gmra.mxu0 %v444
      %v629 = vpop.f32.mrf.mxu0
      %v630 = vadd.f32 0.0, %v629
      %v631 = vpop.f32.mrf.mxu0
      %632 = vmatprep.mubr.f32.mxu0 0.0
      %633 = vmatmul.mubr.f32.gmra.mxu0 %v447
      %v634 = vpop.f32.mrf.mxu0
      %v635 = vadd.f32 0.0, %v634
      %v636 = vpop.f32.mrf.mxu0
      %637 = vmatprep.mubr.f32.mxu0 0.0
      %638 = vmatmul.mubr.f32.gmra.mxu0 %v450
      %v639 = vpop.f32.mrf.mxu0
      %v640 = vadd.f32 0.0, %v639
      %v641 = vpop.f32.mrf.mxu0
      %642 = vmatprep.mubr.f32.mxu0 0.0
      %643 = vmatmul.mubr.f32.gmra.mxu0 %v453
      %v644 = vpop.f32.mrf.mxu0
      %v645 = vadd.f32 0.0, %v644
      %v646 = vpop.f32.mrf.mxu0
      %647 = vmatprep.mubr.f32.mxu0 0.0
      %648 = vmatmul.mubr.f32.gmra.mxu0 %v456
      %v649 = vpop.f32.mrf.mxu0
      %v650 = vadd.f32 0.0, %v649
      %v651 = vpop.f32.mrf.mxu0
      %652 = vmatprep.mubr.f32.mxu0 0.0
      %653 = vmatmul.mubr.f32.gmra.mxu0 %v459
      %v654 = vpop.f32.mrf.mxu0
      %v655 = vadd.f32 0.0, %v654
      %v656 = vpop.f32.mrf.mxu0
      %657 = vmatprep.mubr.f32.mxu0 0.0
      %658 = vmatmul.mubr.f32.gmra.mxu0 %v462
      %v659 = vpop.f32.mrf.mxu0
      %v660 = vadd.f32 0.0, %v659
      %v661 = vpop.f32.mrf.mxu0
      %662 = vmatprep.mubr.f32.mxu0 0.0
      %663 = vmatmul.mubr.f32.gmra.mxu0 %v465
      %v664 = vpop.f32.mrf.mxu0
      %v665 = vadd.f32 0.0, %v664
      %v666 = vpop.f32.mrf.mxu0
      %667 = vmatprep.mubr.f32.mxu0 0.0
      %668 = vmatmul.mubr.f32.gmra.mxu0 %v468
      %v669 = vpop.f32.mrf.mxu0
      %v670 = vadd.f32 0.0, %v669
      %v671 = vpop.f32.mrf.mxu0
      %672 = vmatprep.mubr.f32.mxu0 0.0
      %673 = vmatmul.mubr.f32.gmra.mxu0 %v471
      %v674 = vpop.f32.mrf.mxu0
      %v675 = vadd.f32 0.0, %v674
      %v676 = vpop.f32.mrf.mxu0
      %677 = vmatprep.mubr.f32.mxu0 0.0
      %678 = vmatmul.mubr.f32.gmra.mxu0 %v474
      %v679 = vpop.f32.mrf.mxu0
      %v680 = vadd.f32 0.0, %v679
      %v681 = vpop.f32.mrf.mxu0
      %682 = vmatprep.mubr.f32.mxu0 0.0
      %683 = vmatmul.mubr.f32.gmra.mxu0 %v477
      %v684 = vpop.f32.mrf.mxu0
      %v685 = vadd.f32 0.0, %v684
      %v686 = vpop.f32.mrf.mxu0
      %687 = vmatprep.mubr.f32.mxu0 0.0
      %688 = vmatmul.mubr.f32.gmra.mxu0 %v480
      %v689 = vpop.f32.mrf.mxu0
      %v690 = vadd.f32 0.0, %v689
      %v691 = vpop.f32.mrf.mxu0
      %692 = vmatprep.mubr.f32.mxu0 0.0
      %693 = vmatmul.mubr.f32.gmra.mxu0 %v483
      %v694 = vpop.f32.mrf.mxu0
      %v695 = vadd.f32 0.0, %v694
      %v696 = vpop.f32.mrf.mxu0
      %697 = vmatprep.mubr.f32.mxu0 0.0
      %698 = vmatmul.mubr.f32.gmra.mxu0 %v486
      %v699 = vpop.f32.mrf.mxu0
      %v700 = vadd.f32 0.0, %v699
      %v701 = vpop.f32.mrf.mxu0
      %702 = vmatprep.mubr.f32.mxu0 0.0
      %703 = vmatmul.mubr.f32.gmra.mxu0 %v489
      %v704 = vpop.f32.mrf.mxu0
      %v705 = vadd.f32 0.0, %v704
      %v706 = vpop.f32.mrf.mxu0
      %707 = vmatprep.mubr.f32.mxu0 0.0
      %708 = vmatmul.mubr.f32.gmra.mxu0 %v492
      %v709 = vpop.f32.mrf.mxu0
      %v710 = vadd.f32 0.0, %v709
      %v711 = vpop.f32.mrf.mxu0
      %712 = vmatprep.mubr.f32.mxu0 0.0
      %713 = vmatmul.mubr.f32.gmra.mxu0 %v495
      %v714 = vpop.f32.mrf.mxu0
      %v715 = vadd.f32 0.0, %v714
      %v716 = vpop.f32.mrf.mxu0
      %717 = vmatprep.mubr.f32.mxu0 0.0
      %718 = vmatmul.mubr.f32.gmra.mxu0 %v498
      %v719 = vpop.f32.mrf.mxu0
      %v720 = vadd.f32 0.0, %v719
      %v721 = vpop.f32.mrf.mxu0
      %722 = vmatprep.mubr.f32.mxu0 0.0
      %723 = vmatmul.mubr.f32.gmra.mxu0 %v501
      %v724 = vpop.f32.mrf.mxu0
      %v725 = vadd.f32 0.0, %v724
      %v726 = vpop.f32.mrf.mxu0
      %727 = vmatprep.mubr.f32.mxu0 0.0
      %728 = vmatmul.mubr.f32.gmra.mxu0 %v504
      %v729 = vpop.f32.mrf.mxu0
      %v730 = vadd.f32 0.0, %v729
      %v731 = vpop.f32.mrf.mxu0
      %732 = vmatprep.mubr.f32.mxu0 0.0
      %733 = vmatmul.mubr.f32.gmra.mxu0 %v507
      %v734 = vpop.f32.mrf.mxu0
      %v735 = vadd.f32 0.0, %v734
      %v736 = vpop.f32.mrf.mxu0
      %737 = vdwg.mxu0
      %v739 = vsel %vm225, %v346, 0
      %v742 = vsel %vm225, %v347, 0
      %v745 = vsel %vm225, %v348, 0
      %v748 = vsel %vm225, %v349, 0
      %v751 = vsel %vm225, %v350, 0
      %v754 = vsel %vm225, %v351, 0
      %v757 = vsel %vm225, %v352, 0
      %v760 = vsel %vm225, %v353, 0
      %v763 = vsel %vm225, %v354, 0
      %v766 = vsel %vm225, %v355, 0
      %v769 = vsel %vm225, %v356, 0
      %v772 = vsel %vm225, %v357, 0
      %v775 = vsel %vm225, %v358, 0
      %v778 = vsel %vm225, %v359, 0
      %v781 = vsel %vm225, %v360, 0
      %v784 = vsel %vm225, %v361, 0
      %v787 = vsel %vm225, %v362, 0
      %v790 = vsel %vm225, %v363, 0
      %v793 = vsel %vm225, %v364, 0
      %v796 = vsel %vm225, %v365, 0
      %v799 = vsel %vm225, %v366, 0
      %v802 = vsel %vm225, %v367, 0
      %v805 = vsel %vm225, %v368, 0
      %v808 = vsel %vm225, %v369, 0
      %v811 = vsel %vm225, %v370, 0
      %v814 = vsel %vm225, %v371, 0
      %v817 = vsel %vm225, %v372, 0
      %v820 = vsel %vm225, %v373, 0
      %v823 = vsel %vm225, %v374, 0
      %v826 = vsel %vm225, %v375, 0
      %v829 = vsel %vm225, %v376, 0
      %v832 = vsel %vm225, %v377, 0
      %v835 = vsel %vm509, %v378, 0
      %837 = vmatprep.subr.mxu0 0.0
      %838 = vmatpush1.msra.mxu0 0.0
      %839 = vmatprep.subr.mxu0 0.0
      %840 = vmatpush1.msra.mxu0 0.0
      %841 = vmatprep.subr.mxu0 0.0
      %842 = vmatpush1.msra.mxu0 0.0
      %843 = vmatprep.subr.mxu0 0.0
      %844 = vmatpush1.msra.mxu0 0.0
      %845 = vmatprep.subr.mxu0 0.0
      %846 = vmatpush1.msra.mxu0 0.0
      %847 = vmatprep.subr.mxu0 0.0
      %848 = vmatpush1.msra.mxu0 0.0
      %849 = vmatprep.subr.mxu0 0.0
      %850 = vmatpush1.msra.mxu0 0.0
      %851 = vmatprep.subr.mxu0 0.0
      %852 = vmatpush1.msra.mxu0 0.0
      %853 = vmatprep.subr.mxu0 0.0
      %854 = vmatpush1.msra.mxu0 0.0
      %855 = vmatprep.subr.mxu0 0.0
      %856 = vmatpush1.msra.mxu0 0.0
      %857 = vmatprep.subr.mxu0 0.0
      %858 = vmatpush1.msra.mxu0 0.0
      %859 = vmatprep.subr.mxu0 0.0
      %860 = vmatpush1.msra.mxu0 0.0
      %861 = vmatprep.subr.mxu0 0.0
      %862 = vmatpush1.msra.mxu0 0.0
      %863 = vmatprep.subr.mxu0 0.0
      %864 = vmatpush1.msra.mxu0 0.0
      %865 = vmatprep.subr.mxu0 0.0
      %866 = vmatpush1.msra.mxu0 0.0
      %867 = vmatprep.subr.mxu0 0.0
      %868 = vmatpush1.msra.mxu0 %v835
      %869 = vmatprep.subr.mxu0 0.0
      %870 = vmatpush2.msra.mxu0 0.0
      %871 = vmatprep.subr.mxu0 0.0
      %872 = vmatpush2.msra.mxu0 0.0
      %873 = vmatprep.subr.mxu0 0.0
      %874 = vmatpush2.msra.mxu0 0.0
      %875 = vmatprep.subr.mxu0 0.0
      %876 = vmatpush2.msra.mxu0 0.0
      %877 = vmatprep.subr.mxu0 0.0
      %878 = vmatpush2.msra.mxu0 0.0
      %879 = vmatprep.subr.mxu0 0.0
      %880 = vmatpush2.msra.mxu0 0.0
      %881 = vmatprep.subr.mxu0 0.0
      %882 = vmatpush2.msra.mxu0 0.0
      %883 = vmatprep.subr.mxu0 0.0
      %884 = vmatpush2.msra.mxu0 0.0
      %885 = vmatprep.subr.mxu0 0.0
      %886 = vmatpush2.msra.mxu0 0.0
      %887 = vmatprep.subr.mxu0 0.0
      %888 = vmatpush2.msra.mxu0 0.0
      %889 = vmatprep.subr.mxu0 0.0
      %890 = vmatpush2.msra.mxu0 0.0
      %891 = vmatprep.subr.mxu0 0.0
      %892 = vmatpush2.msra.mxu0 0.0
      %893 = vmatprep.subr.mxu0 0.0
      %894 = vmatpush2.msra.mxu0 0.0
      %895 = vmatprep.subr.mxu0 0.0
      %896 = vmatpush2.msra.mxu0 0.0
      %897 = vmatprep.subr.mxu0 0.0
      %898 = vmatpush2.msra.mxu0 0.0
      %899 = vmatprep.subr.mxu0 0.0
      %900 = vmatpush2.msra.mxu0 0.0
      %901 = vmatprep.mubr.f32.mxu0 0.0
      %902 = vmatmul.mubr.f32.gmra.mxu0 %v739
      %v903 = vpop.f32.mrf.mxu0
      %v904 = vadd.f32 %v580, %v903
      %v905 = vpop.f32.mrf.mxu0
      %906 = vmatprep.mubr.f32.mxu0 0.0
      %907 = vmatmul.mubr.f32.gmra.mxu0 %v742
      %v908 = vpop.f32.mrf.mxu0
      %v909 = vadd.f32 %v585, %v908
      %v910 = vpop.f32.mrf.mxu0
      %911 = vmatprep.mubr.f32.mxu0 0.0
      %912 = vmatmul.mubr.f32.gmra.mxu0 %v745
      %v913 = vpop.f32.mrf.mxu0
      %v914 = vadd.f32 %v590, %v913
      %v915 = vpop.f32.mrf.mxu0
      %916 = vmatprep.mubr.f32.mxu0 0.0
      %917 = vmatmul.mubr.f32.gmra.mxu0 %v748
      %v918 = vpop.f32.mrf.mxu0
      %v919 = vadd.f32 %v595, %v918
      %v920 = vpop.f32.mrf.mxu0
      %921 = vmatprep.mubr.f32.mxu0 0.0
      %922 = vmatmul.mubr.f32.gmra.mxu0 %v751
      %v923 = vpop.f32.mrf.mxu0
      %v924 = vadd.f32 %v600, %v923
      %v925 = vpop.f32.mrf.mxu0
      %926 = vmatprep.mubr.f32.mxu0 0.0
      %927 = vmatmul.mubr.f32.gmra.mxu0 %v754
      %v928 = vpop.f32.mrf.mxu0
      %v929 = vadd.f32 %v605, %v928
      %v930 = vpop.f32.mrf.mxu0
      %931 = vmatprep.mubr.f32.mxu0 0.0
      %932 = vmatmul.mubr.f32.gmra.mxu0 %v757
      %v933 = vpop.f32.mrf.mxu0
      %v934 = vadd.f32 %v610, %v933
      %v935 = vpop.f32.mrf.mxu0
      %936 = vmatprep.mubr.f32.mxu0 0.0
      %937 = vmatmul.mubr.f32.gmra.mxu0 %v760
      %v938 = vpop.f32.mrf.mxu0
      %v939 = vadd.f32 %v615, %v938
      %v940 = vpop.f32.mrf.mxu0
      %941 = vmatprep.mubr.f32.mxu0 0.0
      %942 = vmatmul.mubr.f32.gmra.mxu0 %v763
      %v943 = vpop.f32.mrf.mxu0
      %v944 = vadd.f32 %v620, %v943
      %v945 = vpop.f32.mrf.mxu0
      %946 = vmatprep.mubr.f32.mxu0 0.0
      %947 = vmatmul.mubr.f32.gmra.mxu0 %v766
      %v948 = vpop.f32.mrf.mxu0
      %v949 = vadd.f32 %v625, %v948
      %v950 = vpop.f32.mrf.mxu0
      %951 = vmatprep.mubr.f32.mxu0 0.0
      %952 = vmatmul.mubr.f32.gmra.mxu0 %v769
      %v953 = vpop.f32.mrf.mxu0
      %v954 = vadd.f32 %v630, %v953
      %v955 = vpop.f32.mrf.mxu0
      %956 = vmatprep.mubr.f32.mxu0 0.0
      %957 = vmatmul.mubr.f32.gmra.mxu0 %v772
      %v958 = vpop.f32.mrf.mxu0
      %v959 = vadd.f32 %v635, %v958
      %v960 = vpop.f32.mrf.mxu0
      %961 = vmatprep.mubr.f32.mxu0 0.0
      %962 = vmatmul.mubr.f32.gmra.mxu0 %v775
      %v963 = vpop.f32.mrf.mxu0
      %v964 = vadd.f32 %v640, %v963
      %v965 = vpop.f32.mrf.mxu0
      %966 = vmatprep.mubr.f32.mxu0 0.0
      %967 = vmatmul.mubr.f32.gmra.mxu0 %v778
      %v968 = vpop.f32.mrf.mxu0
      %v969 = vadd.f32 %v645, %v968
      %v970 = vpop.f32.mrf.mxu0
      %971 = vmatprep.mubr.f32.mxu0 0.0
      %972 = vmatmul.mubr.f32.gmra.mxu0 %v781
      %v973 = vpop.f32.mrf.mxu0
      %v974 = vadd.f32 %v650, %v973
      %v975 = vpop.f32.mrf.mxu0
      %976 = vmatprep.mubr.f32.mxu0 0.0
      %977 = vmatmul.mubr.f32.gmra.mxu0 %v784
      %v978 = vpop.f32.mrf.mxu0
      %v979 = vadd.f32 %v655, %v978
      %v980 = vpop.f32.mrf.mxu0
      %981 = vmatprep.mubr.f32.mxu0 0.0
      %982 = vmatmul.mubr.f32.gmra.mxu0 %v787
      %v983 = vpop.f32.mrf.mxu0
      %v984 = vadd.f32 %v660, %v983
      %v985 = vpop.f32.mrf.mxu0
      %986 = vmatprep.mubr.f32.mxu0 0.0
      %987 = vmatmul.mubr.f32.gmra.mxu0 %v790
      %v988 = vpop.f32.mrf.mxu0
      %v989 = vadd.f32 %v665, %v988
      %v990 = vpop.f32.mrf.mxu0
      %991 = vmatprep.mubr.f32.mxu0 0.0
      %992 = vmatmul.mubr.f32.gmra.mxu0 %v793
      %v993 = vpop.f32.mrf.mxu0
      %v994 = vadd.f32 %v670, %v993
      %v995 = vpop.f32.mrf.mxu0
      %996 = vmatprep.mubr.f32.mxu0 0.0
      %997 = vmatmul.mubr.f32.gmra.mxu0 %v796
      %v998 = vpop.f32.mrf.mxu0
      %v999 = vadd.f32 %v675, %v998
      %v1000 = vpop.f32.mrf.mxu0
      %1001 = vmatprep.mubr.f32.mxu0 0.0
      %1002 = vmatmul.mubr.f32.gmra.mxu0 %v799
      %v1003 = vpop.f32.mrf.mxu0
      %v1004 = vadd.f32 %v680, %v1003
      %v1005 = vpop.f32.mrf.mxu0
      %1006 = vmatprep.mubr.f32.mxu0 0.0
      %1007 = vmatmul.mubr.f32.gmra.mxu0 %v802
      %v1008 = vpop.f32.mrf.mxu0
      %v1009 = vadd.f32 %v685, %v1008
      %v1010 = vpop.f32.mrf.mxu0
      %1011 = vmatprep.mubr.f32.mxu0 0.0
      %1012 = vmatmul.mubr.f32.gmra.mxu0 %v805
      %v1013 = vpop.f32.mrf.mxu0
      %v1014 = vadd.f32 %v690, %v1013
      %v1015 = vpop.f32.mrf.mxu0
      %1016 = vmatprep.mubr.f32.mxu0 0.0
      %1017 = vmatmul.mubr.f32.gmra.mxu0 %v808
      %v1018 = vpop.f32.mrf.mxu0
      %v1019 = vadd.f32 %v695, %v1018
      %v1020 = vpop.f32.mrf.mxu0
      %1021 = vmatprep.mubr.f32.mxu0 0.0
      %1022 = vmatmul.mubr.f32.gmra.mxu0 %v811
      %v1023 = vpop.f32.mrf.mxu0
      %v1024 = vadd.f32 %v700, %v1023
      %v1025 = vpop.f32.mrf.mxu0
      %1026 = vmatprep.mubr.f32.mxu0 0.0
      %1027 = vmatmul.mubr.f32.gmra.mxu0 %v814
      %v1028 = vpop.f32.mrf.mxu0
      %v1029 = vadd.f32 %v705, %v1028
      %v1030 = vpop.f32.mrf.mxu0
      %1031 = vmatprep.mubr.f32.mxu0 0.0
      %1032 = vmatmul.mubr.f32.gmra.mxu0 %v817
      %v1033 = vpop.f32.mrf.mxu0
      %v1034 = vadd.f32 %v710, %v1033
      %v1035 = vpop.f32.mrf.mxu0
      %1036 = vmatprep.mubr.f32.mxu0 0.0
      %1037 = vmatmul.mubr.f32.gmra.mxu0 %v820
      %v1038 = vpop.f32.mrf.mxu0
      %v1039 = vadd.f32 %v715, %v1038
      %v1040 = vpop.f32.mrf.mxu0
      %1041 = vmatprep.mubr.f32.mxu0 0.0
      %1042 = vmatmul.mubr.f32.gmra.mxu0 %v823
      %v1043 = vpop.f32.mrf.mxu0
      %v1044 = vadd.f32 %v720, %v1043
      %v1045 = vpop.f32.mrf.mxu0
      %1046 = vmatprep.mubr.f32.mxu0 0.0
      %1047 = vmatmul.mubr.f32.gmra.mxu0 %v826
      %v1048 = vpop.f32.mrf.mxu0
      %v1049 = vadd.f32 %v725, %v1048
      %v1050 = vpop.f32.mrf.mxu0
      %1051 = vmatprep.mubr.f32.mxu0 0.0
      %1052 = vmatmul.mubr.f32.gmra.mxu0 %v829
      %v1053 = vpop.f32.mrf.mxu0
      %v1054 = vadd.f32 %v730, %v1053
      %v1055 = vpop.f32.mrf.mxu0
      %1056 = vmatprep.mubr.f32.mxu0 0.0
      %1057 = vmatmul.mubr.f32.gmra.mxu0 %v832
      %v1058 = vpop.f32.mrf.mxu0
      %v1059 = vadd.f32 %v735, %v1058
      %v1060 = vpop.f32.mrf.mxu0
      %1061 = vdwg.mxu0
      %v1062 = vld [vmem:[#allocation2 + $0x2] sm:$0xff]
      %v1063 = vld [vmem:[#allocation2 + $0xa] sm:$0xff]
      %v1064 = vld [vmem:[#allocation2 + $0x1a] sm:$0xff]
      %v1065 = vld [vmem:[#allocation2 + $0x22] sm:$0xff]
      %v1066 = vld [vmem:[#allocation2 + $0x32] sm:$0xff]
      %v1067 = vld [vmem:[#allocation2 + $0x3a] sm:$0xff]
      %v1068 = vld [vmem:[#allocation2 + $0x4a] sm:$0xff]
      %v1069 = vld [vmem:[#allocation2 + $0x52] sm:$0xff]
      %v1070 = vld [vmem:[#allocation2 + $0x62] sm:$0xff]
      %v1071 = vld [vmem:[#allocation2 + $0x6a] sm:$0xff]
      %v1072 = vld [vmem:[#allocation2 + $0x7a] sm:$0xff]
      %v1073 = vld [vmem:[#allocation2 + $0x82] sm:$0xff]
      %v1074 = vld [vmem:[#allocation2 + $0x92] sm:$0xff]
      %v1075 = vld [vmem:[#allocation2 + $0x9a] sm:$0xff]
      %v1076 = vld [vmem:[#allocation2 + $0xaa] sm:$0xff]
      %v1077 = vld [vmem:[#allocation2 + $0xb2] sm:$0xff]
      %v1078 = vld [vmem:[#allocation2 + $0xc2] sm:$0xff]
      %v1079 = vld [vmem:[#allocation2 + $0xca] sm:$0xff]
      %v1080 = vld [vmem:[#allocation2 + $0xda] sm:$0xff]
      %v1081 = vld [vmem:[#allocation2 + $0xe2] sm:$0xff]
      %v1082 = vld [vmem:[#allocation2 + $0xf2] sm:$0xff]
      %v1083 = vld [vmem:[#allocation2 + $0xfa] sm:$0xff]
      %v1084 = vld [vmem:[#allocation2 + $0x10a] sm:$0xff]
      %v1085 = vld [vmem:[#allocation2 + $0x112] sm:$0xff]
      %v1086 = vld [vmem:[#allocation2 + $0x122] sm:$0xff]
      %v1087 = vld [vmem:[#allocation2 + $0x12a] sm:$0xff]
      %v1088 = vld [vmem:[#allocation2 + $0x13a] sm:$0xff]
      %v1089 = vld [vmem:[#allocation2 + $0x142] sm:$0xff]
      %v1090 = vld [vmem:[#allocation2 + $0x152] sm:$0xff]
      %v1091 = vld [vmem:[#allocation2 + $0x15a] sm:$0xff]
      %v1092 = vld [vmem:[#allocation2 + $0x16a] sm:$0xff]
      %v1093 = vld [vmem:[#allocation2 + $0x172] sm:$0xff]
      %s1094 = scalar_lea.vmem %s1, 8
      %v1095 = vld [vmem:[%s1094] sm:$0xf]
      %v1097 = vsel %vm225, %v1062, 0
      %v1100 = vsel %vm225, %v1063, 0
      %v1103 = vsel %vm225, %v1064, 0
      %v1106 = vsel %vm225, %v1065, 0
      %v1109 = vsel %vm225, %v1066, 0
      %v1112 = vsel %vm225, %v1067, 0
      %v1115 = vsel %vm225, %v1068, 0
      %v1118 = vsel %vm225, %v1069, 0
      %v1121 = vsel %vm225, %v1070, 0
      %v1124 = vsel %vm225, %v1071, 0
      %v1127 = vsel %vm225, %v1072, 0
      %v1130 = vsel %vm225, %v1073, 0
      %v1133 = vsel %vm225, %v1074, 0
      %v1136 = vsel %vm225, %v1075, 0
      %v1139 = vsel %vm225, %v1076, 0
      %v1142 = vsel %vm225, %v1077, 0
      %v1145 = vsel %vm225, %v1078, 0
      %v1148 = vsel %vm225, %v1079, 0
      %v1151 = vsel %vm225, %v1080, 0
      %v1154 = vsel %vm225, %v1081, 0
      %v1157 = vsel %vm225, %v1082, 0
      %v1160 = vsel %vm225, %v1083, 0
      %v1163 = vsel %vm225, %v1084, 0
      %v1166 = vsel %vm225, %v1085, 0
      %v1169 = vsel %vm225, %v1086, 0
      %v1172 = vsel %vm225, %v1087, 0
      %v1175 = vsel %vm225, %v1088, 0
      %v1178 = vsel %vm225, %v1089, 0
      %v1181 = vsel %vm225, %v1090, 0
      %v1184 = vsel %vm225, %v1091, 0
      %v1187 = vsel %vm225, %v1092, 0
      %v1190 = vsel %vm225, %v1093, 0
      %v1193 = vsel %vm509, %v1095, 0
      %1195 = vmatprep.subr.mxu0 0.0
      %1196 = vmatpush1.msra.mxu0 0.0
      %1197 = vmatprep.subr.mxu0 0.0
      %1198 = vmatpush1.msra.mxu0 0.0
      %1199 = vmatprep.subr.mxu0 0.0
      %1200 = vmatpush1.msra.mxu0 0.0
      %1201 = vmatprep.subr.mxu0 0.0
      %1202 = vmatpush1.msra.mxu0 0.0
      %1203 = vmatprep.subr.mxu0 0.0
      %1204 = vmatpush1.msra.mxu0 0.0
      %1205 = vmatprep.subr.mxu0 0.0
      %1206 = vmatpush1.msra.mxu0 0.0
      %1207 = vmatprep.subr.mxu0 0.0
      %1208 = vmatpush1.msra.mxu0 0.0
      %1209 = vmatprep.subr.mxu0 0.0
      %1210 = vmatpush1.msra.mxu0 0.0
      %1211 = vmatprep.subr.mxu0 0.0
      %1212 = vmatpush1.msra.mxu0 0.0
      %1213 = vmatprep.subr.mxu0 0.0
      %1214 = vmatpush1.msra.mxu0 0.0
      %1215 = vmatprep.subr.mxu0 0.0
      %1216 = vmatpush1.msra.mxu0 0.0
      %1217 = vmatprep.subr.mxu0 0.0
      %1218 = vmatpush1.msra.mxu0 0.0
      %1219 = vmatprep.subr.mxu0 0.0
      %1220 = vmatpush1.msra.mxu0 0.0
      %1221 = vmatprep.subr.mxu0 0.0
      %1222 = vmatpush1.msra.mxu0 0.0
      %1223 = vmatprep.subr.mxu0 0.0
      %1224 = vmatpush1.msra.mxu0 0.0
      %1225 = vmatprep.subr.mxu0 0.0
      %1226 = vmatpush1.msra.mxu0 %v1193
      %1227 = vmatprep.subr.mxu0 0.0
      %1228 = vmatpush2.msra.mxu0 0.0
      %1229 = vmatprep.subr.mxu0 0.0
      %1230 = vmatpush2.msra.mxu0 0.0
      %1231 = vmatprep.subr.mxu0 0.0
      %1232 = vmatpush2.msra.mxu0 0.0
      %1233 = vmatprep.subr.mxu0 0.0
      %1234 = vmatpush2.msra.mxu0 0.0
      %1235 = vmatprep.subr.mxu0 0.0
      %1236 = vmatpush2.msra.mxu0 0.0
      %1237 = vmatprep.subr.mxu0 0.0
      %1238 = vmatpush2.msra.mxu0 0.0
      %1239 = vmatprep.subr.mxu0 0.0
      %1240 = vmatpush2.msra.mxu0 0.0
      %1241 = vmatprep.subr.mxu0 0.0
      %1242 = vmatpush2.msra.mxu0 0.0
      %1243 = vmatprep.subr.mxu0 0.0
      %1244 = vmatpush2.msra.mxu0 0.0
      %1245 = vmatprep.subr.mxu0 0.0
      %1246 = vmatpush2.msra.mxu0 0.0
      %1247 = vmatprep.subr.mxu0 0.0
      %1248 = vmatpush2.msra.mxu0 0.0
      %1249 = vmatprep.subr.mxu0 0.0
      %1250 = vmatpush2.msra.mxu0 0.0
      %1251 = vmatprep.subr.mxu0 0.0
      %1252 = vmatpush2.msra.mxu0 0.0
      %1253 = vmatprep.subr.mxu0 0.0
      %1254 = vmatpush2.msra.mxu0 0.0
      %1255 = vmatprep.subr.mxu0 0.0
      %1256 = vmatpush2.msra.mxu0 0.0
      %1257 = vmatprep.subr.mxu0 0.0
      %1258 = vmatpush2.msra.mxu0 0.0
      %1259 = vmatprep.mubr.f32.mxu0 0.0
      %1260 = vmatmul.mubr.f32.gmra.mxu0 %v1097
      %v1261 = vpop.f32.mrf.mxu0
      %v1262 = vadd.f32 0.0, %v1261
      %v1263 = vpop.f32.mrf.mxu0
      %1264 = vmatprep.mubr.f32.mxu0 0.0
      %1265 = vmatmul.mubr.f32.gmra.mxu0 %v1100
      %v1266 = vpop.f32.mrf.mxu0
      %v1267 = vadd.f32 0.0, %v1266
      %v1268 = vpop.f32.mrf.mxu0
      %1269 = vmatprep.mubr.f32.mxu0 0.0
      %1270 = vmatmul.mubr.f32.gmra.mxu0 %v1103
      %v1271 = vpop.f32.mrf.mxu0
      %v1272 = vadd.f32 0.0, %v1271
      %v1273 = vpop.f32.mrf.mxu0
      %1274 = vmatprep.mubr.f32.mxu0 0.0
      %1275 = vmatmul.mubr.f32.gmra.mxu0 %v1106
      %v1276 = vpop.f32.mrf.mxu0
      %v1277 = vadd.f32 0.0, %v1276
      %v1278 = vpop.f32.mrf.mxu0
      %1279 = vmatprep.mubr.f32.mxu0 0.0
      %1280 = vmatmul.mubr.f32.gmra.mxu0 %v1109
      %v1281 = vpop.f32.mrf.mxu0
      %v1282 = vadd.f32 0.0, %v1281
      %v1283 = vpop.f32.mrf.mxu0
      %1284 = vmatprep.mubr.f32.mxu0 0.0
      %1285 = vmatmul.mubr.f32.gmra.mxu0 %v1112
      %v1286 = vpop.f32.mrf.mxu0
      %v1287 = vadd.f32 0.0, %v1286
      %v1288 = vpop.f32.mrf.mxu0
      %1289 = vmatprep.mubr.f32.mxu0 0.0
      %1290 = vmatmul.mubr.f32.gmra.mxu0 %v1115
      %v1291 = vpop.f32.mrf.mxu0
      %v1292 = vadd.f32 0.0, %v1291
      %v1293 = vpop.f32.mrf.mxu0
      %1294 = vmatprep.mubr.f32.mxu0 0.0
      %1295 = vmatmul.mubr.f32.gmra.mxu0 %v1118
      %v1296 = vpop.f32.mrf.mxu0
      %v1297 = vadd.f32 0.0, %v1296
      %v1298 = vpop.f32.mrf.mxu0
      %1299 = vmatprep.mubr.f32.mxu0 0.0
      %1300 = vmatmul.mubr.f32.gmra.mxu0 %v1121
      %v1301 = vpop.f32.mrf.mxu0
      %v1302 = vadd.f32 0.0, %v1301
      %v1303 = vpop.f32.mrf.mxu0
      %1304 = vmatprep.mubr.f32.mxu0 0.0
      %1305 = vmatmul.mubr.f32.gmra.mxu0 %v1124
      %v1306 = vpop.f32.mrf.mxu0
      %v1307 = vadd.f32 0.0, %v1306
      %v1308 = vpop.f32.mrf.mxu0
      %1309 = vmatprep.mubr.f32.mxu0 0.0
      %1310 = vmatmul.mubr.f32.gmra.mxu0 %v1127
      %v1311 = vpop.f32.mrf.mxu0
      %v1312 = vadd.f32 0.0, %v1311
      %v1313 = vpop.f32.mrf.mxu0
      %1314 = vmatprep.mubr.f32.mxu0 0.0
      %1315 = vmatmul.mubr.f32.gmra.mxu0 %v1130
      %v1316 = vpop.f32.mrf.mxu0
      %v1317 = vadd.f32 0.0, %v1316
      %v1318 = vpop.f32.mrf.mxu0
      %1319 = vmatprep.mubr.f32.mxu0 0.0
      %1320 = vmatmul.mubr.f32.gmra.mxu0 %v1133
      %v1321 = vpop.f32.mrf.mxu0
      %v1322 = vadd.f32 0.0, %v1321
      %v1323 = vpop.f32.mrf.mxu0
      %1324 = vmatprep.mubr.f32.mxu0 0.0
      %1325 = vmatmul.mubr.f32.gmra.mxu0 %v1136
      %v1326 = vpop.f32.mrf.mxu0
      %v1327 = vadd.f32 0.0, %v1326
      %v1328 = vpop.f32.mrf.mxu0
      %1329 = vmatprep.mubr.f32.mxu0 0.0
      %1330 = vmatmul.mubr.f32.gmra.mxu0 %v1139
      %v1331 = vpop.f32.mrf.mxu0
      %v1332 = vadd.f32 0.0, %v1331
      %v1333 = vpop.f32.mrf.mxu0
      %1334 = vmatprep.mubr.f32.mxu0 0.0
      %1335 = vmatmul.mubr.f32.gmra.mxu0 %v1142
      %v1336 = vpop.f32.mrf.mxu0
      %v1337 = vadd.f32 0.0, %v1336
      %v1338 = vpop.f32.mrf.mxu0
      %1339 = vmatprep.mubr.f32.mxu0 0.0
      %1340 = vmatmul.mubr.f32.gmra.mxu0 %v1145
      %v1341 = vpop.f32.mrf.mxu0
      %v1342 = vadd.f32 0.0, %v1341
      %v1343 = vpop.f32.mrf.mxu0
      %1344 = vmatprep.mubr.f32.mxu0 0.0
      %1345 = vmatmul.mubr.f32.gmra.mxu0 %v1148
      %v1346 = vpop.f32.mrf.mxu0
      %v1347 = vadd.f32 0.0, %v1346
      %v1348 = vpop.f32.mrf.mxu0
      %1349 = vmatprep.mubr.f32.mxu0 0.0
      %1350 = vmatmul.mubr.f32.gmra.mxu0 %v1151
      %v1351 = vpop.f32.mrf.mxu0
      %v1352 = vadd.f32 0.0, %v1351
      %v1353 = vpop.f32.mrf.mxu0
      %1354 = vmatprep.mubr.f32.mxu0 0.0
      %1355 = vmatmul.mubr.f32.gmra.mxu0 %v1154
      %v1356 = vpop.f32.mrf.mxu0
      %v1357 = vadd.f32 0.0, %v1356
      %v1358 = vpop.f32.mrf.mxu0
      %1359 = vmatprep.mubr.f32.mxu0 0.0
      %1360 = vmatmul.mubr.f32.gmra.mxu0 %v1157
      %v1361 = vpop.f32.mrf.mxu0
      %v1362 = vadd.f32 0.0, %v1361
      %v1363 = vpop.f32.mrf.mxu0
      %1364 = vmatprep.mubr.f32.mxu0 0.0
      %1365 = vmatmul.mubr.f32.gmra.mxu0 %v1160
      %v1366 = vpop.f32.mrf.mxu0
      %v1367 = vadd.f32 0.0, %v1366
      %v1368 = vpop.f32.mrf.mxu0
      %1369 = vmatprep.mubr.f32.mxu0 0.0
      %1370 = vmatmul.mubr.f32.gmra.mxu0 %v1163
      %v1371 = vpop.f32.mrf.mxu0
      %v1372 = vadd.f32 0.0, %v1371
      %v1373 = vpop.f32.mrf.mxu0
      %1374 = vmatprep.mubr.f32.mxu0 0.0
      %1375 = vmatmul.mubr.f32.gmra.mxu0 %v1166
      %v1376 = vpop.f32.mrf.mxu0
      %v1377 = vadd.f32 0.0, %v1376
      %v1378 = vpop.f32.mrf.mxu0
      %1379 = vmatprep.mubr.f32.mxu0 0.0
      %1380 = vmatmul.mubr.f32.gmra.mxu0 %v1169
      %v1381 = vpop.f32.mrf.mxu0
      %v1382 = vadd.f32 0.0, %v1381
      %v1383 = vpop.f32.mrf.mxu0
      %1384 = vmatprep.mubr.f32.mxu0 0.0
      %1385 = vmatmul.mubr.f32.gmra.mxu0 %v1172
      %v1386 = vpop.f32.mrf.mxu0
      %v1387 = vadd.f32 0.0, %v1386
      %v1388 = vpop.f32.mrf.mxu0
      %1389 = vmatprep.mubr.f32.mxu0 0.0
      %1390 = vmatmul.mubr.f32.gmra.mxu0 %v1175
      %v1391 = vpop.f32.mrf.mxu0
      %v1392 = vadd.f32 0.0, %v1391
      %v1393 = vpop.f32.mrf.mxu0
      %1394 = vmatprep.mubr.f32.mxu0 0.0
      %1395 = vmatmul.mubr.f32.gmra.mxu0 %v1178
      %v1396 = vpop.f32.mrf.mxu0
      %v1397 = vadd.f32 0.0, %v1396
      %v1398 = vpop.f32.mrf.mxu0
      %1399 = vmatprep.mubr.f32.mxu0 0.0
      %1400 = vmatmul.mubr.f32.gmra.mxu0 %v1181
      %v1401 = vpop.f32.mrf.mxu0
      %v1402 = vadd.f32 0.0, %v1401
      %v1403 = vpop.f32.mrf.mxu0
      %1404 = vmatprep.mubr.f32.mxu0 0.0
      %1405 = vmatmul.mubr.f32.gmra.mxu0 %v1184
      %v1406 = vpop.f32.mrf.mxu0
      %v1407 = vadd.f32 0.0, %v1406
      %v1408 = vpop.f32.mrf.mxu0
      %1409 = vmatprep.mubr.f32.mxu0 0.0
      %1410 = vmatmul.mubr.f32.gmra.mxu0 %v1187
      %v1411 = vpop.f32.mrf.mxu0
      %v1412 = vadd.f32 0.0, %v1411
      %v1413 = vpop.f32.mrf.mxu0
      %1414 = vmatprep.mubr.f32.mxu0 0.0
      %1415 = vmatmul.mubr.f32.gmra.mxu0 %v1190
      %v1416 = vpop.f32.mrf.mxu0
      %v1417 = vadd.f32 0.0, %v1416
      %v1418 = vpop.f32.mrf.mxu0
      %1419 = vdwg.mxu0
      %v1420 = vadd.f32 %v904, %v1262
      %v1421 = vadd.f32 %v909, %v1267
      %v1422 = vadd.f32 %v914, %v1272
      %v1423 = vadd.f32 %v919, %v1277
      %v1424 = vadd.f32 %v924, %v1282
      %v1425 = vadd.f32 %v929, %v1287
      %v1426 = vadd.f32 %v934, %v1292
      %v1427 = vadd.f32 %v939, %v1297
      %v1428 = vadd.f32 %v944, %v1302
      %v1429 = vadd.f32 %v949, %v1307
      %v1430 = vadd.f32 %v954, %v1312
      %v1431 = vadd.f32 %v959, %v1317
      %v1432 = vadd.f32 %v964, %v1322
      %v1433 = vadd.f32 %v969, %v1327
      %v1434 = vadd.f32 %v974, %v1332
      %v1435 = vadd.f32 %v979, %v1337
      %v1436 = vadd.f32 %v984, %v1342
      %v1437 = vadd.f32 %v989, %v1347
      %v1438 = vadd.f32 %v994, %v1352
      %v1439 = vadd.f32 %v999, %v1357
      %v1440 = vadd.f32 %v1004, %v1362
      %v1441 = vadd.f32 %v1009, %v1367
      %v1442 = vadd.f32 %v1014, %v1372
      %v1443 = vadd.f32 %v1019, %v1377
      %v1444 = vadd.f32 %v1024, %v1382
      %v1445 = vadd.f32 %v1029, %v1387
      %v1446 = vadd.f32 %v1034, %v1392
      %v1447 = vadd.f32 %v1039, %v1397
      %v1448 = vadd.f32 %v1044, %v1402
      %v1449 = vadd.f32 %v1049, %v1407
      %v1450 = vadd.f32 %v1054, %v1412
      %v1451 = vadd.f32 %v1059, %v1417
      %v1452 = vld [vmem:[%s313] sm:$0xff]
      %v1453 = vld [vmem:[%s313 + $0x8] sm:$0xff]
      %v1454 = vld [vmem:[%s313 + $0x18] sm:$0xff]
      %v1455 = vld [vmem:[%s313 + $0x20] sm:$0xff]
      %v1456 = vld [vmem:[%s313 + $0x30] sm:$0xff]
      %v1457 = vld [vmem:[%s313 + $0x38] sm:$0xff]
      %v1458 = vld [vmem:[%s313 + $0x48] sm:$0xff]
      %v1459 = vld [vmem:[%s313 + $0x50] sm:$0xff]
      %v1460 = vld [vmem:[%s313 + $0x60] sm:$0xff]
      %v1461 = vld [vmem:[%s313 + $0x68] sm:$0xff]
      %v1462 = vld [vmem:[%s313 + $0x78] sm:$0xff]
      %v1463 = vld [vmem:[%s313 + $0x80] sm:$0xff]
      %v1464 = vld [vmem:[%s313 + $0x90] sm:$0xff]
      %v1465 = vld [vmem:[%s313 + $0x98] sm:$0xff]
      %v1466 = vld [vmem:[%s313 + $0xa8] sm:$0xff]
      %v1467 = vld [vmem:[%s313 + $0xb0] sm:$0xff]
      %v1468 = vld [vmem:[%s313 + $0xc0] sm:$0xff]
      %v1469 = vld [vmem:[%s313 + $0xc8] sm:$0xff]
      %v1470 = vld [vmem:[%s313 + $0xd8] sm:$0xff]
      %v1471 = vld [vmem:[%s313 + $0xe0] sm:$0xff]
      %v1472 = vld [vmem:[%s313 + $0xf0] sm:$0xff]
      %v1473 = vld [vmem:[%s313 + $0xf8] sm:$0xff]
      %v1474 = vld [vmem:[%s313 + $0x108] sm:$0xff]
      %v1475 = vld [vmem:[%s313 + $0x110] sm:$0xff]
      %v1476 = vld [vmem:[%s313 + $0x120] sm:$0xff]
      %v1477 = vld [vmem:[%s313 + $0x128] sm:$0xff]
      %v1478 = vld [vmem:[%s313 + $0x138] sm:$0xff]
      %v1479 = vld [vmem:[%s313 + $0x140] sm:$0xff]
      %v1480 = vld [vmem:[%s313 + $0x150] sm:$0xff]
      %v1481 = vld [vmem:[%s313 + $0x158] sm:$0xff]
      %v1482 = vld [vmem:[%s313 + $0x168] sm:$0xff]
      %v1483 = vld [vmem:[%s313 + $0x170] sm:$0xff]
      %s1484 = scalar_lea.vmem %s1, 12
      %v1485 = vld [vmem:[%s1484] sm:$0xf]
      %v1487 = vsel %vm225, %v1452, 0
      %v1490 = vsel %vm225, %v1453, 0
      %v1493 = vsel %vm225, %v1454, 0
      %v1496 = vsel %vm225, %v1455, 0
      %v1499 = vsel %vm225, %v1456, 0
      %v1502 = vsel %vm225, %v1457, 0
      %v1505 = vsel %vm225, %v1458, 0
      %v1508 = vsel %vm225, %v1459, 0
      %v1511 = vsel %vm225, %v1460, 0
      %v1514 = vsel %vm225, %v1461, 0
      %v1517 = vsel %vm225, %v1462, 0
      %v1520 = vsel %vm225, %v1463, 0
      %v1523 = vsel %vm225, %v1464, 0
      %v1526 = vsel %vm225, %v1465, 0
      %v1529 = vsel %vm225, %v1466, 0
      %v1532 = vsel %vm225, %v1467, 0
      %v1535 = vsel %vm225, %v1468, 0
      %v1538 = vsel %vm225, %v1469, 0
      %v1541 = vsel %vm225, %v1470, 0
      %v1544 = vsel %vm225, %v1471, 0
      %v1547 = vsel %vm225, %v1472, 0
      %v1550 = vsel %vm225, %v1473, 0
      %v1553 = vsel %vm225, %v1474, 0
      %v1556 = vsel %vm225, %v1475, 0
      %v1559 = vsel %vm225, %v1476, 0
      %v1562 = vsel %vm225, %v1477, 0
      %v1565 = vsel %vm225, %v1478, 0
      %v1568 = vsel %vm225, %v1479, 0
      %v1571 = vsel %vm225, %v1480, 0
      %v1574 = vsel %vm225, %v1481, 0
      %v1577 = vsel %vm225, %v1482, 0
      %v1580 = vsel %vm225, %v1483, 0
      %v1583 = vsel %vm509, %v1485, 0
      %1585 = vmatprep.subr.mxu0 0.0
      %1586 = vmatpush1.msra.mxu0 0.0
      %1587 = vmatprep.subr.mxu0 0.0
      %1588 = vmatpush1.msra.mxu0 0.0
      %1589 = vmatprep.subr.mxu0 0.0
      %1590 = vmatpush1.msra.mxu0 0.0
      %1591 = vmatprep.subr.mxu0 0.0
      %1592 = vmatpush1.msra.mxu0 0.0
      %1593 = vmatprep.subr.mxu0 0.0
      %1594 = vmatpush1.msra.mxu0 0.0
      %1595 = vmatprep.subr.mxu0 0.0
      %1596 = vmatpush1.msra.mxu0 0.0
      %1597 = vmatprep.subr.mxu0 0.0
      %1598 = vmatpush1.msra.mxu0 0.0
      %1599 = vmatprep.subr.mxu0 0.0
      %1600 = vmatpush1.msra.mxu0 0.0
      %1601 = vmatprep.subr.mxu0 0.0
      %1602 = vmatpush1.msra.mxu0 0.0
      %1603 = vmatprep.subr.mxu0 0.0
      %1604 = vmatpush1.msra.mxu0 0.0
      %1605 = vmatprep.subr.mxu0 0.0
      %1606 = vmatpush1.msra.mxu0 0.0
      %1607 = vmatprep.subr.mxu0 0.0
      %1608 = vmatpush1.msra.mxu0 0.0
      %1609 = vmatprep.subr.mxu0 0.0
      %1610 = vmatpush1.msra.mxu0 0.0
      %1611 = vmatprep.subr.mxu0 0.0
      %1612 = vmatpush1.msra.mxu0 0.0
      %1613 = vmatprep.subr.mxu0 0.0
      %1614 = vmatpush1.msra.mxu0 0.0
      %1615 = vmatprep.subr.mxu0 0.0
      %1616 = vmatpush1.msra.mxu0 %v1583
      %1617 = vmatprep.subr.mxu0 0.0
      %1618 = vmatpush2.msra.mxu0 0.0
      %1619 = vmatprep.subr.mxu0 0.0
      %1620 = vmatpush2.msra.mxu0 0.0
      %1621 = vmatprep.subr.mxu0 0.0
      %1622 = vmatpush2.msra.mxu0 0.0
      %1623 = vmatprep.subr.mxu0 0.0
      %1624 = vmatpush2.msra.mxu0 0.0
      %1625 = vmatprep.subr.mxu0 0.0
      %1626 = vmatpush2.msra.mxu0 0.0
      %1627 = vmatprep.subr.mxu0 0.0
      %1628 = vmatpush2.msra.mxu0 0.0
      %1629 = vmatprep.subr.mxu0 0.0
      %1630 = vmatpush2.msra.mxu0 0.0
      %1631 = vmatprep.subr.mxu0 0.0
      %1632 = vmatpush2.msra.mxu0 0.0
      %1633 = vmatprep.subr.mxu0 0.0
      %1634 = vmatpush2.msra.mxu0 0.0
      %1635 = vmatprep.subr.mxu0 0.0
      %1636 = vmatpush2.msra.mxu0 0.0
      %1637 = vmatprep.subr.mxu0 0.0
      %1638 = vmatpush2.msra.mxu0 0.0
      %1639 = vmatprep.subr.mxu0 0.0
      %1640 = vmatpush2.msra.mxu0 0.0
      %1641 = vmatprep.subr.mxu0 0.0
      %1642 = vmatpush2.msra.mxu0 0.0
      %1643 = vmatprep.subr.mxu0 0.0
      %1644 = vmatpush2.msra.mxu0 0.0
      %1645 = vmatprep.subr.mxu0 0.0
      %1646 = vmatpush2.msra.mxu0 0.0
      %1647 = vmatprep.subr.mxu0 0.0
      %1648 = vmatpush2.msra.mxu0 0.0
      %1649 = vmatprep.mubr.f32.mxu0 0.0
      %1650 = vmatmul.mubr.f32.gmra.mxu0 %v1487
      %v1651 = vpop.f32.mrf.mxu0
      %v1652 = vadd.f32 0.0, %v1651
      %v1653 = vpop.f32.mrf.mxu0
      %1654 = vmatprep.mubr.f32.mxu0 0.0
      %1655 = vmatmul.mubr.f32.gmra.mxu0 %v1490
      %v1656 = vpop.f32.mrf.mxu0
      %v1657 = vadd.f32 0.0, %v1656
      %v1658 = vpop.f32.mrf.mxu0
      %1659 = vmatprep.mubr.f32.mxu0 0.0
      %1660 = vmatmul.mubr.f32.gmra.mxu0 %v1493
      %v1661 = vpop.f32.mrf.mxu0
      %v1662 = vadd.f32 0.0, %v1661
      %v1663 = vpop.f32.mrf.mxu0
      %1664 = vmatprep.mubr.f32.mxu0 0.0
      %1665 = vmatmul.mubr.f32.gmra.mxu0 %v1496
      %v1666 = vpop.f32.mrf.mxu0
      %v1667 = vadd.f32 0.0, %v1666
      %v1668 = vpop.f32.mrf.mxu0
      %1669 = vmatprep.mubr.f32.mxu0 0.0
      %1670 = vmatmul.mubr.f32.gmra.mxu0 %v1499
      %v1671 = vpop.f32.mrf.mxu0
      %v1672 = vadd.f32 0.0, %v1671
      %v1673 = vpop.f32.mrf.mxu0
      %1674 = vmatprep.mubr.f32.mxu0 0.0
      %1675 = vmatmul.mubr.f32.gmra.mxu0 %v1502
      %v1676 = vpop.f32.mrf.mxu0
      %v1677 = vadd.f32 0.0, %v1676
      %v1678 = vpop.f32.mrf.mxu0
      %1679 = vmatprep.mubr.f32.mxu0 0.0
      %1680 = vmatmul.mubr.f32.gmra.mxu0 %v1505
      %v1681 = vpop.f32.mrf.mxu0
      %v1682 = vadd.f32 0.0, %v1681
      %v1683 = vpop.f32.mrf.mxu0
      %1684 = vmatprep.mubr.f32.mxu0 0.0
      %1685 = vmatmul.mubr.f32.gmra.mxu0 %v1508
      %v1686 = vpop.f32.mrf.mxu0
      %v1687 = vadd.f32 0.0, %v1686
      %v1688 = vpop.f32.mrf.mxu0
      %1689 = vmatprep.mubr.f32.mxu0 0.0
      %1690 = vmatmul.mubr.f32.gmra.mxu0 %v1511
      %v1691 = vpop.f32.mrf.mxu0
      %v1692 = vadd.f32 0.0, %v1691
      %v1693 = vpop.f32.mrf.mxu0
      %1694 = vmatprep.mubr.f32.mxu0 0.0
      %1695 = vmatmul.mubr.f32.gmra.mxu0 %v1514
      %v1696 = vpop.f32.mrf.mxu0
      %v1697 = vadd.f32 0.0, %v1696
      %v1698 = vpop.f32.mrf.mxu0
      %1699 = vmatprep.mubr.f32.mxu0 0.0
      %1700 = vmatmul.mubr.f32.gmra.mxu0 %v1517
      %v1701 = vpop.f32.mrf.mxu0
      %v1702 = vadd.f32 0.0, %v1701
      %v1703 = vpop.f32.mrf.mxu0
      %1704 = vmatprep.mubr.f32.mxu0 0.0
      %1705 = vmatmul.mubr.f32.gmra.mxu0 %v1520
      %v1706 = vpop.f32.mrf.mxu0
      %v1707 = vadd.f32 0.0, %v1706
      %v1708 = vpop.f32.mrf.mxu0
      %1709 = vmatprep.mubr.f32.mxu0 0.0
      %1710 = vmatmul.mubr.f32.gmra.mxu0 %v1523
      %v1711 = vpop.f32.mrf.mxu0
      %v1712 = vadd.f32 0.0, %v1711
      %v1713 = vpop.f32.mrf.mxu0
      %1714 = vmatprep.mubr.f32.mxu0 0.0
      %1715 = vmatmul.mubr.f32.gmra.mxu0 %v1526
      %v1716 = vpop.f32.mrf.mxu0
      %v1717 = vadd.f32 0.0, %v1716
      %v1718 = vpop.f32.mrf.mxu0
      %1719 = vmatprep.mubr.f32.mxu0 0.0
      %1720 = vmatmul.mubr.f32.gmra.mxu0 %v1529
      %v1721 = vpop.f32.mrf.mxu0
      %v1722 = vadd.f32 0.0, %v1721
      %v1723 = vpop.f32.mrf.mxu0
      %1724 = vmatprep.mubr.f32.mxu0 0.0
      %1725 = vmatmul.mubr.f32.gmra.mxu0 %v1532
      %v1726 = vpop.f32.mrf.mxu0
      %v1727 = vadd.f32 0.0, %v1726
      %v1728 = vpop.f32.mrf.mxu0
      %1729 = vmatprep.mubr.f32.mxu0 0.0
      %1730 = vmatmul.mubr.f32.gmra.mxu0 %v1535
      %v1731 = vpop.f32.mrf.mxu0
      %v1732 = vadd.f32 0.0, %v1731
      %v1733 = vpop.f32.mrf.mxu0
      %1734 = vmatprep.mubr.f32.mxu0 0.0
      %1735 = vmatmul.mubr.f32.gmra.mxu0 %v1538
      %v1736 = vpop.f32.mrf.mxu0
      %v1737 = vadd.f32 0.0, %v1736
      %v1738 = vpop.f32.mrf.mxu0
      %1739 = vmatprep.mubr.f32.mxu0 0.0
      %1740 = vmatmul.mubr.f32.gmra.mxu0 %v1541
      %v1741 = vpop.f32.mrf.mxu0
      %v1742 = vadd.f32 0.0, %v1741
      %v1743 = vpop.f32.mrf.mxu0
      %1744 = vmatprep.mubr.f32.mxu0 0.0
      %1745 = vmatmul.mubr.f32.gmra.mxu0 %v1544
      %v1746 = vpop.f32.mrf.mxu0
      %v1747 = vadd.f32 0.0, %v1746
      %v1748 = vpop.f32.mrf.mxu0
      %1749 = vmatprep.mubr.f32.mxu0 0.0
      %1750 = vmatmul.mubr.f32.gmra.mxu0 %v1547
      %v1751 = vpop.f32.mrf.mxu0
      %v1752 = vadd.f32 0.0, %v1751
      %v1753 = vpop.f32.mrf.mxu0
      %1754 = vmatprep.mubr.f32.mxu0 0.0
      %1755 = vmatmul.mubr.f32.gmra.mxu0 %v1550
      %v1756 = vpop.f32.mrf.mxu0
      %v1757 = vadd.f32 0.0, %v1756
      %v1758 = vpop.f32.mrf.mxu0
      %1759 = vmatprep.mubr.f32.mxu0 0.0
      %1760 = vmatmul.mubr.f32.gmra.mxu0 %v1553
      %v1761 = vpop.f32.mrf.mxu0
      %v1762 = vadd.f32 0.0, %v1761
      %v1763 = vpop.f32.mrf.mxu0
      %1764 = vmatprep.mubr.f32.mxu0 0.0
      %1765 = vmatmul.mubr.f32.gmra.mxu0 %v1556
      %v1766 = vpop.f32.mrf.mxu0
      %v1767 = vadd.f32 0.0, %v1766
      %v1768 = vpop.f32.mrf.mxu0
      %1769 = vmatprep.mubr.f32.mxu0 0.0
      %1770 = vmatmul.mubr.f32.gmra.mxu0 %v1559
      %v1771 = vpop.f32.mrf.mxu0
      %v1772 = vadd.f32 0.0, %v1771
      %v1773 = vpop.f32.mrf.mxu0
      %1774 = vmatprep.mubr.f32.mxu0 0.0
      %1775 = vmatmul.mubr.f32.gmra.mxu0 %v1562
      %v1776 = vpop.f32.mrf.mxu0
      %v1777 = vadd.f32 0.0, %v1776
      %v1778 = vpop.f32.mrf.mxu0
      %1779 = vmatprep.mubr.f32.mxu0 0.0
      %1780 = vmatmul.mubr.f32.gmra.mxu0 %v1565
      %v1781 = vpop.f32.mrf.mxu0
      %v1782 = vadd.f32 0.0, %v1781
      %v1783 = vpop.f32.mrf.mxu0
      %1784 = vmatprep.mubr.f32.mxu0 0.0
      %1785 = vmatmul.mubr.f32.gmra.mxu0 %v1568
      %v1786 = vpop.f32.mrf.mxu0
      %v1787 = vadd.f32 0.0, %v1786
      %v1788 = vpop.f32.mrf.mxu0
      %1789 = vmatprep.mubr.f32.mxu0 0.0
      %1790 = vmatmul.mubr.f32.gmra.mxu0 %v1571
      %v1791 = vpop.f32.mrf.mxu0
      %v1792 = vadd.f32 0.0, %v1791
      %v1793 = vpop.f32.mrf.mxu0
      %1794 = vmatprep.mubr.f32.mxu0 0.0
      %1795 = vmatmul.mubr.f32.gmra.mxu0 %v1574
      %v1796 = vpop.f32.mrf.mxu0
      %v1797 = vadd.f32 0.0, %v1796
      %v1798 = vpop.f32.mrf.mxu0
      %1799 = vmatprep.mubr.f32.mxu0 0.0
      %1800 = vmatmul.mubr.f32.gmra.mxu0 %v1577
      %v1801 = vpop.f32.mrf.mxu0
      %v1802 = vadd.f32 0.0, %v1801
      %v1803 = vpop.f32.mrf.mxu0
      %1804 = vmatprep.mubr.f32.mxu0 0.0
      %1805 = vmatmul.mubr.f32.gmra.mxu0 %v1580
      %v1806 = vpop.f32.mrf.mxu0
      %v1807 = vadd.f32 0.0, %v1806
      %v1808 = vpop.f32.mrf.mxu0
      %1809 = vdwg.mxu0
      %v1810 = vadd.f32 %v1420, %v1652
      %v1811 = vadd.f32 %v1421, %v1657
      %v1812 = vadd.f32 %v1422, %v1662
      %v1813 = vadd.f32 %v1423, %v1667
      %v1814 = vadd.f32 %v1424, %v1672
      %v1815 = vadd.f32 %v1425, %v1677
      %v1816 = vadd.f32 %v1426, %v1682
      %v1817 = vadd.f32 %v1427, %v1687
      %v1818 = vadd.f32 %v1428, %v1692
      %v1819 = vadd.f32 %v1429, %v1697
      %v1820 = vadd.f32 %v1430, %v1702
      %v1821 = vadd.f32 %v1431, %v1707
      %v1822 = vadd.f32 %v1432, %v1712
      %v1823 = vadd.f32 %v1433, %v1717
      %v1824 = vadd.f32 %v1434, %v1722
      %v1825 = vadd.f32 %v1435, %v1727
      %v1826 = vadd.f32 %v1436, %v1732
      %v1827 = vadd.f32 %v1437, %v1737
      %v1828 = vadd.f32 %v1438, %v1742
      %v1829 = vadd.f32 %v1439, %v1747
      %v1830 = vadd.f32 %v1440, %v1752
      %v1831 = vadd.f32 %v1441, %v1757
      %v1832 = vadd.f32 %v1442, %v1762
      %v1833 = vadd.f32 %v1443, %v1767
      %v1834 = vadd.f32 %v1444, %v1772
      %v1835 = vadd.f32 %v1445, %v1777
      %v1836 = vadd.f32 %v1446, %v1782
      %v1837 = vadd.f32 %v1447, %v1787
      %v1838 = vadd.f32 %v1448, %v1792
      %v1839 = vadd.f32 %v1449, %v1797
      %v1840 = vadd.f32 %v1450, %v1802
      %v1841 = vadd.f32 %v1451, %v1807
      %v1842 = vld [vmem:[%s313 + $0x1] sm:$0xff]
      %v1843 = vld [vmem:[%s313 + $0x9] sm:$0xff]
      %v1844 = vld [vmem:[%s313 + $0x19] sm:$0xff]
      %v1845 = vld [vmem:[%s313 + $0x21] sm:$0xff]
      %v1846 = vld [vmem:[%s313 + $0x31] sm:$0xff]
      %v1847 = vld [vmem:[%s313 + $0x39] sm:$0xff]
      %v1848 = vld [vmem:[%s313 + $0x49] sm:$0xff]
      %v1849 = vld [vmem:[%s313 + $0x51] sm:$0xff]
      %v1850 = vld [vmem:[%s313 + $0x61] sm:$0xff]
      %v1851 = vld [vmem:[%s313 + $0x69] sm:$0xff]
      %v1852 = vld [vmem:[%s313 + $0x79] sm:$0xff]
      %v1853 = vld [vmem:[%s313 + $0x81] sm:$0xff]
      %v1854 = vld [vmem:[%s313 + $0x91] sm:$0xff]
      %v1855 = vld [vmem:[%s313 + $0x99] sm:$0xff]
      %v1856 = vld [vmem:[%s313 + $0xa9] sm:$0xff]
      %v1857 = vld [vmem:[%s313 + $0xb1] sm:$0xff]
      %v1858 = vld [vmem:[%s313 + $0xc1] sm:$0xff]
      %v1859 = vld [vmem:[%s313 + $0xc9] sm:$0xff]
      %v1860 = vld [vmem:[%s313 + $0xd9] sm:$0xff]
      %v1861 = vld [vmem:[%s313 + $0xe1] sm:$0xff]
      %v1862 = vld [vmem:[%s313 + $0xf1] sm:$0xff]
      %v1863 = vld [vmem:[%s313 + $0xf9] sm:$0xff]
      %v1864 = vld [vmem:[%s313 + $0x109] sm:$0xff]
      %v1865 = vld [vmem:[%s313 + $0x111] sm:$0xff]
      %v1866 = vld [vmem:[%s313 + $0x121] sm:$0xff]
      %v1867 = vld [vmem:[%s313 + $0x129] sm:$0xff]
      %v1868 = vld [vmem:[%s313 + $0x139] sm:$0xff]
      %v1869 = vld [vmem:[%s313 + $0x141] sm:$0xff]
      %v1870 = vld [vmem:[%s313 + $0x151] sm:$0xff]
      %v1871 = vld [vmem:[%s313 + $0x159] sm:$0xff]
      %v1872 = vld [vmem:[%s313 + $0x169] sm:$0xff]
      %v1873 = vld [vmem:[%s313 + $0x171] sm:$0xff]
      %s1874 = scalar_lea.vmem %s1, 16
      %v1875 = vld [vmem:[%s1874] sm:$0xf]
      %v1877 = vsel %vm225, %v1842, 0
      %v1880 = vsel %vm225, %v1843, 0
      %v1883 = vsel %vm225, %v1844, 0
      %v1886 = vsel %vm225, %v1845, 0
      %v1889 = vsel %vm225, %v1846, 0
      %v1892 = vsel %vm225, %v1847, 0
      %v1895 = vsel %vm225, %v1848, 0
      %v1898 = vsel %vm225, %v1849, 0
      %v1901 = vsel %vm225, %v1850, 0
      %v1904 = vsel %vm225, %v1851, 0
      %v1907 = vsel %vm225, %v1852, 0
      %v1910 = vsel %vm225, %v1853, 0
      %v1913 = vsel %vm225, %v1854, 0
      %v1916 = vsel %vm225, %v1855, 0
      %v1919 = vsel %vm225, %v1856, 0
      %v1922 = vsel %vm225, %v1857, 0
      %v1925 = vsel %vm225, %v1858, 0
      %v1928 = vsel %vm225, %v1859, 0
      %v1931 = vsel %vm225, %v1860, 0
      %v1934 = vsel %vm225, %v1861, 0
      %v1937 = vsel %vm225, %v1862, 0
      %v1940 = vsel %vm225, %v1863, 0
      %v1943 = vsel %vm225, %v1864, 0
      %v1946 = vsel %vm225, %v1865, 0
      %v1949 = vsel %vm225, %v1866, 0
      %v1952 = vsel %vm225, %v1867, 0
      %v1955 = vsel %vm225, %v1868, 0
      %v1958 = vsel %vm225, %v1869, 0
      %v1961 = vsel %vm225, %v1870, 0
      %v1964 = vsel %vm225, %v1871, 0
      %v1967 = vsel %vm225, %v1872, 0
      %v1970 = vsel %vm225, %v1873, 0
      %v1973 = vsel %vm509, %v1875, 0
      %1975 = vmatprep.subr.mxu0 0.0
      %1976 = vmatpush1.msra.mxu0 0.0
      %1977 = vmatprep.subr.mxu0 0.0
      %1978 = vmatpush1.msra.mxu0 0.0
      %1979 = vmatprep.subr.mxu0 0.0
      %1980 = vmatpush1.msra.mxu0 0.0
      %1981 = vmatprep.subr.mxu0 0.0
      %1982 = vmatpush1.msra.mxu0 0.0
      %1983 = vmatprep.subr.mxu0 0.0
      %1984 = vmatpush1.msra.mxu0 0.0
      %1985 = vmatprep.subr.mxu0 0.0
      %1986 = vmatpush1.msra.mxu0 0.0
      %1987 = vmatprep.subr.mxu0 0.0
      %1988 = vmatpush1.msra.mxu0 0.0
      %1989 = vmatprep.subr.mxu0 0.0
      %1990 = vmatpush1.msra.mxu0 0.0
      %1991 = vmatprep.subr.mxu0 0.0
      %1992 = vmatpush1.msra.mxu0 0.0
      %1993 = vmatprep.subr.mxu0 0.0
      %1994 = vmatpush1.msra.mxu0 0.0
      %1995 = vmatprep.subr.mxu0 0.0
      %1996 = vmatpush1.msra.mxu0 0.0
      %1997 = vmatprep.subr.mxu0 0.0
      %1998 = vmatpush1.msra.mxu0 0.0
      %1999 = vmatprep.subr.mxu0 0.0
      %2000 = vmatpush1.msra.mxu0 0.0
      %2001 = vmatprep.subr.mxu0 0.0
      %2002 = vmatpush1.msra.mxu0 0.0
      %2003 = vmatprep.subr.mxu0 0.0
      %2004 = vmatpush1.msra.mxu0 0.0
      %2005 = vmatprep.subr.mxu0 0.0
      %2006 = vmatpush1.msra.mxu0 %v1973
      %2007 = vmatprep.subr.mxu0 0.0
      %2008 = vmatpush2.msra.mxu0 0.0
      %2009 = vmatprep.subr.mxu0 0.0
      %2010 = vmatpush2.msra.mxu0 0.0
      %2011 = vmatprep.subr.mxu0 0.0
      %2012 = vmatpush2.msra.mxu0 0.0
      %2013 = vmatprep.subr.mxu0 0.0
      %2014 = vmatpush2.msra.mxu0 0.0
      %2015 = vmatprep.subr.mxu0 0.0
      %2016 = vmatpush2.msra.mxu0 0.0
      %2017 = vmatprep.subr.mxu0 0.0
      %2018 = vmatpush2.msra.mxu0 0.0
      %2019 = vmatprep.subr.mxu0 0.0
      %2020 = vmatpush2.msra.mxu0 0.0
      %2021 = vmatprep.subr.mxu0 0.0
      %2022 = vmatpush2.msra.mxu0 0.0
      %2023 = vmatprep.subr.mxu0 0.0
      %2024 = vmatpush2.msra.mxu0 0.0
      %2025 = vmatprep.subr.mxu0 0.0
      %2026 = vmatpush2.msra.mxu0 0.0
      %2027 = vmatprep.subr.mxu0 0.0
      %2028 = vmatpush2.msra.mxu0 0.0
      %2029 = vmatprep.subr.mxu0 0.0
      %2030 = vmatpush2.msra.mxu0 0.0
      %2031 = vmatprep.subr.mxu0 0.0
      %2032 = vmatpush2.msra.mxu0 0.0
      %2033 = vmatprep.subr.mxu0 0.0
      %2034 = vmatpush2.msra.mxu0 0.0
      %2035 = vmatprep.subr.mxu0 0.0
      %2036 = vmatpush2.msra.mxu0 0.0
      %2037 = vmatprep.subr.mxu0 0.0
      %2038 = vmatpush2.msra.mxu0 0.0
      %2039 = vmatprep.mubr.f32.mxu0 0.0
      %2040 = vmatmul.mubr.f32.gmra.mxu0 %v1877
      %v2041 = vpop.f32.mrf.mxu0
      %v2042 = vadd.f32 0.0, %v2041
      %v2043 = vpop.f32.mrf.mxu0
      %2044 = vmatprep.mubr.f32.mxu0 0.0
      %2045 = vmatmul.mubr.f32.gmra.mxu0 %v1880
      %v2046 = vpop.f32.mrf.mxu0
      %v2047 = vadd.f32 0.0, %v2046
      %v2048 = vpop.f32.mrf.mxu0
      %2049 = vmatprep.mubr.f32.mxu0 0.0
      %2050 = vmatmul.mubr.f32.gmra.mxu0 %v1883
      %v2051 = vpop.f32.mrf.mxu0
      %v2052 = vadd.f32 0.0, %v2051
      %v2053 = vpop.f32.mrf.mxu0
      %2054 = vmatprep.mubr.f32.mxu0 0.0
      %2055 = vmatmul.mubr.f32.gmra.mxu0 %v1886
      %v2056 = vpop.f32.mrf.mxu0
      %v2057 = vadd.f32 0.0, %v2056
      %v2058 = vpop.f32.mrf.mxu0
      %2059 = vmatprep.mubr.f32.mxu0 0.0
      %2060 = vmatmul.mubr.f32.gmra.mxu0 %v1889
      %v2061 = vpop.f32.mrf.mxu0
      %v2062 = vadd.f32 0.0, %v2061
      %v2063 = vpop.f32.mrf.mxu0
      %2064 = vmatprep.mubr.f32.mxu0 0.0
      %2065 = vmatmul.mubr.f32.gmra.mxu0 %v1892
      %v2066 = vpop.f32.mrf.mxu0
      %v2067 = vadd.f32 0.0, %v2066
      %v2068 = vpop.f32.mrf.mxu0
      %2069 = vmatprep.mubr.f32.mxu0 0.0
      %2070 = vmatmul.mubr.f32.gmra.mxu0 %v1895
      %v2071 = vpop.f32.mrf.mxu0
      %v2072 = vadd.f32 0.0, %v2071
      %v2073 = vpop.f32.mrf.mxu0
      %2074 = vmatprep.mubr.f32.mxu0 0.0
      %2075 = vmatmul.mubr.f32.gmra.mxu0 %v1898
      %v2076 = vpop.f32.mrf.mxu0
      %v2077 = vadd.f32 0.0, %v2076
      %v2078 = vpop.f32.mrf.mxu0
      %2079 = vmatprep.mubr.f32.mxu0 0.0
      %2080 = vmatmul.mubr.f32.gmra.mxu0 %v1901
      %v2081 = vpop.f32.mrf.mxu0
      %v2082 = vadd.f32 0.0, %v2081
      %v2083 = vpop.f32.mrf.mxu0
      %2084 = vmatprep.mubr.f32.mxu0 0.0
      %2085 = vmatmul.mubr.f32.gmra.mxu0 %v1904
      %v2086 = vpop.f32.mrf.mxu0
      %v2087 = vadd.f32 0.0, %v2086
      %v2088 = vpop.f32.mrf.mxu0
      %2089 = vmatprep.mubr.f32.mxu0 0.0
      %2090 = vmatmul.mubr.f32.gmra.mxu0 %v1907
      %v2091 = vpop.f32.mrf.mxu0
      %v2092 = vadd.f32 0.0, %v2091
      %v2093 = vpop.f32.mrf.mxu0
      %2094 = vmatprep.mubr.f32.mxu0 0.0
      %2095 = vmatmul.mubr.f32.gmra.mxu0 %v1910
      %v2096 = vpop.f32.mrf.mxu0
      %v2097 = vadd.f32 0.0, %v2096
      %v2098 = vpop.f32.mrf.mxu0
      %2099 = vmatprep.mubr.f32.mxu0 0.0
      %2100 = vmatmul.mubr.f32.gmra.mxu0 %v1913
      %v2101 = vpop.f32.mrf.mxu0
      %v2102 = vadd.f32 0.0, %v2101
      %v2103 = vpop.f32.mrf.mxu0
      %2104 = vmatprep.mubr.f32.mxu0 0.0
      %2105 = vmatmul.mubr.f32.gmra.mxu0 %v1916
      %v2106 = vpop.f32.mrf.mxu0
      %v2107 = vadd.f32 0.0, %v2106
      %v2108 = vpop.f32.mrf.mxu0
      %2109 = vmatprep.mubr.f32.mxu0 0.0
      %2110 = vmatmul.mubr.f32.gmra.mxu0 %v1919
      %v2111 = vpop.f32.mrf.mxu0
      %v2112 = vadd.f32 0.0, %v2111
      %v2113 = vpop.f32.mrf.mxu0
      %2114 = vmatprep.mubr.f32.mxu0 0.0
      %2115 = vmatmul.mubr.f32.gmra.mxu0 %v1922
      %v2116 = vpop.f32.mrf.mxu0
      %v2117 = vadd.f32 0.0, %v2116
      %v2118 = vpop.f32.mrf.mxu0
      %2119 = vmatprep.mubr.f32.mxu0 0.0
      %2120 = vmatmul.mubr.f32.gmra.mxu0 %v1925
      %v2121 = vpop.f32.mrf.mxu0
      %v2122 = vadd.f32 0.0, %v2121
      %v2123 = vpop.f32.mrf.mxu0
      %2124 = vmatprep.mubr.f32.mxu0 0.0
      %2125 = vmatmul.mubr.f32.gmra.mxu0 %v1928
      %v2126 = vpop.f32.mrf.mxu0
      %v2127 = vadd.f32 0.0, %v2126
      %v2128 = vpop.f32.mrf.mxu0
      %2129 = vmatprep.mubr.f32.mxu0 0.0
      %2130 = vmatmul.mubr.f32.gmra.mxu0 %v1931
      %v2131 = vpop.f32.mrf.mxu0
      %v2132 = vadd.f32 0.0, %v2131
      %v2133 = vpop.f32.mrf.mxu0
      %2134 = vmatprep.mubr.f32.mxu0 0.0
      %2135 = vmatmul.mubr.f32.gmra.mxu0 %v1934
      %v2136 = vpop.f32.mrf.mxu0
      %v2137 = vadd.f32 0.0, %v2136
      %v2138 = vpop.f32.mrf.mxu0
      %2139 = vmatprep.mubr.f32.mxu0 0.0
      %2140 = vmatmul.mubr.f32.gmra.mxu0 %v1937
      %v2141 = vpop.f32.mrf.mxu0
      %v2142 = vadd.f32 0.0, %v2141
      %v2143 = vpop.f32.mrf.mxu0
      %2144 = vmatprep.mubr.f32.mxu0 0.0
      %2145 = vmatmul.mubr.f32.gmra.mxu0 %v1940
      %v2146 = vpop.f32.mrf.mxu0
      %v2147 = vadd.f32 0.0, %v2146
      %v2148 = vpop.f32.mrf.mxu0
      %2149 = vmatprep.mubr.f32.mxu0 0.0
      %2150 = vmatmul.mubr.f32.gmra.mxu0 %v1943
      %v2151 = vpop.f32.mrf.mxu0
      %v2152 = vadd.f32 0.0, %v2151
      %v2153 = vpop.f32.mrf.mxu0
      %2154 = vmatprep.mubr.f32.mxu0 0.0
      %2155 = vmatmul.mubr.f32.gmra.mxu0 %v1946
      %v2156 = vpop.f32.mrf.mxu0
      %v2157 = vadd.f32 0.0, %v2156
      %v2158 = vpop.f32.mrf.mxu0
      %2159 = vmatprep.mubr.f32.mxu0 0.0
      %2160 = vmatmul.mubr.f32.gmra.mxu0 %v1949
      %v2161 = vpop.f32.mrf.mxu0
      %v2162 = vadd.f32 0.0, %v2161
      %v2163 = vpop.f32.mrf.mxu0
      %2164 = vmatprep.mubr.f32.mxu0 0.0
      %2165 = vmatmul.mubr.f32.gmra.mxu0 %v1952
      %v2166 = vpop.f32.mrf.mxu0
      %v2167 = vadd.f32 0.0, %v2166
      %v2168 = vpop.f32.mrf.mxu0
      %2169 = vmatprep.mubr.f32.mxu0 0.0
      %2170 = vmatmul.mubr.f32.gmra.mxu0 %v1955
      %v2171 = vpop.f32.mrf.mxu0
      %v2172 = vadd.f32 0.0, %v2171
      %v2173 = vpop.f32.mrf.mxu0
      %2174 = vmatprep.mubr.f32.mxu0 0.0
      %2175 = vmatmul.mubr.f32.gmra.mxu0 %v1958
      %v2176 = vpop.f32.mrf.mxu0
      %v2177 = vadd.f32 0.0, %v2176
      %v2178 = vpop.f32.mrf.mxu0
      %2179 = vmatprep.mubr.f32.mxu0 0.0
      %2180 = vmatmul.mubr.f32.gmra.mxu0 %v1961
      %v2181 = vpop.f32.mrf.mxu0
      %v2182 = vadd.f32 0.0, %v2181
      %v2183 = vpop.f32.mrf.mxu0
      %2184 = vmatprep.mubr.f32.mxu0 0.0
      %2185 = vmatmul.mubr.f32.gmra.mxu0 %v1964
      %v2186 = vpop.f32.mrf.mxu0
      %v2187 = vadd.f32 0.0, %v2186
      %v2188 = vpop.f32.mrf.mxu0
      %2189 = vmatprep.mubr.f32.mxu0 0.0
      %2190 = vmatmul.mubr.f32.gmra.mxu0 %v1967
      %v2191 = vpop.f32.mrf.mxu0
      %v2192 = vadd.f32 0.0, %v2191
      %v2193 = vpop.f32.mrf.mxu0
      %2194 = vmatprep.mubr.f32.mxu0 0.0
      %2195 = vmatmul.mubr.f32.gmra.mxu0 %v1970
      %v2196 = vpop.f32.mrf.mxu0
      %v2197 = vadd.f32 0.0, %v2196
      %v2198 = vpop.f32.mrf.mxu0
      %2199 = vdwg.mxu0
      %v2200 = vadd.f32 %v1810, %v2042
      %v2201 = vadd.f32 %v1811, %v2047
      %v2202 = vadd.f32 %v1812, %v2052
      %v2203 = vadd.f32 %v1813, %v2057
      %v2204 = vadd.f32 %v1814, %v2062
      %v2205 = vadd.f32 %v1815, %v2067
      %v2206 = vadd.f32 %v1816, %v2072
      %v2207 = vadd.f32 %v1817, %v2077
      %v2208 = vadd.f32 %v1818, %v2082
      %v2209 = vadd.f32 %v1819, %v2087
      %v2210 = vadd.f32 %v1820, %v2092
      %v2211 = vadd.f32 %v1821, %v2097
      %v2212 = vadd.f32 %v1822, %v2102
      %v2213 = vadd.f32 %v1823, %v2107
      %v2214 = vadd.f32 %v1824, %v2112
      %v2215 = vadd.f32 %v1825, %v2117
      %v2216 = vadd.f32 %v1826, %v2122
      %v2217 = vadd.f32 %v1827, %v2127
      %v2218 = vadd.f32 %v1828, %v2132
      %v2219 = vadd.f32 %v1829, %v2137
      %v2220 = vadd.f32 %v1830, %v2142
      %v2221 = vadd.f32 %v1831, %v2147
      %v2222 = vadd.f32 %v1832, %v2152
      %v2223 = vadd.f32 %v1833, %v2157
      %v2224 = vadd.f32 %v1834, %v2162
      %v2225 = vadd.f32 %v1835, %v2167
      %v2226 = vadd.f32 %v1836, %v2172
      %v2227 = vadd.f32 %v1837, %v2177
      %v2228 = vadd.f32 %v1838, %v2182
      %v2229 = vadd.f32 %v1839, %v2187
      %v2230 = vadd.f32 %v1840, %v2192
      %v2231 = vadd.f32 %v1841, %v2197
      %v2232 = vld [vmem:[%s313 + $0x2] sm:$0xff]
      %v2233 = vld [vmem:[%s313 + $0xa] sm:$0xff]
      %v2234 = vld [vmem:[%s313 + $0x1a] sm:$0xff]
      %v2235 = vld [vmem:[%s313 + $0x22] sm:$0xff]
      %v2236 = vld [vmem:[%s313 + $0x32] sm:$0xff]
      %v2237 = vld [vmem:[%s313 + $0x3a] sm:$0xff]
      %v2238 = vld [vmem:[%s313 + $0x4a] sm:$0xff]
      %v2239 = vld [vmem:[%s313 + $0x52] sm:$0xff]
      %v2240 = vld [vmem:[%s313 + $0x62] sm:$0xff]
      %v2241 = vld [vmem:[%s313 + $0x6a] sm:$0xff]
      %v2242 = vld [vmem:[%s313 + $0x7a] sm:$0xff]
      %v2243 = vld [vmem:[%s313 + $0x82] sm:$0xff]
      %v2244 = vld [vmem:[%s313 + $0x92] sm:$0xff]
      %v2245 = vld [vmem:[%s313 + $0x9a] sm:$0xff]
      %v2246 = vld [vmem:[%s313 + $0xaa] sm:$0xff]
      %v2247 = vld [vmem:[%s313 + $0xb2] sm:$0xff]
      %v2248 = vld [vmem:[%s313 + $0xc2] sm:$0xff]
      %v2249 = vld [vmem:[%s313 + $0xca] sm:$0xff]
      %v2250 = vld [vmem:[%s313 + $0xda] sm:$0xff]
      %v2251 = vld [vmem:[%s313 + $0xe2] sm:$0xff]
      %v2252 = vld [vmem:[%s313 + $0xf2] sm:$0xff]
      %v2253 = vld [vmem:[%s313 + $0xfa] sm:$0xff]
      %v2254 = vld [vmem:[%s313 + $0x10a] sm:$0xff]
      %v2255 = vld [vmem:[%s313 + $0x112] sm:$0xff]
      %v2256 = vld [vmem:[%s313 + $0x122] sm:$0xff]
      %v2257 = vld [vmem:[%s313 + $0x12a] sm:$0xff]
      %v2258 = vld [vmem:[%s313 + $0x13a] sm:$0xff]
      %v2259 = vld [vmem:[%s313 + $0x142] sm:$0xff]
      %v2260 = vld [vmem:[%s313 + $0x152] sm:$0xff]
      %v2261 = vld [vmem:[%s313 + $0x15a] sm:$0xff]
      %v2262 = vld [vmem:[%s313 + $0x16a] sm:$0xff]
      %v2263 = vld [vmem:[%s313 + $0x172] sm:$0xff]
      %s2264 = scalar_lea.vmem %s1, 20
      %v2265 = vld [vmem:[%s2264] sm:$0xf]
      %v2267 = vsel %vm225, %v2232, 0
      %v2270 = vsel %vm225, %v2233, 0
      %v2273 = vsel %vm225, %v2234, 0
      %v2276 = vsel %vm225, %v2235, 0
      %v2279 = vsel %vm225, %v2236, 0
      %v2282 = vsel %vm225, %v2237, 0
      %v2285 = vsel %vm225, %v2238, 0
      %v2288 = vsel %vm225, %v2239, 0
      %v2291 = vsel %vm225, %v2240, 0
      %v2294 = vsel %vm225, %v2241, 0
      %v2297 = vsel %vm225, %v2242, 0
      %v2300 = vsel %vm225, %v2243, 0
      %v2303 = vsel %vm225, %v2244, 0
      %v2306 = vsel %vm225, %v2245, 0
      %v2309 = vsel %vm225, %v2246, 0
      %v2312 = vsel %vm225, %v2247, 0
      %v2315 = vsel %vm225, %v2248, 0
      %v2318 = vsel %vm225, %v2249, 0
      %v2321 = vsel %vm225, %v2250, 0
      %v2324 = vsel %vm225, %v2251, 0
      %v2327 = vsel %vm225, %v2252, 0
      %v2330 = vsel %vm225, %v2253, 0
      %v2333 = vsel %vm225, %v2254, 0
      %v2336 = vsel %vm225, %v2255, 0
      %v2339 = vsel %vm225, %v2256, 0
      %v2342 = vsel %vm225, %v2257, 0
      %v2345 = vsel %vm225, %v2258, 0
      %v2348 = vsel %vm225, %v2259, 0
      %v2351 = vsel %vm225, %v2260, 0
      %v2354 = vsel %vm225, %v2261, 0
      %v2357 = vsel %vm225, %v2262, 0
      %v2360 = vsel %vm225, %v2263, 0
      %v2363 = vsel %vm509, %v2265, 0
      %2365 = vmatprep.subr.mxu0 0.0
      %2366 = vmatpush1.msra.mxu0 0.0
      %2367 = vmatprep.subr.mxu0 0.0
      %2368 = vmatpush1.msra.mxu0 0.0
      %2369 = vmatprep.subr.mxu0 0.0
      %2370 = vmatpush1.msra.mxu0 0.0
      %2371 = vmatprep.subr.mxu0 0.0
      %2372 = vmatpush1.msra.mxu0 0.0
      %2373 = vmatprep.subr.mxu0 0.0
      %2374 = vmatpush1.msra.mxu0 0.0
      %2375 = vmatprep.subr.mxu0 0.0
      %2376 = vmatpush1.msra.mxu0 0.0
      %2377 = vmatprep.subr.mxu0 0.0
      %2378 = vmatpush1.msra.mxu0 0.0
      %2379 = vmatprep.subr.mxu0 0.0
      %2380 = vmatpush1.msra.mxu0 0.0
      %2381 = vmatprep.subr.mxu0 0.0
      %2382 = vmatpush1.msra.mxu0 0.0
      %2383 = vmatprep.subr.mxu0 0.0
      %2384 = vmatpush1.msra.mxu0 0.0
      %2385 = vmatprep.subr.mxu0 0.0
      %2386 = vmatpush1.msra.mxu0 0.0
      %2387 = vmatprep.subr.mxu0 0.0
      %2388 = vmatpush1.msra.mxu0 0.0
      %2389 = vmatprep.subr.mxu0 0.0
      %2390 = vmatpush1.msra.mxu0 0.0
      %2391 = vmatprep.subr.mxu0 0.0
      %2392 = vmatpush1.msra.mxu0 0.0
      %2393 = vmatprep.subr.mxu0 0.0
      %2394 = vmatpush1.msra.mxu0 0.0
      %2395 = vmatprep.subr.mxu0 0.0
      %2396 = vmatpush1.msra.mxu0 %v2363
      %2397 = vmatprep.subr.mxu0 0.0
      %2398 = vmatpush2.msra.mxu0 0.0
      %2399 = vmatprep.subr.mxu0 0.0
      %2400 = vmatpush2.msra.mxu0 0.0
      %2401 = vmatprep.subr.mxu0 0.0
      %2402 = vmatpush2.msra.mxu0 0.0
      %2403 = vmatprep.subr.mxu0 0.0
      %2404 = vmatpush2.msra.mxu0 0.0
      %2405 = vmatprep.subr.mxu0 0.0
      %2406 = vmatpush2.msra.mxu0 0.0
      %2407 = vmatprep.subr.mxu0 0.0
      %2408 = vmatpush2.msra.mxu0 0.0
      %2409 = vmatprep.subr.mxu0 0.0
      %2410 = vmatpush2.msra.mxu0 0.0
      %2411 = vmatprep.subr.mxu0 0.0
      %2412 = vmatpush2.msra.mxu0 0.0
      %2413 = vmatprep.subr.mxu0 0.0
      %2414 = vmatpush2.msra.mxu0 0.0
      %2415 = vmatprep.subr.mxu0 0.0
      %2416 = vmatpush2.msra.mxu0 0.0
      %2417 = vmatprep.subr.mxu0 0.0
      %2418 = vmatpush2.msra.mxu0 0.0
      %2419 = vmatprep.subr.mxu0 0.0
      %2420 = vmatpush2.msra.mxu0 0.0
      %2421 = vmatprep.subr.mxu0 0.0
      %2422 = vmatpush2.msra.mxu0 0.0
      %2423 = vmatprep.subr.mxu0 0.0
      %2424 = vmatpush2.msra.mxu0 0.0
      %2425 = vmatprep.subr.mxu0 0.0
      %2426 = vmatpush2.msra.mxu0 0.0
      %2427 = vmatprep.subr.mxu0 0.0
      %2428 = vmatpush2.msra.mxu0 0.0
      %2429 = vmatprep.mubr.f32.mxu0 0.0
      %2430 = vmatmul.mubr.f32.gmra.mxu0 %v2267
      %v2431 = vpop.f32.mrf.mxu0
      %v2432 = vadd.f32 0.0, %v2431
      %v2433 = vpop.f32.mrf.mxu0
      %2434 = vmatprep.mubr.f32.mxu0 0.0
      %2435 = vmatmul.mubr.f32.gmra.mxu0 %v2270
      %v2436 = vpop.f32.mrf.mxu0
      %v2437 = vadd.f32 0.0, %v2436
      %v2438 = vpop.f32.mrf.mxu0
      %2439 = vmatprep.mubr.f32.mxu0 0.0
      %2440 = vmatmul.mubr.f32.gmra.mxu0 %v2273
      %v2441 = vpop.f32.mrf.mxu0
      %v2442 = vadd.f32 0.0, %v2441
      %v2443 = vpop.f32.mrf.mxu0
      %2444 = vmatprep.mubr.f32.mxu0 0.0
      %2445 = vmatmul.mubr.f32.gmra.mxu0 %v2276
      %v2446 = vpop.f32.mrf.mxu0
      %v2447 = vadd.f32 0.0, %v2446
      %v2448 = vpop.f32.mrf.mxu0
      %2449 = vmatprep.mubr.f32.mxu0 0.0
      %2450 = vmatmul.mubr.f32.gmra.mxu0 %v2279
      %v2451 = vpop.f32.mrf.mxu0
      %v2452 = vadd.f32 0.0, %v2451
      %v2453 = vpop.f32.mrf.mxu0
      %2454 = vmatprep.mubr.f32.mxu0 0.0
      %2455 = vmatmul.mubr.f32.gmra.mxu0 %v2282
      %v2456 = vpop.f32.mrf.mxu0
      %v2457 = vadd.f32 0.0, %v2456
      %v2458 = vpop.f32.mrf.mxu0
      %2459 = vmatprep.mubr.f32.mxu0 0.0
      %2460 = vmatmul.mubr.f32.gmra.mxu0 %v2285
      %v2461 = vpop.f32.mrf.mxu0
      %v2462 = vadd.f32 0.0, %v2461
      %v2463 = vpop.f32.mrf.mxu0
      %2464 = vmatprep.mubr.f32.mxu0 0.0
      %2465 = vmatmul.mubr.f32.gmra.mxu0 %v2288
      %v2466 = vpop.f32.mrf.mxu0
      %v2467 = vadd.f32 0.0, %v2466
      %v2468 = vpop.f32.mrf.mxu0
      %2469 = vmatprep.mubr.f32.mxu0 0.0
      %2470 = vmatmul.mubr.f32.gmra.mxu0 %v2291
      %v2471 = vpop.f32.mrf.mxu0
      %v2472 = vadd.f32 0.0, %v2471
      %v2473 = vpop.f32.mrf.mxu0
      %2474 = vmatprep.mubr.f32.mxu0 0.0
      %2475 = vmatmul.mubr.f32.gmra.mxu0 %v2294
      %v2476 = vpop.f32.mrf.mxu0
      %v2477 = vadd.f32 0.0, %v2476
      %v2478 = vpop.f32.mrf.mxu0
      %2479 = vmatprep.mubr.f32.mxu0 0.0
      %2480 = vmatmul.mubr.f32.gmra.mxu0 %v2297
      %v2481 = vpop.f32.mrf.mxu0
      %v2482 = vadd.f32 0.0, %v2481
      %v2483 = vpop.f32.mrf.mxu0
      %2484 = vmatprep.mubr.f32.mxu0 0.0
      %2485 = vmatmul.mubr.f32.gmra.mxu0 %v2300
      %v2486 = vpop.f32.mrf.mxu0
      %v2487 = vadd.f32 0.0, %v2486
      %v2488 = vpop.f32.mrf.mxu0
      %2489 = vmatprep.mubr.f32.mxu0 0.0
      %2490 = vmatmul.mubr.f32.gmra.mxu0 %v2303
      %v2491 = vpop.f32.mrf.mxu0
      %v2492 = vadd.f32 0.0, %v2491
      %v2493 = vpop.f32.mrf.mxu0
      %2494 = vmatprep.mubr.f32.mxu0 0.0
      %2495 = vmatmul.mubr.f32.gmra.mxu0 %v2306
      %v2496 = vpop.f32.mrf.mxu0
      %v2497 = vadd.f32 0.0, %v2496
      %v2498 = vpop.f32.mrf.mxu0
      %2499 = vmatprep.mubr.f32.mxu0 0.0
      %2500 = vmatmul.mubr.f32.gmra.mxu0 %v2309
      %v2501 = vpop.f32.mrf.mxu0
      %v2502 = vadd.f32 0.0, %v2501
      %v2503 = vpop.f32.mrf.mxu0
      %2504 = vmatprep.mubr.f32.mxu0 0.0
      %2505 = vmatmul.mubr.f32.gmra.mxu0 %v2312
      %v2506 = vpop.f32.mrf.mxu0
      %v2507 = vadd.f32 0.0, %v2506
      %v2508 = vpop.f32.mrf.mxu0
      %2509 = vmatprep.mubr.f32.mxu0 0.0
      %2510 = vmatmul.mubr.f32.gmra.mxu0 %v2315
      %v2511 = vpop.f32.mrf.mxu0
      %v2512 = vadd.f32 0.0, %v2511
      %v2513 = vpop.f32.mrf.mxu0
      %2514 = vmatprep.mubr.f32.mxu0 0.0
      %2515 = vmatmul.mubr.f32.gmra.mxu0 %v2318
      %v2516 = vpop.f32.mrf.mxu0
      %v2517 = vadd.f32 0.0, %v2516
      %v2518 = vpop.f32.mrf.mxu0
      %2519 = vmatprep.mubr.f32.mxu0 0.0
      %2520 = vmatmul.mubr.f32.gmra.mxu0 %v2321
      %v2521 = vpop.f32.mrf.mxu0
      %v2522 = vadd.f32 0.0, %v2521
      %v2523 = vpop.f32.mrf.mxu0
      %2524 = vmatprep.mubr.f32.mxu0 0.0
      %2525 = vmatmul.mubr.f32.gmra.mxu0 %v2324
      %v2526 = vpop.f32.mrf.mxu0
      %v2527 = vadd.f32 0.0, %v2526
      %v2528 = vpop.f32.mrf.mxu0
      %2529 = vmatprep.mubr.f32.mxu0 0.0
      %2530 = vmatmul.mubr.f32.gmra.mxu0 %v2327
      %v2531 = vpop.f32.mrf.mxu0
      %v2532 = vadd.f32 0.0, %v2531
      %v2533 = vpop.f32.mrf.mxu0
      %2534 = vmatprep.mubr.f32.mxu0 0.0
      %2535 = vmatmul.mubr.f32.gmra.mxu0 %v2330
      %v2536 = vpop.f32.mrf.mxu0
      %v2537 = vadd.f32 0.0, %v2536
      %v2538 = vpop.f32.mrf.mxu0
      %2539 = vmatprep.mubr.f32.mxu0 0.0
      %2540 = vmatmul.mubr.f32.gmra.mxu0 %v2333
      %v2541 = vpop.f32.mrf.mxu0
      %v2542 = vadd.f32 0.0, %v2541
      %v2543 = vpop.f32.mrf.mxu0
      %2544 = vmatprep.mubr.f32.mxu0 0.0
      %2545 = vmatmul.mubr.f32.gmra.mxu0 %v2336
      %v2546 = vpop.f32.mrf.mxu0
      %v2547 = vadd.f32 0.0, %v2546
      %v2548 = vpop.f32.mrf.mxu0
      %2549 = vmatprep.mubr.f32.mxu0 0.0
      %2550 = vmatmul.mubr.f32.gmra.mxu0 %v2339
      %v2551 = vpop.f32.mrf.mxu0
      %v2552 = vadd.f32 0.0, %v2551
      %v2553 = vpop.f32.mrf.mxu0
      %2554 = vmatprep.mubr.f32.mxu0 0.0
      %2555 = vmatmul.mubr.f32.gmra.mxu0 %v2342
      %v2556 = vpop.f32.mrf.mxu0
      %v2557 = vadd.f32 0.0, %v2556
      %v2558 = vpop.f32.mrf.mxu0
      %2559 = vmatprep.mubr.f32.mxu0 0.0
      %2560 = vmatmul.mubr.f32.gmra.mxu0 %v2345
      %v2561 = vpop.f32.mrf.mxu0
      %v2562 = vadd.f32 0.0, %v2561
      %v2563 = vpop.f32.mrf.mxu0
      %2564 = vmatprep.mubr.f32.mxu0 0.0
      %2565 = vmatmul.mubr.f32.gmra.mxu0 %v2348
      %v2566 = vpop.f32.mrf.mxu0
      %v2567 = vadd.f32 0.0, %v2566
      %v2568 = vpop.f32.mrf.mxu0
      %2569 = vmatprep.mubr.f32.mxu0 0.0
      %2570 = vmatmul.mubr.f32.gmra.mxu0 %v2351
      %v2571 = vpop.f32.mrf.mxu0
      %v2572 = vadd.f32 0.0, %v2571
      %v2573 = vpop.f32.mrf.mxu0
      %2574 = vmatprep.mubr.f32.mxu0 0.0
      %2575 = vmatmul.mubr.f32.gmra.mxu0 %v2354
      %v2576 = vpop.f32.mrf.mxu0
      %v2577 = vadd.f32 0.0, %v2576
      %v2578 = vpop.f32.mrf.mxu0
      %2579 = vmatprep.mubr.f32.mxu0 0.0
      %2580 = vmatmul.mubr.f32.gmra.mxu0 %v2357
      %v2581 = vpop.f32.mrf.mxu0
      %v2582 = vadd.f32 0.0, %v2581
      %v2583 = vpop.f32.mrf.mxu0
      %2584 = vmatprep.mubr.f32.mxu0 0.0
      %2585 = vmatmul.mubr.f32.gmra.mxu0 %v2360
      %v2586 = vpop.f32.mrf.mxu0
      %v2587 = vadd.f32 0.0, %v2586
      %v2588 = vpop.f32.mrf.mxu0
      %2589 = vdwg.mxu0
      %v2590 = vadd.f32 %v2200, %v2432
      %v2591 = vadd.f32 %v2201, %v2437
      %v2592 = vadd.f32 %v2202, %v2442
      %v2593 = vadd.f32 %v2203, %v2447
      %v2594 = vadd.f32 %v2204, %v2452
      %v2595 = vadd.f32 %v2205, %v2457
      %v2596 = vadd.f32 %v2206, %v2462
      %v2597 = vadd.f32 %v2207, %v2467
      %v2598 = vadd.f32 %v2208, %v2472
      %v2599 = vadd.f32 %v2209, %v2477
      %v2600 = vadd.f32 %v2210, %v2482
      %v2601 = vadd.f32 %v2211, %v2487
      %v2602 = vadd.f32 %v2212, %v2492
      %v2603 = vadd.f32 %v2213, %v2497
      %v2604 = vadd.f32 %v2214, %v2502
      %v2605 = vadd.f32 %v2215, %v2507
      %v2606 = vadd.f32 %v2216, %v2512
      %v2607 = vadd.f32 %v2217, %v2517
      %v2608 = vadd.f32 %v2218, %v2522
      %v2609 = vadd.f32 %v2219, %v2527
      %v2610 = vadd.f32 %v2220, %v2532
      %v2611 = vadd.f32 %v2221, %v2537
      %v2612 = vadd.f32 %v2222, %v2542
      %v2613 = vadd.f32 %v2223, %v2547
      %v2614 = vadd.f32 %v2224, %v2552
      %v2615 = vadd.f32 %v2225, %v2557
      %v2616 = vadd.f32 %v2226, %v2562
      %v2617 = vadd.f32 %v2227, %v2567
      %v2618 = vadd.f32 %v2228, %v2572
      %v2619 = vadd.f32 %v2229, %v2577
      %v2620 = vadd.f32 %v2230, %v2582
      %v2621 = vadd.f32 %v2231, %v2587
      %s2622 = scalar_lea.vmem [#allocation2], 48
      %v2623 = vld [vmem:[%s2622] sm:$0xff]
      %v2624 = vld [vmem:[%s2622 + $0x8] sm:$0xff]
      %v2625 = vld [vmem:[%s2622 + $0x18] sm:$0xff]
      %v2626 = vld [vmem:[%s2622 + $0x20] sm:$0xff]
      %v2627 = vld [vmem:[%s2622 + $0x30] sm:$0xff]
      %v2628 = vld [vmem:[%s2622 + $0x38] sm:$0xff]
      %v2629 = vld [vmem:[%s2622 + $0x48] sm:$0xff]
      %v2630 = vld [vmem:[%s2622 + $0x50] sm:$0xff]
      %v2631 = vld [vmem:[%s2622 + $0x60] sm:$0xff]
      %v2632 = vld [vmem:[%s2622 + $0x68] sm:$0xff]
      %v2633 = vld [vmem:[%s2622 + $0x78] sm:$0xff]
      %v2634 = vld [vmem:[%s2622 + $0x80] sm:$0xff]
      %v2635 = vld [vmem:[%s2622 + $0x90] sm:$0xff]
      %v2636 = vld [vmem:[%s2622 + $0x98] sm:$0xff]
      %v2637 = vld [vmem:[%s2622 + $0xa8] sm:$0xff]
      %v2638 = vld [vmem:[%s2622 + $0xb0] sm:$0xff]
      %v2639 = vld [vmem:[%s2622 + $0xc0] sm:$0xff]
      %v2640 = vld [vmem:[%s2622 + $0xc8] sm:$0xff]
      %v2641 = vld [vmem:[%s2622 + $0xd8] sm:$0xff]
      %v2642 = vld [vmem:[%s2622 + $0xe0] sm:$0xff]
      %v2643 = vld [vmem:[%s2622 + $0xf0] sm:$0xff]
      %v2644 = vld [vmem:[%s2622 + $0xf8] sm:$0xff]
      %v2645 = vld [vmem:[%s2622 + $0x108] sm:$0xff]
      %v2646 = vld [vmem:[%s2622 + $0x110] sm:$0xff]
      %v2647 = vld [vmem:[%s2622 + $0x120] sm:$0xff]
      %v2648 = vld [vmem:[%s2622 + $0x128] sm:$0xff]
      %v2649 = vld [vmem:[%s2622 + $0x138] sm:$0xff]
      %v2650 = vld [vmem:[%s2622 + $0x140] sm:$0xff]
      %v2651 = vld [vmem:[%s2622 + $0x150] sm:$0xff]
      %v2652 = vld [vmem:[%s2622 + $0x158] sm:$0xff]
      %v2653 = vld [vmem:[%s2622 + $0x168] sm:$0xff]
      %v2654 = vld [vmem:[%s2622 + $0x170] sm:$0xff]
      %s2655 = scalar_lea.vmem %s1, 24
      %v2656 = vld [vmem:[%s2655] sm:$0xf]
      %v2658 = vsel %vm225, %v2623, 0
      %v2661 = vsel %vm225, %v2624, 0
      %v2664 = vsel %vm225, %v2625, 0
      %v2667 = vsel %vm225, %v2626, 0
      %v2670 = vsel %vm225, %v2627, 0
      %v2673 = vsel %vm225, %v2628, 0
      %v2676 = vsel %vm225, %v2629, 0
      %v2679 = vsel %vm225, %v2630, 0
      %v2682 = vsel %vm225, %v2631, 0
      %v2685 = vsel %vm225, %v2632, 0
      %v2688 = vsel %vm225, %v2633, 0
      %v2691 = vsel %vm225, %v2634, 0
      %v2694 = vsel %vm225, %v2635, 0
      %v2697 = vsel %vm225, %v2636, 0
      %v2700 = vsel %vm225, %v2637, 0
      %v2703 = vsel %vm225, %v2638, 0
      %v2706 = vsel %vm225, %v2639, 0
      %v2709 = vsel %vm225, %v2640, 0
      %v2712 = vsel %vm225, %v2641, 0
      %v2715 = vsel %vm225, %v2642, 0
      %v2718 = vsel %vm225, %v2643, 0
      %v2721 = vsel %vm225, %v2644, 0
      %v2724 = vsel %vm225, %v2645, 0
      %v2727 = vsel %vm225, %v2646, 0
      %v2730 = vsel %vm225, %v2647, 0
      %v2733 = vsel %vm225, %v2648, 0
      %v2736 = vsel %vm225, %v2649, 0
      %v2739 = vsel %vm225, %v2650, 0
      %v2742 = vsel %vm225, %v2651, 0
      %v2745 = vsel %vm225, %v2652, 0
      %v2748 = vsel %vm225, %v2653, 0
      %v2751 = vsel %vm225, %v2654, 0
      %v2754 = vsel %vm509, %v2656, 0
      %2756 = vmatprep.subr.mxu0 0.0
      %2757 = vmatpush1.msra.mxu0 0.0
      %2758 = vmatprep.subr.mxu0 0.0
      %2759 = vmatpush1.msra.mxu0 0.0
      %2760 = vmatprep.subr.mxu0 0.0
      %2761 = vmatpush1.msra.mxu0 0.0
      %2762 = vmatprep.subr.mxu0 0.0
      %2763 = vmatpush1.msra.mxu0 0.0
      %2764 = vmatprep.subr.mxu0 0.0
      %2765 = vmatpush1.msra.mxu0 0.0
      %2766 = vmatprep.subr.mxu0 0.0
      %2767 = vmatpush1.msra.mxu0 0.0
      %2768 = vmatprep.subr.mxu0 0.0
      %2769 = vmatpush1.msra.mxu0 0.0
      %2770 = vmatprep.subr.mxu0 0.0
      %2771 = vmatpush1.msra.mxu0 0.0
      %2772 = vmatprep.subr.mxu0 0.0
      %2773 = vmatpush1.msra.mxu0 0.0
      %2774 = vmatprep.subr.mxu0 0.0
      %2775 = vmatpush1.msra.mxu0 0.0
      %2776 = vmatprep.subr.mxu0 0.0
      %2777 = vmatpush1.msra.mxu0 0.0
      %2778 = vmatprep.subr.mxu0 0.0
      %2779 = vmatpush1.msra.mxu0 0.0
      %2780 = vmatprep.subr.mxu0 0.0
      %2781 = vmatpush1.msra.mxu0 0.0
      %2782 = vmatprep.subr.mxu0 0.0
      %2783 = vmatpush1.msra.mxu0 0.0
      %2784 = vmatprep.subr.mxu0 0.0
      %2785 = vmatpush1.msra.mxu0 0.0
      %2786 = vmatprep.subr.mxu0 0.0
      %2787 = vmatpush1.msra.mxu0 %v2754
      %2788 = vmatprep.subr.mxu0 0.0
      %2789 = vmatpush2.msra.mxu0 0.0
      %2790 = vmatprep.subr.mxu0 0.0
      %2791 = vmatpush2.msra.mxu0 0.0
      %2792 = vmatprep.subr.mxu0 0.0
      %2793 = vmatpush2.msra.mxu0 0.0
      %2794 = vmatprep.subr.mxu0 0.0
      %2795 = vmatpush2.msra.mxu0 0.0
      %2796 = vmatprep.subr.mxu0 0.0
      %2797 = vmatpush2.msra.mxu0 0.0
      %2798 = vmatprep.subr.mxu0 0.0
      %2799 = vmatpush2.msra.mxu0 0.0
      %2800 = vmatprep.subr.mxu0 0.0
      %2801 = vmatpush2.msra.mxu0 0.0
      %2802 = vmatprep.subr.mxu0 0.0
      %2803 = vmatpush2.msra.mxu0 0.0
      %2804 = vmatprep.subr.mxu0 0.0
      %2805 = vmatpush2.msra.mxu0 0.0
      %2806 = vmatprep.subr.mxu0 0.0
      %2807 = vmatpush2.msra.mxu0 0.0
      %2808 = vmatprep.subr.mxu0 0.0
      %2809 = vmatpush2.msra.mxu0 0.0
      %2810 = vmatprep.subr.mxu0 0.0
      %2811 = vmatpush2.msra.mxu0 0.0
      %2812 = vmatprep.subr.mxu0 0.0
      %2813 = vmatpush2.msra.mxu0 0.0
      %2814 = vmatprep.subr.mxu0 0.0
      %2815 = vmatpush2.msra.mxu0 0.0
      %2816 = vmatprep.subr.mxu0 0.0
      %2817 = vmatpush2.msra.mxu0 0.0
      %2818 = vmatprep.subr.mxu0 0.0
      %2819 = vmatpush2.msra.mxu0 0.0
      %2820 = vmatprep.mubr.f32.mxu0 0.0
      %2821 = vmatmul.mubr.f32.gmra.mxu0 %v2658
      %v2822 = vpop.f32.mrf.mxu0
      %v2823 = vadd.f32 0.0, %v2822
      %v2824 = vpop.f32.mrf.mxu0
      %2825 = vmatprep.mubr.f32.mxu0 0.0
      %2826 = vmatmul.mubr.f32.gmra.mxu0 %v2661
      %v2827 = vpop.f32.mrf.mxu0
      %v2828 = vadd.f32 0.0, %v2827
      %v2829 = vpop.f32.mrf.mxu0
      %2830 = vmatprep.mubr.f32.mxu0 0.0
      %2831 = vmatmul.mubr.f32.gmra.mxu0 %v2664
      %v2832 = vpop.f32.mrf.mxu0
      %v2833 = vadd.f32 0.0, %v2832
      %v2834 = vpop.f32.mrf.mxu0
      %2835 = vmatprep.mubr.f32.mxu0 0.0
      %2836 = vmatmul.mubr.f32.gmra.mxu0 %v2667
      %v2837 = vpop.f32.mrf.mxu0
      %v2838 = vadd.f32 0.0, %v2837
      %v2839 = vpop.f32.mrf.mxu0
      %2840 = vmatprep.mubr.f32.mxu0 0.0
      %2841 = vmatmul.mubr.f32.gmra.mxu0 %v2670
      %v2842 = vpop.f32.mrf.mxu0
      %v2843 = vadd.f32 0.0, %v2842
      %v2844 = vpop.f32.mrf.mxu0
      %2845 = vmatprep.mubr.f32.mxu0 0.0
      %2846 = vmatmul.mubr.f32.gmra.mxu0 %v2673
      %v2847 = vpop.f32.mrf.mxu0
      %v2848 = vadd.f32 0.0, %v2847
      %v2849 = vpop.f32.mrf.mxu0
      %2850 = vmatprep.mubr.f32.mxu0 0.0
      %2851 = vmatmul.mubr.f32.gmra.mxu0 %v2676
      %v2852 = vpop.f32.mrf.mxu0
      %v2853 = vadd.f32 0.0, %v2852
      %v2854 = vpop.f32.mrf.mxu0
      %2855 = vmatprep.mubr.f32.mxu0 0.0
      %2856 = vmatmul.mubr.f32.gmra.mxu0 %v2679
      %v2857 = vpop.f32.mrf.mxu0
      %v2858 = vadd.f32 0.0, %v2857
      %v2859 = vpop.f32.mrf.mxu0
      %2860 = vmatprep.mubr.f32.mxu0 0.0
      %2861 = vmatmul.mubr.f32.gmra.mxu0 %v2682
      %v2862 = vpop.f32.mrf.mxu0
      %v2863 = vadd.f32 0.0, %v2862
      %v2864 = vpop.f32.mrf.mxu0
      %2865 = vmatprep.mubr.f32.mxu0 0.0
      %2866 = vmatmul.mubr.f32.gmra.mxu0 %v2685
      %v2867 = vpop.f32.mrf.mxu0
      %v2868 = vadd.f32 0.0, %v2867
      %v2869 = vpop.f32.mrf.mxu0
      %2870 = vmatprep.mubr.f32.mxu0 0.0
      %2871 = vmatmul.mubr.f32.gmra.mxu0 %v2688
      %v2872 = vpop.f32.mrf.mxu0
      %v2873 = vadd.f32 0.0, %v2872
      %v2874 = vpop.f32.mrf.mxu0
      %2875 = vmatprep.mubr.f32.mxu0 0.0
      %2876 = vmatmul.mubr.f32.gmra.mxu0 %v2691
      %v2877 = vpop.f32.mrf.mxu0
      %v2878 = vadd.f32 0.0, %v2877
      %v2879 = vpop.f32.mrf.mxu0
      %2880 = vmatprep.mubr.f32.mxu0 0.0
      %2881 = vmatmul.mubr.f32.gmra.mxu0 %v2694
      %v2882 = vpop.f32.mrf.mxu0
      %v2883 = vadd.f32 0.0, %v2882
      %v2884 = vpop.f32.mrf.mxu0
      %2885 = vmatprep.mubr.f32.mxu0 0.0
      %2886 = vmatmul.mubr.f32.gmra.mxu0 %v2697
      %v2887 = vpop.f32.mrf.mxu0
      %v2888 = vadd.f32 0.0, %v2887
      %v2889 = vpop.f32.mrf.mxu0
      %2890 = vmatprep.mubr.f32.mxu0 0.0
      %2891 = vmatmul.mubr.f32.gmra.mxu0 %v2700
      %v2892 = vpop.f32.mrf.mxu0
      %v2893 = vadd.f32 0.0, %v2892
      %v2894 = vpop.f32.mrf.mxu0
      %2895 = vmatprep.mubr.f32.mxu0 0.0
      %2896 = vmatmul.mubr.f32.gmra.mxu0 %v2703
      %v2897 = vpop.f32.mrf.mxu0
      %v2898 = vadd.f32 0.0, %v2897
      %v2899 = vpop.f32.mrf.mxu0
      %2900 = vmatprep.mubr.f32.mxu0 0.0
      %2901 = vmatmul.mubr.f32.gmra.mxu0 %v2706
      %v2902 = vpop.f32.mrf.mxu0
      %v2903 = vadd.f32 0.0, %v2902
      %v2904 = vpop.f32.mrf.mxu0
      %2905 = vmatprep.mubr.f32.mxu0 0.0
      %2906 = vmatmul.mubr.f32.gmra.mxu0 %v2709
      %v2907 = vpop.f32.mrf.mxu0
      %v2908 = vadd.f32 0.0, %v2907
      %v2909 = vpop.f32.mrf.mxu0
      %2910 = vmatprep.mubr.f32.mxu0 0.0
      %2911 = vmatmul.mubr.f32.gmra.mxu0 %v2712
      %v2912 = vpop.f32.mrf.mxu0
      %v2913 = vadd.f32 0.0, %v2912
      %v2914 = vpop.f32.mrf.mxu0
      %2915 = vmatprep.mubr.f32.mxu0 0.0
      %2916 = vmatmul.mubr.f32.gmra.mxu0 %v2715
      %v2917 = vpop.f32.mrf.mxu0
      %v2918 = vadd.f32 0.0, %v2917
      %v2919 = vpop.f32.mrf.mxu0
      %2920 = vmatprep.mubr.f32.mxu0 0.0
      %2921 = vmatmul.mubr.f32.gmra.mxu0 %v2718
      %v2922 = vpop.f32.mrf.mxu0
      %v2923 = vadd.f32 0.0, %v2922
      %v2924 = vpop.f32.mrf.mxu0
      %2925 = vmatprep.mubr.f32.mxu0 0.0
      %2926 = vmatmul.mubr.f32.gmra.mxu0 %v2721
      %v2927 = vpop.f32.mrf.mxu0
      %v2928 = vadd.f32 0.0, %v2927
      %v2929 = vpop.f32.mrf.mxu0
      %2930 = vmatprep.mubr.f32.mxu0 0.0
      %2931 = vmatmul.mubr.f32.gmra.mxu0 %v2724
      %v2932 = vpop.f32.mrf.mxu0
      %v2933 = vadd.f32 0.0, %v2932
      %v2934 = vpop.f32.mrf.mxu0
      %2935 = vmatprep.mubr.f32.mxu0 0.0
      %2936 = vmatmul.mubr.f32.gmra.mxu0 %v2727
      %v2937 = vpop.f32.mrf.mxu0
      %v2938 = vadd.f32 0.0, %v2937
      %v2939 = vpop.f32.mrf.mxu0
      %2940 = vmatprep.mubr.f32.mxu0 0.0
      %2941 = vmatmul.mubr.f32.gmra.mxu0 %v2730
      %v2942 = vpop.f32.mrf.mxu0
      %v2943 = vadd.f32 0.0, %v2942
      %v2944 = vpop.f32.mrf.mxu0
      %2945 = vmatprep.mubr.f32.mxu0 0.0
      %2946 = vmatmul.mubr.f32.gmra.mxu0 %v2733
      %v2947 = vpop.f32.mrf.mxu0
      %v2948 = vadd.f32 0.0, %v2947
      %v2949 = vpop.f32.mrf.mxu0
      %2950 = vmatprep.mubr.f32.mxu0 0.0
      %2951 = vmatmul.mubr.f32.gmra.mxu0 %v2736
      %v2952 = vpop.f32.mrf.mxu0
      %v2953 = vadd.f32 0.0, %v2952
      %v2954 = vpop.f32.mrf.mxu0
      %2955 = vmatprep.mubr.f32.mxu0 0.0
      %2956 = vmatmul.mubr.f32.gmra.mxu0 %v2739
      %v2957 = vpop.f32.mrf.mxu0
      %v2958 = vadd.f32 0.0, %v2957
      %v2959 = vpop.f32.mrf.mxu0
      %2960 = vmatprep.mubr.f32.mxu0 0.0
      %2961 = vmatmul.mubr.f32.gmra.mxu0 %v2742
      %v2962 = vpop.f32.mrf.mxu0
      %v2963 = vadd.f32 0.0, %v2962
      %v2964 = vpop.f32.mrf.mxu0
      %2965 = vmatprep.mubr.f32.mxu0 0.0
      %2966 = vmatmul.mubr.f32.gmra.mxu0 %v2745
      %v2967 = vpop.f32.mrf.mxu0
      %v2968 = vadd.f32 0.0, %v2967
      %v2969 = vpop.f32.mrf.mxu0
      %2970 = vmatprep.mubr.f32.mxu0 0.0
      %2971 = vmatmul.mubr.f32.gmra.mxu0 %v2748
      %v2972 = vpop.f32.mrf.mxu0
      %v2973 = vadd.f32 0.0, %v2972
      %v2974 = vpop.f32.mrf.mxu0
      %2975 = vmatprep.mubr.f32.mxu0 0.0
      %2976 = vmatmul.mubr.f32.gmra.mxu0 %v2751
      %v2977 = vpop.f32.mrf.mxu0
      %v2978 = vadd.f32 0.0, %v2977
      %v2979 = vpop.f32.mrf.mxu0
      %2980 = vdwg.mxu0
      %v2981 = vadd.f32 %v2590, %v2823
      %v2982 = vadd.f32 %v2591, %v2828
      %v2983 = vadd.f32 %v2592, %v2833
      %v2984 = vadd.f32 %v2593, %v2838
      %v2985 = vadd.f32 %v2594, %v2843
      %v2986 = vadd.f32 %v2595, %v2848
      %v2987 = vadd.f32 %v2596, %v2853
      %v2988 = vadd.f32 %v2597, %v2858
      %v2989 = vadd.f32 %v2598, %v2863
      %v2990 = vadd.f32 %v2599, %v2868
      %v2991 = vadd.f32 %v2600, %v2873
      %v2992 = vadd.f32 %v2601, %v2878
      %v2993 = vadd.f32 %v2602, %v2883
      %v2994 = vadd.f32 %v2603, %v2888
      %v2995 = vadd.f32 %v2604, %v2893
      %v2996 = vadd.f32 %v2605, %v2898
      %v2997 = vadd.f32 %v2606, %v2903
      %v2998 = vadd.f32 %v2607, %v2908
      %v2999 = vadd.f32 %v2608, %v2913
      %v3000 = vadd.f32 %v2609, %v2918
      %v3001 = vadd.f32 %v2610, %v2923
      %v3002 = vadd.f32 %v2611, %v2928
      %v3003 = vadd.f32 %v2612, %v2933
      %v3004 = vadd.f32 %v2613, %v2938
      %v3005 = vadd.f32 %v2614, %v2943
      %v3006 = vadd.f32 %v2615, %v2948
      %v3007 = vadd.f32 %v2616, %v2953
      %v3008 = vadd.f32 %v2617, %v2958
      %v3009 = vadd.f32 %v2618, %v2963
      %v3010 = vadd.f32 %v2619, %v2968
      %v3011 = vadd.f32 %v2620, %v2973
      %v3012 = vadd.f32 %v2621, %v2978
      %v3013 = vld [vmem:[%s2622 + $0x1] sm:$0xff]
      %v3014 = vld [vmem:[%s2622 + $0x9] sm:$0xff]
      %v3015 = vld [vmem:[%s2622 + $0x19] sm:$0xff]
      %v3016 = vld [vmem:[%s2622 + $0x21] sm:$0xff]
      %v3017 = vld [vmem:[%s2622 + $0x31] sm:$0xff]
      %v3018 = vld [vmem:[%s2622 + $0x39] sm:$0xff]
      %v3019 = vld [vmem:[%s2622 + $0x49] sm:$0xff]
      %v3020 = vld [vmem:[%s2622 + $0x51] sm:$0xff]
      %v3021 = vld [vmem:[%s2622 + $0x61] sm:$0xff]
      %v3022 = vld [vmem:[%s2622 + $0x69] sm:$0xff]
      %v3023 = vld [vmem:[%s2622 + $0x79] sm:$0xff]
      %v3024 = vld [vmem:[%s2622 + $0x81] sm:$0xff]
      %v3025 = vld [vmem:[%s2622 + $0x91] sm:$0xff]
      %v3026 = vld [vmem:[%s2622 + $0x99] sm:$0xff]
      %v3027 = vld [vmem:[%s2622 + $0xa9] sm:$0xff]
      %v3028 = vld [vmem:[%s2622 + $0xb1] sm:$0xff]
      %v3029 = vld [vmem:[%s2622 + $0xc1] sm:$0xff]
      %v3030 = vld [vmem:[%s2622 + $0xc9] sm:$0xff]
      %v3031 = vld [vmem:[%s2622 + $0xd9] sm:$0xff]
      %v3032 = vld [vmem:[%s2622 + $0xe1] sm:$0xff]
      %v3033 = vld [vmem:[%s2622 + $0xf1] sm:$0xff]
      %v3034 = vld [vmem:[%s2622 + $0xf9] sm:$0xff]
      %v3035 = vld [vmem:[%s2622 + $0x109] sm:$0xff]
      %v3036 = vld [vmem:[%s2622 + $0x111] sm:$0xff]
      %v3037 = vld [vmem:[%s2622 + $0x121] sm:$0xff]
      %v3038 = vld [vmem:[%s2622 + $0x129] sm:$0xff]
      %v3039 = vld [vmem:[%s2622 + $0x139] sm:$0xff]
      %v3040 = vld [vmem:[%s2622 + $0x141] sm:$0xff]
      %v3041 = vld [vmem:[%s2622 + $0x151] sm:$0xff]
      %v3042 = vld [vmem:[%s2622 + $0x159] sm:$0xff]
      %v3043 = vld [vmem:[%s2622 + $0x169] sm:$0xff]
      %v3044 = vld [vmem:[%s2622 + $0x171] sm:$0xff]
      %s3045 = scalar_lea.vmem %s1, 28
      %v3046 = vld [vmem:[%s3045] sm:$0xf]
      %v3048 = vsel %vm225, %v3013, 0
      %v3051 = vsel %vm225, %v3014, 0
      %v3054 = vsel %vm225, %v3015, 0
      %v3057 = vsel %vm225, %v3016, 0
      %v3060 = vsel %vm225, %v3017, 0
      %v3063 = vsel %vm225, %v3018, 0
      %v3066 = vsel %vm225, %v3019, 0
      %v3069 = vsel %vm225, %v3020, 0
      %v3072 = vsel %vm225, %v3021, 0
      %v3075 = vsel %vm225, %v3022, 0
      %v3078 = vsel %vm225, %v3023, 0
      %v3081 = vsel %vm225, %v3024, 0
      %v3084 = vsel %vm225, %v3025, 0
      %v3087 = vsel %vm225, %v3026, 0
      %v3090 = vsel %vm225, %v3027, 0
      %v3093 = vsel %vm225, %v3028, 0
      %v3096 = vsel %vm225, %v3029, 0
      %v3099 = vsel %vm225, %v3030, 0
      %v3102 = vsel %vm225, %v3031, 0
      %v3105 = vsel %vm225, %v3032, 0
      %v3108 = vsel %vm225, %v3033, 0
      %v3111 = vsel %vm225, %v3034, 0
      %v3114 = vsel %vm225, %v3035, 0
      %v3117 = vsel %vm225, %v3036, 0
      %v3120 = vsel %vm225, %v3037, 0
      %v3123 = vsel %vm225, %v3038, 0
      %v3126 = vsel %vm225, %v3039, 0
      %v3129 = vsel %vm225, %v3040, 0
      %v3132 = vsel %vm225, %v3041, 0
      %v3135 = vsel %vm225, %v3042, 0
      %v3138 = vsel %vm225, %v3043, 0
      %v3141 = vsel %vm225, %v3044, 0
      %v3144 = vsel %vm509, %v3046, 0
      %3146 = vmatprep.subr.mxu0 0.0
      %3147 = vmatpush1.msra.mxu0 0.0
      %3148 = vmatprep.subr.mxu0 0.0
      %3149 = vmatpush1.msra.mxu0 0.0
      %3150 = vmatprep.subr.mxu0 0.0
      %3151 = vmatpush1.msra.mxu0 0.0
      %3152 = vmatprep.subr.mxu0 0.0
      %3153 = vmatpush1.msra.mxu0 0.0
      %3154 = vmatprep.subr.mxu0 0.0
      %3155 = vmatpush1.msra.mxu0 0.0
      %3156 = vmatprep.subr.mxu0 0.0
      %3157 = vmatpush1.msra.mxu0 0.0
      %3158 = vmatprep.subr.mxu0 0.0
      %3159 = vmatpush1.msra.mxu0 0.0
      %3160 = vmatprep.subr.mxu0 0.0
      %3161 = vmatpush1.msra.mxu0 0.0
      %3162 = vmatprep.subr.mxu0 0.0
      %3163 = vmatpush1.msra.mxu0 0.0
      %3164 = vmatprep.subr.mxu0 0.0
      %3165 = vmatpush1.msra.mxu0 0.0
      %3166 = vmatprep.subr.mxu0 0.0
      %3167 = vmatpush1.msra.mxu0 0.0
      %3168 = vmatprep.subr.mxu0 0.0
      %3169 = vmatpush1.msra.mxu0 0.0
      %3170 = vmatprep.subr.mxu0 0.0
      %3171 = vmatpush1.msra.mxu0 0.0
      %3172 = vmatprep.subr.mxu0 0.0
      %3173 = vmatpush1.msra.mxu0 0.0
      %3174 = vmatprep.subr.mxu0 0.0
      %3175 = vmatpush1.msra.mxu0 0.0
      %3176 = vmatprep.subr.mxu0 0.0
      %3177 = vmatpush1.msra.mxu0 %v3144
      %3178 = vmatprep.subr.mxu0 0.0
      %3179 = vmatpush2.msra.mxu0 0.0
      %3180 = vmatprep.subr.mxu0 0.0
      %3181 = vmatpush2.msra.mxu0 0.0
      %3182 = vmatprep.subr.mxu0 0.0
      %3183 = vmatpush2.msra.mxu0 0.0
      %3184 = vmatprep.subr.mxu0 0.0
      %3185 = vmatpush2.msra.mxu0 0.0
      %3186 = vmatprep.subr.mxu0 0.0
      %3187 = vmatpush2.msra.mxu0 0.0
      %3188 = vmatprep.subr.mxu0 0.0
      %3189 = vmatpush2.msra.mxu0 0.0
      %3190 = vmatprep.subr.mxu0 0.0
      %3191 = vmatpush2.msra.mxu0 0.0
      %3192 = vmatprep.subr.mxu0 0.0
      %3193 = vmatpush2.msra.mxu0 0.0
      %3194 = vmatprep.subr.mxu0 0.0
      %3195 = vmatpush2.msra.mxu0 0.0
      %3196 = vmatprep.subr.mxu0 0.0
      %3197 = vmatpush2.msra.mxu0 0.0
      %3198 = vmatprep.subr.mxu0 0.0
      %3199 = vmatpush2.msra.mxu0 0.0
      %3200 = vmatprep.subr.mxu0 0.0
      %3201 = vmatpush2.msra.mxu0 0.0
      %3202 = vmatprep.subr.mxu0 0.0
      %3203 = vmatpush2.msra.mxu0 0.0
      %3204 = vmatprep.subr.mxu0 0.0
      %3205 = vmatpush2.msra.mxu0 0.0
      %3206 = vmatprep.subr.mxu0 0.0
      %3207 = vmatpush2.msra.mxu0 0.0
      %3208 = vmatprep.subr.mxu0 0.0
      %3209 = vmatpush2.msra.mxu0 0.0
      %3210 = vmatprep.mubr.f32.mxu0 0.0
      %3211 = vmatmul.mubr.f32.gmra.mxu0 %v3048
      %v3212 = vpop.f32.mrf.mxu0
      %v3213 = vadd.f32 0.0, %v3212
      %v3214 = vpop.f32.mrf.mxu0
      %3215 = vmatprep.mubr.f32.mxu0 0.0
      %3216 = vmatmul.mubr.f32.gmra.mxu0 %v3051
      %v3217 = vpop.f32.mrf.mxu0
      %v3218 = vadd.f32 0.0, %v3217
      %v3219 = vpop.f32.mrf.mxu0
      %3220 = vmatprep.mubr.f32.mxu0 0.0
      %3221 = vmatmul.mubr.f32.gmra.mxu0 %v3054
      %v3222 = vpop.f32.mrf.mxu0
      %v3223 = vadd.f32 0.0, %v3222
      %v3224 = vpop.f32.mrf.mxu0
      %3225 = vmatprep.mubr.f32.mxu0 0.0
      %3226 = vmatmul.mubr.f32.gmra.mxu0 %v3057
      %v3227 = vpop.f32.mrf.mxu0
      %v3228 = vadd.f32 0.0, %v3227
      %v3229 = vpop.f32.mrf.mxu0
      %3230 = vmatprep.mubr.f32.mxu0 0.0
      %3231 = vmatmul.mubr.f32.gmra.mxu0 %v3060
      %v3232 = vpop.f32.mrf.mxu0
      %v3233 = vadd.f32 0.0, %v3232
      %v3234 = vpop.f32.mrf.mxu0
      %3235 = vmatprep.mubr.f32.mxu0 0.0
      %3236 = vmatmul.mubr.f32.gmra.mxu0 %v3063
      %v3237 = vpop.f32.mrf.mxu0
      %v3238 = vadd.f32 0.0, %v3237
      %v3239 = vpop.f32.mrf.mxu0
      %3240 = vmatprep.mubr.f32.mxu0 0.0
      %3241 = vmatmul.mubr.f32.gmra.mxu0 %v3066
      %v3242 = vpop.f32.mrf.mxu0
      %v3243 = vadd.f32 0.0, %v3242
      %v3244 = vpop.f32.mrf.mxu0
      %3245 = vmatprep.mubr.f32.mxu0 0.0
      %3246 = vmatmul.mubr.f32.gmra.mxu0 %v3069
      %v3247 = vpop.f32.mrf.mxu0
      %v3248 = vadd.f32 0.0, %v3247
      %v3249 = vpop.f32.mrf.mxu0
      %3250 = vmatprep.mubr.f32.mxu0 0.0
      %3251 = vmatmul.mubr.f32.gmra.mxu0 %v3072
      %v3252 = vpop.f32.mrf.mxu0
      %v3253 = vadd.f32 0.0, %v3252
      %v3254 = vpop.f32.mrf.mxu0
      %3255 = vmatprep.mubr.f32.mxu0 0.0
      %3256 = vmatmul.mubr.f32.gmra.mxu0 %v3075
      %v3257 = vpop.f32.mrf.mxu0
      %v3258 = vadd.f32 0.0, %v3257
      %v3259 = vpop.f32.mrf.mxu0
      %3260 = vmatprep.mubr.f32.mxu0 0.0
      %3261 = vmatmul.mubr.f32.gmra.mxu0 %v3078
      %v3262 = vpop.f32.mrf.mxu0
      %v3263 = vadd.f32 0.0, %v3262
      %v3264 = vpop.f32.mrf.mxu0
      %3265 = vmatprep.mubr.f32.mxu0 0.0
      %3266 = vmatmul.mubr.f32.gmra.mxu0 %v3081
      %v3267 = vpop.f32.mrf.mxu0
      %v3268 = vadd.f32 0.0, %v3267
      %v3269 = vpop.f32.mrf.mxu0
      %3270 = vmatprep.mubr.f32.mxu0 0.0
      %3271 = vmatmul.mubr.f32.gmra.mxu0 %v3084
      %v3272 = vpop.f32.mrf.mxu0
      %v3273 = vadd.f32 0.0, %v3272
      %v3274 = vpop.f32.mrf.mxu0
      %3275 = vmatprep.mubr.f32.mxu0 0.0
      %3276 = vmatmul.mubr.f32.gmra.mxu0 %v3087
      %v3277 = vpop.f32.mrf.mxu0
      %v3278 = vadd.f32 0.0, %v3277
      %v3279 = vpop.f32.mrf.mxu0
      %3280 = vmatprep.mubr.f32.mxu0 0.0
      %3281 = vmatmul.mubr.f32.gmra.mxu0 %v3090
      %v3282 = vpop.f32.mrf.mxu0
      %v3283 = vadd.f32 0.0, %v3282
      %v3284 = vpop.f32.mrf.mxu0
      %3285 = vmatprep.mubr.f32.mxu0 0.0
      %3286 = vmatmul.mubr.f32.gmra.mxu0 %v3093
      %v3287 = vpop.f32.mrf.mxu0
      %v3288 = vadd.f32 0.0, %v3287
      %v3289 = vpop.f32.mrf.mxu0
      %3290 = vmatprep.mubr.f32.mxu0 0.0
      %3291 = vmatmul.mubr.f32.gmra.mxu0 %v3096
      %v3292 = vpop.f32.mrf.mxu0
      %v3293 = vadd.f32 0.0, %v3292
      %v3294 = vpop.f32.mrf.mxu0
      %3295 = vmatprep.mubr.f32.mxu0 0.0
      %3296 = vmatmul.mubr.f32.gmra.mxu0 %v3099
      %v3297 = vpop.f32.mrf.mxu0
      %v3298 = vadd.f32 0.0, %v3297
      %v3299 = vpop.f32.mrf.mxu0
      %3300 = vmatprep.mubr.f32.mxu0 0.0
      %3301 = vmatmul.mubr.f32.gmra.mxu0 %v3102
      %v3302 = vpop.f32.mrf.mxu0
      %v3303 = vadd.f32 0.0, %v3302
      %v3304 = vpop.f32.mrf.mxu0
      %3305 = vmatprep.mubr.f32.mxu0 0.0
      %3306 = vmatmul.mubr.f32.gmra.mxu0 %v3105
      %v3307 = vpop.f32.mrf.mxu0
      %v3308 = vadd.f32 0.0, %v3307
      %v3309 = vpop.f32.mrf.mxu0
      %3310 = vmatprep.mubr.f32.mxu0 0.0
      %3311 = vmatmul.mubr.f32.gmra.mxu0 %v3108
      %v3312 = vpop.f32.mrf.mxu0
      %v3313 = vadd.f32 0.0, %v3312
      %v3314 = vpop.f32.mrf.mxu0
      %3315 = vmatprep.mubr.f32.mxu0 0.0
      %3316 = vmatmul.mubr.f32.gmra.mxu0 %v3111
      %v3317 = vpop.f32.mrf.mxu0
      %v3318 = vadd.f32 0.0, %v3317
      %v3319 = vpop.f32.mrf.mxu0
      %3320 = vmatprep.mubr.f32.mxu0 0.0
      %3321 = vmatmul.mubr.f32.gmra.mxu0 %v3114
      %v3322 = vpop.f32.mrf.mxu0
      %v3323 = vadd.f32 0.0, %v3322
      %v3324 = vpop.f32.mrf.mxu0
      %3325 = vmatprep.mubr.f32.mxu0 0.0
      %3326 = vmatmul.mubr.f32.gmra.mxu0 %v3117
      %v3327 = vpop.f32.mrf.mxu0
      %v3328 = vadd.f32 0.0, %v3327
      %v3329 = vpop.f32.mrf.mxu0
      %3330 = vmatprep.mubr.f32.mxu0 0.0
      %3331 = vmatmul.mubr.f32.gmra.mxu0 %v3120
      %v3332 = vpop.f32.mrf.mxu0
      %v3333 = vadd.f32 0.0, %v3332
      %v3334 = vpop.f32.mrf.mxu0
      %3335 = vmatprep.mubr.f32.mxu0 0.0
      %3336 = vmatmul.mubr.f32.gmra.mxu0 %v3123
      %v3337 = vpop.f32.mrf.mxu0
      %v3338 = vadd.f32 0.0, %v3337
      %v3339 = vpop.f32.mrf.mxu0
      %3340 = vmatprep.mubr.f32.mxu0 0.0
      %3341 = vmatmul.mubr.f32.gmra.mxu0 %v3126
      %v3342 = vpop.f32.mrf.mxu0
      %v3343 = vadd.f32 0.0, %v3342
      %v3344 = vpop.f32.mrf.mxu0
      %3345 = vmatprep.mubr.f32.mxu0 0.0
      %3346 = vmatmul.mubr.f32.gmra.mxu0 %v3129
      %v3347 = vpop.f32.mrf.mxu0
      %v3348 = vadd.f32 0.0, %v3347
      %v3349 = vpop.f32.mrf.mxu0
      %3350 = vmatprep.mubr.f32.mxu0 0.0
      %3351 = vmatmul.mubr.f32.gmra.mxu0 %v3132
      %v3352 = vpop.f32.mrf.mxu0
      %v3353 = vadd.f32 0.0, %v3352
      %v3354 = vpop.f32.mrf.mxu0
      %3355 = vmatprep.mubr.f32.mxu0 0.0
      %3356 = vmatmul.mubr.f32.gmra.mxu0 %v3135
      %v3357 = vpop.f32.mrf.mxu0
      %v3358 = vadd.f32 0.0, %v3357
      %v3359 = vpop.f32.mrf.mxu0
      %3360 = vmatprep.mubr.f32.mxu0 0.0
      %3361 = vmatmul.mubr.f32.gmra.mxu0 %v3138
      %v3362 = vpop.f32.mrf.mxu0
      %v3363 = vadd.f32 0.0, %v3362
      %v3364 = vpop.f32.mrf.mxu0
      %3365 = vmatprep.mubr.f32.mxu0 0.0
      %3366 = vmatmul.mubr.f32.gmra.mxu0 %v3141
      %v3367 = vpop.f32.mrf.mxu0
      %v3368 = vadd.f32 0.0, %v3367
      %v3369 = vpop.f32.mrf.mxu0
      %3370 = vdwg.mxu0
      %v3371 = vadd.f32 %v2981, %v3213
      %v3372 = vadd.f32 %v2982, %v3218
      %v3373 = vadd.f32 %v2983, %v3223
      %v3374 = vadd.f32 %v2984, %v3228
      %v3375 = vadd.f32 %v2985, %v3233
      %v3376 = vadd.f32 %v2986, %v3238
      %v3377 = vadd.f32 %v2987, %v3243
      %v3378 = vadd.f32 %v2988, %v3248
      %v3379 = vadd.f32 %v2989, %v3253
      %v3380 = vadd.f32 %v2990, %v3258
      %v3381 = vadd.f32 %v2991, %v3263
      %v3382 = vadd.f32 %v2992, %v3268
      %v3383 = vadd.f32 %v2993, %v3273
      %v3384 = vadd.f32 %v2994, %v3278
      %v3385 = vadd.f32 %v2995, %v3283
      %v3386 = vadd.f32 %v2996, %v3288
      %v3387 = vadd.f32 %v2997, %v3293
      %v3388 = vadd.f32 %v2998, %v3298
      %v3389 = vadd.f32 %v2999, %v3303
      %v3390 = vadd.f32 %v3000, %v3308
      %v3391 = vadd.f32 %v3001, %v3313
      %v3392 = vadd.f32 %v3002, %v3318
      %v3393 = vadd.f32 %v3003, %v3323
      %v3394 = vadd.f32 %v3004, %v3328
      %v3395 = vadd.f32 %v3005, %v3333
      %v3396 = vadd.f32 %v3006, %v3338
      %v3397 = vadd.f32 %v3007, %v3343
      %v3398 = vadd.f32 %v3008, %v3348
      %v3399 = vadd.f32 %v3009, %v3353
      %v3400 = vadd.f32 %v3010, %v3358
      %v3401 = vadd.f32 %v3011, %v3363
      %v3402 = vadd.f32 %v3012, %v3368
      %v3403 = vld [vmem:[%s2622 + $0x2] sm:$0xff]
      %v3404 = vld [vmem:[%s2622 + $0xa] sm:$0xff]
      %v3405 = vld [vmem:[%s2622 + $0x1a] sm:$0xff]
      %v3406 = vld [vmem:[%s2622 + $0x22] sm:$0xff]
      %v3407 = vld [vmem:[%s2622 + $0x32] sm:$0xff]
      %v3408 = vld [vmem:[%s2622 + $0x3a] sm:$0xff]
      %v3409 = vld [vmem:[%s2622 + $0x4a] sm:$0xff]
      %v3410 = vld [vmem:[%s2622 + $0x52] sm:$0xff]
      %v3411 = vld [vmem:[%s2622 + $0x62] sm:$0xff]
      %v3412 = vld [vmem:[%s2622 + $0x6a] sm:$0xff]
      %v3413 = vld [vmem:[%s2622 + $0x7a] sm:$0xff]
      %v3414 = vld [vmem:[%s2622 + $0x82] sm:$0xff]
      %v3415 = vld [vmem:[%s2622 + $0x92] sm:$0xff]
      %v3416 = vld [vmem:[%s2622 + $0x9a] sm:$0xff]
      %v3417 = vld [vmem:[%s2622 + $0xaa] sm:$0xff]
      %v3418 = vld [vmem:[%s2622 + $0xb2] sm:$0xff]
      %v3419 = vld [vmem:[%s2622 + $0xc2] sm:$0xff]
      %v3420 = vld [vmem:[%s2622 + $0xca] sm:$0xff]
      %v3421 = vld [vmem:[%s2622 + $0xda] sm:$0xff]
      %v3422 = vld [vmem:[%s2622 + $0xe2] sm:$0xff]
      %v3423 = vld [vmem:[%s2622 + $0xf2] sm:$0xff]
      %v3424 = vld [vmem:[%s2622 + $0xfa] sm:$0xff]
      %v3425 = vld [vmem:[%s2622 + $0x10a] sm:$0xff]
      %v3426 = vld [vmem:[%s2622 + $0x112] sm:$0xff]
      %v3427 = vld [vmem:[%s2622 + $0x122] sm:$0xff]
      %v3428 = vld [vmem:[%s2622 + $0x12a] sm:$0xff]
      %v3429 = vld [vmem:[%s2622 + $0x13a] sm:$0xff]
      %v3430 = vld [vmem:[%s2622 + $0x142] sm:$0xff]
      %v3431 = vld [vmem:[%s2622 + $0x152] sm:$0xff]
      %v3432 = vld [vmem:[%s2622 + $0x15a] sm:$0xff]
      %v3433 = vld [vmem:[%s2622 + $0x16a] sm:$0xff]
      %v3434 = vld [vmem:[%s2622 + $0x172] sm:$0xff]
      %s3435 = scalar_lea.vmem %s1, 32
      %v3436 = vld [vmem:[%s3435] sm:$0xf]
      %v3438 = vsel %vm225, %v3403, 0
      %v3441 = vsel %vm225, %v3404, 0
      %v3444 = vsel %vm225, %v3405, 0
      %v3447 = vsel %vm225, %v3406, 0
      %v3450 = vsel %vm225, %v3407, 0
      %v3453 = vsel %vm225, %v3408, 0
      %v3456 = vsel %vm225, %v3409, 0
      %v3459 = vsel %vm225, %v3410, 0
      %v3462 = vsel %vm225, %v3411, 0
      %v3465 = vsel %vm225, %v3412, 0
      %v3468 = vsel %vm225, %v3413, 0
      %v3471 = vsel %vm225, %v3414, 0
      %v3474 = vsel %vm225, %v3415, 0
      %v3477 = vsel %vm225, %v3416, 0
      %v3480 = vsel %vm225, %v3417, 0
      %v3483 = vsel %vm225, %v3418, 0
      %v3486 = vsel %vm225, %v3419, 0
      %v3489 = vsel %vm225, %v3420, 0
      %v3492 = vsel %vm225, %v3421, 0
      %v3495 = vsel %vm225, %v3422, 0
      %v3498 = vsel %vm225, %v3423, 0
      %v3501 = vsel %vm225, %v3424, 0
      %v3504 = vsel %vm225, %v3425, 0
      %v3507 = vsel %vm225, %v3426, 0
      %v3510 = vsel %vm225, %v3427, 0
      %v3513 = vsel %vm225, %v3428, 0
      %v3516 = vsel %vm225, %v3429, 0
      %v3519 = vsel %vm225, %v3430, 0
      %v3522 = vsel %vm225, %v3431, 0
      %v3525 = vsel %vm225, %v3432, 0
      %v3528 = vsel %vm225, %v3433, 0
      %v3531 = vsel %vm225, %v3434, 0
      %v3534 = vsel %vm509, %v3436, 0
      %3536 = vmatprep.subr.mxu0 0.0
      %3537 = vmatpush1.msra.mxu0 0.0
      %3538 = vmatprep.subr.mxu0 0.0
      %3539 = vmatpush1.msra.mxu0 0.0
      %3540 = vmatprep.subr.mxu0 0.0
      %3541 = vmatpush1.msra.mxu0 0.0
      %3542 = vmatprep.subr.mxu0 0.0
      %3543 = vmatpush1.msra.mxu0 0.0
      %3544 = vmatprep.subr.mxu0 0.0
      %3545 = vmatpush1.msra.mxu0 0.0
      %3546 = vmatprep.subr.mxu0 0.0
      %3547 = vmatpush1.msra.mxu0 0.0
      %3548 = vmatprep.subr.mxu0 0.0
      %3549 = vmatpush1.msra.mxu0 0.0
      %3550 = vmatprep.subr.mxu0 0.0
      %3551 = vmatpush1.msra.mxu0 0.0
      %3552 = vmatprep.subr.mxu0 0.0
      %3553 = vmatpush1.msra.mxu0 0.0
      %3554 = vmatprep.subr.mxu0 0.0
      %3555 = vmatpush1.msra.mxu0 0.0
      %3556 = vmatprep.subr.mxu0 0.0
      %3557 = vmatpush1.msra.mxu0 0.0
      %3558 = vmatprep.subr.mxu0 0.0
      %3559 = vmatpush1.msra.mxu0 0.0
      %3560 = vmatprep.subr.mxu0 0.0
      %3561 = vmatpush1.msra.mxu0 0.0
      %3562 = vmatprep.subr.mxu0 0.0
      %3563 = vmatpush1.msra.mxu0 0.0
      %3564 = vmatprep.subr.mxu0 0.0
      %3565 = vmatpush1.msra.mxu0 0.0
      %3566 = vmatprep.subr.mxu0 0.0
      %3567 = vmatpush1.msra.mxu0 %v3534
      %3568 = vmatprep.subr.mxu0 0.0
      %3569 = vmatpush2.msra.mxu0 0.0
      %3570 = vmatprep.subr.mxu0 0.0
      %3571 = vmatpush2.msra.mxu0 0.0
      %3572 = vmatprep.subr.mxu0 0.0
      %3573 = vmatpush2.msra.mxu0 0.0
      %3574 = vmatprep.subr.mxu0 0.0
      %3575 = vmatpush2.msra.mxu0 0.0
      %3576 = vmatprep.subr.mxu0 0.0
      %3577 = vmatpush2.msra.mxu0 0.0
      %3578 = vmatprep.subr.mxu0 0.0
      %3579 = vmatpush2.msra.mxu0 0.0
      %3580 = vmatprep.subr.mxu0 0.0
      %3581 = vmatpush2.msra.mxu0 0.0
      %3582 = vmatprep.subr.mxu0 0.0
      %3583 = vmatpush2.msra.mxu0 0.0
      %3584 = vmatprep.subr.mxu0 0.0
      %3585 = vmatpush2.msra.mxu0 0.0
      %3586 = vmatprep.subr.mxu0 0.0
      %3587 = vmatpush2.msra.mxu0 0.0
      %3588 = vmatprep.subr.mxu0 0.0
      %3589 = vmatpush2.msra.mxu0 0.0
      %3590 = vmatprep.subr.mxu0 0.0
      %3591 = vmatpush2.msra.mxu0 0.0
      %3592 = vmatprep.subr.mxu0 0.0
      %3593 = vmatpush2.msra.mxu0 0.0
      %3594 = vmatprep.subr.mxu0 0.0
      %3595 = vmatpush2.msra.mxu0 0.0
      %3596 = vmatprep.subr.mxu0 0.0
      %3597 = vmatpush2.msra.mxu0 0.0
      %3598 = vmatprep.subr.mxu0 0.0
      %3599 = vmatpush2.msra.mxu0 0.0
      %3600 = vmatprep.mubr.f32.mxu0 0.0
      %3601 = vmatmul.mubr.f32.gmra.mxu0 %v3438
      %v3602 = vpop.f32.mrf.mxu0
      %v3603 = vadd.f32 0.0, %v3602
      %v3604 = vpop.f32.mrf.mxu0
      %3605 = vmatprep.mubr.f32.mxu0 0.0
      %3606 = vmatmul.mubr.f32.gmra.mxu0 %v3441
      %v3607 = vpop.f32.mrf.mxu0
      %v3608 = vadd.f32 0.0, %v3607
      %v3609 = vpop.f32.mrf.mxu0
      %3610 = vmatprep.mubr.f32.mxu0 0.0
      %3611 = vmatmul.mubr.f32.gmra.mxu0 %v3444
      %v3612 = vpop.f32.mrf.mxu0
      %v3613 = vadd.f32 0.0, %v3612
      %v3614 = vpop.f32.mrf.mxu0
      %3615 = vmatprep.mubr.f32.mxu0 0.0
      %3616 = vmatmul.mubr.f32.gmra.mxu0 %v3447
      %v3617 = vpop.f32.mrf.mxu0
      %v3618 = vadd.f32 0.0, %v3617
      %v3619 = vpop.f32.mrf.mxu0
      %3620 = vmatprep.mubr.f32.mxu0 0.0
      %3621 = vmatmul.mubr.f32.gmra.mxu0 %v3450
      %v3622 = vpop.f32.mrf.mxu0
      %v3623 = vadd.f32 0.0, %v3622
      %v3624 = vpop.f32.mrf.mxu0
      %3625 = vmatprep.mubr.f32.mxu0 0.0
      %3626 = vmatmul.mubr.f32.gmra.mxu0 %v3453
      %v3627 = vpop.f32.mrf.mxu0
      %v3628 = vadd.f32 0.0, %v3627
      %v3629 = vpop.f32.mrf.mxu0
      %3630 = vmatprep.mubr.f32.mxu0 0.0
      %3631 = vmatmul.mubr.f32.gmra.mxu0 %v3456
      %v3632 = vpop.f32.mrf.mxu0
      %v3633 = vadd.f32 0.0, %v3632
      %v3634 = vpop.f32.mrf.mxu0
      %3635 = vmatprep.mubr.f32.mxu0 0.0
      %3636 = vmatmul.mubr.f32.gmra.mxu0 %v3459
      %v3637 = vpop.f32.mrf.mxu0
      %v3638 = vadd.f32 0.0, %v3637
      %v3639 = vpop.f32.mrf.mxu0
      %3640 = vmatprep.mubr.f32.mxu0 0.0
      %3641 = vmatmul.mubr.f32.gmra.mxu0 %v3462
      %v3642 = vpop.f32.mrf.mxu0
      %v3643 = vadd.f32 0.0, %v3642
      %v3644 = vpop.f32.mrf.mxu0
      %3645 = vmatprep.mubr.f32.mxu0 0.0
      %3646 = vmatmul.mubr.f32.gmra.mxu0 %v3465
      %v3647 = vpop.f32.mrf.mxu0
      %v3648 = vadd.f32 0.0, %v3647
      %v3649 = vpop.f32.mrf.mxu0
      %3650 = vmatprep.mubr.f32.mxu0 0.0
      %3651 = vmatmul.mubr.f32.gmra.mxu0 %v3468
      %v3652 = vpop.f32.mrf.mxu0
      %v3653 = vadd.f32 0.0, %v3652
      %v3654 = vpop.f32.mrf.mxu0
      %3655 = vmatprep.mubr.f32.mxu0 0.0
      %3656 = vmatmul.mubr.f32.gmra.mxu0 %v3471
      %v3657 = vpop.f32.mrf.mxu0
      %v3658 = vadd.f32 0.0, %v3657
      %v3659 = vpop.f32.mrf.mxu0
      %3660 = vmatprep.mubr.f32.mxu0 0.0
      %3661 = vmatmul.mubr.f32.gmra.mxu0 %v3474
      %v3662 = vpop.f32.mrf.mxu0
      %v3663 = vadd.f32 0.0, %v3662
      %v3664 = vpop.f32.mrf.mxu0
      %3665 = vmatprep.mubr.f32.mxu0 0.0
      %3666 = vmatmul.mubr.f32.gmra.mxu0 %v3477
      %v3667 = vpop.f32.mrf.mxu0
      %v3668 = vadd.f32 0.0, %v3667
      %v3669 = vpop.f32.mrf.mxu0
      %3670 = vmatprep.mubr.f32.mxu0 0.0
      %3671 = vmatmul.mubr.f32.gmra.mxu0 %v3480
      %v3672 = vpop.f32.mrf.mxu0
      %v3673 = vadd.f32 0.0, %v3672
      %v3674 = vpop.f32.mrf.mxu0
      %3675 = vmatprep.mubr.f32.mxu0 0.0
      %3676 = vmatmul.mubr.f32.gmra.mxu0 %v3483
      %v3677 = vpop.f32.mrf.mxu0
      %v3678 = vadd.f32 0.0, %v3677
      %v3679 = vpop.f32.mrf.mxu0
      %3680 = vmatprep.mubr.f32.mxu0 0.0
      %3681 = vmatmul.mubr.f32.gmra.mxu0 %v3486
      %v3682 = vpop.f32.mrf.mxu0
      %v3683 = vadd.f32 0.0, %v3682
      %v3684 = vpop.f32.mrf.mxu0
      %3685 = vmatprep.mubr.f32.mxu0 0.0
      %3686 = vmatmul.mubr.f32.gmra.mxu0 %v3489
      %v3687 = vpop.f32.mrf.mxu0
      %v3688 = vadd.f32 0.0, %v3687
      %v3689 = vpop.f32.mrf.mxu0
      %3690 = vmatprep.mubr.f32.mxu0 0.0
      %3691 = vmatmul.mubr.f32.gmra.mxu0 %v3492
      %v3692 = vpop.f32.mrf.mxu0
      %v3693 = vadd.f32 0.0, %v3692
      %v3694 = vpop.f32.mrf.mxu0
      %3695 = vmatprep.mubr.f32.mxu0 0.0
      %3696 = vmatmul.mubr.f32.gmra.mxu0 %v3495
      %v3697 = vpop.f32.mrf.mxu0
      %v3698 = vadd.f32 0.0, %v3697
      %v3699 = vpop.f32.mrf.mxu0
      %3700 = vmatprep.mubr.f32.mxu0 0.0
      %3701 = vmatmul.mubr.f32.gmra.mxu0 %v3498
      %v3702 = vpop.f32.mrf.mxu0
      %v3703 = vadd.f32 0.0, %v3702
      %v3704 = vpop.f32.mrf.mxu0
      %3705 = vmatprep.mubr.f32.mxu0 0.0
      %3706 = vmatmul.mubr.f32.gmra.mxu0 %v3501
      %v3707 = vpop.f32.mrf.mxu0
      %v3708 = vadd.f32 0.0, %v3707
      %v3709 = vpop.f32.mrf.mxu0
      %3710 = vmatprep.mubr.f32.mxu0 0.0
      %3711 = vmatmul.mubr.f32.gmra.mxu0 %v3504
      %v3712 = vpop.f32.mrf.mxu0
      %v3713 = vadd.f32 0.0, %v3712
      %v3714 = vpop.f32.mrf.mxu0
      %3715 = vmatprep.mubr.f32.mxu0 0.0
      %3716 = vmatmul.mubr.f32.gmra.mxu0 %v3507
      %v3717 = vpop.f32.mrf.mxu0
      %v3718 = vadd.f32 0.0, %v3717
      %v3719 = vpop.f32.mrf.mxu0
      %3720 = vmatprep.mubr.f32.mxu0 0.0
      %3721 = vmatmul.mubr.f32.gmra.mxu0 %v3510
      %v3722 = vpop.f32.mrf.mxu0
      %v3723 = vadd.f32 0.0, %v3722
      %v3724 = vpop.f32.mrf.mxu0
      %3725 = vmatprep.mubr.f32.mxu0 0.0
      %3726 = vmatmul.mubr.f32.gmra.mxu0 %v3513
      %v3727 = vpop.f32.mrf.mxu0
      %v3728 = vadd.f32 0.0, %v3727
      %v3729 = vpop.f32.mrf.mxu0
      %3730 = vmatprep.mubr.f32.mxu0 0.0
      %3731 = vmatmul.mubr.f32.gmra.mxu0 %v3516
      %v3732 = vpop.f32.mrf.mxu0
      %v3733 = vadd.f32 0.0, %v3732
      %v3734 = vpop.f32.mrf.mxu0
      %3735 = vmatprep.mubr.f32.mxu0 0.0
      %3736 = vmatmul.mubr.f32.gmra.mxu0 %v3519
      %v3737 = vpop.f32.mrf.mxu0
      %v3738 = vadd.f32 0.0, %v3737
      %v3739 = vpop.f32.mrf.mxu0
      %3740 = vmatprep.mubr.f32.mxu0 0.0
      %3741 = vmatmul.mubr.f32.gmra.mxu0 %v3522
      %v3742 = vpop.f32.mrf.mxu0
      %v3743 = vadd.f32 0.0, %v3742
      %v3744 = vpop.f32.mrf.mxu0
      %3745 = vmatprep.mubr.f32.mxu0 0.0
      %3746 = vmatmul.mubr.f32.gmra.mxu0 %v3525
      %v3747 = vpop.f32.mrf.mxu0
      %v3748 = vadd.f32 0.0, %v3747
      %v3749 = vpop.f32.mrf.mxu0
      %3750 = vmatprep.mubr.f32.mxu0 0.0
      %3751 = vmatmul.mubr.f32.gmra.mxu0 %v3528
      %v3752 = vpop.f32.mrf.mxu0
      %v3753 = vadd.f32 0.0, %v3752
      %v3754 = vpop.f32.mrf.mxu0
      %3755 = vmatprep.mubr.f32.mxu0 0.0
      %3756 = vmatmul.mubr.f32.gmra.mxu0 %v3531
      %v3757 = vpop.f32.mrf.mxu0
      %v3758 = vadd.f32 0.0, %v3757
      %v3759 = vpop.f32.mrf.mxu0
      %3760 = vdwg.mxu0
      %v3761 = vadd.f32 %v3371, %v3603
      %v3762 = vadd.f32 %v3372, %v3608
      %v3763 = vadd.f32 %v3373, %v3613
      %v3764 = vadd.f32 %v3374, %v3618
      %v3765 = vadd.f32 %v3375, %v3623
      %v3766 = vadd.f32 %v3376, %v3628
      %v3767 = vadd.f32 %v3377, %v3633
      %v3768 = vadd.f32 %v3378, %v3638
      %v3769 = vadd.f32 %v3379, %v3643
      %v3770 = vadd.f32 %v3380, %v3648
      %v3771 = vadd.f32 %v3381, %v3653
      %v3772 = vadd.f32 %v3382, %v3658
      %v3773 = vadd.f32 %v3383, %v3663
      %v3774 = vadd.f32 %v3384, %v3668
      %v3775 = vadd.f32 %v3385, %v3673
      %v3776 = vadd.f32 %v3386, %v3678
      %v3777 = vadd.f32 %v3387, %v3683
      %v3778 = vadd.f32 %v3388, %v3688
      %v3779 = vadd.f32 %v3389, %v3693
      %v3780 = vadd.f32 %v3390, %v3698
      %v3781 = vadd.f32 %v3391, %v3703
      %v3782 = vadd.f32 %v3392, %v3708
      %v3783 = vadd.f32 %v3393, %v3713
      %v3784 = vadd.f32 %v3394, %v3718
      %v3785 = vadd.f32 %v3395, %v3723
      %v3786 = vadd.f32 %v3396, %v3728
      %v3787 = vadd.f32 %v3397, %v3733
      %v3788 = vadd.f32 %v3398, %v3738
      %v3789 = vadd.f32 %v3399, %v3743
      %v3790 = vadd.f32 %v3400, %v3748
      %v3791 = vadd.f32 %v3401, %v3753
      %v3792 = vadd.f32 %v3402, %v3758
      %v3793 = vld [vmem:[%s2] sm:$0x1]
      %v3795 = vlaneseq
      %v3796 = vshrl.u32 %v3795, 7
      %v3797 = vsub.s32 0, %v3796
      %v3798 = vrot.slane %v3793, %v3797
      %v3800 = vadd.f32 %v3761, %v3798
      %v3801 = vadd.f32 %v3762, %v3798
      %v3802 = vadd.f32 %v3763, %v3798
      %v3803 = vadd.f32 %v3764, %v3798
      %v3804 = vadd.f32 %v3765, %v3798
      %v3805 = vadd.f32 %v3766, %v3798
      %v3806 = vadd.f32 %v3767, %v3798
      %v3807 = vadd.f32 %v3768, %v3798
      %v3808 = vadd.f32 %v3769, %v3798
      %v3809 = vadd.f32 %v3770, %v3798
      %v3810 = vadd.f32 %v3771, %v3798
      %v3811 = vadd.f32 %v3772, %v3798
      %v3812 = vadd.f32 %v3773, %v3798
      %v3813 = vadd.f32 %v3774, %v3798
      %v3814 = vadd.f32 %v3775, %v3798
      %v3815 = vadd.f32 %v3776, %v3798
      %v3816 = vadd.f32 %v3777, %v3798
      %v3817 = vadd.f32 %v3778, %v3798
      %v3818 = vadd.f32 %v3779, %v3798
      %v3819 = vadd.f32 %v3780, %v3798
      %v3820 = vadd.f32 %v3781, %v3798
      %v3821 = vadd.f32 %v3782, %v3798
      %v3822 = vadd.f32 %v3783, %v3798
      %v3823 = vadd.f32 %v3784, %v3798
      %v3824 = vadd.f32 %v3785, %v3798
      %v3825 = vadd.f32 %v3786, %v3798
      %v3826 = vadd.f32 %v3787, %v3798
      %v3827 = vadd.f32 %v3788, %v3798
      %v3828 = vadd.f32 %v3789, %v3798
      %v3829 = vadd.f32 %v3790, %v3798
      %v3830 = vadd.f32 %v3791, %v3798
      %v3831 = vadd.f32 %v3792, %v3798
      %v3832 = vmax.f32 %v3800, 0.0
      %v3833 = vmax.f32 %v3801, 0.0
      %v3834 = vmax.f32 %v3802, 0.0
      %v3835 = vmax.f32 %v3803, 0.0
      %v3836 = vmax.f32 %v3804, 0.0
      %v3837 = vmax.f32 %v3805, 0.0
      %v3838 = vmax.f32 %v3806, 0.0
      %v3839 = vmax.f32 %v3807, 0.0
      %v3840 = vmax.f32 %v3808, 0.0
      %v3841 = vmax.f32 %v3809, 0.0
      %v3842 = vmax.f32 %v3810, 0.0
      %v3843 = vmax.f32 %v3811, 0.0
      %v3844 = vmax.f32 %v3812, 0.0
      %v3845 = vmax.f32 %v3813, 0.0
      %v3846 = vmax.f32 %v3814, 0.0
      %v3847 = vmax.f32 %v3815, 0.0
      %v3848 = vmax.f32 %v3816, 0.0
      %v3849 = vmax.f32 %v3817, 0.0
      %v3850 = vmax.f32 %v3818, 0.0
      %v3851 = vmax.f32 %v3819, 0.0
      %v3852 = vmax.f32 %v3820, 0.0
      %v3853 = vmax.f32 %v3821, 0.0
      %v3854 = vmax.f32 %v3822, 0.0
      %v3855 = vmax.f32 %v3823, 0.0
      %v3856 = vmax.f32 %v3824, 0.0
      %v3857 = vmax.f32 %v3825, 0.0
      %v3858 = vmax.f32 %v3826, 0.0
      %v3859 = vmax.f32 %v3827, 0.0
      %v3860 = vmax.f32 %v3828, 0.0
      %v3861 = vmax.f32 %v3829, 0.0
      %v3862 = vmax.f32 %v3830, 0.0
      %v3863 = vmax.f32 %v3831, 0.0
      %3864 = vst.msk [vmem:[#allocation3] sm:$0xff] %vm225, 0.0
      %3865 = vst.msk [vmem:[#allocation3 + $0x8] sm:$0xff] %vm225, 0.0
      %3866 = vst.msk [vmem:[#allocation3 + $0x10] sm:$0x3] %vm228, 0.0
      %3867 = vst.msk [vmem:[#allocation3 + $0x18] sm:$0xff] %vm225, 0.0
      %3868 = vst.msk [vmem:[#allocation3 + $0x20] sm:$0xff] %vm225, 0.0
      %3869 = vst.msk [vmem:[#allocation3 + $0x28] sm:$0x3] %vm228, 0.0
      %3870 = vst.msk [vmem:[#allocation3 + $0x30] sm:$0xff] %vm225, 0.0
      %3871 = vst.msk [vmem:[#allocation3 + $0x38] sm:$0xff] %vm225, 0.0
      %3872 = vst.msk [vmem:[#allocation3 + $0x40] sm:$0x3] %vm228, 0.0
      %3873 = vst.msk [vmem:[#allocation3 + $0x48] sm:$0xff] %vm225, 0.0
      %3874 = vst.msk [vmem:[#allocation3 + $0x50] sm:$0xff] %vm225, 0.0
      %3875 = vst.msk [vmem:[#allocation3 + $0x58] sm:$0x3] %vm228, 0.0
      %3876 = vst.msk [vmem:[#allocation3 + $0x60] sm:$0xff] %vm225, 0.0
      %3877 = vst.msk [vmem:[#allocation3 + $0x68] sm:$0xff] %vm225, 0.0
      %3878 = vst.msk [vmem:[#allocation3 + $0x70] sm:$0x3] %vm228, 0.0
      %3879 = vst.msk [vmem:[#allocation3 + $0x78] sm:$0xff] %vm225, 0.0
      %3880 = vst.msk [vmem:[#allocation3 + $0x80] sm:$0xff] %vm225, 0.0
      %3881 = vst.msk [vmem:[#allocation3 + $0x88] sm:$0x3] %vm228, 0.0
      %3882 = vst.msk [vmem:[#allocation3 + $0x90] sm:$0xff] %vm225, 0.0
      %3883 = vst.msk [vmem:[#allocation3 + $0x98] sm:$0xff] %vm225, 0.0
      %3884 = vst.msk [vmem:[#allocation3 + $0xa0] sm:$0x3] %vm228, 0.0
      %3885 = vst.msk [vmem:[#allocation3 + $0xa8] sm:$0xff] %vm225, 0.0
      %3886 = vst.msk [vmem:[#allocation3 + $0xb0] sm:$0xff] %vm225, 0.0
      %3887 = vst.msk [vmem:[#allocation3 + $0xb8] sm:$0x3] %vm228, 0.0
      %3888 = vst.msk [vmem:[#allocation3 + $0xc0] sm:$0xff] %vm225, 0.0
      %3889 = vst.msk [vmem:[#allocation3 + $0xc8] sm:$0xff] %vm225, 0.0
      %3890 = vst.msk [vmem:[#allocation3 + $0xd0] sm:$0x3] %vm228, 0.0
      %3891 = vst.msk [vmem:[#allocation3 + $0xd8] sm:$0xff] %vm225, 0.0
      %3892 = vst.msk [vmem:[#allocation3 + $0xe0] sm:$0xff] %vm225, 0.0
      %3893 = vst.msk [vmem:[#allocation3 + $0xe8] sm:$0x3] %vm228, 0.0
      %3894 = vst.msk [vmem:[#allocation3 + $0xf0] sm:$0xff] %vm225, 0.0
      %3895 = vst.msk [vmem:[#allocation3 + $0xf8] sm:$0xff] %vm225, 0.0
      %3896 = vst.msk [vmem:[#allocation3 + $0x100] sm:$0x3] %vm228, 0.0
      %3897 = vst.msk [vmem:[#allocation3 + $0x108] sm:$0xff] %vm225, 0.0
      %3898 = vst.msk [vmem:[#allocation3 + $0x110] sm:$0xff] %vm225, 0.0
      %3899 = vst.msk [vmem:[#allocation3 + $0x118] sm:$0x3] %vm228, 0.0
      %3900 = vst.msk [vmem:[#allocation3 + $0x120] sm:$0xff] %vm225, 0.0
      %3901 = vst.msk [vmem:[#allocation3 + $0x128] sm:$0xff] %vm225, 0.0
      %3902 = vst.msk [vmem:[#allocation3 + $0x130] sm:$0x3] %vm228, 0.0
      %3903 = vst.msk [vmem:[#allocation3 + $0x138] sm:$0xff] %vm225, 0.0
      %3904 = vst.msk [vmem:[#allocation3 + $0x140] sm:$0xff] %vm225, 0.0
      %3905 = vst.msk [vmem:[#allocation3 + $0x148] sm:$0x3] %vm228, 0.0
      %3906 = vst.msk [vmem:[#allocation3 + $0x150] sm:$0xff] %vm225, 0.0
      %3907 = vst.msk [vmem:[#allocation3 + $0x158] sm:$0xff] %vm225, 0.0
      %3908 = vst.msk [vmem:[#allocation3 + $0x160] sm:$0x3] %vm228, 0.0
      %3909 = vst.msk [vmem:[#allocation3 + $0x168] sm:$0xff] %vm225, 0.0
      %3910 = vst.msk [vmem:[#allocation3 + $0x170] sm:$0xff] %vm225, 0.0
      %3911 = vst.msk [vmem:[#allocation3 + $0x178] sm:$0x3] %vm228, 0.0
      %3912 = vst.msk [vmem:[#allocation3 + $0x180] sm:$0xff] %vm225, 0.0
      %3913 = vst.msk [vmem:[#allocation3 + $0x188] sm:$0xff] %vm225, 0.0
      %3914 = vst.msk [vmem:[#allocation3 + $0x190] sm:$0x3] %vm228, 0.0
      %3915 = vst.msk [vmem:[#allocation3 + $0x198] sm:$0xff] %vm225, 0.0
      %3916 = vst.msk [vmem:[#allocation3 + $0x1a0] sm:$0xff] %vm225, 0.0
      %3917 = vst.msk [vmem:[#allocation3 + $0x1a8] sm:$0x3] %vm228, 0.0
      %s3918 = scalar_lea.vmem [#allocation3], 24
      %3919 = vst.msk [vmem:[%s3918 + $0x1] sm:$0xff] %vm225, %v3832
      %3920 = vst.msk [vmem:[%s3918 + $0x9] sm:$0xff] %vm225, %v3833
      %3921 = vst.msk [vmem:[%s3918 + $0x19] sm:$0xff] %vm225, %v3834
      %3922 = vst.msk [vmem:[%s3918 + $0x21] sm:$0xff] %vm225, %v3835
      %3923 = vst.msk [vmem:[%s3918 + $0x31] sm:$0xff] %vm225, %v3836
      %3924 = vst.msk [vmem:[%s3918 + $0x39] sm:$0xff] %vm225, %v3837
      %3925 = vst.msk [vmem:[%s3918 + $0x49] sm:$0xff] %vm225, %v3838
      %3926 = vst.msk [vmem:[%s3918 + $0x51] sm:$0xff] %vm225, %v3839
      %3927 = vst.msk [vmem:[%s3918 + $0x61] sm:$0xff] %vm225, %v3840
      %3928 = vst.msk [vmem:[%s3918 + $0x69] sm:$0xff] %vm225, %v3841
      %3929 = vst.msk [vmem:[%s3918 + $0x79] sm:$0xff] %vm225, %v3842
      %3930 = vst.msk [vmem:[%s3918 + $0x81] sm:$0xff] %vm225, %v3843
      %3931 = vst.msk [vmem:[%s3918 + $0x91] sm:$0xff] %vm225, %v3844
      %3932 = vst.msk [vmem:[%s3918 + $0x99] sm:$0xff] %vm225, %v3845
      %3933 = vst.msk [vmem:[%s3918 + $0xa9] sm:$0xff] %vm225, %v3846
      %3934 = vst.msk [vmem:[%s3918 + $0xb1] sm:$0xff] %vm225, %v3847
      %3935 = vst.msk [vmem:[%s3918 + $0xc1] sm:$0xff] %vm225, %v3848
      %3936 = vst.msk [vmem:[%s3918 + $0xc9] sm:$0xff] %vm225, %v3849
      %3937 = vst.msk [vmem:[%s3918 + $0xd9] sm:$0xff] %vm225, %v3850
      %3938 = vst.msk [vmem:[%s3918 + $0xe1] sm:$0xff] %vm225, %v3851
      %3939 = vst.msk [vmem:[%s3918 + $0xf1] sm:$0xff] %vm225, %v3852
      %3940 = vst.msk [vmem:[%s3918 + $0xf9] sm:$0xff] %vm225, %v3853
      %3941 = vst.msk [vmem:[%s3918 + $0x109] sm:$0xff] %vm225, %v3854
      %3942 = vst.msk [vmem:[%s3918 + $0x111] sm:$0xff] %vm225, %v3855
      %3943 = vst.msk [vmem:[%s3918 + $0x121] sm:$0xff] %vm225, %v3856
      %3944 = vst.msk [vmem:[%s3918 + $0x129] sm:$0xff] %vm225, %v3857
      %3945 = vst.msk [vmem:[%s3918 + $0x139] sm:$0xff] %vm225, %v3858
      %3946 = vst.msk [vmem:[%s3918 + $0x141] sm:$0xff] %vm225, %v3859
      %3947 = vst.msk [vmem:[%s3918 + $0x151] sm:$0xff] %vm225, %v3860
      %3948 = vst.msk [vmem:[%s3918 + $0x159] sm:$0xff] %vm225, %v3861
      %3949 = vst.msk [vmem:[%s3918 + $0x169] sm:$0xff] %vm225, %v3862
      %3950 = vst.msk [vmem:[%s3918 + $0x171] sm:$0xff] %vm225, %v3863
      %v3951 = vld [vmem:[#allocation3] sm:$0xff]
      %v3952 = vld [vmem:[#allocation3 + $0x8] sm:$0xff]
      %v3953 = vld [vmem:[#allocation3 + $0x18] sm:$0xff]
      %v3954 = vld [vmem:[#allocation3 + $0x20] sm:$0xff]
      %v3955 = vld [vmem:[#allocation3 + $0x30] sm:$0xff]
      %v3956 = vld [vmem:[#allocation3 + $0x38] sm:$0xff]
      %v3957 = vld [vmem:[#allocation3 + $0x48] sm:$0xff]
      %v3958 = vld [vmem:[#allocation3 + $0x50] sm:$0xff]
      %v3959 = vld [vmem:[#allocation3 + $0x60] sm:$0xff]
      %v3960 = vld [vmem:[#allocation3 + $0x68] sm:$0xff]
      %v3961 = vld [vmem:[#allocation3 + $0x78] sm:$0xff]
      %v3962 = vld [vmem:[#allocation3 + $0x80] sm:$0xff]
      %v3963 = vld [vmem:[#allocation3 + $0x90] sm:$0xff]
      %v3964 = vld [vmem:[#allocation3 + $0x98] sm:$0xff]
      %v3965 = vld [vmem:[#allocation3 + $0xa8] sm:$0xff]
      %v3966 = vld [vmem:[#allocation3 + $0xb0] sm:$0xff]
      %v3967 = vld [vmem:[#allocation3 + $0xc0] sm:$0xff]
      %v3968 = vld [vmem:[#allocation3 + $0xc8] sm:$0xff]
      %v3969 = vld [vmem:[#allocation3 + $0xd8] sm:$0xff]
      %v3970 = vld [vmem:[#allocation3 + $0xe0] sm:$0xff]
      %v3971 = vld [vmem:[#allocation3 + $0xf0] sm:$0xff]
      %v3972 = vld [vmem:[#allocation3 + $0xf8] sm:$0xff]
      %v3973 = vld [vmem:[#allocation3 + $0x108] sm:$0xff]
      %v3974 = vld [vmem:[#allocation3 + $0x110] sm:$0xff]
      %v3975 = vld [vmem:[#allocation3 + $0x120] sm:$0xff]
      %v3976 = vld [vmem:[#allocation3 + $0x128] sm:$0xff]
      %v3977 = vld [vmem:[#allocation3 + $0x138] sm:$0xff]
      %v3978 = vld [vmem:[#allocation3 + $0x140] sm:$0xff]
      %v3979 = vld [vmem:[#allocation3 + $0x150] sm:$0xff]
      %v3980 = vld [vmem:[#allocation3 + $0x158] sm:$0xff]
      %v3981 = vld [vmem:[#allocation3 + $0x168] sm:$0xff]
      %v3982 = vld [vmem:[#allocation3 + $0x170] sm:$0xff]
      %v3983 = vld [vmem:[%s3] sm:$0xf]
      %v3984 = vld [vmem:[#allocation3 + $0x1] sm:$0xff]
      %v3985 = vld [vmem:[#allocation3 + $0x9] sm:$0xff]
      %v3986 = vld [vmem:[#allocation3 + $0x19] sm:$0xff]
      %v3987 = vld [vmem:[#allocation3 + $0x21] sm:$0xff]
      %v3988 = vld [vmem:[#allocation3 + $0x31] sm:$0xff]
      %v3989 = vld [vmem:[#allocation3 + $0x39] sm:$0xff]
      %v3990 = vld [vmem:[#allocation3 + $0x49] sm:$0xff]
      %v3991 = vld [vmem:[#allocation3 + $0x51] sm:$0xff]
      %v3992 = vld [vmem:[#allocation3 + $0x61] sm:$0xff]
      %v3993 = vld [vmem:[#allocation3 + $0x69] sm:$0xff]
      %v3994 = vld [vmem:[#allocation3 + $0x79] sm:$0xff]
      %v3995 = vld [vmem:[#allocation3 + $0x81] sm:$0xff]
      %v3996 = vld [vmem:[#allocation3 + $0x91] sm:$0xff]
      %v3997 = vld [vmem:[#allocation3 + $0x99] sm:$0xff]
      %v3998 = vld [vmem:[#allocation3 + $0xa9] sm:$0xff]
      %v3999 = vld [vmem:[#allocation3 + $0xb1] sm:$0xff]
      %v4000 = vld [vmem:[#allocation3 + $0xc1] sm:$0xff]
      %v4001 = vld [vmem:[#allocation3 + $0xc9] sm:$0xff]
      %v4002 = vld [vmem:[#allocation3 + $0xd9] sm:$0xff]
      %v4003 = vld [vmem:[#allocation3 + $0xe1] sm:$0xff]
      %v4004 = vld [vmem:[#allocation3 + $0xf1] sm:$0xff]
      %v4005 = vld [vmem:[#allocation3 + $0xf9] sm:$0xff]
      %v4006 = vld [vmem:[#allocation3 + $0x109] sm:$0xff]
      %v4007 = vld [vmem:[#allocation3 + $0x111] sm:$0xff]
      %v4008 = vld [vmem:[#allocation3 + $0x121] sm:$0xff]
      %v4009 = vld [vmem:[#allocation3 + $0x129] sm:$0xff]
      %v4010 = vld [vmem:[#allocation3 + $0x139] sm:$0xff]
      %v4011 = vld [vmem:[#allocation3 + $0x141] sm:$0xff]
      %v4012 = vld [vmem:[#allocation3 + $0x151] sm:$0xff]
      %v4013 = vld [vmem:[#allocation3 + $0x159] sm:$0xff]
      %v4014 = vld [vmem:[#allocation3 + $0x169] sm:$0xff]
      %v4015 = vld [vmem:[#allocation3 + $0x171] sm:$0xff]
      %s4016 = scalar_lea.vmem %s3, 4
      %v4017 = vld [vmem:[%s4016] sm:$0xf]
      %v4019 = vsel %vm225, %v3984, 0
      %v4022 = vsel %vm225, %v3985, 0
      %v4025 = vsel %vm225, %v3986, 0
      %v4028 = vsel %vm225, %v3987, 0
      %v4031 = vsel %vm225, %v3988, 0
      %v4034 = vsel %vm225, %v3989, 0
      %v4037 = vsel %vm225, %v3990, 0
      %v4040 = vsel %vm225, %v3991, 0
      %v4043 = vsel %vm225, %v3992, 0
      %v4046 = vsel %vm225, %v3993, 0
      %v4049 = vsel %vm225, %v3994, 0
      %v4052 = vsel %vm225, %v3995, 0
      %v4055 = vsel %vm225, %v3996, 0
      %v4058 = vsel %vm225, %v3997, 0
      %v4061 = vsel %vm225, %v3998, 0
      %v4064 = vsel %vm225, %v3999, 0
      %v4067 = vsel %vm225, %v4000, 0
      %v4070 = vsel %vm225, %v4001, 0
      %v4073 = vsel %vm225, %v4002, 0
      %v4076 = vsel %vm225, %v4003, 0
      %v4079 = vsel %vm225, %v4004, 0
      %v4082 = vsel %vm225, %v4005, 0
      %v4085 = vsel %vm225, %v4006, 0
      %v4088 = vsel %vm225, %v4007, 0
      %v4091 = vsel %vm225, %v4008, 0
      %v4094 = vsel %vm225, %v4009, 0
      %v4097 = vsel %vm225, %v4010, 0
      %v4100 = vsel %vm225, %v4011, 0
      %v4103 = vsel %vm225, %v4012, 0
      %v4106 = vsel %vm225, %v4013, 0
      %v4109 = vsel %vm225, %v4014, 0
      %v4112 = vsel %vm225, %v4015, 0
      %v4115 = vsel %vm509, %v4017, 0
      %4117 = vmatprep.subr.mxu0 0.0
      %4118 = vmatpush1.msra.mxu0 0.0
      %4119 = vmatprep.subr.mxu0 0.0
      %4120 = vmatpush1.msra.mxu0 0.0
      %4121 = vmatprep.subr.mxu0 0.0
      %4122 = vmatpush1.msra.mxu0 0.0
      %4123 = vmatprep.subr.mxu0 0.0
      %4124 = vmatpush1.msra.mxu0 0.0
      %4125 = vmatprep.subr.mxu0 0.0
      %4126 = vmatpush1.msra.mxu0 0.0
      %4127 = vmatprep.subr.mxu0 0.0
      %4128 = vmatpush1.msra.mxu0 0.0
      %4129 = vmatprep.subr.mxu0 0.0
      %4130 = vmatpush1.msra.mxu0 0.0
      %4131 = vmatprep.subr.mxu0 0.0
      %4132 = vmatpush1.msra.mxu0 0.0
      %4133 = vmatprep.subr.mxu0 0.0
      %4134 = vmatpush1.msra.mxu0 0.0
      %4135 = vmatprep.subr.mxu0 0.0
      %4136 = vmatpush1.msra.mxu0 0.0
      %4137 = vmatprep.subr.mxu0 0.0
      %4138 = vmatpush1.msra.mxu0 0.0
      %4139 = vmatprep.subr.mxu0 0.0
      %4140 = vmatpush1.msra.mxu0 0.0
      %4141 = vmatprep.subr.mxu0 0.0
      %4142 = vmatpush1.msra.mxu0 0.0
      %4143 = vmatprep.subr.mxu0 0.0
      %4144 = vmatpush1.msra.mxu0 0.0
      %4145 = vmatprep.subr.mxu0 0.0
      %4146 = vmatpush1.msra.mxu0 0.0
      %4147 = vmatprep.subr.mxu0 0.0
      %4148 = vmatpush1.msra.mxu0 %v4115
      %4149 = vmatprep.subr.mxu0 0.0
      %4150 = vmatpush2.msra.mxu0 0.0
      %4151 = vmatprep.subr.mxu0 0.0
      %4152 = vmatpush2.msra.mxu0 0.0
      %4153 = vmatprep.subr.mxu0 0.0
      %4154 = vmatpush2.msra.mxu0 0.0
      %4155 = vmatprep.subr.mxu0 0.0
      %4156 = vmatpush2.msra.mxu0 0.0
      %4157 = vmatprep.subr.mxu0 0.0
      %4158 = vmatpush2.msra.mxu0 0.0
      %4159 = vmatprep.subr.mxu0 0.0
      %4160 = vmatpush2.msra.mxu0 0.0
      %4161 = vmatprep.subr.mxu0 0.0
      %4162 = vmatpush2.msra.mxu0 0.0
      %4163 = vmatprep.subr.mxu0 0.0
      %4164 = vmatpush2.msra.mxu0 0.0
      %4165 = vmatprep.subr.mxu0 0.0
      %4166 = vmatpush2.msra.mxu0 0.0
      %4167 = vmatprep.subr.mxu0 0.0
      %4168 = vmatpush2.msra.mxu0 0.0
      %4169 = vmatprep.subr.mxu0 0.0
      %4170 = vmatpush2.msra.mxu0 0.0
      %4171 = vmatprep.subr.mxu0 0.0
      %4172 = vmatpush2.msra.mxu0 0.0
      %4173 = vmatprep.subr.mxu0 0.0
      %4174 = vmatpush2.msra.mxu0 0.0
      %4175 = vmatprep.subr.mxu0 0.0
      %4176 = vmatpush2.msra.mxu0 0.0
      %4177 = vmatprep.subr.mxu0 0.0
      %4178 = vmatpush2.msra.mxu0 0.0
      %4179 = vmatprep.subr.mxu0 0.0
      %4180 = vmatpush2.msra.mxu0 0.0
      %4181 = vmatprep.mubr.f32.mxu0 0.0
      %4182 = vmatmul.mubr.f32.gmra.mxu0 %v4019
      %v4183 = vpop.f32.mrf.mxu0
      %v4184 = vadd.f32 0.0, %v4183
      %v4185 = vpop.f32.mrf.mxu0
      %4186 = vmatprep.mubr.f32.mxu0 0.0
      %4187 = vmatmul.mubr.f32.gmra.mxu0 %v4022
      %v4188 = vpop.f32.mrf.mxu0
      %v4189 = vadd.f32 0.0, %v4188
      %v4190 = vpop.f32.mrf.mxu0
      %4191 = vmatprep.mubr.f32.mxu0 0.0
      %4192 = vmatmul.mubr.f32.gmra.mxu0 %v4025
      %v4193 = vpop.f32.mrf.mxu0
      %v4194 = vadd.f32 0.0, %v4193
      %v4195 = vpop.f32.mrf.mxu0
      %4196 = vmatprep.mubr.f32.mxu0 0.0
      %4197 = vmatmul.mubr.f32.gmra.mxu0 %v4028
      %v4198 = vpop.f32.mrf.mxu0
      %v4199 = vadd.f32 0.0, %v4198
      %v4200 = vpop.f32.mrf.mxu0
      %4201 = vmatprep.mubr.f32.mxu0 0.0
      %4202 = vmatmul.mubr.f32.gmra.mxu0 %v4031
      %v4203 = vpop.f32.mrf.mxu0
      %v4204 = vadd.f32 0.0, %v4203
      %v4205 = vpop.f32.mrf.mxu0
      %4206 = vmatprep.mubr.f32.mxu0 0.0
      %4207 = vmatmul.mubr.f32.gmra.mxu0 %v4034
      %v4208 = vpop.f32.mrf.mxu0
      %v4209 = vadd.f32 0.0, %v4208
      %v4210 = vpop.f32.mrf.mxu0
      %4211 = vmatprep.mubr.f32.mxu0 0.0
      %4212 = vmatmul.mubr.f32.gmra.mxu0 %v4037
      %v4213 = vpop.f32.mrf.mxu0
      %v4214 = vadd.f32 0.0, %v4213
      %v4215 = vpop.f32.mrf.mxu0
      %4216 = vmatprep.mubr.f32.mxu0 0.0
      %4217 = vmatmul.mubr.f32.gmra.mxu0 %v4040
      %v4218 = vpop.f32.mrf.mxu0
      %v4219 = vadd.f32 0.0, %v4218
      %v4220 = vpop.f32.mrf.mxu0
      %4221 = vmatprep.mubr.f32.mxu0 0.0
      %4222 = vmatmul.mubr.f32.gmra.mxu0 %v4043
      %v4223 = vpop.f32.mrf.mxu0
      %v4224 = vadd.f32 0.0, %v4223
      %v4225 = vpop.f32.mrf.mxu0
      %4226 = vmatprep.mubr.f32.mxu0 0.0
      %4227 = vmatmul.mubr.f32.gmra.mxu0 %v4046
      %v4228 = vpop.f32.mrf.mxu0
      %v4229 = vadd.f32 0.0, %v4228
      %v4230 = vpop.f32.mrf.mxu0
      %4231 = vmatprep.mubr.f32.mxu0 0.0
      %4232 = vmatmul.mubr.f32.gmra.mxu0 %v4049
      %v4233 = vpop.f32.mrf.mxu0
      %v4234 = vadd.f32 0.0, %v4233
      %v4235 = vpop.f32.mrf.mxu0
      %4236 = vmatprep.mubr.f32.mxu0 0.0
      %4237 = vmatmul.mubr.f32.gmra.mxu0 %v4052
      %v4238 = vpop.f32.mrf.mxu0
      %v4239 = vadd.f32 0.0, %v4238
      %v4240 = vpop.f32.mrf.mxu0
      %4241 = vmatprep.mubr.f32.mxu0 0.0
      %4242 = vmatmul.mubr.f32.gmra.mxu0 %v4055
      %v4243 = vpop.f32.mrf.mxu0
      %v4244 = vadd.f32 0.0, %v4243
      %v4245 = vpop.f32.mrf.mxu0
      %4246 = vmatprep.mubr.f32.mxu0 0.0
      %4247 = vmatmul.mubr.f32.gmra.mxu0 %v4058
      %v4248 = vpop.f32.mrf.mxu0
      %v4249 = vadd.f32 0.0, %v4248
      %v4250 = vpop.f32.mrf.mxu0
      %4251 = vmatprep.mubr.f32.mxu0 0.0
      %4252 = vmatmul.mubr.f32.gmra.mxu0 %v4061
      %v4253 = vpop.f32.mrf.mxu0
      %v4254 = vadd.f32 0.0, %v4253
      %v4255 = vpop.f32.mrf.mxu0
      %4256 = vmatprep.mubr.f32.mxu0 0.0
      %4257 = vmatmul.mubr.f32.gmra.mxu0 %v4064
      %v4258 = vpop.f32.mrf.mxu0
      %v4259 = vadd.f32 0.0, %v4258
      %v4260 = vpop.f32.mrf.mxu0
      %4261 = vmatprep.mubr.f32.mxu0 0.0
      %4262 = vmatmul.mubr.f32.gmra.mxu0 %v4067
      %v4263 = vpop.f32.mrf.mxu0
      %v4264 = vadd.f32 0.0, %v4263
      %v4265 = vpop.f32.mrf.mxu0
      %4266 = vmatprep.mubr.f32.mxu0 0.0
      %4267 = vmatmul.mubr.f32.gmra.mxu0 %v4070
      %v4268 = vpop.f32.mrf.mxu0
      %v4269 = vadd.f32 0.0, %v4268
      %v4270 = vpop.f32.mrf.mxu0
      %4271 = vmatprep.mubr.f32.mxu0 0.0
      %4272 = vmatmul.mubr.f32.gmra.mxu0 %v4073
      %v4273 = vpop.f32.mrf.mxu0
      %v4274 = vadd.f32 0.0, %v4273
      %v4275 = vpop.f32.mrf.mxu0
      %4276 = vmatprep.mubr.f32.mxu0 0.0
      %4277 = vmatmul.mubr.f32.gmra.mxu0 %v4076
      %v4278 = vpop.f32.mrf.mxu0
      %v4279 = vadd.f32 0.0, %v4278
      %v4280 = vpop.f32.mrf.mxu0
      %4281 = vmatprep.mubr.f32.mxu0 0.0
      %4282 = vmatmul.mubr.f32.gmra.mxu0 %v4079
      %v4283 = vpop.f32.mrf.mxu0
      %v4284 = vadd.f32 0.0, %v4283
      %v4285 = vpop.f32.mrf.mxu0
      %4286 = vmatprep.mubr.f32.mxu0 0.0
      %4287 = vmatmul.mubr.f32.gmra.mxu0 %v4082
      %v4288 = vpop.f32.mrf.mxu0
      %v4289 = vadd.f32 0.0, %v4288
      %v4290 = vpop.f32.mrf.mxu0
      %4291 = vmatprep.mubr.f32.mxu0 0.0
      %4292 = vmatmul.mubr.f32.gmra.mxu0 %v4085
      %v4293 = vpop.f32.mrf.mxu0
      %v4294 = vadd.f32 0.0, %v4293
      %v4295 = vpop.f32.mrf.mxu0
      %4296 = vmatprep.mubr.f32.mxu0 0.0
      %4297 = vmatmul.mubr.f32.gmra.mxu0 %v4088
      %v4298 = vpop.f32.mrf.mxu0
      %v4299 = vadd.f32 0.0, %v4298
      %v4300 = vpop.f32.mrf.mxu0
      %4301 = vmatprep.mubr.f32.mxu0 0.0
      %4302 = vmatmul.mubr.f32.gmra.mxu0 %v4091
      %v4303 = vpop.f32.mrf.mxu0
      %v4304 = vadd.f32 0.0, %v4303
      %v4305 = vpop.f32.mrf.mxu0
      %4306 = vmatprep.mubr.f32.mxu0 0.0
      %4307 = vmatmul.mubr.f32.gmra.mxu0 %v4094
      %v4308 = vpop.f32.mrf.mxu0
      %v4309 = vadd.f32 0.0, %v4308
      %v4310 = vpop.f32.mrf.mxu0
      %4311 = vmatprep.mubr.f32.mxu0 0.0
      %4312 = vmatmul.mubr.f32.gmra.mxu0 %v4097
      %v4313 = vpop.f32.mrf.mxu0
      %v4314 = vadd.f32 0.0, %v4313
      %v4315 = vpop.f32.mrf.mxu0
      %4316 = vmatprep.mubr.f32.mxu0 0.0
      %4317 = vmatmul.mubr.f32.gmra.mxu0 %v4100
      %v4318 = vpop.f32.mrf.mxu0
      %v4319 = vadd.f32 0.0, %v4318
      %v4320 = vpop.f32.mrf.mxu0
      %4321 = vmatprep.mubr.f32.mxu0 0.0
      %4322 = vmatmul.mubr.f32.gmra.mxu0 %v4103
      %v4323 = vpop.f32.mrf.mxu0
      %v4324 = vadd.f32 0.0, %v4323
      %v4325 = vpop.f32.mrf.mxu0
      %4326 = vmatprep.mubr.f32.mxu0 0.0
      %4327 = vmatmul.mubr.f32.gmra.mxu0 %v4106
      %v4328 = vpop.f32.mrf.mxu0
      %v4329 = vadd.f32 0.0, %v4328
      %v4330 = vpop.f32.mrf.mxu0
      %4331 = vmatprep.mubr.f32.mxu0 0.0
      %4332 = vmatmul.mubr.f32.gmra.mxu0 %v4109
      %v4333 = vpop.f32.mrf.mxu0
      %v4334 = vadd.f32 0.0, %v4333
      %v4335 = vpop.f32.mrf.mxu0
      %4336 = vmatprep.mubr.f32.mxu0 0.0
      %4337 = vmatmul.mubr.f32.gmra.mxu0 %v4112
      %v4338 = vpop.f32.mrf.mxu0
      %v4339 = vadd.f32 0.0, %v4338
      %v4340 = vpop.f32.mrf.mxu0
      %4341 = vdwg.mxu0
      %v4343 = vsel %vm225, %v3951, 0
      %v4346 = vsel %vm225, %v3952, 0
      %v4349 = vsel %vm225, %v3953, 0
      %v4352 = vsel %vm225, %v3954, 0
      %v4355 = vsel %vm225, %v3955, 0
      %v4358 = vsel %vm225, %v3956, 0
      %v4361 = vsel %vm225, %v3957, 0
      %v4364 = vsel %vm225, %v3958, 0
      %v4367 = vsel %vm225, %v3959, 0
      %v4370 = vsel %vm225, %v3960, 0
      %v4373 = vsel %vm225, %v3961, 0
      %v4376 = vsel %vm225, %v3962, 0
      %v4379 = vsel %vm225, %v3963, 0
      %v4382 = vsel %vm225, %v3964, 0
      %v4385 = vsel %vm225, %v3965, 0
      %v4388 = vsel %vm225, %v3966, 0
      %v4391 = vsel %vm225, %v3967, 0
      %v4394 = vsel %vm225, %v3968, 0
      %v4397 = vsel %vm225, %v3969, 0
      %v4400 = vsel %vm225, %v3970, 0
      %v4403 = vsel %vm225, %v3971, 0
      %v4406 = vsel %vm225, %v3972, 0
      %v4409 = vsel %vm225, %v3973, 0
      %v4412 = vsel %vm225, %v3974, 0
      %v4415 = vsel %vm225, %v3975, 0
      %v4418 = vsel %vm225, %v3976, 0
      %v4421 = vsel %vm225, %v3977, 0
      %v4424 = vsel %vm225, %v3978, 0
      %v4427 = vsel %vm225, %v3979, 0
      %v4430 = vsel %vm225, %v3980, 0
      %v4433 = vsel %vm225, %v3981, 0
      %v4436 = vsel %vm225, %v3982, 0
      %v4439 = vsel %vm509, %v3983, 0
      %4441 = vmatprep.subr.mxu0 0.0
      %4442 = vmatpush1.msra.mxu0 0.0
      %4443 = vmatprep.subr.mxu0 0.0
      %4444 = vmatpush1.msra.mxu0 0.0
      %4445 = vmatprep.subr.mxu0 0.0
      %4446 = vmatpush1.msra.mxu0 0.0
      %4447 = vmatprep.subr.mxu0 0.0
      %4448 = vmatpush1.msra.mxu0 0.0
      %4449 = vmatprep.subr.mxu0 0.0
      %4450 = vmatpush1.msra.mxu0 0.0
      %4451 = vmatprep.subr.mxu0 0.0
      %4452 = vmatpush1.msra.mxu0 0.0
      %4453 = vmatprep.subr.mxu0 0.0
      %4454 = vmatpush1.msra.mxu0 0.0
      %4455 = vmatprep.subr.mxu0 0.0
      %4456 = vmatpush1.msra.mxu0 0.0
      %4457 = vmatprep.subr.mxu0 0.0
      %4458 = vmatpush1.msra.mxu0 0.0
      %4459 = vmatprep.subr.mxu0 0.0
      %4460 = vmatpush1.msra.mxu0 0.0
      %4461 = vmatprep.subr.mxu0 0.0
      %4462 = vmatpush1.msra.mxu0 0.0
      %4463 = vmatprep.subr.mxu0 0.0
      %4464 = vmatpush1.msra.mxu0 0.0
      %4465 = vmatprep.subr.mxu0 0.0
      %4466 = vmatpush1.msra.mxu0 0.0
      %4467 = vmatprep.subr.mxu0 0.0
      %4468 = vmatpush1.msra.mxu0 0.0
      %4469 = vmatprep.subr.mxu0 0.0
      %4470 = vmatpush1.msra.mxu0 0.0
      %4471 = vmatprep.subr.mxu0 0.0
      %4472 = vmatpush1.msra.mxu0 %v4439
      %4473 = vmatprep.subr.mxu0 0.0
      %4474 = vmatpush2.msra.mxu0 0.0
      %4475 = vmatprep.subr.mxu0 0.0
      %4476 = vmatpush2.msra.mxu0 0.0
      %4477 = vmatprep.subr.mxu0 0.0
      %4478 = vmatpush2.msra.mxu0 0.0
      %4479 = vmatprep.subr.mxu0 0.0
      %4480 = vmatpush2.msra.mxu0 0.0
      %4481 = vmatprep.subr.mxu0 0.0
      %4482 = vmatpush2.msra.mxu0 0.0
      %4483 = vmatprep.subr.mxu0 0.0
      %4484 = vmatpush2.msra.mxu0 0.0
      %4485 = vmatprep.subr.mxu0 0.0
      %4486 = vmatpush2.msra.mxu0 0.0
      %4487 = vmatprep.subr.mxu0 0.0
      %4488 = vmatpush2.msra.mxu0 0.0
      %4489 = vmatprep.subr.mxu0 0.0
      %4490 = vmatpush2.msra.mxu0 0.0
      %4491 = vmatprep.subr.mxu0 0.0
      %4492 = vmatpush2.msra.mxu0 0.0
      %4493 = vmatprep.subr.mxu0 0.0
      %4494 = vmatpush2.msra.mxu0 0.0
      %4495 = vmatprep.subr.mxu0 0.0
      %4496 = vmatpush2.msra.mxu0 0.0
      %4497 = vmatprep.subr.mxu0 0.0
      %4498 = vmatpush2.msra.mxu0 0.0
      %4499 = vmatprep.subr.mxu0 0.0
      %4500 = vmatpush2.msra.mxu0 0.0
      %4501 = vmatprep.subr.mxu0 0.0
      %4502 = vmatpush2.msra.mxu0 0.0
      %4503 = vmatprep.subr.mxu0 0.0
      %4504 = vmatpush2.msra.mxu0 0.0
      %4505 = vmatprep.mubr.f32.mxu0 0.0
      %4506 = vmatmul.mubr.f32.gmra.mxu0 %v4343
      %v4507 = vpop.f32.mrf.mxu0
      %v4508 = vadd.f32 %v4184, %v4507
      %v4509 = vpop.f32.mrf.mxu0
      %4510 = vmatprep.mubr.f32.mxu0 0.0
      %4511 = vmatmul.mubr.f32.gmra.mxu0 %v4346
      %v4512 = vpop.f32.mrf.mxu0
      %v4513 = vadd.f32 %v4189, %v4512
      %v4514 = vpop.f32.mrf.mxu0
      %4515 = vmatprep.mubr.f32.mxu0 0.0
      %4516 = vmatmul.mubr.f32.gmra.mxu0 %v4349
      %v4517 = vpop.f32.mrf.mxu0
      %v4518 = vadd.f32 %v4194, %v4517
      %v4519 = vpop.f32.mrf.mxu0
      %4520 = vmatprep.mubr.f32.mxu0 0.0
      %4521 = vmatmul.mubr.f32.gmra.mxu0 %v4352
      %v4522 = vpop.f32.mrf.mxu0
      %v4523 = vadd.f32 %v4199, %v4522
      %v4524 = vpop.f32.mrf.mxu0
      %4525 = vmatprep.mubr.f32.mxu0 0.0
      %4526 = vmatmul.mubr.f32.gmra.mxu0 %v4355
      %v4527 = vpop.f32.mrf.mxu0
      %v4528 = vadd.f32 %v4204, %v4527
      %v4529 = vpop.f32.mrf.mxu0
      %4530 = vmatprep.mubr.f32.mxu0 0.0
      %4531 = vmatmul.mubr.f32.gmra.mxu0 %v4358
      %v4532 = vpop.f32.mrf.mxu0
      %v4533 = vadd.f32 %v4209, %v4532
      %v4534 = vpop.f32.mrf.mxu0
      %4535 = vmatprep.mubr.f32.mxu0 0.0
      %4536 = vmatmul.mubr.f32.gmra.mxu0 %v4361
      %v4537 = vpop.f32.mrf.mxu0
      %v4538 = vadd.f32 %v4214, %v4537
      %v4539 = vpop.f32.mrf.mxu0
      %4540 = vmatprep.mubr.f32.mxu0 0.0
      %4541 = vmatmul.mubr.f32.gmra.mxu0 %v4364
      %v4542 = vpop.f32.mrf.mxu0
      %v4543 = vadd.f32 %v4219, %v4542
      %v4544 = vpop.f32.mrf.mxu0
      %4545 = vmatprep.mubr.f32.mxu0 0.0
      %4546 = vmatmul.mubr.f32.gmra.mxu0 %v4367
      %v4547 = vpop.f32.mrf.mxu0
      %v4548 = vadd.f32 %v4224, %v4547
      %v4549 = vpop.f32.mrf.mxu0
      %4550 = vmatprep.mubr.f32.mxu0 0.0
      %4551 = vmatmul.mubr.f32.gmra.mxu0 %v4370
      %v4552 = vpop.f32.mrf.mxu0
      %v4553 = vadd.f32 %v4229, %v4552
      %v4554 = vpop.f32.mrf.mxu0
      %4555 = vmatprep.mubr.f32.mxu0 0.0
      %4556 = vmatmul.mubr.f32.gmra.mxu0 %v4373
      %v4557 = vpop.f32.mrf.mxu0
      %v4558 = vadd.f32 %v4234, %v4557
      %v4559 = vpop.f32.mrf.mxu0
      %4560 = vmatprep.mubr.f32.mxu0 0.0
      %4561 = vmatmul.mubr.f32.gmra.mxu0 %v4376
      %v4562 = vpop.f32.mrf.mxu0
      %v4563 = vadd.f32 %v4239, %v4562
      %v4564 = vpop.f32.mrf.mxu0
      %4565 = vmatprep.mubr.f32.mxu0 0.0
      %4566 = vmatmul.mubr.f32.gmra.mxu0 %v4379
      %v4567 = vpop.f32.mrf.mxu0
      %v4568 = vadd.f32 %v4244, %v4567
      %v4569 = vpop.f32.mrf.mxu0
      %4570 = vmatprep.mubr.f32.mxu0 0.0
      %4571 = vmatmul.mubr.f32.gmra.mxu0 %v4382
      %v4572 = vpop.f32.mrf.mxu0
      %v4573 = vadd.f32 %v4249, %v4572
      %v4574 = vpop.f32.mrf.mxu0
      %4575 = vmatprep.mubr.f32.mxu0 0.0
      %4576 = vmatmul.mubr.f32.gmra.mxu0 %v4385
      %v4577 = vpop.f32.mrf.mxu0
      %v4578 = vadd.f32 %v4254, %v4577
      %v4579 = vpop.f32.mrf.mxu0
      %4580 = vmatprep.mubr.f32.mxu0 0.0
      %4581 = vmatmul.mubr.f32.gmra.mxu0 %v4388
      %v4582 = vpop.f32.mrf.mxu0
      %v4583 = vadd.f32 %v4259, %v4582
      %v4584 = vpop.f32.mrf.mxu0
      %4585 = vmatprep.mubr.f32.mxu0 0.0
      %4586 = vmatmul.mubr.f32.gmra.mxu0 %v4391
      %v4587 = vpop.f32.mrf.mxu0
      %v4588 = vadd.f32 %v4264, %v4587
      %v4589 = vpop.f32.mrf.mxu0
      %4590 = vmatprep.mubr.f32.mxu0 0.0
      %4591 = vmatmul.mubr.f32.gmra.mxu0 %v4394
      %v4592 = vpop.f32.mrf.mxu0
      %v4593 = vadd.f32 %v4269, %v4592
      %v4594 = vpop.f32.mrf.mxu0
      %4595 = vmatprep.mubr.f32.mxu0 0.0
      %4596 = vmatmul.mubr.f32.gmra.mxu0 %v4397
      %v4597 = vpop.f32.mrf.mxu0
      %v4598 = vadd.f32 %v4274, %v4597
      %v4599 = vpop.f32.mrf.mxu0
      %4600 = vmatprep.mubr.f32.mxu0 0.0
      %4601 = vmatmul.mubr.f32.gmra.mxu0 %v4400
      %v4602 = vpop.f32.mrf.mxu0
      %v4603 = vadd.f32 %v4279, %v4602
      %v4604 = vpop.f32.mrf.mxu0
      %4605 = vmatprep.mubr.f32.mxu0 0.0
      %4606 = vmatmul.mubr.f32.gmra.mxu0 %v4403
      %v4607 = vpop.f32.mrf.mxu0
      %v4608 = vadd.f32 %v4284, %v4607
      %v4609 = vpop.f32.mrf.mxu0
      %4610 = vmatprep.mubr.f32.mxu0 0.0
      %4611 = vmatmul.mubr.f32.gmra.mxu0 %v4406
      %v4612 = vpop.f32.mrf.mxu0
      %v4613 = vadd.f32 %v4289, %v4612
      %v4614 = vpop.f32.mrf.mxu0
      %4615 = vmatprep.mubr.f32.mxu0 0.0
      %4616 = vmatmul.mubr.f32.gmra.mxu0 %v4409
      %v4617 = vpop.f32.mrf.mxu0
      %v4618 = vadd.f32 %v4294, %v4617
      %v4619 = vpop.f32.mrf.mxu0
      %4620 = vmatprep.mubr.f32.mxu0 0.0
      %4621 = vmatmul.mubr.f32.gmra.mxu0 %v4412
      %v4622 = vpop.f32.mrf.mxu0
      %v4623 = vadd.f32 %v4299, %v4622
      %v4624 = vpop.f32.mrf.mxu0
      %4625 = vmatprep.mubr.f32.mxu0 0.0
      %4626 = vmatmul.mubr.f32.gmra.mxu0 %v4415
      %v4627 = vpop.f32.mrf.mxu0
      %v4628 = vadd.f32 %v4304, %v4627
      %v4629 = vpop.f32.mrf.mxu0
      %4630 = vmatprep.mubr.f32.mxu0 0.0
      %4631 = vmatmul.mubr.f32.gmra.mxu0 %v4418
      %v4632 = vpop.f32.mrf.mxu0
      %v4633 = vadd.f32 %v4309, %v4632
      %v4634 = vpop.f32.mrf.mxu0
      %4635 = vmatprep.mubr.f32.mxu0 0.0
      %4636 = vmatmul.mubr.f32.gmra.mxu0 %v4421
      %v4637 = vpop.f32.mrf.mxu0
      %v4638 = vadd.f32 %v4314, %v4637
      %v4639 = vpop.f32.mrf.mxu0
      %4640 = vmatprep.mubr.f32.mxu0 0.0
      %4641 = vmatmul.mubr.f32.gmra.mxu0 %v4424
      %v4642 = vpop.f32.mrf.mxu0
      %v4643 = vadd.f32 %v4319, %v4642
      %v4644 = vpop.f32.mrf.mxu0
      %4645 = vmatprep.mubr.f32.mxu0 0.0
      %4646 = vmatmul.mubr.f32.gmra.mxu0 %v4427
      %v4647 = vpop.f32.mrf.mxu0
      %v4648 = vadd.f32 %v4324, %v4647
      %v4649 = vpop.f32.mrf.mxu0
      %4650 = vmatprep.mubr.f32.mxu0 0.0
      %4651 = vmatmul.mubr.f32.gmra.mxu0 %v4430
      %v4652 = vpop.f32.mrf.mxu0
      %v4653 = vadd.f32 %v4329, %v4652
      %v4654 = vpop.f32.mrf.mxu0
      %4655 = vmatprep.mubr.f32.mxu0 0.0
      %4656 = vmatmul.mubr.f32.gmra.mxu0 %v4433
      %v4657 = vpop.f32.mrf.mxu0
      %v4658 = vadd.f32 %v4334, %v4657
      %v4659 = vpop.f32.mrf.mxu0
      %4660 = vmatprep.mubr.f32.mxu0 0.0
      %4661 = vmatmul.mubr.f32.gmra.mxu0 %v4436
      %v4662 = vpop.f32.mrf.mxu0
      %v4663 = vadd.f32 %v4339, %v4662
      %v4664 = vpop.f32.mrf.mxu0
      %4665 = vdwg.mxu0
      %v4666 = vld [vmem:[#allocation3 + $0x2] sm:$0xff]
      %v4667 = vld [vmem:[#allocation3 + $0xa] sm:$0xff]
      %v4668 = vld [vmem:[#allocation3 + $0x1a] sm:$0xff]
      %v4669 = vld [vmem:[#allocation3 + $0x22] sm:$0xff]
      %v4670 = vld [vmem:[#allocation3 + $0x32] sm:$0xff]
      %v4671 = vld [vmem:[#allocation3 + $0x3a] sm:$0xff]
      %v4672 = vld [vmem:[#allocation3 + $0x4a] sm:$0xff]
      %v4673 = vld [vmem:[#allocation3 + $0x52] sm:$0xff]
      %v4674 = vld [vmem:[#allocation3 + $0x62] sm:$0xff]
      %v4675 = vld [vmem:[#allocation3 + $0x6a] sm:$0xff]
      %v4676 = vld [vmem:[#allocation3 + $0x7a] sm:$0xff]
      %v4677 = vld [vmem:[#allocation3 + $0x82] sm:$0xff]
      %v4678 = vld [vmem:[#allocation3 + $0x92] sm:$0xff]
      %v4679 = vld [vmem:[#allocation3 + $0x9a] sm:$0xff]
      %v4680 = vld [vmem:[#allocation3 + $0xaa] sm:$0xff]
      %v4681 = vld [vmem:[#allocation3 + $0xb2] sm:$0xff]
      %v4682 = vld [vmem:[#allocation3 + $0xc2] sm:$0xff]
      %v4683 = vld [vmem:[#allocation3 + $0xca] sm:$0xff]
      %v4684 = vld [vmem:[#allocation3 + $0xda] sm:$0xff]
      %v4685 = vld [vmem:[#allocation3 + $0xe2] sm:$0xff]
      %v4686 = vld [vmem:[#allocation3 + $0xf2] sm:$0xff]
      %v4687 = vld [vmem:[#allocation3 + $0xfa] sm:$0xff]
      %v4688 = vld [vmem:[#allocation3 + $0x10a] sm:$0xff]
      %v4689 = vld [vmem:[#allocation3 + $0x112] sm:$0xff]
      %v4690 = vld [vmem:[#allocation3 + $0x122] sm:$0xff]
      %v4691 = vld [vmem:[#allocation3 + $0x12a] sm:$0xff]
      %v4692 = vld [vmem:[#allocation3 + $0x13a] sm:$0xff]
      %v4693 = vld [vmem:[#allocation3 + $0x142] sm:$0xff]
      %v4694 = vld [vmem:[#allocation3 + $0x152] sm:$0xff]
      %v4695 = vld [vmem:[#allocation3 + $0x15a] sm:$0xff]
      %v4696 = vld [vmem:[#allocation3 + $0x16a] sm:$0xff]
      %v4697 = vld [vmem:[#allocation3 + $0x172] sm:$0xff]
      %s4698 = scalar_lea.vmem %s3, 8
      %v4699 = vld [vmem:[%s4698] sm:$0xf]
      %v4701 = vsel %vm225, %v4666, 0
      %v4704 = vsel %vm225, %v4667, 0
      %v4707 = vsel %vm225, %v4668, 0
      %v4710 = vsel %vm225, %v4669, 0
      %v4713 = vsel %vm225, %v4670, 0
      %v4716 = vsel %vm225, %v4671, 0
      %v4719 = vsel %vm225, %v4672, 0
      %v4722 = vsel %vm225, %v4673, 0
      %v4725 = vsel %vm225, %v4674, 0
      %v4728 = vsel %vm225, %v4675, 0
      %v4731 = vsel %vm225, %v4676, 0
      %v4734 = vsel %vm225, %v4677, 0
      %v4737 = vsel %vm225, %v4678, 0
      %v4740 = vsel %vm225, %v4679, 0
      %v4743 = vsel %vm225, %v4680, 0
      %v4746 = vsel %vm225, %v4681, 0
      %v4749 = vsel %vm225, %v4682, 0
      %v4752 = vsel %vm225, %v4683, 0
      %v4755 = vsel %vm225, %v4684, 0
      %v4758 = vsel %vm225, %v4685, 0
      %v4761 = vsel %vm225, %v4686, 0
      %v4764 = vsel %vm225, %v4687, 0
      %v4767 = vsel %vm225, %v4688, 0
      %v4770 = vsel %vm225, %v4689, 0
      %v4773 = vsel %vm225, %v4690, 0
      %v4776 = vsel %vm225, %v4691, 0
      %v4779 = vsel %vm225, %v4692, 0
      %v4782 = vsel %vm225, %v4693, 0
      %v4785 = vsel %vm225, %v4694, 0
      %v4788 = vsel %vm225, %v4695, 0
      %v4791 = vsel %vm225, %v4696, 0
      %v4794 = vsel %vm225, %v4697, 0
      %v4797 = vsel %vm509, %v4699, 0
      %4799 = vmatprep.subr.mxu0 0.0
      %4800 = vmatpush1.msra.mxu0 0.0
      %4801 = vmatprep.subr.mxu0 0.0
      %4802 = vmatpush1.msra.mxu0 0.0
      %4803 = vmatprep.subr.mxu0 0.0
      %4804 = vmatpush1.msra.mxu0 0.0
      %4805 = vmatprep.subr.mxu0 0.0
      %4806 = vmatpush1.msra.mxu0 0.0
      %4807 = vmatprep.subr.mxu0 0.0
      %4808 = vmatpush1.msra.mxu0 0.0
      %4809 = vmatprep.subr.mxu0 0.0
      %4810 = vmatpush1.msra.mxu0 0.0
      %4811 = vmatprep.subr.mxu0 0.0
      %4812 = vmatpush1.msra.mxu0 0.0
      %4813 = vmatprep.subr.mxu0 0.0
      %4814 = vmatpush1.msra.mxu0 0.0
      %4815 = vmatprep.subr.mxu0 0.0
      %4816 = vmatpush1.msra.mxu0 0.0
      %4817 = vmatprep.subr.mxu0 0.0
      %4818 = vmatpush1.msra.mxu0 0.0
      %4819 = vmatprep.subr.mxu0 0.0
      %4820 = vmatpush1.msra.mxu0 0.0
      %4821 = vmatprep.subr.mxu0 0.0
      %4822 = vmatpush1.msra.mxu0 0.0
      %4823 = vmatprep.subr.mxu0 0.0
      %4824 = vmatpush1.msra.mxu0 0.0
      %4825 = vmatprep.subr.mxu0 0.0
      %4826 = vmatpush1.msra.mxu0 0.0
      %4827 = vmatprep.subr.mxu0 0.0
      %4828 = vmatpush1.msra.mxu0 0.0
      %4829 = vmatprep.subr.mxu0 0.0
      %4830 = vmatpush1.msra.mxu0 %v4797
      %4831 = vmatprep.subr.mxu0 0.0
      %4832 = vmatpush2.msra.mxu0 0.0
      %4833 = vmatprep.subr.mxu0 0.0
      %4834 = vmatpush2.msra.mxu0 0.0
      %4835 = vmatprep.subr.mxu0 0.0
      %4836 = vmatpush2.msra.mxu0 0.0
      %4837 = vmatprep.subr.mxu0 0.0
      %4838 = vmatpush2.msra.mxu0 0.0
      %4839 = vmatprep.subr.mxu0 0.0
      %4840 = vmatpush2.msra.mxu0 0.0
      %4841 = vmatprep.subr.mxu0 0.0
      %4842 = vmatpush2.msra.mxu0 0.0
      %4843 = vmatprep.subr.mxu0 0.0
      %4844 = vmatpush2.msra.mxu0 0.0
      %4845 = vmatprep.subr.mxu0 0.0
      %4846 = vmatpush2.msra.mxu0 0.0
      %4847 = vmatprep.subr.mxu0 0.0
      %4848 = vmatpush2.msra.mxu0 0.0
      %4849 = vmatprep.subr.mxu0 0.0
      %4850 = vmatpush2.msra.mxu0 0.0
      %4851 = vmatprep.subr.mxu0 0.0
      %4852 = vmatpush2.msra.mxu0 0.0
      %4853 = vmatprep.subr.mxu0 0.0
      %4854 = vmatpush2.msra.mxu0 0.0
      %4855 = vmatprep.subr.mxu0 0.0
      %4856 = vmatpush2.msra.mxu0 0.0
      %4857 = vmatprep.subr.mxu0 0.0
      %4858 = vmatpush2.msra.mxu0 0.0
      %4859 = vmatprep.subr.mxu0 0.0
      %4860 = vmatpush2.msra.mxu0 0.0
      %4861 = vmatprep.subr.mxu0 0.0
      %4862 = vmatpush2.msra.mxu0 0.0
      %4863 = vmatprep.mubr.f32.mxu0 0.0
      %4864 = vmatmul.mubr.f32.gmra.mxu0 %v4701
      %v4865 = vpop.f32.mrf.mxu0
      %v4866 = vadd.f32 0.0, %v4865
      %v4867 = vpop.f32.mrf.mxu0
      %4868 = vmatprep.mubr.f32.mxu0 0.0
      %4869 = vmatmul.mubr.f32.gmra.mxu0 %v4704
      %v4870 = vpop.f32.mrf.mxu0
      %v4871 = vadd.f32 0.0, %v4870
      %v4872 = vpop.f32.mrf.mxu0
      %4873 = vmatprep.mubr.f32.mxu0 0.0
      %4874 = vmatmul.mubr.f32.gmra.mxu0 %v4707
      %v4875 = vpop.f32.mrf.mxu0
      %v4876 = vadd.f32 0.0, %v4875
      %v4877 = vpop.f32.mrf.mxu0
      %4878 = vmatprep.mubr.f32.mxu0 0.0
      %4879 = vmatmul.mubr.f32.gmra.mxu0 %v4710
      %v4880 = vpop.f32.mrf.mxu0
      %v4881 = vadd.f32 0.0, %v4880
      %v4882 = vpop.f32.mrf.mxu0
      %4883 = vmatprep.mubr.f32.mxu0 0.0
      %4884 = vmatmul.mubr.f32.gmra.mxu0 %v4713
      %v4885 = vpop.f32.mrf.mxu0
      %v4886 = vadd.f32 0.0, %v4885
      %v4887 = vpop.f32.mrf.mxu0
      %4888 = vmatprep.mubr.f32.mxu0 0.0
      %4889 = vmatmul.mubr.f32.gmra.mxu0 %v4716
      %v4890 = vpop.f32.mrf.mxu0
      %v4891 = vadd.f32 0.0, %v4890
      %v4892 = vpop.f32.mrf.mxu0
      %4893 = vmatprep.mubr.f32.mxu0 0.0
      %4894 = vmatmul.mubr.f32.gmra.mxu0 %v4719
      %v4895 = vpop.f32.mrf.mxu0
      %v4896 = vadd.f32 0.0, %v4895
      %v4897 = vpop.f32.mrf.mxu0
      %4898 = vmatprep.mubr.f32.mxu0 0.0
      %4899 = vmatmul.mubr.f32.gmra.mxu0 %v4722
      %v4900 = vpop.f32.mrf.mxu0
      %v4901 = vadd.f32 0.0, %v4900
      %v4902 = vpop.f32.mrf.mxu0
      %4903 = vmatprep.mubr.f32.mxu0 0.0
      %4904 = vmatmul.mubr.f32.gmra.mxu0 %v4725
      %v4905 = vpop.f32.mrf.mxu0
      %v4906 = vadd.f32 0.0, %v4905
      %v4907 = vpop.f32.mrf.mxu0
      %4908 = vmatprep.mubr.f32.mxu0 0.0
      %4909 = vmatmul.mubr.f32.gmra.mxu0 %v4728
      %v4910 = vpop.f32.mrf.mxu0
      %v4911 = vadd.f32 0.0, %v4910
      %v4912 = vpop.f32.mrf.mxu0
      %4913 = vmatprep.mubr.f32.mxu0 0.0
      %4914 = vmatmul.mubr.f32.gmra.mxu0 %v4731
      %v4915 = vpop.f32.mrf.mxu0
      %v4916 = vadd.f32 0.0, %v4915
      %v4917 = vpop.f32.mrf.mxu0
      %4918 = vmatprep.mubr.f32.mxu0 0.0
      %4919 = vmatmul.mubr.f32.gmra.mxu0 %v4734
      %v4920 = vpop.f32.mrf.mxu0
      %v4921 = vadd.f32 0.0, %v4920
      %v4922 = vpop.f32.mrf.mxu0
      %4923 = vmatprep.mubr.f32.mxu0 0.0
      %4924 = vmatmul.mubr.f32.gmra.mxu0 %v4737
      %v4925 = vpop.f32.mrf.mxu0
      %v4926 = vadd.f32 0.0, %v4925
      %v4927 = vpop.f32.mrf.mxu0
      %4928 = vmatprep.mubr.f32.mxu0 0.0
      %4929 = vmatmul.mubr.f32.gmra.mxu0 %v4740
      %v4930 = vpop.f32.mrf.mxu0
      %v4931 = vadd.f32 0.0, %v4930
      %v4932 = vpop.f32.mrf.mxu0
      %4933 = vmatprep.mubr.f32.mxu0 0.0
      %4934 = vmatmul.mubr.f32.gmra.mxu0 %v4743
      %v4935 = vpop.f32.mrf.mxu0
      %v4936 = vadd.f32 0.0, %v4935
      %v4937 = vpop.f32.mrf.mxu0
      %4938 = vmatprep.mubr.f32.mxu0 0.0
      %4939 = vmatmul.mubr.f32.gmra.mxu0 %v4746
      %v4940 = vpop.f32.mrf.mxu0
      %v4941 = vadd.f32 0.0, %v4940
      %v4942 = vpop.f32.mrf.mxu0
      %4943 = vmatprep.mubr.f32.mxu0 0.0
      %4944 = vmatmul.mubr.f32.gmra.mxu0 %v4749
      %v4945 = vpop.f32.mrf.mxu0
      %v4946 = vadd.f32 0.0, %v4945
      %v4947 = vpop.f32.mrf.mxu0
      %4948 = vmatprep.mubr.f32.mxu0 0.0
      %4949 = vmatmul.mubr.f32.gmra.mxu0 %v4752
      %v4950 = vpop.f32.mrf.mxu0
      %v4951 = vadd.f32 0.0, %v4950
      %v4952 = vpop.f32.mrf.mxu0
      %4953 = vmatprep.mubr.f32.mxu0 0.0
      %4954 = vmatmul.mubr.f32.gmra.mxu0 %v4755
      %v4955 = vpop.f32.mrf.mxu0
      %v4956 = vadd.f32 0.0, %v4955
      %v4957 = vpop.f32.mrf.mxu0
      %4958 = vmatprep.mubr.f32.mxu0 0.0
      %4959 = vmatmul.mubr.f32.gmra.mxu0 %v4758
      %v4960 = vpop.f32.mrf.mxu0
      %v4961 = vadd.f32 0.0, %v4960
      %v4962 = vpop.f32.mrf.mxu0
      %4963 = vmatprep.mubr.f32.mxu0 0.0
      %4964 = vmatmul.mubr.f32.gmra.mxu0 %v4761
      %v4965 = vpop.f32.mrf.mxu0
      %v4966 = vadd.f32 0.0, %v4965
      %v4967 = vpop.f32.mrf.mxu0
      %4968 = vmatprep.mubr.f32.mxu0 0.0
      %4969 = vmatmul.mubr.f32.gmra.mxu0 %v4764
      %v4970 = vpop.f32.mrf.mxu0
      %v4971 = vadd.f32 0.0, %v4970
      %v4972 = vpop.f32.mrf.mxu0
      %4973 = vmatprep.mubr.f32.mxu0 0.0
      %4974 = vmatmul.mubr.f32.gmra.mxu0 %v4767
      %v4975 = vpop.f32.mrf.mxu0
      %v4976 = vadd.f32 0.0, %v4975
      %v4977 = vpop.f32.mrf.mxu0
      %4978 = vmatprep.mubr.f32.mxu0 0.0
      %4979 = vmatmul.mubr.f32.gmra.mxu0 %v4770
      %v4980 = vpop.f32.mrf.mxu0
      %v4981 = vadd.f32 0.0, %v4980
      %v4982 = vpop.f32.mrf.mxu0
      %4983 = vmatprep.mubr.f32.mxu0 0.0
      %4984 = vmatmul.mubr.f32.gmra.mxu0 %v4773
      %v4985 = vpop.f32.mrf.mxu0
      %v4986 = vadd.f32 0.0, %v4985
      %v4987 = vpop.f32.mrf.mxu0
      %4988 = vmatprep.mubr.f32.mxu0 0.0
      %4989 = vmatmul.mubr.f32.gmra.mxu0 %v4776
      %v4990 = vpop.f32.mrf.mxu0
      %v4991 = vadd.f32 0.0, %v4990
      %v4992 = vpop.f32.mrf.mxu0
      %4993 = vmatprep.mubr.f32.mxu0 0.0
      %4994 = vmatmul.mubr.f32.gmra.mxu0 %v4779
      %v4995 = vpop.f32.mrf.mxu0
      %v4996 = vadd.f32 0.0, %v4995
      %v4997 = vpop.f32.mrf.mxu0
      %4998 = vmatprep.mubr.f32.mxu0 0.0
      %4999 = vmatmul.mubr.f32.gmra.mxu0 %v4782
      %v5000 = vpop.f32.mrf.mxu0
      %v5001 = vadd.f32 0.0, %v5000
      %v5002 = vpop.f32.mrf.mxu0
      %5003 = vmatprep.mubr.f32.mxu0 0.0
      %5004 = vmatmul.mubr.f32.gmra.mxu0 %v4785
      %v5005 = vpop.f32.mrf.mxu0
      %v5006 = vadd.f32 0.0, %v5005
      %v5007 = vpop.f32.mrf.mxu0
      %5008 = vmatprep.mubr.f32.mxu0 0.0
      %5009 = vmatmul.mubr.f32.gmra.mxu0 %v4788
      %v5010 = vpop.f32.mrf.mxu0
      %v5011 = vadd.f32 0.0, %v5010
      %v5012 = vpop.f32.mrf.mxu0
      %5013 = vmatprep.mubr.f32.mxu0 0.0
      %5014 = vmatmul.mubr.f32.gmra.mxu0 %v4791
      %v5015 = vpop.f32.mrf.mxu0
      %v5016 = vadd.f32 0.0, %v5015
      %v5017 = vpop.f32.mrf.mxu0
      %5018 = vmatprep.mubr.f32.mxu0 0.0
      %5019 = vmatmul.mubr.f32.gmra.mxu0 %v4794
      %v5020 = vpop.f32.mrf.mxu0
      %v5021 = vadd.f32 0.0, %v5020
      %v5022 = vpop.f32.mrf.mxu0
      %5023 = vdwg.mxu0
      %v5024 = vadd.f32 %v4508, %v4866
      %v5025 = vadd.f32 %v4513, %v4871
      %v5026 = vadd.f32 %v4518, %v4876
      %v5027 = vadd.f32 %v4523, %v4881
      %v5028 = vadd.f32 %v4528, %v4886
      %v5029 = vadd.f32 %v4533, %v4891
      %v5030 = vadd.f32 %v4538, %v4896
      %v5031 = vadd.f32 %v4543, %v4901
      %v5032 = vadd.f32 %v4548, %v4906
      %v5033 = vadd.f32 %v4553, %v4911
      %v5034 = vadd.f32 %v4558, %v4916
      %v5035 = vadd.f32 %v4563, %v4921
      %v5036 = vadd.f32 %v4568, %v4926
      %v5037 = vadd.f32 %v4573, %v4931
      %v5038 = vadd.f32 %v4578, %v4936
      %v5039 = vadd.f32 %v4583, %v4941
      %v5040 = vadd.f32 %v4588, %v4946
      %v5041 = vadd.f32 %v4593, %v4951
      %v5042 = vadd.f32 %v4598, %v4956
      %v5043 = vadd.f32 %v4603, %v4961
      %v5044 = vadd.f32 %v4608, %v4966
      %v5045 = vadd.f32 %v4613, %v4971
      %v5046 = vadd.f32 %v4618, %v4976
      %v5047 = vadd.f32 %v4623, %v4981
      %v5048 = vadd.f32 %v4628, %v4986
      %v5049 = vadd.f32 %v4633, %v4991
      %v5050 = vadd.f32 %v4638, %v4996
      %v5051 = vadd.f32 %v4643, %v5001
      %v5052 = vadd.f32 %v4648, %v5006
      %v5053 = vadd.f32 %v4653, %v5011
      %v5054 = vadd.f32 %v4658, %v5016
      %v5055 = vadd.f32 %v4663, %v5021
      %v5056 = vld [vmem:[%s3918] sm:$0xff]
      %v5057 = vld [vmem:[%s3918 + $0x8] sm:$0xff]
      %v5058 = vld [vmem:[%s3918 + $0x18] sm:$0xff]
      %v5059 = vld [vmem:[%s3918 + $0x20] sm:$0xff]
      %v5060 = vld [vmem:[%s3918 + $0x30] sm:$0xff]
      %v5061 = vld [vmem:[%s3918 + $0x38] sm:$0xff]
      %v5062 = vld [vmem:[%s3918 + $0x48] sm:$0xff]
      %v5063 = vld [vmem:[%s3918 + $0x50] sm:$0xff]
      %v5064 = vld [vmem:[%s3918 + $0x60] sm:$0xff]
      %v5065 = vld [vmem:[%s3918 + $0x68] sm:$0xff]
      %v5066 = vld [vmem:[%s3918 + $0x78] sm:$0xff]
      %v5067 = vld [vmem:[%s3918 + $0x80] sm:$0xff]
      %v5068 = vld [vmem:[%s3918 + $0x90] sm:$0xff]
      %v5069 = vld [vmem:[%s3918 + $0x98] sm:$0xff]
      %v5070 = vld [vmem:[%s3918 + $0xa8] sm:$0xff]
      %v5071 = vld [vmem:[%s3918 + $0xb0] sm:$0xff]
      %v5072 = vld [vmem:[%s3918 + $0xc0] sm:$0xff]
      %v5073 = vld [vmem:[%s3918 + $0xc8] sm:$0xff]
      %v5074 = vld [vmem:[%s3918 + $0xd8] sm:$0xff]
      %v5075 = vld [vmem:[%s3918 + $0xe0] sm:$0xff]
      %v5076 = vld [vmem:[%s3918 + $0xf0] sm:$0xff]
      %v5077 = vld [vmem:[%s3918 + $0xf8] sm:$0xff]
      %v5078 = vld [vmem:[%s3918 + $0x108] sm:$0xff]
      %v5079 = vld [vmem:[%s3918 + $0x110] sm:$0xff]
      %v5080 = vld [vmem:[%s3918 + $0x120] sm:$0xff]
      %v5081 = vld [vmem:[%s3918 + $0x128] sm:$0xff]
      %v5082 = vld [vmem:[%s3918 + $0x138] sm:$0xff]
      %v5083 = vld [vmem:[%s3918 + $0x140] sm:$0xff]
      %v5084 = vld [vmem:[%s3918 + $0x150] sm:$0xff]
      %v5085 = vld [vmem:[%s3918 + $0x158] sm:$0xff]
      %v5086 = vld [vmem:[%s3918 + $0x168] sm:$0xff]
      %v5087 = vld [vmem:[%s3918 + $0x170] sm:$0xff]
      %s5088 = scalar_lea.vmem %s3, 12
      %v5089 = vld [vmem:[%s5088] sm:$0xf]
      %v5091 = vsel %vm225, %v5056, 0
      %v5094 = vsel %vm225, %v5057, 0
      %v5097 = vsel %vm225, %v5058, 0
      %v5100 = vsel %vm225, %v5059, 0
      %v5103 = vsel %vm225, %v5060, 0
      %v5106 = vsel %vm225, %v5061, 0
      %v5109 = vsel %vm225, %v5062, 0
      %v5112 = vsel %vm225, %v5063, 0
      %v5115 = vsel %vm225, %v5064, 0
      %v5118 = vsel %vm225, %v5065, 0
      %v5121 = vsel %vm225, %v5066, 0
      %v5124 = vsel %vm225, %v5067, 0
      %v5127 = vsel %vm225, %v5068, 0
      %v5130 = vsel %vm225, %v5069, 0
      %v5133 = vsel %vm225, %v5070, 0
      %v5136 = vsel %vm225, %v5071, 0
      %v5139 = vsel %vm225, %v5072, 0
      %v5142 = vsel %vm225, %v5073, 0
      %v5145 = vsel %vm225, %v5074, 0
      %v5148 = vsel %vm225, %v5075, 0
      %v5151 = vsel %vm225, %v5076, 0
      %v5154 = vsel %vm225, %v5077, 0
      %v5157 = vsel %vm225, %v5078, 0
      %v5160 = vsel %vm225, %v5079, 0
      %v5163 = vsel %vm225, %v5080, 0
      %v5166 = vsel %vm225, %v5081, 0
      %v5169 = vsel %vm225, %v5082, 0
      %v5172 = vsel %vm225, %v5083, 0
      %v5175 = vsel %vm225, %v5084, 0
      %v5178 = vsel %vm225, %v5085, 0
      %v5181 = vsel %vm225, %v5086, 0
      %v5184 = vsel %vm225, %v5087, 0
      %v5187 = vsel %vm509, %v5089, 0
      %5189 = vmatprep.subr.mxu0 0.0
      %5190 = vmatpush1.msra.mxu0 0.0
      %5191 = vmatprep.subr.mxu0 0.0
      %5192 = vmatpush1.msra.mxu0 0.0
      %5193 = vmatprep.subr.mxu0 0.0
      %5194 = vmatpush1.msra.mxu0 0.0
      %5195 = vmatprep.subr.mxu0 0.0
      %5196 = vmatpush1.msra.mxu0 0.0
      %5197 = vmatprep.subr.mxu0 0.0
      %5198 = vmatpush1.msra.mxu0 0.0
      %5199 = vmatprep.subr.mxu0 0.0
      %5200 = vmatpush1.msra.mxu0 0.0
      %5201 = vmatprep.subr.mxu0 0.0
      %5202 = vmatpush1.msra.mxu0 0.0
      %5203 = vmatprep.subr.mxu0 0.0
      %5204 = vmatpush1.msra.mxu0 0.0
      %5205 = vmatprep.subr.mxu0 0.0
      %5206 = vmatpush1.msra.mxu0 0.0
      %5207 = vmatprep.subr.mxu0 0.0
      %5208 = vmatpush1.msra.mxu0 0.0
      %5209 = vmatprep.subr.mxu0 0.0
      %5210 = vmatpush1.msra.mxu0 0.0
      %5211 = vmatprep.subr.mxu0 0.0
      %5212 = vmatpush1.msra.mxu0 0.0
      %5213 = vmatprep.subr.mxu0 0.0
      %5214 = vmatpush1.msra.mxu0 0.0
      %5215 = vmatprep.subr.mxu0 0.0
      %5216 = vmatpush1.msra.mxu0 0.0
      %5217 = vmatprep.subr.mxu0 0.0
      %5218 = vmatpush1.msra.mxu0 0.0
      %5219 = vmatprep.subr.mxu0 0.0
      %5220 = vmatpush1.msra.mxu0 %v5187
      %5221 = vmatprep.subr.mxu0 0.0
      %5222 = vmatpush2.msra.mxu0 0.0
      %5223 = vmatprep.subr.mxu0 0.0
      %5224 = vmatpush2.msra.mxu0 0.0
      %5225 = vmatprep.subr.mxu0 0.0
      %5226 = vmatpush2.msra.mxu0 0.0
      %5227 = vmatprep.subr.mxu0 0.0
      %5228 = vmatpush2.msra.mxu0 0.0
      %5229 = vmatprep.subr.mxu0 0.0
      %5230 = vmatpush2.msra.mxu0 0.0
      %5231 = vmatprep.subr.mxu0 0.0
      %5232 = vmatpush2.msra.mxu0 0.0
      %5233 = vmatprep.subr.mxu0 0.0
      %5234 = vmatpush2.msra.mxu0 0.0
      %5235 = vmatprep.subr.mxu0 0.0
      %5236 = vmatpush2.msra.mxu0 0.0
      %5237 = vmatprep.subr.mxu0 0.0
      %5238 = vmatpush2.msra.mxu0 0.0
      %5239 = vmatprep.subr.mxu0 0.0
      %5240 = vmatpush2.msra.mxu0 0.0
      %5241 = vmatprep.subr.mxu0 0.0
      %5242 = vmatpush2.msra.mxu0 0.0
      %5243 = vmatprep.subr.mxu0 0.0
      %5244 = vmatpush2.msra.mxu0 0.0
      %5245 = vmatprep.subr.mxu0 0.0
      %5246 = vmatpush2.msra.mxu0 0.0
      %5247 = vmatprep.subr.mxu0 0.0
      %5248 = vmatpush2.msra.mxu0 0.0
      %5249 = vmatprep.subr.mxu0 0.0
      %5250 = vmatpush2.msra.mxu0 0.0
      %5251 = vmatprep.subr.mxu0 0.0
      %5252 = vmatpush2.msra.mxu0 0.0
      %5253 = vmatprep.mubr.f32.mxu0 0.0
      %5254 = vmatmul.mubr.f32.gmra.mxu0 %v5091
      %v5255 = vpop.f32.mrf.mxu0
      %v5256 = vadd.f32 0.0, %v5255
      %v5257 = vpop.f32.mrf.mxu0
      %5258 = vmatprep.mubr.f32.mxu0 0.0
      %5259 = vmatmul.mubr.f32.gmra.mxu0 %v5094
      %v5260 = vpop.f32.mrf.mxu0
      %v5261 = vadd.f32 0.0, %v5260
      %v5262 = vpop.f32.mrf.mxu0
      %5263 = vmatprep.mubr.f32.mxu0 0.0
      %5264 = vmatmul.mubr.f32.gmra.mxu0 %v5097
      %v5265 = vpop.f32.mrf.mxu0
      %v5266 = vadd.f32 0.0, %v5265
      %v5267 = vpop.f32.mrf.mxu0
      %5268 = vmatprep.mubr.f32.mxu0 0.0
      %5269 = vmatmul.mubr.f32.gmra.mxu0 %v5100
      %v5270 = vpop.f32.mrf.mxu0
      %v5271 = vadd.f32 0.0, %v5270
      %v5272 = vpop.f32.mrf.mxu0
      %5273 = vmatprep.mubr.f32.mxu0 0.0
      %5274 = vmatmul.mubr.f32.gmra.mxu0 %v5103
      %v5275 = vpop.f32.mrf.mxu0
      %v5276 = vadd.f32 0.0, %v5275
      %v5277 = vpop.f32.mrf.mxu0
      %5278 = vmatprep.mubr.f32.mxu0 0.0
      %5279 = vmatmul.mubr.f32.gmra.mxu0 %v5106
      %v5280 = vpop.f32.mrf.mxu0
      %v5281 = vadd.f32 0.0, %v5280
      %v5282 = vpop.f32.mrf.mxu0
      %5283 = vmatprep.mubr.f32.mxu0 0.0
      %5284 = vmatmul.mubr.f32.gmra.mxu0 %v5109
      %v5285 = vpop.f32.mrf.mxu0
      %v5286 = vadd.f32 0.0, %v5285
      %v5287 = vpop.f32.mrf.mxu0
      %5288 = vmatprep.mubr.f32.mxu0 0.0
      %5289 = vmatmul.mubr.f32.gmra.mxu0 %v5112
      %v5290 = vpop.f32.mrf.mxu0
      %v5291 = vadd.f32 0.0, %v5290
      %v5292 = vpop.f32.mrf.mxu0
      %5293 = vmatprep.mubr.f32.mxu0 0.0
      %5294 = vmatmul.mubr.f32.gmra.mxu0 %v5115
      %v5295 = vpop.f32.mrf.mxu0
      %v5296 = vadd.f32 0.0, %v5295
      %v5297 = vpop.f32.mrf.mxu0
      %5298 = vmatprep.mubr.f32.mxu0 0.0
      %5299 = vmatmul.mubr.f32.gmra.mxu0 %v5118
      %v5300 = vpop.f32.mrf.mxu0
      %v5301 = vadd.f32 0.0, %v5300
      %v5302 = vpop.f32.mrf.mxu0
      %5303 = vmatprep.mubr.f32.mxu0 0.0
      %5304 = vmatmul.mubr.f32.gmra.mxu0 %v5121
      %v5305 = vpop.f32.mrf.mxu0
      %v5306 = vadd.f32 0.0, %v5305
      %v5307 = vpop.f32.mrf.mxu0
      %5308 = vmatprep.mubr.f32.mxu0 0.0
      %5309 = vmatmul.mubr.f32.gmra.mxu0 %v5124
      %v5310 = vpop.f32.mrf.mxu0
      %v5311 = vadd.f32 0.0, %v5310
      %v5312 = vpop.f32.mrf.mxu0
      %5313 = vmatprep.mubr.f32.mxu0 0.0
      %5314 = vmatmul.mubr.f32.gmra.mxu0 %v5127
      %v5315 = vpop.f32.mrf.mxu0
      %v5316 = vadd.f32 0.0, %v5315
      %v5317 = vpop.f32.mrf.mxu0
      %5318 = vmatprep.mubr.f32.mxu0 0.0
      %5319 = vmatmul.mubr.f32.gmra.mxu0 %v5130
      %v5320 = vpop.f32.mrf.mxu0
      %v5321 = vadd.f32 0.0, %v5320
      %v5322 = vpop.f32.mrf.mxu0
      %5323 = vmatprep.mubr.f32.mxu0 0.0
      %5324 = vmatmul.mubr.f32.gmra.mxu0 %v5133
      %v5325 = vpop.f32.mrf.mxu0
      %v5326 = vadd.f32 0.0, %v5325
      %v5327 = vpop.f32.mrf.mxu0
      %5328 = vmatprep.mubr.f32.mxu0 0.0
      %5329 = vmatmul.mubr.f32.gmra.mxu0 %v5136
      %v5330 = vpop.f32.mrf.mxu0
      %v5331 = vadd.f32 0.0, %v5330
      %v5332 = vpop.f32.mrf.mxu0
      %5333 = vmatprep.mubr.f32.mxu0 0.0
      %5334 = vmatmul.mubr.f32.gmra.mxu0 %v5139
      %v5335 = vpop.f32.mrf.mxu0
      %v5336 = vadd.f32 0.0, %v5335
      %v5337 = vpop.f32.mrf.mxu0
      %5338 = vmatprep.mubr.f32.mxu0 0.0
      %5339 = vmatmul.mubr.f32.gmra.mxu0 %v5142
      %v5340 = vpop.f32.mrf.mxu0
      %v5341 = vadd.f32 0.0, %v5340
      %v5342 = vpop.f32.mrf.mxu0
      %5343 = vmatprep.mubr.f32.mxu0 0.0
      %5344 = vmatmul.mubr.f32.gmra.mxu0 %v5145
      %v5345 = vpop.f32.mrf.mxu0
      %v5346 = vadd.f32 0.0, %v5345
      %v5347 = vpop.f32.mrf.mxu0
      %5348 = vmatprep.mubr.f32.mxu0 0.0
      %5349 = vmatmul.mubr.f32.gmra.mxu0 %v5148
      %v5350 = vpop.f32.mrf.mxu0
      %v5351 = vadd.f32 0.0, %v5350
      %v5352 = vpop.f32.mrf.mxu0
      %5353 = vmatprep.mubr.f32.mxu0 0.0
      %5354 = vmatmul.mubr.f32.gmra.mxu0 %v5151
      %v5355 = vpop.f32.mrf.mxu0
      %v5356 = vadd.f32 0.0, %v5355
      %v5357 = vpop.f32.mrf.mxu0
      %5358 = vmatprep.mubr.f32.mxu0 0.0
      %5359 = vmatmul.mubr.f32.gmra.mxu0 %v5154
      %v5360 = vpop.f32.mrf.mxu0
      %v5361 = vadd.f32 0.0, %v5360
      %v5362 = vpop.f32.mrf.mxu0
      %5363 = vmatprep.mubr.f32.mxu0 0.0
      %5364 = vmatmul.mubr.f32.gmra.mxu0 %v5157
      %v5365 = vpop.f32.mrf.mxu0
      %v5366 = vadd.f32 0.0, %v5365
      %v5367 = vpop.f32.mrf.mxu0
      %5368 = vmatprep.mubr.f32.mxu0 0.0
      %5369 = vmatmul.mubr.f32.gmra.mxu0 %v5160
      %v5370 = vpop.f32.mrf.mxu0
      %v5371 = vadd.f32 0.0, %v5370
      %v5372 = vpop.f32.mrf.mxu0
      %5373 = vmatprep.mubr.f32.mxu0 0.0
      %5374 = vmatmul.mubr.f32.gmra.mxu0 %v5163
      %v5375 = vpop.f32.mrf.mxu0
      %v5376 = vadd.f32 0.0, %v5375
      %v5377 = vpop.f32.mrf.mxu0
      %5378 = vmatprep.mubr.f32.mxu0 0.0
      %5379 = vmatmul.mubr.f32.gmra.mxu0 %v5166
      %v5380 = vpop.f32.mrf.mxu0
      %v5381 = vadd.f32 0.0, %v5380
      %v5382 = vpop.f32.mrf.mxu0
      %5383 = vmatprep.mubr.f32.mxu0 0.0
      %5384 = vmatmul.mubr.f32.gmra.mxu0 %v5169
      %v5385 = vpop.f32.mrf.mxu0
      %v5386 = vadd.f32 0.0, %v5385
      %v5387 = vpop.f32.mrf.mxu0
      %5388 = vmatprep.mubr.f32.mxu0 0.0
      %5389 = vmatmul.mubr.f32.gmra.mxu0 %v5172
      %v5390 = vpop.f32.mrf.mxu0
      %v5391 = vadd.f32 0.0, %v5390
      %v5392 = vpop.f32.mrf.mxu0
      %5393 = vmatprep.mubr.f32.mxu0 0.0
      %5394 = vmatmul.mubr.f32.gmra.mxu0 %v5175
      %v5395 = vpop.f32.mrf.mxu0
      %v5396 = vadd.f32 0.0, %v5395
      %v5397 = vpop.f32.mrf.mxu0
      %5398 = vmatprep.mubr.f32.mxu0 0.0
      %5399 = vmatmul.mubr.f32.gmra.mxu0 %v5178
      %v5400 = vpop.f32.mrf.mxu0
      %v5401 = vadd.f32 0.0, %v5400
      %v5402 = vpop.f32.mrf.mxu0
      %5403 = vmatprep.mubr.f32.mxu0 0.0
      %5404 = vmatmul.mubr.f32.gmra.mxu0 %v5181
      %v5405 = vpop.f32.mrf.mxu0
      %v5406 = vadd.f32 0.0, %v5405
      %v5407 = vpop.f32.mrf.mxu0
      %5408 = vmatprep.mubr.f32.mxu0 0.0
      %5409 = vmatmul.mubr.f32.gmra.mxu0 %v5184
      %v5410 = vpop.f32.mrf.mxu0
      %v5411 = vadd.f32 0.0, %v5410
      %v5412 = vpop.f32.mrf.mxu0
      %5413 = vdwg.mxu0
      %v5414 = vadd.f32 %v5024, %v5256
      %v5415 = vadd.f32 %v5025, %v5261
      %v5416 = vadd.f32 %v5026, %v5266
      %v5417 = vadd.f32 %v5027, %v5271
      %v5418 = vadd.f32 %v5028, %v5276
      %v5419 = vadd.f32 %v5029, %v5281
      %v5420 = vadd.f32 %v5030, %v5286
      %v5421 = vadd.f32 %v5031, %v5291
      %v5422 = vadd.f32 %v5032, %v5296
      %v5423 = vadd.f32 %v5033, %v5301
      %v5424 = vadd.f32 %v5034, %v5306
      %v5425 = vadd.f32 %v5035, %v5311
      %v5426 = vadd.f32 %v5036, %v5316
      %v5427 = vadd.f32 %v5037, %v5321
      %v5428 = vadd.f32 %v5038, %v5326
      %v5429 = vadd.f32 %v5039, %v5331
      %v5430 = vadd.f32 %v5040, %v5336
      %v5431 = vadd.f32 %v5041, %v5341
      %v5432 = vadd.f32 %v5042, %v5346
      %v5433 = vadd.f32 %v5043, %v5351
      %v5434 = vadd.f32 %v5044, %v5356
      %v5435 = vadd.f32 %v5045, %v5361
      %v5436 = vadd.f32 %v5046, %v5366
      %v5437 = vadd.f32 %v5047, %v5371
      %v5438 = vadd.f32 %v5048, %v5376
      %v5439 = vadd.f32 %v5049, %v5381
      %v5440 = vadd.f32 %v5050, %v5386
      %v5441 = vadd.f32 %v5051, %v5391
      %v5442 = vadd.f32 %v5052, %v5396
      %v5443 = vadd.f32 %v5053, %v5401
      %v5444 = vadd.f32 %v5054, %v5406
      %v5445 = vadd.f32 %v5055, %v5411
      %v5446 = vld [vmem:[%s3918 + $0x1] sm:$0xff]
      %v5447 = vld [vmem:[%s3918 + $0x9] sm:$0xff]
      %v5448 = vld [vmem:[%s3918 + $0x19] sm:$0xff]
      %v5449 = vld [vmem:[%s3918 + $0x21] sm:$0xff]
      %v5450 = vld [vmem:[%s3918 + $0x31] sm:$0xff]
      %v5451 = vld [vmem:[%s3918 + $0x39] sm:$0xff]
      %v5452 = vld [vmem:[%s3918 + $0x49] sm:$0xff]
      %v5453 = vld [vmem:[%s3918 + $0x51] sm:$0xff]
      %v5454 = vld [vmem:[%s3918 + $0x61] sm:$0xff]
      %v5455 = vld [vmem:[%s3918 + $0x69] sm:$0xff]
      %v5456 = vld [vmem:[%s3918 + $0x79] sm:$0xff]
      %v5457 = vld [vmem:[%s3918 + $0x81] sm:$0xff]
      %v5458 = vld [vmem:[%s3918 + $0x91] sm:$0xff]
      %v5459 = vld [vmem:[%s3918 + $0x99] sm:$0xff]
      %v5460 = vld [vmem:[%s3918 + $0xa9] sm:$0xff]
      %v5461 = vld [vmem:[%s3918 + $0xb1] sm:$0xff]
      %v5462 = vld [vmem:[%s3918 + $0xc1] sm:$0xff]
      %v5463 = vld [vmem:[%s3918 + $0xc9] sm:$0xff]
      %v5464 = vld [vmem:[%s3918 + $0xd9] sm:$0xff]
      %v5465 = vld [vmem:[%s3918 + $0xe1] sm:$0xff]
      %v5466 = vld [vmem:[%s3918 + $0xf1] sm:$0xff]
      %v5467 = vld [vmem:[%s3918 + $0xf9] sm:$0xff]
      %v5468 = vld [vmem:[%s3918 + $0x109] sm:$0xff]
      %v5469 = vld [vmem:[%s3918 + $0x111] sm:$0xff]
      %v5470 = vld [vmem:[%s3918 + $0x121] sm:$0xff]
      %v5471 = vld [vmem:[%s3918 + $0x129] sm:$0xff]
      %v5472 = vld [vmem:[%s3918 + $0x139] sm:$0xff]
      %v5473 = vld [vmem:[%s3918 + $0x141] sm:$0xff]
      %v5474 = vld [vmem:[%s3918 + $0x151] sm:$0xff]
      %v5475 = vld [vmem:[%s3918 + $0x159] sm:$0xff]
      %v5476 = vld [vmem:[%s3918 + $0x169] sm:$0xff]
      %v5477 = vld [vmem:[%s3918 + $0x171] sm:$0xff]
      %s5478 = scalar_lea.vmem %s3, 16
      %v5479 = vld [vmem:[%s5478] sm:$0xf]
      %v5481 = vsel %vm225, %v5446, 0
      %v5484 = vsel %vm225, %v5447, 0
      %v5487 = vsel %vm225, %v5448, 0
      %v5490 = vsel %vm225, %v5449, 0
      %v5493 = vsel %vm225, %v5450, 0
      %v5496 = vsel %vm225, %v5451, 0
      %v5499 = vsel %vm225, %v5452, 0
      %v5502 = vsel %vm225, %v5453, 0
      %v5505 = vsel %vm225, %v5454, 0
      %v5508 = vsel %vm225, %v5455, 0
      %v5511 = vsel %vm225, %v5456, 0
      %v5514 = vsel %vm225, %v5457, 0
      %v5517 = vsel %vm225, %v5458, 0
      %v5520 = vsel %vm225, %v5459, 0
      %v5523 = vsel %vm225, %v5460, 0
      %v5526 = vsel %vm225, %v5461, 0
      %v5529 = vsel %vm225, %v5462, 0
      %v5532 = vsel %vm225, %v5463, 0
      %v5535 = vsel %vm225, %v5464, 0
      %v5538 = vsel %vm225, %v5465, 0
      %v5541 = vsel %vm225, %v5466, 0
      %v5544 = vsel %vm225, %v5467, 0
      %v5547 = vsel %vm225, %v5468, 0
      %v5550 = vsel %vm225, %v5469, 0
      %v5553 = vsel %vm225, %v5470, 0
      %v5556 = vsel %vm225, %v5471, 0
      %v5559 = vsel %vm225, %v5472, 0
      %v5562 = vsel %vm225, %v5473, 0
      %v5565 = vsel %vm225, %v5474, 0
      %v5568 = vsel %vm225, %v5475, 0
      %v5571 = vsel %vm225, %v5476, 0
      %v5574 = vsel %vm225, %v5477, 0
      %v5577 = vsel %vm509, %v5479, 0
      %5579 = vmatprep.subr.mxu0 0.0
      %5580 = vmatpush1.msra.mxu0 0.0
      %5581 = vmatprep.subr.mxu0 0.0
      %5582 = vmatpush1.msra.mxu0 0.0
      %5583 = vmatprep.subr.mxu0 0.0
      %5584 = vmatpush1.msra.mxu0 0.0
      %5585 = vmatprep.subr.mxu0 0.0
      %5586 = vmatpush1.msra.mxu0 0.0
      %5587 = vmatprep.subr.mxu0 0.0
      %5588 = vmatpush1.msra.mxu0 0.0
      %5589 = vmatprep.subr.mxu0 0.0
      %5590 = vmatpush1.msra.mxu0 0.0
      %5591 = vmatprep.subr.mxu0 0.0
      %5592 = vmatpush1.msra.mxu0 0.0
      %5593 = vmatprep.subr.mxu0 0.0
      %5594 = vmatpush1.msra.mxu0 0.0
      %5595 = vmatprep.subr.mxu0 0.0
      %5596 = vmatpush1.msra.mxu0 0.0
      %5597 = vmatprep.subr.mxu0 0.0
      %5598 = vmatpush1.msra.mxu0 0.0
      %5599 = vmatprep.subr.mxu0 0.0
      %5600 = vmatpush1.msra.mxu0 0.0
      %5601 = vmatprep.subr.mxu0 0.0
      %5602 = vmatpush1.msra.mxu0 0.0
      %5603 = vmatprep.subr.mxu0 0.0
      %5604 = vmatpush1.msra.mxu0 0.0
      %5605 = vmatprep.subr.mxu0 0.0
      %5606 = vmatpush1.msra.mxu0 0.0
      %5607 = vmatprep.subr.mxu0 0.0
      %5608 = vmatpush1.msra.mxu0 0.0
      %5609 = vmatprep.subr.mxu0 0.0
      %5610 = vmatpush1.msra.mxu0 %v5577
      %5611 = vmatprep.subr.mxu0 0.0
      %5612 = vmatpush2.msra.mxu0 0.0
      %5613 = vmatprep.subr.mxu0 0.0
      %5614 = vmatpush2.msra.mxu0 0.0
      %5615 = vmatprep.subr.mxu0 0.0
      %5616 = vmatpush2.msra.mxu0 0.0
      %5617 = vmatprep.subr.mxu0 0.0
      %5618 = vmatpush2.msra.mxu0 0.0
      %5619 = vmatprep.subr.mxu0 0.0
      %5620 = vmatpush2.msra.mxu0 0.0
      %5621 = vmatprep.subr.mxu0 0.0
      %5622 = vmatpush2.msra.mxu0 0.0
      %5623 = vmatprep.subr.mxu0 0.0
      %5624 = vmatpush2.msra.mxu0 0.0
      %5625 = vmatprep.subr.mxu0 0.0
      %5626 = vmatpush2.msra.mxu0 0.0
      %5627 = vmatprep.subr.mxu0 0.0
      %5628 = vmatpush2.msra.mxu0 0.0
      %5629 = vmatprep.subr.mxu0 0.0
      %5630 = vmatpush2.msra.mxu0 0.0
      %5631 = vmatprep.subr.mxu0 0.0
      %5632 = vmatpush2.msra.mxu0 0.0
      %5633 = vmatprep.subr.mxu0 0.0
      %5634 = vmatpush2.msra.mxu0 0.0
      %5635 = vmatprep.subr.mxu0 0.0
      %5636 = vmatpush2.msra.mxu0 0.0
      %5637 = vmatprep.subr.mxu0 0.0
      %5638 = vmatpush2.msra.mxu0 0.0
      %5639 = vmatprep.subr.mxu0 0.0
      %5640 = vmatpush2.msra.mxu0 0.0
      %5641 = vmatprep.subr.mxu0 0.0
      %5642 = vmatpush2.msra.mxu0 0.0
      %5643 = vmatprep.mubr.f32.mxu0 0.0
      %5644 = vmatmul.mubr.f32.gmra.mxu0 %v5481
      %v5645 = vpop.f32.mrf.mxu0
      %v5646 = vadd.f32 0.0, %v5645
      %v5647 = vpop.f32.mrf.mxu0
      %5648 = vmatprep.mubr.f32.mxu0 0.0
      %5649 = vmatmul.mubr.f32.gmra.mxu0 %v5484
      %v5650 = vpop.f32.mrf.mxu0
      %v5651 = vadd.f32 0.0, %v5650
      %v5652 = vpop.f32.mrf.mxu0
      %5653 = vmatprep.mubr.f32.mxu0 0.0
      %5654 = vmatmul.mubr.f32.gmra.mxu0 %v5487
      %v5655 = vpop.f32.mrf.mxu0
      %v5656 = vadd.f32 0.0, %v5655
      %v5657 = vpop.f32.mrf.mxu0
      %5658 = vmatprep.mubr.f32.mxu0 0.0
      %5659 = vmatmul.mubr.f32.gmra.mxu0 %v5490
      %v5660 = vpop.f32.mrf.mxu0
      %v5661 = vadd.f32 0.0, %v5660
      %v5662 = vpop.f32.mrf.mxu0
      %5663 = vmatprep.mubr.f32.mxu0 0.0
      %5664 = vmatmul.mubr.f32.gmra.mxu0 %v5493
      %v5665 = vpop.f32.mrf.mxu0
      %v5666 = vadd.f32 0.0, %v5665
      %v5667 = vpop.f32.mrf.mxu0
      %5668 = vmatprep.mubr.f32.mxu0 0.0
      %5669 = vmatmul.mubr.f32.gmra.mxu0 %v5496
      %v5670 = vpop.f32.mrf.mxu0
      %v5671 = vadd.f32 0.0, %v5670
      %v5672 = vpop.f32.mrf.mxu0
      %5673 = vmatprep.mubr.f32.mxu0 0.0
      %5674 = vmatmul.mubr.f32.gmra.mxu0 %v5499
      %v5675 = vpop.f32.mrf.mxu0
      %v5676 = vadd.f32 0.0, %v5675
      %v5677 = vpop.f32.mrf.mxu0
      %5678 = vmatprep.mubr.f32.mxu0 0.0
      %5679 = vmatmul.mubr.f32.gmra.mxu0 %v5502
      %v5680 = vpop.f32.mrf.mxu0
      %v5681 = vadd.f32 0.0, %v5680
      %v5682 = vpop.f32.mrf.mxu0
      %5683 = vmatprep.mubr.f32.mxu0 0.0
      %5684 = vmatmul.mubr.f32.gmra.mxu0 %v5505
      %v5685 = vpop.f32.mrf.mxu0
      %v5686 = vadd.f32 0.0, %v5685
      %v5687 = vpop.f32.mrf.mxu0
      %5688 = vmatprep.mubr.f32.mxu0 0.0
      %5689 = vmatmul.mubr.f32.gmra.mxu0 %v5508
      %v5690 = vpop.f32.mrf.mxu0
      %v5691 = vadd.f32 0.0, %v5690
      %v5692 = vpop.f32.mrf.mxu0
      %5693 = vmatprep.mubr.f32.mxu0 0.0
      %5694 = vmatmul.mubr.f32.gmra.mxu0 %v5511
      %v5695 = vpop.f32.mrf.mxu0
      %v5696 = vadd.f32 0.0, %v5695
      %v5697 = vpop.f32.mrf.mxu0
      %5698 = vmatprep.mubr.f32.mxu0 0.0
      %5699 = vmatmul.mubr.f32.gmra.mxu0 %v5514
      %v5700 = vpop.f32.mrf.mxu0
      %v5701 = vadd.f32 0.0, %v5700
      %v5702 = vpop.f32.mrf.mxu0
      %5703 = vmatprep.mubr.f32.mxu0 0.0
      %5704 = vmatmul.mubr.f32.gmra.mxu0 %v5517
      %v5705 = vpop.f32.mrf.mxu0
      %v5706 = vadd.f32 0.0, %v5705
      %v5707 = vpop.f32.mrf.mxu0
      %5708 = vmatprep.mubr.f32.mxu0 0.0
      %5709 = vmatmul.mubr.f32.gmra.mxu0 %v5520
      %v5710 = vpop.f32.mrf.mxu0
      %v5711 = vadd.f32 0.0, %v5710
      %v5712 = vpop.f32.mrf.mxu0
      %5713 = vmatprep.mubr.f32.mxu0 0.0
      %5714 = vmatmul.mubr.f32.gmra.mxu0 %v5523
      %v5715 = vpop.f32.mrf.mxu0
      %v5716 = vadd.f32 0.0, %v5715
      %v5717 = vpop.f32.mrf.mxu0
      %5718 = vmatprep.mubr.f32.mxu0 0.0
      %5719 = vmatmul.mubr.f32.gmra.mxu0 %v5526
      %v5720 = vpop.f32.mrf.mxu0
      %v5721 = vadd.f32 0.0, %v5720
      %v5722 = vpop.f32.mrf.mxu0
      %5723 = vmatprep.mubr.f32.mxu0 0.0
      %5724 = vmatmul.mubr.f32.gmra.mxu0 %v5529
      %v5725 = vpop.f32.mrf.mxu0
      %v5726 = vadd.f32 0.0, %v5725
      %v5727 = vpop.f32.mrf.mxu0
      %5728 = vmatprep.mubr.f32.mxu0 0.0
      %5729 = vmatmul.mubr.f32.gmra.mxu0 %v5532
      %v5730 = vpop.f32.mrf.mxu0
      %v5731 = vadd.f32 0.0, %v5730
      %v5732 = vpop.f32.mrf.mxu0
      %5733 = vmatprep.mubr.f32.mxu0 0.0
      %5734 = vmatmul.mubr.f32.gmra.mxu0 %v5535
      %v5735 = vpop.f32.mrf.mxu0
      %v5736 = vadd.f32 0.0, %v5735
      %v5737 = vpop.f32.mrf.mxu0
      %5738 = vmatprep.mubr.f32.mxu0 0.0
      %5739 = vmatmul.mubr.f32.gmra.mxu0 %v5538
      %v5740 = vpop.f32.mrf.mxu0
      %v5741 = vadd.f32 0.0, %v5740
      %v5742 = vpop.f32.mrf.mxu0
      %5743 = vmatprep.mubr.f32.mxu0 0.0
      %5744 = vmatmul.mubr.f32.gmra.mxu0 %v5541
      %v5745 = vpop.f32.mrf.mxu0
      %v5746 = vadd.f32 0.0, %v5745
      %v5747 = vpop.f32.mrf.mxu0
      %5748 = vmatprep.mubr.f32.mxu0 0.0
      %5749 = vmatmul.mubr.f32.gmra.mxu0 %v5544
      %v5750 = vpop.f32.mrf.mxu0
      %v5751 = vadd.f32 0.0, %v5750
      %v5752 = vpop.f32.mrf.mxu0
      %5753 = vmatprep.mubr.f32.mxu0 0.0
      %5754 = vmatmul.mubr.f32.gmra.mxu0 %v5547
      %v5755 = vpop.f32.mrf.mxu0
      %v5756 = vadd.f32 0.0, %v5755
      %v5757 = vpop.f32.mrf.mxu0
      %5758 = vmatprep.mubr.f32.mxu0 0.0
      %5759 = vmatmul.mubr.f32.gmra.mxu0 %v5550
      %v5760 = vpop.f32.mrf.mxu0
      %v5761 = vadd.f32 0.0, %v5760
      %v5762 = vpop.f32.mrf.mxu0
      %5763 = vmatprep.mubr.f32.mxu0 0.0
      %5764 = vmatmul.mubr.f32.gmra.mxu0 %v5553
      %v5765 = vpop.f32.mrf.mxu0
      %v5766 = vadd.f32 0.0, %v5765
      %v5767 = vpop.f32.mrf.mxu0
      %5768 = vmatprep.mubr.f32.mxu0 0.0
      %5769 = vmatmul.mubr.f32.gmra.mxu0 %v5556
      %v5770 = vpop.f32.mrf.mxu0
      %v5771 = vadd.f32 0.0, %v5770
      %v5772 = vpop.f32.mrf.mxu0
      %5773 = vmatprep.mubr.f32.mxu0 0.0
      %5774 = vmatmul.mubr.f32.gmra.mxu0 %v5559
      %v5775 = vpop.f32.mrf.mxu0
      %v5776 = vadd.f32 0.0, %v5775
      %v5777 = vpop.f32.mrf.mxu0
      %5778 = vmatprep.mubr.f32.mxu0 0.0
      %5779 = vmatmul.mubr.f32.gmra.mxu0 %v5562
      %v5780 = vpop.f32.mrf.mxu0
      %v5781 = vadd.f32 0.0, %v5780
      %v5782 = vpop.f32.mrf.mxu0
      %5783 = vmatprep.mubr.f32.mxu0 0.0
      %5784 = vmatmul.mubr.f32.gmra.mxu0 %v5565
      %v5785 = vpop.f32.mrf.mxu0
      %v5786 = vadd.f32 0.0, %v5785
      %v5787 = vpop.f32.mrf.mxu0
      %5788 = vmatprep.mubr.f32.mxu0 0.0
      %5789 = vmatmul.mubr.f32.gmra.mxu0 %v5568
      %v5790 = vpop.f32.mrf.mxu0
      %v5791 = vadd.f32 0.0, %v5790
      %v5792 = vpop.f32.mrf.mxu0
      %5793 = vmatprep.mubr.f32.mxu0 0.0
      %5794 = vmatmul.mubr.f32.gmra.mxu0 %v5571
      %v5795 = vpop.f32.mrf.mxu0
      %v5796 = vadd.f32 0.0, %v5795
      %v5797 = vpop.f32.mrf.mxu0
      %5798 = vmatprep.mubr.f32.mxu0 0.0
      %5799 = vmatmul.mubr.f32.gmra.mxu0 %v5574
      %v5800 = vpop.f32.mrf.mxu0
      %v5801 = vadd.f32 0.0, %v5800
      %v5802 = vpop.f32.mrf.mxu0
      %5803 = vdwg.mxu0
      %v5804 = vadd.f32 %v5414, %v5646
      %v5805 = vadd.f32 %v5415, %v5651
      %v5806 = vadd.f32 %v5416, %v5656
      %v5807 = vadd.f32 %v5417, %v5661
      %v5808 = vadd.f32 %v5418, %v5666
      %v5809 = vadd.f32 %v5419, %v5671
      %v5810 = vadd.f32 %v5420, %v5676
      %v5811 = vadd.f32 %v5421, %v5681
      %v5812 = vadd.f32 %v5422, %v5686
      %v5813 = vadd.f32 %v5423, %v5691
      %v5814 = vadd.f32 %v5424, %v5696
      %v5815 = vadd.f32 %v5425, %v5701
      %v5816 = vadd.f32 %v5426, %v5706
      %v5817 = vadd.f32 %v5427, %v5711
      %v5818 = vadd.f32 %v5428, %v5716
      %v5819 = vadd.f32 %v5429, %v5721
      %v5820 = vadd.f32 %v5430, %v5726
      %v5821 = vadd.f32 %v5431, %v5731
      %v5822 = vadd.f32 %v5432, %v5736
      %v5823 = vadd.f32 %v5433, %v5741
      %v5824 = vadd.f32 %v5434, %v5746
      %v5825 = vadd.f32 %v5435, %v5751
      %v5826 = vadd.f32 %v5436, %v5756
      %v5827 = vadd.f32 %v5437, %v5761
      %v5828 = vadd.f32 %v5438, %v5766
      %v5829 = vadd.f32 %v5439, %v5771
      %v5830 = vadd.f32 %v5440, %v5776
      %v5831 = vadd.f32 %v5441, %v5781
      %v5832 = vadd.f32 %v5442, %v5786
      %v5833 = vadd.f32 %v5443, %v5791
      %v5834 = vadd.f32 %v5444, %v5796
      %v5835 = vadd.f32 %v5445, %v5801
      %v5836 = vld [vmem:[%s3918 + $0x2] sm:$0xff]
      %v5837 = vld [vmem:[%s3918 + $0xa] sm:$0xff]
      %v5838 = vld [vmem:[%s3918 + $0x1a] sm:$0xff]
      %v5839 = vld [vmem:[%s3918 + $0x22] sm:$0xff]
      %v5840 = vld [vmem:[%s3918 + $0x32] sm:$0xff]
      %v5841 = vld [vmem:[%s3918 + $0x3a] sm:$0xff]
      %v5842 = vld [vmem:[%s3918 + $0x4a] sm:$0xff]
      %v5843 = vld [vmem:[%s3918 + $0x52] sm:$0xff]
      %v5844 = vld [vmem:[%s3918 + $0x62] sm:$0xff]
      %v5845 = vld [vmem:[%s3918 + $0x6a] sm:$0xff]
      %v5846 = vld [vmem:[%s3918 + $0x7a] sm:$0xff]
      %v5847 = vld [vmem:[%s3918 + $0x82] sm:$0xff]
      %v5848 = vld [vmem:[%s3918 + $0x92] sm:$0xff]
      %v5849 = vld [vmem:[%s3918 + $0x9a] sm:$0xff]
      %v5850 = vld [vmem:[%s3918 + $0xaa] sm:$0xff]
      %v5851 = vld [vmem:[%s3918 + $0xb2] sm:$0xff]
      %v5852 = vld [vmem:[%s3918 + $0xc2] sm:$0xff]
      %v5853 = vld [vmem:[%s3918 + $0xca] sm:$0xff]
      %v5854 = vld [vmem:[%s3918 + $0xda] sm:$0xff]
      %v5855 = vld [vmem:[%s3918 + $0xe2] sm:$0xff]
      %v5856 = vld [vmem:[%s3918 + $0xf2] sm:$0xff]
      %v5857 = vld [vmem:[%s3918 + $0xfa] sm:$0xff]
      %v5858 = vld [vmem:[%s3918 + $0x10a] sm:$0xff]
      %v5859 = vld [vmem:[%s3918 + $0x112] sm:$0xff]
      %v5860 = vld [vmem:[%s3918 + $0x122] sm:$0xff]
      %v5861 = vld [vmem:[%s3918 + $0x12a] sm:$0xff]
      %v5862 = vld [vmem:[%s3918 + $0x13a] sm:$0xff]
      %v5863 = vld [vmem:[%s3918 + $0x142] sm:$0xff]
      %v5864 = vld [vmem:[%s3918 + $0x152] sm:$0xff]
      %v5865 = vld [vmem:[%s3918 + $0x15a] sm:$0xff]
      %v5866 = vld [vmem:[%s3918 + $0x16a] sm:$0xff]
      %v5867 = vld [vmem:[%s3918 + $0x172] sm:$0xff]
      %s5868 = scalar_lea.vmem %s3, 20
      %v5869 = vld [vmem:[%s5868] sm:$0xf]
      %v5871 = vsel %vm225, %v5836, 0
      %v5874 = vsel %vm225, %v5837, 0
      %v5877 = vsel %vm225, %v5838, 0
      %v5880 = vsel %vm225, %v5839, 0
      %v5883 = vsel %vm225, %v5840, 0
      %v5886 = vsel %vm225, %v5841, 0
      %v5889 = vsel %vm225, %v5842, 0
      %v5892 = vsel %vm225, %v5843, 0
      %v5895 = vsel %vm225, %v5844, 0
      %v5898 = vsel %vm225, %v5845, 0
      %v5901 = vsel %vm225, %v5846, 0
      %v5904 = vsel %vm225, %v5847, 0
      %v5907 = vsel %vm225, %v5848, 0
      %v5910 = vsel %vm225, %v5849, 0
      %v5913 = vsel %vm225, %v5850, 0
      %v5916 = vsel %vm225, %v5851, 0
      %v5919 = vsel %vm225, %v5852, 0
      %v5922 = vsel %vm225, %v5853, 0
      %v5925 = vsel %vm225, %v5854, 0
      %v5928 = vsel %vm225, %v5855, 0
      %v5931 = vsel %vm225, %v5856, 0
      %v5934 = vsel %vm225, %v5857, 0
      %v5937 = vsel %vm225, %v5858, 0
      %v5940 = vsel %vm225, %v5859, 0
      %v5943 = vsel %vm225, %v5860, 0
      %v5946 = vsel %vm225, %v5861, 0
      %v5949 = vsel %vm225, %v5862, 0
      %v5952 = vsel %vm225, %v5863, 0
      %v5955 = vsel %vm225, %v5864, 0
      %v5958 = vsel %vm225, %v5865, 0
      %v5961 = vsel %vm225, %v5866, 0
      %v5964 = vsel %vm225, %v5867, 0
      %v5967 = vsel %vm509, %v5869, 0
      %5969 = vmatprep.subr.mxu0 0.0
      %5970 = vmatpush1.msra.mxu0 0.0
      %5971 = vmatprep.subr.mxu0 0.0
      %5972 = vmatpush1.msra.mxu0 0.0
      %5973 = vmatprep.subr.mxu0 0.0
      %5974 = vmatpush1.msra.mxu0 0.0
      %5975 = vmatprep.subr.mxu0 0.0
      %5976 = vmatpush1.msra.mxu0 0.0
      %5977 = vmatprep.subr.mxu0 0.0
      %5978 = vmatpush1.msra.mxu0 0.0
      %5979 = vmatprep.subr.mxu0 0.0
      %5980 = vmatpush1.msra.mxu0 0.0
      %5981 = vmatprep.subr.mxu0 0.0
      %5982 = vmatpush1.msra.mxu0 0.0
      %5983 = vmatprep.subr.mxu0 0.0
      %5984 = vmatpush1.msra.mxu0 0.0
      %5985 = vmatprep.subr.mxu0 0.0
      %5986 = vmatpush1.msra.mxu0 0.0
      %5987 = vmatprep.subr.mxu0 0.0
      %5988 = vmatpush1.msra.mxu0 0.0
      %5989 = vmatprep.subr.mxu0 0.0
      %5990 = vmatpush1.msra.mxu0 0.0
      %5991 = vmatprep.subr.mxu0 0.0
      %5992 = vmatpush1.msra.mxu0 0.0
      %5993 = vmatprep.subr.mxu0 0.0
      %5994 = vmatpush1.msra.mxu0 0.0
      %5995 = vmatprep.subr.mxu0 0.0
      %5996 = vmatpush1.msra.mxu0 0.0
      %5997 = vmatprep.subr.mxu0 0.0
      %5998 = vmatpush1.msra.mxu0 0.0
      %5999 = vmatprep.subr.mxu0 0.0
      %6000 = vmatpush1.msra.mxu0 %v5967
      %6001 = vmatprep.subr.mxu0 0.0
      %6002 = vmatpush2.msra.mxu0 0.0
      %6003 = vmatprep.subr.mxu0 0.0
      %6004 = vmatpush2.msra.mxu0 0.0
      %6005 = vmatprep.subr.mxu0 0.0
      %6006 = vmatpush2.msra.mxu0 0.0
      %6007 = vmatprep.subr.mxu0 0.0
      %6008 = vmatpush2.msra.mxu0 0.0
      %6009 = vmatprep.subr.mxu0 0.0
      %6010 = vmatpush2.msra.mxu0 0.0
      %6011 = vmatprep.subr.mxu0 0.0
      %6012 = vmatpush2.msra.mxu0 0.0
      %6013 = vmatprep.subr.mxu0 0.0
      %6014 = vmatpush2.msra.mxu0 0.0
      %6015 = vmatprep.subr.mxu0 0.0
      %6016 = vmatpush2.msra.mxu0 0.0
      %6017 = vmatprep.subr.mxu0 0.0
      %6018 = vmatpush2.msra.mxu0 0.0
      %6019 = vmatprep.subr.mxu0 0.0
      %6020 = vmatpush2.msra.mxu0 0.0
      %6021 = vmatprep.subr.mxu0 0.0
      %6022 = vmatpush2.msra.mxu0 0.0
      %6023 = vmatprep.subr.mxu0 0.0
      %6024 = vmatpush2.msra.mxu0 0.0
      %6025 = vmatprep.subr.mxu0 0.0
      %6026 = vmatpush2.msra.mxu0 0.0
      %6027 = vmatprep.subr.mxu0 0.0
      %6028 = vmatpush2.msra.mxu0 0.0
      %6029 = vmatprep.subr.mxu0 0.0
      %6030 = vmatpush2.msra.mxu0 0.0
      %6031 = vmatprep.subr.mxu0 0.0
      %6032 = vmatpush2.msra.mxu0 0.0
      %6033 = vmatprep.mubr.f32.mxu0 0.0
      %6034 = vmatmul.mubr.f32.gmra.mxu0 %v5871
      %v6035 = vpop.f32.mrf.mxu0
      %v6036 = vadd.f32 0.0, %v6035
      %v6037 = vpop.f32.mrf.mxu0
      %6038 = vmatprep.mubr.f32.mxu0 0.0
      %6039 = vmatmul.mubr.f32.gmra.mxu0 %v5874
      %v6040 = vpop.f32.mrf.mxu0
      %v6041 = vadd.f32 0.0, %v6040
      %v6042 = vpop.f32.mrf.mxu0
      %6043 = vmatprep.mubr.f32.mxu0 0.0
      %6044 = vmatmul.mubr.f32.gmra.mxu0 %v5877
      %v6045 = vpop.f32.mrf.mxu0
      %v6046 = vadd.f32 0.0, %v6045
      %v6047 = vpop.f32.mrf.mxu0
      %6048 = vmatprep.mubr.f32.mxu0 0.0
      %6049 = vmatmul.mubr.f32.gmra.mxu0 %v5880
      %v6050 = vpop.f32.mrf.mxu0
      %v6051 = vadd.f32 0.0, %v6050
      %v6052 = vpop.f32.mrf.mxu0
      %6053 = vmatprep.mubr.f32.mxu0 0.0
      %6054 = vmatmul.mubr.f32.gmra.mxu0 %v5883
      %v6055 = vpop.f32.mrf.mxu0
      %v6056 = vadd.f32 0.0, %v6055
      %v6057 = vpop.f32.mrf.mxu0
      %6058 = vmatprep.mubr.f32.mxu0 0.0
      %6059 = vmatmul.mubr.f32.gmra.mxu0 %v5886
      %v6060 = vpop.f32.mrf.mxu0
      %v6061 = vadd.f32 0.0, %v6060
      %v6062 = vpop.f32.mrf.mxu0
      %6063 = vmatprep.mubr.f32.mxu0 0.0
      %6064 = vmatmul.mubr.f32.gmra.mxu0 %v5889
      %v6065 = vpop.f32.mrf.mxu0
      %v6066 = vadd.f32 0.0, %v6065
      %v6067 = vpop.f32.mrf.mxu0
      %6068 = vmatprep.mubr.f32.mxu0 0.0
      %6069 = vmatmul.mubr.f32.gmra.mxu0 %v5892
      %v6070 = vpop.f32.mrf.mxu0
      %v6071 = vadd.f32 0.0, %v6070
      %v6072 = vpop.f32.mrf.mxu0
      %6073 = vmatprep.mubr.f32.mxu0 0.0
      %6074 = vmatmul.mubr.f32.gmra.mxu0 %v5895
      %v6075 = vpop.f32.mrf.mxu0
      %v6076 = vadd.f32 0.0, %v6075
      %v6077 = vpop.f32.mrf.mxu0
      %6078 = vmatprep.mubr.f32.mxu0 0.0
      %6079 = vmatmul.mubr.f32.gmra.mxu0 %v5898
      %v6080 = vpop.f32.mrf.mxu0
      %v6081 = vadd.f32 0.0, %v6080
      %v6082 = vpop.f32.mrf.mxu0
      %6083 = vmatprep.mubr.f32.mxu0 0.0
      %6084 = vmatmul.mubr.f32.gmra.mxu0 %v5901
      %v6085 = vpop.f32.mrf.mxu0
      %v6086 = vadd.f32 0.0, %v6085
      %v6087 = vpop.f32.mrf.mxu0
      %6088 = vmatprep.mubr.f32.mxu0 0.0
      %6089 = vmatmul.mubr.f32.gmra.mxu0 %v5904
      %v6090 = vpop.f32.mrf.mxu0
      %v6091 = vadd.f32 0.0, %v6090
      %v6092 = vpop.f32.mrf.mxu0
      %6093 = vmatprep.mubr.f32.mxu0 0.0
      %6094 = vmatmul.mubr.f32.gmra.mxu0 %v5907
      %v6095 = vpop.f32.mrf.mxu0
      %v6096 = vadd.f32 0.0, %v6095
      %v6097 = vpop.f32.mrf.mxu0
      %6098 = vmatprep.mubr.f32.mxu0 0.0
      %6099 = vmatmul.mubr.f32.gmra.mxu0 %v5910
      %v6100 = vpop.f32.mrf.mxu0
      %v6101 = vadd.f32 0.0, %v6100
      %v6102 = vpop.f32.mrf.mxu0
      %6103 = vmatprep.mubr.f32.mxu0 0.0
      %6104 = vmatmul.mubr.f32.gmra.mxu0 %v5913
      %v6105 = vpop.f32.mrf.mxu0
      %v6106 = vadd.f32 0.0, %v6105
      %v6107 = vpop.f32.mrf.mxu0
      %6108 = vmatprep.mubr.f32.mxu0 0.0
      %6109 = vmatmul.mubr.f32.gmra.mxu0 %v5916
      %v6110 = vpop.f32.mrf.mxu0
      %v6111 = vadd.f32 0.0, %v6110
      %v6112 = vpop.f32.mrf.mxu0
      %6113 = vmatprep.mubr.f32.mxu0 0.0
      %6114 = vmatmul.mubr.f32.gmra.mxu0 %v5919
      %v6115 = vpop.f32.mrf.mxu0
      %v6116 = vadd.f32 0.0, %v6115
      %v6117 = vpop.f32.mrf.mxu0
      %6118 = vmatprep.mubr.f32.mxu0 0.0
      %6119 = vmatmul.mubr.f32.gmra.mxu0 %v5922
      %v6120 = vpop.f32.mrf.mxu0
      %v6121 = vadd.f32 0.0, %v6120
      %v6122 = vpop.f32.mrf.mxu0
      %6123 = vmatprep.mubr.f32.mxu0 0.0
      %6124 = vmatmul.mubr.f32.gmra.mxu0 %v5925
      %v6125 = vpop.f32.mrf.mxu0
      %v6126 = vadd.f32 0.0, %v6125
      %v6127 = vpop.f32.mrf.mxu0
      %6128 = vmatprep.mubr.f32.mxu0 0.0
      %6129 = vmatmul.mubr.f32.gmra.mxu0 %v5928
      %v6130 = vpop.f32.mrf.mxu0
      %v6131 = vadd.f32 0.0, %v6130
      %v6132 = vpop.f32.mrf.mxu0
      %6133 = vmatprep.mubr.f32.mxu0 0.0
      %6134 = vmatmul.mubr.f32.gmra.mxu0 %v5931
      %v6135 = vpop.f32.mrf.mxu0
      %v6136 = vadd.f32 0.0, %v6135
      %v6137 = vpop.f32.mrf.mxu0
      %6138 = vmatprep.mubr.f32.mxu0 0.0
      %6139 = vmatmul.mubr.f32.gmra.mxu0 %v5934
      %v6140 = vpop.f32.mrf.mxu0
      %v6141 = vadd.f32 0.0, %v6140
      %v6142 = vpop.f32.mrf.mxu0
      %6143 = vmatprep.mubr.f32.mxu0 0.0
      %6144 = vmatmul.mubr.f32.gmra.mxu0 %v5937
      %v6145 = vpop.f32.mrf.mxu0
      %v6146 = vadd.f32 0.0, %v6145
      %v6147 = vpop.f32.mrf.mxu0
      %6148 = vmatprep.mubr.f32.mxu0 0.0
      %6149 = vmatmul.mubr.f32.gmra.mxu0 %v5940
      %v6150 = vpop.f32.mrf.mxu0
      %v6151 = vadd.f32 0.0, %v6150
      %v6152 = vpop.f32.mrf.mxu0
      %6153 = vmatprep.mubr.f32.mxu0 0.0
      %6154 = vmatmul.mubr.f32.gmra.mxu0 %v5943
      %v6155 = vpop.f32.mrf.mxu0
      %v6156 = vadd.f32 0.0, %v6155
      %v6157 = vpop.f32.mrf.mxu0
      %6158 = vmatprep.mubr.f32.mxu0 0.0
      %6159 = vmatmul.mubr.f32.gmra.mxu0 %v5946
      %v6160 = vpop.f32.mrf.mxu0
      %v6161 = vadd.f32 0.0, %v6160
      %v6162 = vpop.f32.mrf.mxu0
      %6163 = vmatprep.mubr.f32.mxu0 0.0
      %6164 = vmatmul.mubr.f32.gmra.mxu0 %v5949
      %v6165 = vpop.f32.mrf.mxu0
      %v6166 = vadd.f32 0.0, %v6165
      %v6167 = vpop.f32.mrf.mxu0
      %6168 = vmatprep.mubr.f32.mxu0 0.0
      %6169 = vmatmul.mubr.f32.gmra.mxu0 %v5952
      %v6170 = vpop.f32.mrf.mxu0
      %v6171 = vadd.f32 0.0, %v6170
      %v6172 = vpop.f32.mrf.mxu0
      %6173 = vmatprep.mubr.f32.mxu0 0.0
      %6174 = vmatmul.mubr.f32.gmra.mxu0 %v5955
      %v6175 = vpop.f32.mrf.mxu0
      %v6176 = vadd.f32 0.0, %v6175
      %v6177 = vpop.f32.mrf.mxu0
      %6178 = vmatprep.mubr.f32.mxu0 0.0
      %6179 = vmatmul.mubr.f32.gmra.mxu0 %v5958
      %v6180 = vpop.f32.mrf.mxu0
      %v6181 = vadd.f32 0.0, %v6180
      %v6182 = vpop.f32.mrf.mxu0
      %6183 = vmatprep.mubr.f32.mxu0 0.0
      %6184 = vmatmul.mubr.f32.gmra.mxu0 %v5961
      %v6185 = vpop.f32.mrf.mxu0
      %v6186 = vadd.f32 0.0, %v6185
      %v6187 = vpop.f32.mrf.mxu0
      %6188 = vmatprep.mubr.f32.mxu0 0.0
      %6189 = vmatmul.mubr.f32.gmra.mxu0 %v5964
      %v6190 = vpop.f32.mrf.mxu0
      %v6191 = vadd.f32 0.0, %v6190
      %v6192 = vpop.f32.mrf.mxu0
      %6193 = vdwg.mxu0
      %v6194 = vadd.f32 %v5804, %v6036
      %v6195 = vadd.f32 %v5805, %v6041
      %v6196 = vadd.f32 %v5806, %v6046
      %v6197 = vadd.f32 %v5807, %v6051
      %v6198 = vadd.f32 %v5808, %v6056
      %v6199 = vadd.f32 %v5809, %v6061
      %v6200 = vadd.f32 %v5810, %v6066
      %v6201 = vadd.f32 %v5811, %v6071
      %v6202 = vadd.f32 %v5812, %v6076
      %v6203 = vadd.f32 %v5813, %v6081
      %v6204 = vadd.f32 %v5814, %v6086
      %v6205 = vadd.f32 %v5815, %v6091
      %v6206 = vadd.f32 %v5816, %v6096
      %v6207 = vadd.f32 %v5817, %v6101
      %v6208 = vadd.f32 %v5818, %v6106
      %v6209 = vadd.f32 %v5819, %v6111
      %v6210 = vadd.f32 %v5820, %v6116
      %v6211 = vadd.f32 %v5821, %v6121
      %v6212 = vadd.f32 %v5822, %v6126
      %v6213 = vadd.f32 %v5823, %v6131
      %v6214 = vadd.f32 %v5824, %v6136
      %v6215 = vadd.f32 %v5825, %v6141
      %v6216 = vadd.f32 %v5826, %v6146
      %v6217 = vadd.f32 %v5827, %v6151
      %v6218 = vadd.f32 %v5828, %v6156
      %v6219 = vadd.f32 %v5829, %v6161
      %v6220 = vadd.f32 %v5830, %v6166
      %v6221 = vadd.f32 %v5831, %v6171
      %v6222 = vadd.f32 %v5832, %v6176
      %v6223 = vadd.f32 %v5833, %v6181
      %v6224 = vadd.f32 %v5834, %v6186
      %v6225 = vadd.f32 %v5835, %v6191
      %s6226 = scalar_lea.vmem [#allocation3], 48
      %v6227 = vld [vmem:[%s6226] sm:$0xff]
      %v6228 = vld [vmem:[%s6226 + $0x8] sm:$0xff]
      %v6229 = vld [vmem:[%s6226 + $0x18] sm:$0xff]
      %v6230 = vld [vmem:[%s6226 + $0x20] sm:$0xff]
      %v6231 = vld [vmem:[%s6226 + $0x30] sm:$0xff]
      %v6232 = vld [vmem:[%s6226 + $0x38] sm:$0xff]
      %v6233 = vld [vmem:[%s6226 + $0x48] sm:$0xff]
      %v6234 = vld [vmem:[%s6226 + $0x50] sm:$0xff]
      %v6235 = vld [vmem:[%s6226 + $0x60] sm:$0xff]
      %v6236 = vld [vmem:[%s6226 + $0x68] sm:$0xff]
      %v6237 = vld [vmem:[%s6226 + $0x78] sm:$0xff]
      %v6238 = vld [vmem:[%s6226 + $0x80] sm:$0xff]
      %v6239 = vld [vmem:[%s6226 + $0x90] sm:$0xff]
      %v6240 = vld [vmem:[%s6226 + $0x98] sm:$0xff]
      %v6241 = vld [vmem:[%s6226 + $0xa8] sm:$0xff]
      %v6242 = vld [vmem:[%s6226 + $0xb0] sm:$0xff]
      %v6243 = vld [vmem:[%s6226 + $0xc0] sm:$0xff]
      %v6244 = vld [vmem:[%s6226 + $0xc8] sm:$0xff]
      %v6245 = vld [vmem:[%s6226 + $0xd8] sm:$0xff]
      %v6246 = vld [vmem:[%s6226 + $0xe0] sm:$0xff]
      %v6247 = vld [vmem:[%s6226 + $0xf0] sm:$0xff]
      %v6248 = vld [vmem:[%s6226 + $0xf8] sm:$0xff]
      %v6249 = vld [vmem:[%s6226 + $0x108] sm:$0xff]
      %v6250 = vld [vmem:[%s6226 + $0x110] sm:$0xff]
      %v6251 = vld [vmem:[%s6226 + $0x120] sm:$0xff]
      %v6252 = vld [vmem:[%s6226 + $0x128] sm:$0xff]
      %v6253 = vld [vmem:[%s6226 + $0x138] sm:$0xff]
      %v6254 = vld [vmem:[%s6226 + $0x140] sm:$0xff]
      %v6255 = vld [vmem:[%s6226 + $0x150] sm:$0xff]
      %v6256 = vld [vmem:[%s6226 + $0x158] sm:$0xff]
      %v6257 = vld [vmem:[%s6226 + $0x168] sm:$0xff]
      %v6258 = vld [vmem:[%s6226 + $0x170] sm:$0xff]
      %s6259 = scalar_lea.vmem %s3, 24
      %v6260 = vld [vmem:[%s6259] sm:$0xf]
      %v6262 = vsel %vm225, %v6227, 0
      %v6265 = vsel %vm225, %v6228, 0
      %v6268 = vsel %vm225, %v6229, 0
      %v6271 = vsel %vm225, %v6230, 0
      %v6274 = vsel %vm225, %v6231, 0
      %v6277 = vsel %vm225, %v6232, 0
      %v6280 = vsel %vm225, %v6233, 0
      %v6283 = vsel %vm225, %v6234, 0
      %v6286 = vsel %vm225, %v6235, 0
      %v6289 = vsel %vm225, %v6236, 0
      %v6292 = vsel %vm225, %v6237, 0
      %v6295 = vsel %vm225, %v6238, 0
      %v6298 = vsel %vm225, %v6239, 0
      %v6301 = vsel %vm225, %v6240, 0
      %v6304 = vsel %vm225, %v6241, 0
      %v6307 = vsel %vm225, %v6242, 0
      %v6310 = vsel %vm225, %v6243, 0
      %v6313 = vsel %vm225, %v6244, 0
      %v6316 = vsel %vm225, %v6245, 0
      %v6319 = vsel %vm225, %v6246, 0
      %v6322 = vsel %vm225, %v6247, 0
      %v6325 = vsel %vm225, %v6248, 0
      %v6328 = vsel %vm225, %v6249, 0
      %v6331 = vsel %vm225, %v6250, 0
      %v6334 = vsel %vm225, %v6251, 0
      %v6337 = vsel %vm225, %v6252, 0
      %v6340 = vsel %vm225, %v6253, 0
      %v6343 = vsel %vm225, %v6254, 0
      %v6346 = vsel %vm225, %v6255, 0
      %v6349 = vsel %vm225, %v6256, 0
      %v6352 = vsel %vm225, %v6257, 0
      %v6355 = vsel %vm225, %v6258, 0
      %v6358 = vsel %vm509, %v6260, 0
      %6360 = vmatprep.subr.mxu0 0.0
      %6361 = vmatpush1.msra.mxu0 0.0
      %6362 = vmatprep.subr.mxu0 0.0
      %6363 = vmatpush1.msra.mxu0 0.0
      %6364 = vmatprep.subr.mxu0 0.0
      %6365 = vmatpush1.msra.mxu0 0.0
      %6366 = vmatprep.subr.mxu0 0.0
      %6367 = vmatpush1.msra.mxu0 0.0
      %6368 = vmatprep.subr.mxu0 0.0
      %6369 = vmatpush1.msra.mxu0 0.0
      %6370 = vmatprep.subr.mxu0 0.0
      %6371 = vmatpush1.msra.mxu0 0.0
      %6372 = vmatprep.subr.mxu0 0.0
      %6373 = vmatpush1.msra.mxu0 0.0
      %6374 = vmatprep.subr.mxu0 0.0
      %6375 = vmatpush1.msra.mxu0 0.0
      %6376 = vmatprep.subr.mxu0 0.0
      %6377 = vmatpush1.msra.mxu0 0.0
      %6378 = vmatprep.subr.mxu0 0.0
      %6379 = vmatpush1.msra.mxu0 0.0
      %6380 = vmatprep.subr.mxu0 0.0
      %6381 = vmatpush1.msra.mxu0 0.0
      %6382 = vmatprep.subr.mxu0 0.0
      %6383 = vmatpush1.msra.mxu0 0.0
      %6384 = vmatprep.subr.mxu0 0.0
      %6385 = vmatpush1.msra.mxu0 0.0
      %6386 = vmatprep.subr.mxu0 0.0
      %6387 = vmatpush1.msra.mxu0 0.0
      %6388 = vmatprep.subr.mxu0 0.0
      %6389 = vmatpush1.msra.mxu0 0.0
      %6390 = vmatprep.subr.mxu0 0.0
      %6391 = vmatpush1.msra.mxu0 %v6358
      %6392 = vmatprep.subr.mxu0 0.0
      %6393 = vmatpush2.msra.mxu0 0.0
      %6394 = vmatprep.subr.mxu0 0.0
      %6395 = vmatpush2.msra.mxu0 0.0
      %6396 = vmatprep.subr.mxu0 0.0
      %6397 = vmatpush2.msra.mxu0 0.0
      %6398 = vmatprep.subr.mxu0 0.0
      %6399 = vmatpush2.msra.mxu0 0.0
      %6400 = vmatprep.subr.mxu0 0.0
      %6401 = vmatpush2.msra.mxu0 0.0
      %6402 = vmatprep.subr.mxu0 0.0
      %6403 = vmatpush2.msra.mxu0 0.0
      %6404 = vmatprep.subr.mxu0 0.0
      %6405 = vmatpush2.msra.mxu0 0.0
      %6406 = vmatprep.subr.mxu0 0.0
      %6407 = vmatpush2.msra.mxu0 0.0
      %6408 = vmatprep.subr.mxu0 0.0
      %6409 = vmatpush2.msra.mxu0 0.0
      %6410 = vmatprep.subr.mxu0 0.0
      %6411 = vmatpush2.msra.mxu0 0.0
      %6412 = vmatprep.subr.mxu0 0.0
      %6413 = vmatpush2.msra.mxu0 0.0
      %6414 = vmatprep.subr.mxu0 0.0
      %6415 = vmatpush2.msra.mxu0 0.0
      %6416 = vmatprep.subr.mxu0 0.0
      %6417 = vmatpush2.msra.mxu0 0.0
      %6418 = vmatprep.subr.mxu0 0.0
      %6419 = vmatpush2.msra.mxu0 0.0
      %6420 = vmatprep.subr.mxu0 0.0
      %6421 = vmatpush2.msra.mxu0 0.0
      %6422 = vmatprep.subr.mxu0 0.0
      %6423 = vmatpush2.msra.mxu0 0.0
      %6424 = vmatprep.mubr.f32.mxu0 0.0
      %6425 = vmatmul.mubr.f32.gmra.mxu0 %v6262
      %v6426 = vpop.f32.mrf.mxu0
      %v6427 = vadd.f32 0.0, %v6426
      %v6428 = vpop.f32.mrf.mxu0
      %6429 = vmatprep.mubr.f32.mxu0 0.0
      %6430 = vmatmul.mubr.f32.gmra.mxu0 %v6265
      %v6431 = vpop.f32.mrf.mxu0
      %v6432 = vadd.f32 0.0, %v6431
      %v6433 = vpop.f32.mrf.mxu0
      %6434 = vmatprep.mubr.f32.mxu0 0.0
      %6435 = vmatmul.mubr.f32.gmra.mxu0 %v6268
      %v6436 = vpop.f32.mrf.mxu0
      %v6437 = vadd.f32 0.0, %v6436
      %v6438 = vpop.f32.mrf.mxu0
      %6439 = vmatprep.mubr.f32.mxu0 0.0
      %6440 = vmatmul.mubr.f32.gmra.mxu0 %v6271
      %v6441 = vpop.f32.mrf.mxu0
      %v6442 = vadd.f32 0.0, %v6441
      %v6443 = vpop.f32.mrf.mxu0
      %6444 = vmatprep.mubr.f32.mxu0 0.0
      %6445 = vmatmul.mubr.f32.gmra.mxu0 %v6274
      %v6446 = vpop.f32.mrf.mxu0
      %v6447 = vadd.f32 0.0, %v6446
      %v6448 = vpop.f32.mrf.mxu0
      %6449 = vmatprep.mubr.f32.mxu0 0.0
      %6450 = vmatmul.mubr.f32.gmra.mxu0 %v6277
      %v6451 = vpop.f32.mrf.mxu0
      %v6452 = vadd.f32 0.0, %v6451
      %v6453 = vpop.f32.mrf.mxu0
      %6454 = vmatprep.mubr.f32.mxu0 0.0
      %6455 = vmatmul.mubr.f32.gmra.mxu0 %v6280
      %v6456 = vpop.f32.mrf.mxu0
      %v6457 = vadd.f32 0.0, %v6456
      %v6458 = vpop.f32.mrf.mxu0
      %6459 = vmatprep.mubr.f32.mxu0 0.0
      %6460 = vmatmul.mubr.f32.gmra.mxu0 %v6283
      %v6461 = vpop.f32.mrf.mxu0
      %v6462 = vadd.f32 0.0, %v6461
      %v6463 = vpop.f32.mrf.mxu0
      %6464 = vmatprep.mubr.f32.mxu0 0.0
      %6465 = vmatmul.mubr.f32.gmra.mxu0 %v6286
      %v6466 = vpop.f32.mrf.mxu0
      %v6467 = vadd.f32 0.0, %v6466
      %v6468 = vpop.f32.mrf.mxu0
      %6469 = vmatprep.mubr.f32.mxu0 0.0
      %6470 = vmatmul.mubr.f32.gmra.mxu0 %v6289
      %v6471 = vpop.f32.mrf.mxu0
      %v6472 = vadd.f32 0.0, %v6471
      %v6473 = vpop.f32.mrf.mxu0
      %6474 = vmatprep.mubr.f32.mxu0 0.0
      %6475 = vmatmul.mubr.f32.gmra.mxu0 %v6292
      %v6476 = vpop.f32.mrf.mxu0
      %v6477 = vadd.f32 0.0, %v6476
      %v6478 = vpop.f32.mrf.mxu0
      %6479 = vmatprep.mubr.f32.mxu0 0.0
      %6480 = vmatmul.mubr.f32.gmra.mxu0 %v6295
      %v6481 = vpop.f32.mrf.mxu0
      %v6482 = vadd.f32 0.0, %v6481
      %v6483 = vpop.f32.mrf.mxu0
      %6484 = vmatprep.mubr.f32.mxu0 0.0
      %6485 = vmatmul.mubr.f32.gmra.mxu0 %v6298
      %v6486 = vpop.f32.mrf.mxu0
      %v6487 = vadd.f32 0.0, %v6486
      %v6488 = vpop.f32.mrf.mxu0
      %6489 = vmatprep.mubr.f32.mxu0 0.0
      %6490 = vmatmul.mubr.f32.gmra.mxu0 %v6301
      %v6491 = vpop.f32.mrf.mxu0
      %v6492 = vadd.f32 0.0, %v6491
      %v6493 = vpop.f32.mrf.mxu0
      %6494 = vmatprep.mubr.f32.mxu0 0.0
      %6495 = vmatmul.mubr.f32.gmra.mxu0 %v6304
      %v6496 = vpop.f32.mrf.mxu0
      %v6497 = vadd.f32 0.0, %v6496
      %v6498 = vpop.f32.mrf.mxu0
      %6499 = vmatprep.mubr.f32.mxu0 0.0
      %6500 = vmatmul.mubr.f32.gmra.mxu0 %v6307
      %v6501 = vpop.f32.mrf.mxu0
      %v6502 = vadd.f32 0.0, %v6501
      %v6503 = vpop.f32.mrf.mxu0
      %6504 = vmatprep.mubr.f32.mxu0 0.0
      %6505 = vmatmul.mubr.f32.gmra.mxu0 %v6310
      %v6506 = vpop.f32.mrf.mxu0
      %v6507 = vadd.f32 0.0, %v6506
      %v6508 = vpop.f32.mrf.mxu0
      %6509 = vmatprep.mubr.f32.mxu0 0.0
      %6510 = vmatmul.mubr.f32.gmra.mxu0 %v6313
      %v6511 = vpop.f32.mrf.mxu0
      %v6512 = vadd.f32 0.0, %v6511
      %v6513 = vpop.f32.mrf.mxu0
      %6514 = vmatprep.mubr.f32.mxu0 0.0
      %6515 = vmatmul.mubr.f32.gmra.mxu0 %v6316
      %v6516 = vpop.f32.mrf.mxu0
      %v6517 = vadd.f32 0.0, %v6516
      %v6518 = vpop.f32.mrf.mxu0
      %6519 = vmatprep.mubr.f32.mxu0 0.0
      %6520 = vmatmul.mubr.f32.gmra.mxu0 %v6319
      %v6521 = vpop.f32.mrf.mxu0
      %v6522 = vadd.f32 0.0, %v6521
      %v6523 = vpop.f32.mrf.mxu0
      %6524 = vmatprep.mubr.f32.mxu0 0.0
      %6525 = vmatmul.mubr.f32.gmra.mxu0 %v6322
      %v6526 = vpop.f32.mrf.mxu0
      %v6527 = vadd.f32 0.0, %v6526
      %v6528 = vpop.f32.mrf.mxu0
      %6529 = vmatprep.mubr.f32.mxu0 0.0
      %6530 = vmatmul.mubr.f32.gmra.mxu0 %v6325
      %v6531 = vpop.f32.mrf.mxu0
      %v6532 = vadd.f32 0.0, %v6531
      %v6533 = vpop.f32.mrf.mxu0
      %6534 = vmatprep.mubr.f32.mxu0 0.0
      %6535 = vmatmul.mubr.f32.gmra.mxu0 %v6328
      %v6536 = vpop.f32.mrf.mxu0
      %v6537 = vadd.f32 0.0, %v6536
      %v6538 = vpop.f32.mrf.mxu0
      %6539 = vmatprep.mubr.f32.mxu0 0.0
      %6540 = vmatmul.mubr.f32.gmra.mxu0 %v6331
      %v6541 = vpop.f32.mrf.mxu0
      %v6542 = vadd.f32 0.0, %v6541
      %v6543 = vpop.f32.mrf.mxu0
      %6544 = vmatprep.mubr.f32.mxu0 0.0
      %6545 = vmatmul.mubr.f32.gmra.mxu0 %v6334
      %v6546 = vpop.f32.mrf.mxu0
      %v6547 = vadd.f32 0.0, %v6546
      %v6548 = vpop.f32.mrf.mxu0
      %6549 = vmatprep.mubr.f32.mxu0 0.0
      %6550 = vmatmul.mubr.f32.gmra.mxu0 %v6337
      %v6551 = vpop.f32.mrf.mxu0
      %v6552 = vadd.f32 0.0, %v6551
      %v6553 = vpop.f32.mrf.mxu0
      %6554 = vmatprep.mubr.f32.mxu0 0.0
      %6555 = vmatmul.mubr.f32.gmra.mxu0 %v6340
      %v6556 = vpop.f32.mrf.mxu0
      %v6557 = vadd.f32 0.0, %v6556
      %v6558 = vpop.f32.mrf.mxu0
      %6559 = vmatprep.mubr.f32.mxu0 0.0
      %6560 = vmatmul.mubr.f32.gmra.mxu0 %v6343
      %v6561 = vpop.f32.mrf.mxu0
      %v6562 = vadd.f32 0.0, %v6561
      %v6563 = vpop.f32.mrf.mxu0
      %6564 = vmatprep.mubr.f32.mxu0 0.0
      %6565 = vmatmul.mubr.f32.gmra.mxu0 %v6346
      %v6566 = vpop.f32.mrf.mxu0
      %v6567 = vadd.f32 0.0, %v6566
      %v6568 = vpop.f32.mrf.mxu0
      %6569 = vmatprep.mubr.f32.mxu0 0.0
      %6570 = vmatmul.mubr.f32.gmra.mxu0 %v6349
      %v6571 = vpop.f32.mrf.mxu0
      %v6572 = vadd.f32 0.0, %v6571
      %v6573 = vpop.f32.mrf.mxu0
      %6574 = vmatprep.mubr.f32.mxu0 0.0
      %6575 = vmatmul.mubr.f32.gmra.mxu0 %v6352
      %v6576 = vpop.f32.mrf.mxu0
      %v6577 = vadd.f32 0.0, %v6576
      %v6578 = vpop.f32.mrf.mxu0
      %6579 = vmatprep.mubr.f32.mxu0 0.0
      %6580 = vmatmul.mubr.f32.gmra.mxu0 %v6355
      %v6581 = vpop.f32.mrf.mxu0
      %v6582 = vadd.f32 0.0, %v6581
      %v6583 = vpop.f32.mrf.mxu0
      %6584 = vdwg.mxu0
      %v6585 = vadd.f32 %v6194, %v6427
      %v6586 = vadd.f32 %v6195, %v6432
      %v6587 = vadd.f32 %v6196, %v6437
      %v6588 = vadd.f32 %v6197, %v6442
      %v6589 = vadd.f32 %v6198, %v6447
      %v6590 = vadd.f32 %v6199, %v6452
      %v6591 = vadd.f32 %v6200, %v6457
      %v6592 = vadd.f32 %v6201, %v6462
      %v6593 = vadd.f32 %v6202, %v6467
      %v6594 = vadd.f32 %v6203, %v6472
      %v6595 = vadd.f32 %v6204, %v6477
      %v6596 = vadd.f32 %v6205, %v6482
      %v6597 = vadd.f32 %v6206, %v6487
      %v6598 = vadd.f32 %v6207, %v6492
      %v6599 = vadd.f32 %v6208, %v6497
      %v6600 = vadd.f32 %v6209, %v6502
      %v6601 = vadd.f32 %v6210, %v6507
      %v6602 = vadd.f32 %v6211, %v6512
      %v6603 = vadd.f32 %v6212, %v6517
      %v6604 = vadd.f32 %v6213, %v6522
      %v6605 = vadd.f32 %v6214, %v6527
      %v6606 = vadd.f32 %v6215, %v6532
      %v6607 = vadd.f32 %v6216, %v6537
      %v6608 = vadd.f32 %v6217, %v6542
      %v6609 = vadd.f32 %v6218, %v6547
      %v6610 = vadd.f32 %v6219, %v6552
      %v6611 = vadd.f32 %v6220, %v6557
      %v6612 = vadd.f32 %v6221, %v6562
      %v6613 = vadd.f32 %v6222, %v6567
      %v6614 = vadd.f32 %v6223, %v6572
      %v6615 = vadd.f32 %v6224, %v6577
      %v6616 = vadd.f32 %v6225, %v6582
      %v6617 = vld [vmem:[%s6226 + $0x1] sm:$0xff]
      %v6618 = vld [vmem:[%s6226 + $0x9] sm:$0xff]
      %v6619 = vld [vmem:[%s6226 + $0x19] sm:$0xff]
      %v6620 = vld [vmem:[%s6226 + $0x21] sm:$0xff]
      %v6621 = vld [vmem:[%s6226 + $0x31] sm:$0xff]
      %v6622 = vld [vmem:[%s6226 + $0x39] sm:$0xff]
      %v6623 = vld [vmem:[%s6226 + $0x49] sm:$0xff]
      %v6624 = vld [vmem:[%s6226 + $0x51] sm:$0xff]
      %v6625 = vld [vmem:[%s6226 + $0x61] sm:$0xff]
      %v6626 = vld [vmem:[%s6226 + $0x69] sm:$0xff]
      %v6627 = vld [vmem:[%s6226 + $0x79] sm:$0xff]
      %v6628 = vld [vmem:[%s6226 + $0x81] sm:$0xff]
      %v6629 = vld [vmem:[%s6226 + $0x91] sm:$0xff]
      %v6630 = vld [vmem:[%s6226 + $0x99] sm:$0xff]
      %v6631 = vld [vmem:[%s6226 + $0xa9] sm:$0xff]
      %v6632 = vld [vmem:[%s6226 + $0xb1] sm:$0xff]
      %v6633 = vld [vmem:[%s6226 + $0xc1] sm:$0xff]
      %v6634 = vld [vmem:[%s6226 + $0xc9] sm:$0xff]
      %v6635 = vld [vmem:[%s6226 + $0xd9] sm:$0xff]
      %v6636 = vld [vmem:[%s6226 + $0xe1] sm:$0xff]
      %v6637 = vld [vmem:[%s6226 + $0xf1] sm:$0xff]
      %v6638 = vld [vmem:[%s6226 + $0xf9] sm:$0xff]
      %v6639 = vld [vmem:[%s6226 + $0x109] sm:$0xff]
      %v6640 = vld [vmem:[%s6226 + $0x111] sm:$0xff]
      %v6641 = vld [vmem:[%s6226 + $0x121] sm:$0xff]
      %v6642 = vld [vmem:[%s6226 + $0x129] sm:$0xff]
      %v6643 = vld [vmem:[%s6226 + $0x139] sm:$0xff]
      %v6644 = vld [vmem:[%s6226 + $0x141] sm:$0xff]
      %v6645 = vld [vmem:[%s6226 + $0x151] sm:$0xff]
      %v6646 = vld [vmem:[%s6226 + $0x159] sm:$0xff]
      %v6647 = vld [vmem:[%s6226 + $0x169] sm:$0xff]
      %v6648 = vld [vmem:[%s6226 + $0x171] sm:$0xff]
      %s6649 = scalar_lea.vmem %s3, 28
      %v6650 = vld [vmem:[%s6649] sm:$0xf]
      %v6652 = vsel %vm225, %v6617, 0
      %v6655 = vsel %vm225, %v6618, 0
      %v6658 = vsel %vm225, %v6619, 0
      %v6661 = vsel %vm225, %v6620, 0
      %v6664 = vsel %vm225, %v6621, 0
      %v6667 = vsel %vm225, %v6622, 0
      %v6670 = vsel %vm225, %v6623, 0
      %v6673 = vsel %vm225, %v6624, 0
      %v6676 = vsel %vm225, %v6625, 0
      %v6679 = vsel %vm225, %v6626, 0
      %v6682 = vsel %vm225, %v6627, 0
      %v6685 = vsel %vm225, %v6628, 0
      %v6688 = vsel %vm225, %v6629, 0
      %v6691 = vsel %vm225, %v6630, 0
      %v6694 = vsel %vm225, %v6631, 0
      %v6697 = vsel %vm225, %v6632, 0
      %v6700 = vsel %vm225, %v6633, 0
      %v6703 = vsel %vm225, %v6634, 0
      %v6706 = vsel %vm225, %v6635, 0
      %v6709 = vsel %vm225, %v6636, 0
      %v6712 = vsel %vm225, %v6637, 0
      %v6715 = vsel %vm225, %v6638, 0
      %v6718 = vsel %vm225, %v6639, 0
      %v6721 = vsel %vm225, %v6640, 0
      %v6724 = vsel %vm225, %v6641, 0
      %v6727 = vsel %vm225, %v6642, 0
      %v6730 = vsel %vm225, %v6643, 0
      %v6733 = vsel %vm225, %v6644, 0
      %v6736 = vsel %vm225, %v6645, 0
      %v6739 = vsel %vm225, %v6646, 0
      %v6742 = vsel %vm225, %v6647, 0
      %v6745 = vsel %vm225, %v6648, 0
      %v6748 = vsel %vm509, %v6650, 0
      %6750 = vmatprep.subr.mxu0 0.0
      %6751 = vmatpush1.msra.mxu0 0.0
      %6752 = vmatprep.subr.mxu0 0.0
      %6753 = vmatpush1.msra.mxu0 0.0
      %6754 = vmatprep.subr.mxu0 0.0
      %6755 = vmatpush1.msra.mxu0 0.0
      %6756 = vmatprep.subr.mxu0 0.0
      %6757 = vmatpush1.msra.mxu0 0.0
      %6758 = vmatprep.subr.mxu0 0.0
      %6759 = vmatpush1.msra.mxu0 0.0
      %6760 = vmatprep.subr.mxu0 0.0
      %6761 = vmatpush1.msra.mxu0 0.0
      %6762 = vmatprep.subr.mxu0 0.0
      %6763 = vmatpush1.msra.mxu0 0.0
      %6764 = vmatprep.subr.mxu0 0.0
      %6765 = vmatpush1.msra.mxu0 0.0
      %6766 = vmatprep.subr.mxu0 0.0
      %6767 = vmatpush1.msra.mxu0 0.0
      %6768 = vmatprep.subr.mxu0 0.0
      %6769 = vmatpush1.msra.mxu0 0.0
      %6770 = vmatprep.subr.mxu0 0.0
      %6771 = vmatpush1.msra.mxu0 0.0
      %6772 = vmatprep.subr.mxu0 0.0
      %6773 = vmatpush1.msra.mxu0 0.0
      %6774 = vmatprep.subr.mxu0 0.0
      %6775 = vmatpush1.msra.mxu0 0.0
      %6776 = vmatprep.subr.mxu0 0.0
      %6777 = vmatpush1.msra.mxu0 0.0
      %6778 = vmatprep.subr.mxu0 0.0
      %6779 = vmatpush1.msra.mxu0 0.0
      %6780 = vmatprep.subr.mxu0 0.0
      %6781 = vmatpush1.msra.mxu0 %v6748
      %6782 = vmatprep.subr.mxu0 0.0
      %6783 = vmatpush2.msra.mxu0 0.0
      %6784 = vmatprep.subr.mxu0 0.0
      %6785 = vmatpush2.msra.mxu0 0.0
      %6786 = vmatprep.subr.mxu0 0.0
      %6787 = vmatpush2.msra.mxu0 0.0
      %6788 = vmatprep.subr.mxu0 0.0
      %6789 = vmatpush2.msra.mxu0 0.0
      %6790 = vmatprep.subr.mxu0 0.0
      %6791 = vmatpush2.msra.mxu0 0.0
      %6792 = vmatprep.subr.mxu0 0.0
      %6793 = vmatpush2.msra.mxu0 0.0
      %6794 = vmatprep.subr.mxu0 0.0
      %6795 = vmatpush2.msra.mxu0 0.0
      %6796 = vmatprep.subr.mxu0 0.0
      %6797 = vmatpush2.msra.mxu0 0.0
      %6798 = vmatprep.subr.mxu0 0.0
      %6799 = vmatpush2.msra.mxu0 0.0
      %6800 = vmatprep.subr.mxu0 0.0
      %6801 = vmatpush2.msra.mxu0 0.0
      %6802 = vmatprep.subr.mxu0 0.0
      %6803 = vmatpush2.msra.mxu0 0.0
      %6804 = vmatprep.subr.mxu0 0.0
      %6805 = vmatpush2.msra.mxu0 0.0
      %6806 = vmatprep.subr.mxu0 0.0
      %6807 = vmatpush2.msra.mxu0 0.0
      %6808 = vmatprep.subr.mxu0 0.0
      %6809 = vmatpush2.msra.mxu0 0.0
      %6810 = vmatprep.subr.mxu0 0.0
      %6811 = vmatpush2.msra.mxu0 0.0
      %6812 = vmatprep.subr.mxu0 0.0
      %6813 = vmatpush2.msra.mxu0 0.0
      %6814 = vmatprep.mubr.f32.mxu0 0.0
      %6815 = vmatmul.mubr.f32.gmra.mxu0 %v6652
      %v6816 = vpop.f32.mrf.mxu0
      %v6817 = vadd.f32 0.0, %v6816
      %v6818 = vpop.f32.mrf.mxu0
      %6819 = vmatprep.mubr.f32.mxu0 0.0
      %6820 = vmatmul.mubr.f32.gmra.mxu0 %v6655
      %v6821 = vpop.f32.mrf.mxu0
      %v6822 = vadd.f32 0.0, %v6821
      %v6823 = vpop.f32.mrf.mxu0
      %6824 = vmatprep.mubr.f32.mxu0 0.0
      %6825 = vmatmul.mubr.f32.gmra.mxu0 %v6658
      %v6826 = vpop.f32.mrf.mxu0
      %v6827 = vadd.f32 0.0, %v6826
      %v6828 = vpop.f32.mrf.mxu0
      %6829 = vmatprep.mubr.f32.mxu0 0.0
      %6830 = vmatmul.mubr.f32.gmra.mxu0 %v6661
      %v6831 = vpop.f32.mrf.mxu0
      %v6832 = vadd.f32 0.0, %v6831
      %v6833 = vpop.f32.mrf.mxu0
      %6834 = vmatprep.mubr.f32.mxu0 0.0
      %6835 = vmatmul.mubr.f32.gmra.mxu0 %v6664
      %v6836 = vpop.f32.mrf.mxu0
      %v6837 = vadd.f32 0.0, %v6836
      %v6838 = vpop.f32.mrf.mxu0
      %6839 = vmatprep.mubr.f32.mxu0 0.0
      %6840 = vmatmul.mubr.f32.gmra.mxu0 %v6667
      %v6841 = vpop.f32.mrf.mxu0
      %v6842 = vadd.f32 0.0, %v6841
      %v6843 = vpop.f32.mrf.mxu0
      %6844 = vmatprep.mubr.f32.mxu0 0.0
      %6845 = vmatmul.mubr.f32.gmra.mxu0 %v6670
      %v6846 = vpop.f32.mrf.mxu0
      %v6847 = vadd.f32 0.0, %v6846
      %v6848 = vpop.f32.mrf.mxu0
      %6849 = vmatprep.mubr.f32.mxu0 0.0
      %6850 = vmatmul.mubr.f32.gmra.mxu0 %v6673
      %v6851 = vpop.f32.mrf.mxu0
      %v6852 = vadd.f32 0.0, %v6851
      %v6853 = vpop.f32.mrf.mxu0
      %6854 = vmatprep.mubr.f32.mxu0 0.0
      %6855 = vmatmul.mubr.f32.gmra.mxu0 %v6676
      %v6856 = vpop.f32.mrf.mxu0
      %v6857 = vadd.f32 0.0, %v6856
      %v6858 = vpop.f32.mrf.mxu0
      %6859 = vmatprep.mubr.f32.mxu0 0.0
      %6860 = vmatmul.mubr.f32.gmra.mxu0 %v6679
      %v6861 = vpop.f32.mrf.mxu0
      %v6862 = vadd.f32 0.0, %v6861
      %v6863 = vpop.f32.mrf.mxu0
      %6864 = vmatprep.mubr.f32.mxu0 0.0
      %6865 = vmatmul.mubr.f32.gmra.mxu0 %v6682
      %v6866 = vpop.f32.mrf.mxu0
      %v6867 = vadd.f32 0.0, %v6866
      %v6868 = vpop.f32.mrf.mxu0
      %6869 = vmatprep.mubr.f32.mxu0 0.0
      %6870 = vmatmul.mubr.f32.gmra.mxu0 %v6685
      %v6871 = vpop.f32.mrf.mxu0
      %v6872 = vadd.f32 0.0, %v6871
      %v6873 = vpop.f32.mrf.mxu0
      %6874 = vmatprep.mubr.f32.mxu0 0.0
      %6875 = vmatmul.mubr.f32.gmra.mxu0 %v6688
      %v6876 = vpop.f32.mrf.mxu0
      %v6877 = vadd.f32 0.0, %v6876
      %v6878 = vpop.f32.mrf.mxu0
      %6879 = vmatprep.mubr.f32.mxu0 0.0
      %6880 = vmatmul.mubr.f32.gmra.mxu0 %v6691
      %v6881 = vpop.f32.mrf.mxu0
      %v6882 = vadd.f32 0.0, %v6881
      %v6883 = vpop.f32.mrf.mxu0
      %6884 = vmatprep.mubr.f32.mxu0 0.0
      %6885 = vmatmul.mubr.f32.gmra.mxu0 %v6694
      %v6886 = vpop.f32.mrf.mxu0
      %v6887 = vadd.f32 0.0, %v6886
      %v6888 = vpop.f32.mrf.mxu0
      %6889 = vmatprep.mubr.f32.mxu0 0.0
      %6890 = vmatmul.mubr.f32.gmra.mxu0 %v6697
      %v6891 = vpop.f32.mrf.mxu0
      %v6892 = vadd.f32 0.0, %v6891
      %v6893 = vpop.f32.mrf.mxu0
      %6894 = vmatprep.mubr.f32.mxu0 0.0
      %6895 = vmatmul.mubr.f32.gmra.mxu0 %v6700
      %v6896 = vpop.f32.mrf.mxu0
      %v6897 = vadd.f32 0.0, %v6896
      %v6898 = vpop.f32.mrf.mxu0
      %6899 = vmatprep.mubr.f32.mxu0 0.0
      %6900 = vmatmul.mubr.f32.gmra.mxu0 %v6703
      %v6901 = vpop.f32.mrf.mxu0
      %v6902 = vadd.f32 0.0, %v6901
      %v6903 = vpop.f32.mrf.mxu0
      %6904 = vmatprep.mubr.f32.mxu0 0.0
      %6905 = vmatmul.mubr.f32.gmra.mxu0 %v6706
      %v6906 = vpop.f32.mrf.mxu0
      %v6907 = vadd.f32 0.0, %v6906
      %v6908 = vpop.f32.mrf.mxu0
      %6909 = vmatprep.mubr.f32.mxu0 0.0
      %6910 = vmatmul.mubr.f32.gmra.mxu0 %v6709
      %v6911 = vpop.f32.mrf.mxu0
      %v6912 = vadd.f32 0.0, %v6911
      %v6913 = vpop.f32.mrf.mxu0
      %6914 = vmatprep.mubr.f32.mxu0 0.0
      %6915 = vmatmul.mubr.f32.gmra.mxu0 %v6712
      %v6916 = vpop.f32.mrf.mxu0
      %v6917 = vadd.f32 0.0, %v6916
      %v6918 = vpop.f32.mrf.mxu0
      %6919 = vmatprep.mubr.f32.mxu0 0.0
      %6920 = vmatmul.mubr.f32.gmra.mxu0 %v6715
      %v6921 = vpop.f32.mrf.mxu0
      %v6922 = vadd.f32 0.0, %v6921
      %v6923 = vpop.f32.mrf.mxu0
      %6924 = vmatprep.mubr.f32.mxu0 0.0
      %6925 = vmatmul.mubr.f32.gmra.mxu0 %v6718
      %v6926 = vpop.f32.mrf.mxu0
      %v6927 = vadd.f32 0.0, %v6926
      %v6928 = vpop.f32.mrf.mxu0
      %6929 = vmatprep.mubr.f32.mxu0 0.0
      %6930 = vmatmul.mubr.f32.gmra.mxu0 %v6721
      %v6931 = vpop.f32.mrf.mxu0
      %v6932 = vadd.f32 0.0, %v6931
      %v6933 = vpop.f32.mrf.mxu0
      %6934 = vmatprep.mubr.f32.mxu0 0.0
      %6935 = vmatmul.mubr.f32.gmra.mxu0 %v6724
      %v6936 = vpop.f32.mrf.mxu0
      %v6937 = vadd.f32 0.0, %v6936
      %v6938 = vpop.f32.mrf.mxu0
      %6939 = vmatprep.mubr.f32.mxu0 0.0
      %6940 = vmatmul.mubr.f32.gmra.mxu0 %v6727
      %v6941 = vpop.f32.mrf.mxu0
      %v6942 = vadd.f32 0.0, %v6941
      %v6943 = vpop.f32.mrf.mxu0
      %6944 = vmatprep.mubr.f32.mxu0 0.0
      %6945 = vmatmul.mubr.f32.gmra.mxu0 %v6730
      %v6946 = vpop.f32.mrf.mxu0
      %v6947 = vadd.f32 0.0, %v6946
      %v6948 = vpop.f32.mrf.mxu0
      %6949 = vmatprep.mubr.f32.mxu0 0.0
      %6950 = vmatmul.mubr.f32.gmra.mxu0 %v6733
      %v6951 = vpop.f32.mrf.mxu0
      %v6952 = vadd.f32 0.0, %v6951
      %v6953 = vpop.f32.mrf.mxu0
      %6954 = vmatprep.mubr.f32.mxu0 0.0
      %6955 = vmatmul.mubr.f32.gmra.mxu0 %v6736
      %v6956 = vpop.f32.mrf.mxu0
      %v6957 = vadd.f32 0.0, %v6956
      %v6958 = vpop.f32.mrf.mxu0
      %6959 = vmatprep.mubr.f32.mxu0 0.0
      %6960 = vmatmul.mubr.f32.gmra.mxu0 %v6739
      %v6961 = vpop.f32.mrf.mxu0
      %v6962 = vadd.f32 0.0, %v6961
      %v6963 = vpop.f32.mrf.mxu0
      %6964 = vmatprep.mubr.f32.mxu0 0.0
      %6965 = vmatmul.mubr.f32.gmra.mxu0 %v6742
      %v6966 = vpop.f32.mrf.mxu0
      %v6967 = vadd.f32 0.0, %v6966
      %v6968 = vpop.f32.mrf.mxu0
      %6969 = vmatprep.mubr.f32.mxu0 0.0
      %6970 = vmatmul.mubr.f32.gmra.mxu0 %v6745
      %v6971 = vpop.f32.mrf.mxu0
      %v6972 = vadd.f32 0.0, %v6971
      %v6973 = vpop.f32.mrf.mxu0
      %6974 = vdwg.mxu0
      %v6975 = vadd.f32 %v6585, %v6817
      %v6976 = vadd.f32 %v6586, %v6822
      %v6977 = vadd.f32 %v6587, %v6827
      %v6978 = vadd.f32 %v6588, %v6832
      %v6979 = vadd.f32 %v6589, %v6837
      %v6980 = vadd.f32 %v6590, %v6842
      %v6981 = vadd.f32 %v6591, %v6847
      %v6982 = vadd.f32 %v6592, %v6852
      %v6983 = vadd.f32 %v6593, %v6857
      %v6984 = vadd.f32 %v6594, %v6862
      %v6985 = vadd.f32 %v6595, %v6867
      %v6986 = vadd.f32 %v6596, %v6872
      %v6987 = vadd.f32 %v6597, %v6877
      %v6988 = vadd.f32 %v6598, %v6882
      %v6989 = vadd.f32 %v6599, %v6887
      %v6990 = vadd.f32 %v6600, %v6892
      %v6991 = vadd.f32 %v6601, %v6897
      %v6992 = vadd.f32 %v6602, %v6902
      %v6993 = vadd.f32 %v6603, %v6907
      %v6994 = vadd.f32 %v6604, %v6912
      %v6995 = vadd.f32 %v6605, %v6917
      %v6996 = vadd.f32 %v6606, %v6922
      %v6997 = vadd.f32 %v6607, %v6927
      %v6998 = vadd.f32 %v6608, %v6932
      %v6999 = vadd.f32 %v6609, %v6937
      %v7000 = vadd.f32 %v6610, %v6942
      %v7001 = vadd.f32 %v6611, %v6947
      %v7002 = vadd.f32 %v6612, %v6952
      %v7003 = vadd.f32 %v6613, %v6957
      %v7004 = vadd.f32 %v6614, %v6962
      %v7005 = vadd.f32 %v6615, %v6967
      %v7006 = vadd.f32 %v6616, %v6972
      %v7007 = vld [vmem:[%s6226 + $0x2] sm:$0xff]
      %v7008 = vld [vmem:[%s6226 + $0xa] sm:$0xff]
      %v7009 = vld [vmem:[%s6226 + $0x1a] sm:$0xff]
      %v7010 = vld [vmem:[%s6226 + $0x22] sm:$0xff]
      %v7011 = vld [vmem:[%s6226 + $0x32] sm:$0xff]
      %v7012 = vld [vmem:[%s6226 + $0x3a] sm:$0xff]
      %v7013 = vld [vmem:[%s6226 + $0x4a] sm:$0xff]
      %v7014 = vld [vmem:[%s6226 + $0x52] sm:$0xff]
      %v7015 = vld [vmem:[%s6226 + $0x62] sm:$0xff]
      %v7016 = vld [vmem:[%s6226 + $0x6a] sm:$0xff]
      %v7017 = vld [vmem:[%s6226 + $0x7a] sm:$0xff]
      %v7018 = vld [vmem:[%s6226 + $0x82] sm:$0xff]
      %v7019 = vld [vmem:[%s6226 + $0x92] sm:$0xff]
      %v7020 = vld [vmem:[%s6226 + $0x9a] sm:$0xff]
      %v7021 = vld [vmem:[%s6226 + $0xaa] sm:$0xff]
      %v7022 = vld [vmem:[%s6226 + $0xb2] sm:$0xff]
      %v7023 = vld [vmem:[%s6226 + $0xc2] sm:$0xff]
      %v7024 = vld [vmem:[%s6226 + $0xca] sm:$0xff]
      %v7025 = vld [vmem:[%s6226 + $0xda] sm:$0xff]
      %v7026 = vld [vmem:[%s6226 + $0xe2] sm:$0xff]
      %v7027 = vld [vmem:[%s6226 + $0xf2] sm:$0xff]
      %v7028 = vld [vmem:[%s6226 + $0xfa] sm:$0xff]
      %v7029 = vld [vmem:[%s6226 + $0x10a] sm:$0xff]
      %v7030 = vld [vmem:[%s6226 + $0x112] sm:$0xff]
      %v7031 = vld [vmem:[%s6226 + $0x122] sm:$0xff]
      %v7032 = vld [vmem:[%s6226 + $0x12a] sm:$0xff]
      %v7033 = vld [vmem:[%s6226 + $0x13a] sm:$0xff]
      %v7034 = vld [vmem:[%s6226 + $0x142] sm:$0xff]
      %v7035 = vld [vmem:[%s6226 + $0x152] sm:$0xff]
      %v7036 = vld [vmem:[%s6226 + $0x15a] sm:$0xff]
      %v7037 = vld [vmem:[%s6226 + $0x16a] sm:$0xff]
      %v7038 = vld [vmem:[%s6226 + $0x172] sm:$0xff]
      %s7039 = scalar_lea.vmem %s3, 32
      %v7040 = vld [vmem:[%s7039] sm:$0xf]
      %v7042 = vsel %vm225, %v7007, 0
      %v7045 = vsel %vm225, %v7008, 0
      %v7048 = vsel %vm225, %v7009, 0
      %v7051 = vsel %vm225, %v7010, 0
      %v7054 = vsel %vm225, %v7011, 0
      %v7057 = vsel %vm225, %v7012, 0
      %v7060 = vsel %vm225, %v7013, 0
      %v7063 = vsel %vm225, %v7014, 0
      %v7066 = vsel %vm225, %v7015, 0
      %v7069 = vsel %vm225, %v7016, 0
      %v7072 = vsel %vm225, %v7017, 0
      %v7075 = vsel %vm225, %v7018, 0
      %v7078 = vsel %vm225, %v7019, 0
      %v7081 = vsel %vm225, %v7020, 0
      %v7084 = vsel %vm225, %v7021, 0
      %v7087 = vsel %vm225, %v7022, 0
      %v7090 = vsel %vm225, %v7023, 0
      %v7093 = vsel %vm225, %v7024, 0
      %v7096 = vsel %vm225, %v7025, 0
      %v7099 = vsel %vm225, %v7026, 0
      %v7102 = vsel %vm225, %v7027, 0
      %v7105 = vsel %vm225, %v7028, 0
      %v7108 = vsel %vm225, %v7029, 0
      %v7111 = vsel %vm225, %v7030, 0
      %v7114 = vsel %vm225, %v7031, 0
      %v7117 = vsel %vm225, %v7032, 0
      %v7120 = vsel %vm225, %v7033, 0
      %v7123 = vsel %vm225, %v7034, 0
      %v7126 = vsel %vm225, %v7035, 0
      %v7129 = vsel %vm225, %v7036, 0
      %v7132 = vsel %vm225, %v7037, 0
      %v7135 = vsel %vm225, %v7038, 0
      %v7138 = vsel %vm509, %v7040, 0
      %7140 = vmatprep.subr.mxu0 0.0
      %7141 = vmatpush1.msra.mxu0 0.0
      %7142 = vmatprep.subr.mxu0 0.0
      %7143 = vmatpush1.msra.mxu0 0.0
      %7144 = vmatprep.subr.mxu0 0.0
      %7145 = vmatpush1.msra.mxu0 0.0
      %7146 = vmatprep.subr.mxu0 0.0
      %7147 = vmatpush1.msra.mxu0 0.0
      %7148 = vmatprep.subr.mxu0 0.0
      %7149 = vmatpush1.msra.mxu0 0.0
      %7150 = vmatprep.subr.mxu0 0.0
      %7151 = vmatpush1.msra.mxu0 0.0
      %7152 = vmatprep.subr.mxu0 0.0
      %7153 = vmatpush1.msra.mxu0 0.0
      %7154 = vmatprep.subr.mxu0 0.0
      %7155 = vmatpush1.msra.mxu0 0.0
      %7156 = vmatprep.subr.mxu0 0.0
      %7157 = vmatpush1.msra.mxu0 0.0
      %7158 = vmatprep.subr.mxu0 0.0
      %7159 = vmatpush1.msra.mxu0 0.0
      %7160 = vmatprep.subr.mxu0 0.0
      %7161 = vmatpush1.msra.mxu0 0.0
      %7162 = vmatprep.subr.mxu0 0.0
      %7163 = vmatpush1.msra.mxu0 0.0
      %7164 = vmatprep.subr.mxu0 0.0
      %7165 = vmatpush1.msra.mxu0 0.0
      %7166 = vmatprep.subr.mxu0 0.0
      %7167 = vmatpush1.msra.mxu0 0.0
      %7168 = vmatprep.subr.mxu0 0.0
      %7169 = vmatpush1.msra.mxu0 0.0
      %7170 = vmatprep.subr.mxu0 0.0
      %7171 = vmatpush1.msra.mxu0 %v7138
      %7172 = vmatprep.subr.mxu0 0.0
      %7173 = vmatpush2.msra.mxu0 0.0
      %7174 = vmatprep.subr.mxu0 0.0
      %7175 = vmatpush2.msra.mxu0 0.0
      %7176 = vmatprep.subr.mxu0 0.0
      %7177 = vmatpush2.msra.mxu0 0.0
      %7178 = vmatprep.subr.mxu0 0.0
      %7179 = vmatpush2.msra.mxu0 0.0
      %7180 = vmatprep.subr.mxu0 0.0
      %7181 = vmatpush2.msra.mxu0 0.0
      %7182 = vmatprep.subr.mxu0 0.0
      %7183 = vmatpush2.msra.mxu0 0.0
      %7184 = vmatprep.subr.mxu0 0.0
      %7185 = vmatpush2.msra.mxu0 0.0
      %7186 = vmatprep.subr.mxu0 0.0
      %7187 = vmatpush2.msra.mxu0 0.0
      %7188 = vmatprep.subr.mxu0 0.0
      %7189 = vmatpush2.msra.mxu0 0.0
      %7190 = vmatprep.subr.mxu0 0.0
      %7191 = vmatpush2.msra.mxu0 0.0
      %7192 = vmatprep.subr.mxu0 0.0
      %7193 = vmatpush2.msra.mxu0 0.0
      %7194 = vmatprep.subr.mxu0 0.0
      %7195 = vmatpush2.msra.mxu0 0.0
      %7196 = vmatprep.subr.mxu0 0.0
      %7197 = vmatpush2.msra.mxu0 0.0
      %7198 = vmatprep.subr.mxu0 0.0
      %7199 = vmatpush2.msra.mxu0 0.0
      %7200 = vmatprep.subr.mxu0 0.0
      %7201 = vmatpush2.msra.mxu0 0.0
      %7202 = vmatprep.subr.mxu0 0.0
      %7203 = vmatpush2.msra.mxu0 0.0
      %7204 = vmatprep.mubr.f32.mxu0 0.0
      %7205 = vmatmul.mubr.f32.gmra.mxu0 %v7042
      %v7206 = vpop.f32.mrf.mxu0
      %v7207 = vadd.f32 0.0, %v7206
      %v7208 = vpop.f32.mrf.mxu0
      %7209 = vmatprep.mubr.f32.mxu0 0.0
      %7210 = vmatmul.mubr.f32.gmra.mxu0 %v7045
      %v7211 = vpop.f32.mrf.mxu0
      %v7212 = vadd.f32 0.0, %v7211
      %v7213 = vpop.f32.mrf.mxu0
      %7214 = vmatprep.mubr.f32.mxu0 0.0
      %7215 = vmatmul.mubr.f32.gmra.mxu0 %v7048
      %v7216 = vpop.f32.mrf.mxu0
      %v7217 = vadd.f32 0.0, %v7216
      %v7218 = vpop.f32.mrf.mxu0
      %7219 = vmatprep.mubr.f32.mxu0 0.0
      %7220 = vmatmul.mubr.f32.gmra.mxu0 %v7051
      %v7221 = vpop.f32.mrf.mxu0
      %v7222 = vadd.f32 0.0, %v7221
      %v7223 = vpop.f32.mrf.mxu0
      %7224 = vmatprep.mubr.f32.mxu0 0.0
      %7225 = vmatmul.mubr.f32.gmra.mxu0 %v7054
      %v7226 = vpop.f32.mrf.mxu0
      %v7227 = vadd.f32 0.0, %v7226
      %v7228 = vpop.f32.mrf.mxu0
      %7229 = vmatprep.mubr.f32.mxu0 0.0
      %7230 = vmatmul.mubr.f32.gmra.mxu0 %v7057
      %v7231 = vpop.f32.mrf.mxu0
      %v7232 = vadd.f32 0.0, %v7231
      %v7233 = vpop.f32.mrf.mxu0
      %7234 = vmatprep.mubr.f32.mxu0 0.0
      %7235 = vmatmul.mubr.f32.gmra.mxu0 %v7060
      %v7236 = vpop.f32.mrf.mxu0
      %v7237 = vadd.f32 0.0, %v7236
      %v7238 = vpop.f32.mrf.mxu0
      %7239 = vmatprep.mubr.f32.mxu0 0.0
      %7240 = vmatmul.mubr.f32.gmra.mxu0 %v7063
      %v7241 = vpop.f32.mrf.mxu0
      %v7242 = vadd.f32 0.0, %v7241
      %v7243 = vpop.f32.mrf.mxu0
      %7244 = vmatprep.mubr.f32.mxu0 0.0
      %7245 = vmatmul.mubr.f32.gmra.mxu0 %v7066
      %v7246 = vpop.f32.mrf.mxu0
      %v7247 = vadd.f32 0.0, %v7246
      %v7248 = vpop.f32.mrf.mxu0
      %7249 = vmatprep.mubr.f32.mxu0 0.0
      %7250 = vmatmul.mubr.f32.gmra.mxu0 %v7069
      %v7251 = vpop.f32.mrf.mxu0
      %v7252 = vadd.f32 0.0, %v7251
      %v7253 = vpop.f32.mrf.mxu0
      %7254 = vmatprep.mubr.f32.mxu0 0.0
      %7255 = vmatmul.mubr.f32.gmra.mxu0 %v7072
      %v7256 = vpop.f32.mrf.mxu0
      %v7257 = vadd.f32 0.0, %v7256
      %v7258 = vpop.f32.mrf.mxu0
      %7259 = vmatprep.mubr.f32.mxu0 0.0
      %7260 = vmatmul.mubr.f32.gmra.mxu0 %v7075
      %v7261 = vpop.f32.mrf.mxu0
      %v7262 = vadd.f32 0.0, %v7261
      %v7263 = vpop.f32.mrf.mxu0
      %7264 = vmatprep.mubr.f32.mxu0 0.0
      %7265 = vmatmul.mubr.f32.gmra.mxu0 %v7078
      %v7266 = vpop.f32.mrf.mxu0
      %v7267 = vadd.f32 0.0, %v7266
      %v7268 = vpop.f32.mrf.mxu0
      %7269 = vmatprep.mubr.f32.mxu0 0.0
      %7270 = vmatmul.mubr.f32.gmra.mxu0 %v7081
      %v7271 = vpop.f32.mrf.mxu0
      %v7272 = vadd.f32 0.0, %v7271
      %v7273 = vpop.f32.mrf.mxu0
      %7274 = vmatprep.mubr.f32.mxu0 0.0
      %7275 = vmatmul.mubr.f32.gmra.mxu0 %v7084
      %v7276 = vpop.f32.mrf.mxu0
      %v7277 = vadd.f32 0.0, %v7276
      %v7278 = vpop.f32.mrf.mxu0
      %7279 = vmatprep.mubr.f32.mxu0 0.0
      %7280 = vmatmul.mubr.f32.gmra.mxu0 %v7087
      %v7281 = vpop.f32.mrf.mxu0
      %v7282 = vadd.f32 0.0, %v7281
      %v7283 = vpop.f32.mrf.mxu0
      %7284 = vmatprep.mubr.f32.mxu0 0.0
      %7285 = vmatmul.mubr.f32.gmra.mxu0 %v7090
      %v7286 = vpop.f32.mrf.mxu0
      %v7287 = vadd.f32 0.0, %v7286
      %v7288 = vpop.f32.mrf.mxu0
      %7289 = vmatprep.mubr.f32.mxu0 0.0
      %7290 = vmatmul.mubr.f32.gmra.mxu0 %v7093
      %v7291 = vpop.f32.mrf.mxu0
      %v7292 = vadd.f32 0.0, %v7291
      %v7293 = vpop.f32.mrf.mxu0
      %7294 = vmatprep.mubr.f32.mxu0 0.0
      %7295 = vmatmul.mubr.f32.gmra.mxu0 %v7096
      %v7296 = vpop.f32.mrf.mxu0
      %v7297 = vadd.f32 0.0, %v7296
      %v7298 = vpop.f32.mrf.mxu0
      %7299 = vmatprep.mubr.f32.mxu0 0.0
      %7300 = vmatmul.mubr.f32.gmra.mxu0 %v7099
      %v7301 = vpop.f32.mrf.mxu0
      %v7302 = vadd.f32 0.0, %v7301
      %v7303 = vpop.f32.mrf.mxu0
      %7304 = vmatprep.mubr.f32.mxu0 0.0
      %7305 = vmatmul.mubr.f32.gmra.mxu0 %v7102
      %v7306 = vpop.f32.mrf.mxu0
      %v7307 = vadd.f32 0.0, %v7306
      %v7308 = vpop.f32.mrf.mxu0
      %7309 = vmatprep.mubr.f32.mxu0 0.0
      %7310 = vmatmul.mubr.f32.gmra.mxu0 %v7105
      %v7311 = vpop.f32.mrf.mxu0
      %v7312 = vadd.f32 0.0, %v7311
      %v7313 = vpop.f32.mrf.mxu0
      %7314 = vmatprep.mubr.f32.mxu0 0.0
      %7315 = vmatmul.mubr.f32.gmra.mxu0 %v7108
      %v7316 = vpop.f32.mrf.mxu0
      %v7317 = vadd.f32 0.0, %v7316
      %v7318 = vpop.f32.mrf.mxu0
      %7319 = vmatprep.mubr.f32.mxu0 0.0
      %7320 = vmatmul.mubr.f32.gmra.mxu0 %v7111
      %v7321 = vpop.f32.mrf.mxu0
      %v7322 = vadd.f32 0.0, %v7321
      %v7323 = vpop.f32.mrf.mxu0
      %7324 = vmatprep.mubr.f32.mxu0 0.0
      %7325 = vmatmul.mubr.f32.gmra.mxu0 %v7114
      %v7326 = vpop.f32.mrf.mxu0
      %v7327 = vadd.f32 0.0, %v7326
      %v7328 = vpop.f32.mrf.mxu0
      %7329 = vmatprep.mubr.f32.mxu0 0.0
      %7330 = vmatmul.mubr.f32.gmra.mxu0 %v7117
      %v7331 = vpop.f32.mrf.mxu0
      %v7332 = vadd.f32 0.0, %v7331
      %v7333 = vpop.f32.mrf.mxu0
      %7334 = vmatprep.mubr.f32.mxu0 0.0
      %7335 = vmatmul.mubr.f32.gmra.mxu0 %v7120
      %v7336 = vpop.f32.mrf.mxu0
      %v7337 = vadd.f32 0.0, %v7336
      %v7338 = vpop.f32.mrf.mxu0
      %7339 = vmatprep.mubr.f32.mxu0 0.0
      %7340 = vmatmul.mubr.f32.gmra.mxu0 %v7123
      %v7341 = vpop.f32.mrf.mxu0
      %v7342 = vadd.f32 0.0, %v7341
      %v7343 = vpop.f32.mrf.mxu0
      %7344 = vmatprep.mubr.f32.mxu0 0.0
      %7345 = vmatmul.mubr.f32.gmra.mxu0 %v7126
      %v7346 = vpop.f32.mrf.mxu0
      %v7347 = vadd.f32 0.0, %v7346
      %v7348 = vpop.f32.mrf.mxu0
      %7349 = vmatprep.mubr.f32.mxu0 0.0
      %7350 = vmatmul.mubr.f32.gmra.mxu0 %v7129
      %v7351 = vpop.f32.mrf.mxu0
      %v7352 = vadd.f32 0.0, %v7351
      %v7353 = vpop.f32.mrf.mxu0
      %7354 = vmatprep.mubr.f32.mxu0 0.0
      %7355 = vmatmul.mubr.f32.gmra.mxu0 %v7132
      %v7356 = vpop.f32.mrf.mxu0
      %v7357 = vadd.f32 0.0, %v7356
      %v7358 = vpop.f32.mrf.mxu0
      %7359 = vmatprep.mubr.f32.mxu0 0.0
      %7360 = vmatmul.mubr.f32.gmra.mxu0 %v7135
      %v7361 = vpop.f32.mrf.mxu0
      %v7362 = vadd.f32 0.0, %v7361
      %v7363 = vpop.f32.mrf.mxu0
      %7364 = vdwg.mxu0
      %v7365 = vadd.f32 %v6975, %v7207
      %v7366 = vadd.f32 %v6976, %v7212
      %v7367 = vadd.f32 %v6977, %v7217
      %v7368 = vadd.f32 %v6978, %v7222
      %v7369 = vadd.f32 %v6979, %v7227
      %v7370 = vadd.f32 %v6980, %v7232
      %v7371 = vadd.f32 %v6981, %v7237
      %v7372 = vadd.f32 %v6982, %v7242
      %v7373 = vadd.f32 %v6983, %v7247
      %v7374 = vadd.f32 %v6984, %v7252
      %v7375 = vadd.f32 %v6985, %v7257
      %v7376 = vadd.f32 %v6986, %v7262
      %v7377 = vadd.f32 %v6987, %v7267
      %v7378 = vadd.f32 %v6988, %v7272
      %v7379 = vadd.f32 %v6989, %v7277
      %v7380 = vadd.f32 %v6990, %v7282
      %v7381 = vadd.f32 %v6991, %v7287
      %v7382 = vadd.f32 %v6992, %v7292
      %v7383 = vadd.f32 %v6993, %v7297
      %v7384 = vadd.f32 %v6994, %v7302
      %v7385 = vadd.f32 %v6995, %v7307
      %v7386 = vadd.f32 %v6996, %v7312
      %v7387 = vadd.f32 %v6997, %v7317
      %v7388 = vadd.f32 %v6998, %v7322
      %v7389 = vadd.f32 %v6999, %v7327
      %v7390 = vadd.f32 %v7000, %v7332
      %v7391 = vadd.f32 %v7001, %v7337
      %v7392 = vadd.f32 %v7002, %v7342
      %v7393 = vadd.f32 %v7003, %v7347
      %v7394 = vadd.f32 %v7004, %v7352
      %v7395 = vadd.f32 %v7005, %v7357
      %v7396 = vadd.f32 %v7006, %v7362
      %v7397 = vld [vmem:[%s4] sm:$0x1]
      %v7399 = vlaneseq
      %v7400 = vshrl.u32 %v7399, 7
      %v7401 = vsub.s32 0, %v7400
      %v7402 = vrot.slane %v7397, %v7401
      %v7404 = vadd.f32 %v7365, %v7402
      %v7405 = vadd.f32 %v7366, %v7402
      %v7406 = vadd.f32 %v7367, %v7402
      %v7407 = vadd.f32 %v7368, %v7402
      %v7408 = vadd.f32 %v7369, %v7402
      %v7409 = vadd.f32 %v7370, %v7402
      %v7410 = vadd.f32 %v7371, %v7402
      %v7411 = vadd.f32 %v7372, %v7402
      %v7412 = vadd.f32 %v7373, %v7402
      %v7413 = vadd.f32 %v7374, %v7402
      %v7414 = vadd.f32 %v7375, %v7402
      %v7415 = vadd.f32 %v7376, %v7402
      %v7416 = vadd.f32 %v7377, %v7402
      %v7417 = vadd.f32 %v7378, %v7402
      %v7418 = vadd.f32 %v7379, %v7402
      %v7419 = vadd.f32 %v7380, %v7402
      %v7420 = vadd.f32 %v7381, %v7402
      %v7421 = vadd.f32 %v7382, %v7402
      %v7422 = vadd.f32 %v7383, %v7402
      %v7423 = vadd.f32 %v7384, %v7402
      %v7424 = vadd.f32 %v7385, %v7402
      %v7425 = vadd.f32 %v7386, %v7402
      %v7426 = vadd.f32 %v7387, %v7402
      %v7427 = vadd.f32 %v7388, %v7402
      %v7428 = vadd.f32 %v7389, %v7402
      %v7429 = vadd.f32 %v7390, %v7402
      %v7430 = vadd.f32 %v7391, %v7402
      %v7431 = vadd.f32 %v7392, %v7402
      %v7432 = vadd.f32 %v7393, %v7402
      %v7433 = vadd.f32 %v7394, %v7402
      %v7434 = vadd.f32 %v7395, %v7402
      %v7435 = vadd.f32 %v7396, %v7402
      %v7436 = vld [vmem:[%s219] sm:$0xff]
      %v7437 = vld [vmem:[%s219 + $0x8] sm:$0xff]
      %v7438 = vld [vmem:[%s219 + $0x10] sm:$0xff]
      %v7439 = vld [vmem:[%s219 + $0x18] sm:$0xff]
      %v7440 = vld [vmem:[%s219 + $0x20] sm:$0xff]
      %v7441 = vld [vmem:[%s219 + $0x28] sm:$0xff]
      %v7442 = vld [vmem:[%s219 + $0x30] sm:$0xff]
      %v7443 = vld [vmem:[%s219 + $0x38] sm:$0xff]
      %v7444 = vld [vmem:[%s219 + $0x40] sm:$0xff]
      %v7445 = vld [vmem:[%s219 + $0x48] sm:$0xff]
      %v7446 = vld [vmem:[%s219 + $0x50] sm:$0xff]
      %v7447 = vld [vmem:[%s219 + $0x58] sm:$0xff]
      %v7448 = vld [vmem:[%s219 + $0x60] sm:$0xff]
      %v7449 = vld [vmem:[%s219 + $0x68] sm:$0xff]
      %v7450 = vld [vmem:[%s219 + $0x70] sm:$0xff]
      %v7451 = vld [vmem:[%s219 + $0x78] sm:$0xff]
      %v7452 = vld [vmem:[%s219 + $0x80] sm:$0xff]
      %v7453 = vld [vmem:[%s219 + $0x88] sm:$0xff]
      %v7454 = vld [vmem:[%s219 + $0x90] sm:$0xff]
      %v7455 = vld [vmem:[%s219 + $0x98] sm:$0xff]
      %v7456 = vld [vmem:[%s219 + $0xa0] sm:$0xff]
      %v7457 = vld [vmem:[%s219 + $0xa8] sm:$0xff]
      %v7458 = vld [vmem:[%s219 + $0xb0] sm:$0xff]
      %v7459 = vld [vmem:[%s219 + $0xb8] sm:$0xff]
      %v7460 = vld [vmem:[%s219 + $0xc0] sm:$0xff]
      %v7461 = vld [vmem:[%s219 + $0xc8] sm:$0xff]
      %v7462 = vld [vmem:[%s219 + $0xd0] sm:$0xff]
      %v7463 = vld [vmem:[%s219 + $0xd8] sm:$0xff]
      %v7464 = vld [vmem:[%s219 + $0xe0] sm:$0xff]
      %v7465 = vld [vmem:[%s219 + $0xe8] sm:$0xff]
      %v7466 = vld [vmem:[%s219 + $0xf0] sm:$0xff]
      %v7467 = vld [vmem:[%s219 + $0xf8] sm:$0xff]
      %v7468 = vadd.f32 %v7404, %v7436
      %v7469 = vadd.f32 %v7405, %v7437
      %v7470 = vadd.f32 %v7406, %v7438
      %v7471 = vadd.f32 %v7407, %v7439
      %v7472 = vadd.f32 %v7408, %v7440
      %v7473 = vadd.f32 %v7409, %v7441
      %v7474 = vadd.f32 %v7410, %v7442
      %v7475 = vadd.f32 %v7411, %v7443
      %v7476 = vadd.f32 %v7412, %v7444
      %v7477 = vadd.f32 %v7413, %v7445
      %v7478 = vadd.f32 %v7414, %v7446
      %v7479 = vadd.f32 %v7415, %v7447
      %v7480 = vadd.f32 %v7416, %v7448
      %v7481 = vadd.f32 %v7417, %v7449
      %v7482 = vadd.f32 %v7418, %v7450
      %v7483 = vadd.f32 %v7419, %v7451
      %v7484 = vadd.f32 %v7420, %v7452
      %v7485 = vadd.f32 %v7421, %v7453
      %v7486 = vadd.f32 %v7422, %v7454
      %v7487 = vadd.f32 %v7423, %v7455
      %v7488 = vadd.f32 %v7424, %v7456
      %v7489 = vadd.f32 %v7425, %v7457
      %v7490 = vadd.f32 %v7426, %v7458
      %v7491 = vadd.f32 %v7427, %v7459
      %v7492 = vadd.f32 %v7428, %v7460
      %v7493 = vadd.f32 %v7429, %v7461
      %v7494 = vadd.f32 %v7430, %v7462
      %v7495 = vadd.f32 %v7431, %v7463
      %v7496 = vadd.f32 %v7432, %v7464
      %v7497 = vadd.f32 %v7433, %v7465
      %v7498 = vadd.f32 %v7434, %v7466
      %v7499 = vadd.f32 %v7435, %v7467
      %v7500 = vmax.f32 %v7468, 0.0
      %v7501 = vmax.f32 %v7469, 0.0
      %v7502 = vmax.f32 %v7470, 0.0
      %v7503 = vmax.f32 %v7471, 0.0
      %v7504 = vmax.f32 %v7472, 0.0
      %v7505 = vmax.f32 %v7473, 0.0
      %v7506 = vmax.f32 %v7474, 0.0
      %v7507 = vmax.f32 %v7475, 0.0
      %v7508 = vmax.f32 %v7476, 0.0
      %v7509 = vmax.f32 %v7477, 0.0
      %v7510 = vmax.f32 %v7478, 0.0
      %v7511 = vmax.f32 %v7479, 0.0
      %v7512 = vmax.f32 %v7480, 0.0
      %v7513 = vmax.f32 %v7481, 0.0
      %v7514 = vmax.f32 %v7482, 0.0
      %v7515 = vmax.f32 %v7483, 0.0
      %v7516 = vmax.f32 %v7484, 0.0
      %v7517 = vmax.f32 %v7485, 0.0
      %v7518 = vmax.f32 %v7486, 0.0
      %v7519 = vmax.f32 %v7487, 0.0
      %v7520 = vmax.f32 %v7488, 0.0
      %v7521 = vmax.f32 %v7489, 0.0
      %v7522 = vmax.f32 %v7490, 0.0
      %v7523 = vmax.f32 %v7491, 0.0
      %v7524 = vmax.f32 %v7492, 0.0
      %v7525 = vmax.f32 %v7493, 0.0
      %v7526 = vmax.f32 %v7494, 0.0
      %v7527 = vmax.f32 %v7495, 0.0
      %v7528 = vmax.f32 %v7496, 0.0
      %v7529 = vmax.f32 %v7497, 0.0
      %v7530 = vmax.f32 %v7498, 0.0
      %v7531 = vmax.f32 %v7499, 0.0
      %7532 = vst.msk [vmem:[%s224] sm:$0xff] %vm225, %v7500
      %7533 = vst.msk [vmem:[%s224 + $0x8] sm:$0xff] %vm225, %v7501
      %7534 = vst.msk [vmem:[%s224 + $0x10] sm:$0xff] %vm225, %v7502
      %7535 = vst.msk [vmem:[%s224 + $0x18] sm:$0xff] %vm225, %v7503
      %7536 = vst.msk [vmem:[%s224 + $0x20] sm:$0xff] %vm225, %v7504
      %7537 = vst.msk [vmem:[%s224 + $0x28] sm:$0xff] %vm225, %v7505
      %7538 = vst.msk [vmem:[%s224 + $0x30] sm:$0xff] %vm225, %v7506
      %7539 = vst.msk [vmem:[%s224 + $0x38] sm:$0xff] %vm225, %v7507
      %7540 = vst.msk [vmem:[%s224 + $0x40] sm:$0xff] %vm225, %v7508
      %7541 = vst.msk [vmem:[%s224 + $0x48] sm:$0xff] %vm225, %v7509
      %7542 = vst.msk [vmem:[%s224 + $0x50] sm:$0xff] %vm225, %v7510
      %7543 = vst.msk [vmem:[%s224 + $0x58] sm:$0xff] %vm225, %v7511
      %7544 = vst.msk [vmem:[%s224 + $0x60] sm:$0xff] %vm225, %v7512
      %7545 = vst.msk [vmem:[%s224 + $0x68] sm:$0xff] %vm225, %v7513
      %7546 = vst.msk [vmem:[%s224 + $0x70] sm:$0xff] %vm225, %v7514
      %7547 = vst.msk [vmem:[%s224 + $0x78] sm:$0xff] %vm225, %v7515
      %7548 = vst.msk [vmem:[%s224 + $0x80] sm:$0xff] %vm225, %v7516
      %7549 = vst.msk [vmem:[%s224 + $0x88] sm:$0xff] %vm225, %v7517
      %7550 = vst.msk [vmem:[%s224 + $0x90] sm:$0xff] %vm225, %v7518
      %7551 = vst.msk [vmem:[%s224 + $0x98] sm:$0xff] %vm225, %v7519
      %7552 = vst.msk [vmem:[%s224 + $0xa0] sm:$0xff] %vm225, %v7520
      %7553 = vst.msk [vmem:[%s224 + $0xa8] sm:$0xff] %vm225, %v7521
      %7554 = vst.msk [vmem:[%s224 + $0xb0] sm:$0xff] %vm225, %v7522
      %7555 = vst.msk [vmem:[%s224 + $0xb8] sm:$0xff] %vm225, %v7523
      %7556 = vst.msk [vmem:[%s224 + $0xc0] sm:$0xff] %vm225, %v7524
      %7557 = vst.msk [vmem:[%s224 + $0xc8] sm:$0xff] %vm225, %v7525
      %7558 = vst.msk [vmem:[%s224 + $0xd0] sm:$0xff] %vm225, %v7526
      %7559 = vst.msk [vmem:[%s224 + $0xd8] sm:$0xff] %vm225, %v7527
      %7560 = vst.msk [vmem:[%s224 + $0xe0] sm:$0xff] %vm225, %v7528
      %7561 = vst.msk [vmem:[%s224 + $0xe8] sm:$0xff] %vm225, %v7529
      %7562 = vst.msk [vmem:[%s224 + $0xf0] sm:$0xff] %vm225, %v7530
      %7563 = vst.msk [vmem:[%s224 + $0xf8] sm:$0xff] %vm225, %v7531
      %p7564 = scmp.lt.s32.totalorder %s16, 1
      %s7565 = scalar_select %p7564, %s16, 1
      %s7566 = smul.addr %s7565, 32
      %s7567 = smul.addr %s7566, 8
      %s7568 = scalar_lea.vmem %s5, %s7567
      // Predicated region
      $region41: #{tpu_custom_call.1} parent=39 // pred_check
        %p7569 = pneg %p144
      $region42: #{tpu_custom_call.1} parent=39 // pred_check_branch
        %7571 = sbr.rel (%p7569) target = $region44
      $region43: #{tpu_custom_call.1} parent=39 // pred_region
        _
      $region44: #{tpu_custom_call.1} parent=39 // pred_fallthru
        _
    $region40: #{tpu_custom_call.1} parent=5 // pred_fallthru
      _
    %p7572 = scmp.le.s32.totalorder 2, %s11
    // Predicated region
    $region45: #{tpu_custom_call.1} parent=5 // pred_check
      %p7573 = pneg %p7572
    $region46: #{tpu_custom_call.1} parent=5 // pred_check_branch
      %7575 = sbr.rel (%p7573) target = $region48
    $region47: #{tpu_custom_call.1} parent=5 // pred_region
      %s7576 = ssub.s32 %s11, 2
      // Predicated region
      $region49: #{tpu_custom_call.1} parent=47 // pred_check
        %p7577 = pneg %p150
      $region50: #{tpu_custom_call.1} parent=47 // pred_check_branch
        %7579 = sbr.rel (%p7577) target = $region52
      $region51: #{tpu_custom_call.1} parent=47 // pred_region
        %p7580 = scmp.lt.s32.totalorder %s17, 1
        %s7581 = scalar_select %p7580, %s17, 1
        %s7582 = smul.addr %s7581, 32
        %s7583 = smul.addr %s7582, 8
        %s7584 = scalar_lea.vmem %s5, %s7583
      $region52: #{tpu_custom_call.1} parent=47 // pred_fallthru
        _
    $region48: #{tpu_custom_call.1} parent=5 // pred_fallthru
      _
  $region6: #{tpu_custom_call.1} parent=0 // loop_footer
    %s15 = sadd.s32 1, %s11
  $region7: #{tpu_custom_call.1} parent=0 // loop_footer_branch
    %10 = sbr.rel target = $region3
  $region8: #{tpu_custom_call.1} parent=0 // loop_exit
    _

</llo_original>
